<compile_context>
chip_gen: v7x
topology: tpu7x:2x2x1
jax: 0.10.0
libtpu: 0.0.40
codegen_flags: <defaults>
</compile_context>

<pallas_src>
import functools

import jax
import jax.numpy as jnp
from jax import lax
from jax.experimental import pallas as pl
from jax.experimental.pallas import tpu as pltpu


def _round_up(x, m):
    return ((x + m - 1) // m) * m


# ----------------------------------------------------------------------------
# Static network plan (geometry of every layer + its VMEM input buffer)
# ----------------------------------------------------------------------------
def _layer_cfgs(input_nc, ndf, n_layers):
    """(Cin, Cout, stride) per conv, exactly as the torch module builds them."""
    cfgs = [(input_nc, ndf, 2)]
    nf = ndf
    for _ in range(1, n_layers):
        nf_prev, nf = nf, min(nf * 2, 512)
        cfgs.append((nf_prev, nf, 2))
    nf_prev, nf = nf, min(nf * 2, 512)
    cfgs.append((nf_prev, nf, 1))
    cfgs.append((nf, 1, 1))                      # final 1-channel score map
    return cfgs


def build_plan(input_nc, ndf, n_layers, H, W):
    """stride-2 convs (k=4,s=2,p=2) are rewritten exactly as stride-1 2x2 convs
    over a space-to-depth(2) grid (Ho+1, Wo+1) with 4*Cin channels; stride-1
    convs (k=4,s=1,p=2) run over a zero-padded (H+4, W+4) grid.  Each layer's
    input lives in a row-major flattened VMEM buffer (grid_h*grid_w, K)."""
    cfgs = _layer_cfgs(input_nc, ndf, n_layers)
    L = len(cfgs)
    layers = []
    h, w = H, W
    for li, (cin, cout, s) in enumerate(cfgs):
        last = li == L - 1
        cin_p = _round_up(cin, 16)
        cout_p = _round_up(cout, 8 if last else 16)
        if s == 2:
            ho, wo = h // 2 + 1, w // 2 + 1
            gh, gw = ho + 1, wo + 1              # s2d grid
            buf_shape = (gh * gw, 4 * cin_p)
            taps = (2, 2)
        else:
            ho, wo = h + 1, w + 1
            gh, gw = h + 4, w + 4                # padded grid
            buf_shape = (gh * gw, cin_p)
            taps = (4, 4)
        layers.append(dict(stride=s, cin=cin, cout=cout, cin_p=cin_p,
                           cout_p=cout_p, Hi=h, Wi=w, Ho=ho, Wo=wo, taps=taps,
                           grid_w=gw, buf_shape=buf_shape, relu=not last,
                           last=last))
        h, w = ho, wo
    return dict(layers=layers, H=H, W=W, out_h=h, out_w=w)


# ----------------------------------------------------------------------------
# In-kernel helpers
# ----------------------------------------------------------------------------
def _sel_matrix(n_out, n_in, parity, dtype):
    """S[u, q] = 1 iff q == 2*u + parity (even/odd column selector)."""
    rows = lax.broadcasted_iota(jnp.int32, (n_out, n_in), 0)
    cols = lax.broadcasted_iota(jnp.int32, (n_out, n_in), 1)
    return (cols == 2 * rows + parity).astype(dtype)


def _conv_flat(src_ref, w_ref, b_ref, lyr):
    """One conv layer over its flattened padded/s2d input buffer.

    src_ref: (grid_h*grid_w, K) f32 scratch; w_ref: (kh*kw, K, Cout_p) bf16;
    b_ref: (1, Cout_p) f32.  All output rows flattened into the matmul M dim.
    Returns the f32 (M_e, Cout_p) activation; valid row p lives at
    [p*grid_w : p*grid_w + Wo].
    """
    kh, kw = lyr["taps"]
    gw, Ho, Wo = lyr["grid_w"], lyr["Ho"], lyr["Wo"]
    Cout = w_ref.shape[-1]
    m_e = (Ho - 1) * gw + Wo
    acc = jnp.zeros((m_e, Cout), jnp.float32)
    for i in range(kh):
        for j in range(kw):
            off = i * gw + j
            lhs = src_ref[pl.ds(off, m_e), :].astype(jnp.bfloat16)
            acc += jnp.dot(lhs, w_ref[i * kw + j, :, :],
                           preferred_element_type=jnp.float32)
    y = acc + b_ref[...]                         # single bias broadcast
    if lyr["relu"]:
        y = jnp.where(y >= 0.0, y, 0.2 * y)      # LeakyReLU(0.2)
    return y


def _scatter_rows(dst_ref, consumer, rows):
    """Write valid output rows (list of (Wn, C) f32 values) into the consumer
    layer's flattened input buffer: pad-2 offset plus, for stride-2 consumers,
    the space-to-depth split (row phase by address, column phase via tiny 0/1
    selection matmuls; all stores are contiguous)."""
    C = consumer["cin_p"]
    gw = consumer["grid_w"]
    if consumer["stride"] == 2:
        wn = rows[0].shape[0]
        n_e, n_o = (wn + 1) // 2, wn // 2
        s_e = _sel_matrix(n_e, wn, 0, jnp.bfloat16)
        s_o = _sel_matrix(n_o, wn, 1, jnp.bfloat16) if n_o else None
        for p, row in enumerate(rows):
            row16 = row.astype(jnp.bfloat16)     # round once (matches reference)
            rp = p + 2                           # padded row index (pad = 2)
            prow, di = rp // 2, rp % 2
            base = prow * gw + 1                 # padded col 2 -> s2d col Q = 1
            ev = jnp.dot(s_e, row16, preferred_element_type=jnp.float32)
            dst_ref[pl.ds(base, n_e), pl.ds(2 * di * C, C)] = ev
            if n_o:
                od = jnp.dot(s_o, row16, preferred_element_type=jnp.float32)
                dst_ref[pl.ds(base, n_o), pl.ds((2 * di + 1) * C, C)] = od
    else:
        for p, row in enumerate(rows):
            base = (p + 2) * gw + 2
            dst_ref[pl.ds(base, row.shape[0]), :] = row


def _make_fused_kernel(plan):
    layers = plan["layers"]
    L = len(layers)
    H = plan["H"]

    def kernel(*refs):
        x_ref = refs[0]
        w_refs = refs[1:1 + L]
        b_refs = refs[1 + L:1 + 2 * L]
        o_ref = refs[1 + 2 * L]
        buf_refs = refs[2 + 2 * L:2 + 3 * L]

        # Zero all padded/s2d input buffers (borders must be exact zeros).
        for buf in buf_refs:
            buf[...] = jnp.zeros_like(buf)

        # In-kernel pad + space-to-depth of the raw image into layer 0's buffer.
        img_rows = [x_ref[0, r, :, :] for r in range(H)]
        _scatter_rows(buf_refs[0], layers[0], img_rows)

        for li, lyr in enumerate(layers):
            y = _conv_flat(buf_refs[li], w_refs[li], b_refs[li], lyr)
            gw = lyr["grid_w"]
            rows = [y[p * gw:p * gw + lyr["Wo"], :] for p in range(lyr["Ho"])]
            if li + 1 < L:
                _scatter_rows(buf_refs[li + 1], layers[li + 1], rows)
            else:
                for p, row in enumerate(rows):
                    o_ref[0, p, :, :] = row      # final score map, f32

    return kernel


# ----------------------------------------------------------------------------
# Wrapper: weight layout prep + single pallas_call
# ----------------------------------------------------------------------------
def prepare_kernel_params(params, plan):
    """Per-tap weight tensors + padded biases in the in-kernel layouts."""
    kws, kbs = [], []
    for lyr, prm in zip(plan["layers"], params):
        w = prm["w"].astype(jnp.float32)               # (Cout, Cin, 4, 4)
        b = prm["b"].astype(jnp.float32)
        cin, cout = lyr["cin"], lyr["cout"]
        cin_p, cout_p = lyr["cin_p"], lyr["cout_p"]
        wr = jnp.transpose(w, (2, 3, 1, 0))            # (4,4,Cin,Cout) [i,j,c,co]
        wr = jnp.pad(wr, ((0, 0), (0, 0), (0, cin_p - cin), (0, cout_p - cout)))
        if lyr["stride"] == 2:
            # i = 2*ii + di, j = 2*jj + dj ; s2d channel order = (2*di+dj)*Cin + c
            wr = wr.reshape(2, 2, 2, 2, cin_p, cout_p)       # [ii,di,jj,dj,c,co]
            wr = wr.transpose(0, 2, 1, 3, 4, 5).reshape(4, 4 * cin_p, cout_p)
        else:
            wr = wr.reshape(16, cin_p, cout_p)
        kws.append(wr.astype(jnp.bfloat16))
        kbs.append(jnp.pad(b, (0, cout_p - cout)).reshape(1, cout_p))
    return kws, kbs


def patchgan_forward_pallas(x_nchw, plan, kws, kbs):
    layers = plan["layers"]
    N = x_nchw.shape[0]
    H, W = plan["H"], plan["W"]
    c0, c0p = layers[0]["cin"], layers[0]["cin_p"]
    co_l, co_lp = layers[-1]["cout"], layers[-1]["cout_p"]
    out_h, out_w = plan["out_h"], plan["out_w"]

    x = jnp.transpose(x_nchw, (0, 2, 3, 1)).astype(jnp.float32)   # NCHW -> NHWC
    if c0p != c0:
        x = jnp.pad(x, ((0, 0), (0, 0), (0, 0), (0, c0p - c0)))

    in_specs = [pl.BlockSpec((1, H, W, c0p), lambda n: (n, 0, 0, 0))]
    in_specs += [pl.BlockSpec(wk.shape, lambda n: (0, 0, 0)) for wk in kws]
    in_specs += [pl.BlockSpec(bk.shape, lambda n: (0, 0)) for bk in kbs]

    out = pl.pallas_call(
        _make_fused_kernel(plan),
        out_shape=jax.ShapeDtypeStruct((N, out_h, out_w, co_lp), jnp.float32),
        grid_spec=pltpu.PrefetchScalarGridSpec(
            num_scalar_prefetch=0,
            grid=(N,),                           # one sample per grid step / TC
            in_specs=in_specs,
            out_specs=pl.BlockSpec((1, out_h, out_w, co_lp),
                                   lambda n: (n, 0, 0, 0)),
            scratch_shapes=[pltpu.VMEM(l["buf_shape"], jnp.float32)
                            for l in layers],
        ),
        compiler_params=pltpu.CompilerParams(dimension_semantics=("parallel",)),
    )(x, *kws, *kbs)

    out = out[..., :co_l]
    return jnp.transpose(out, (0, 3, 1, 2))                       # NHWC -> NCHW


# ----------------------------------------------------------------------------
# Parameters (weights_init N(0, 0.02) + spectral normalization)
# ----------------------------------------------------------------------------
def spectral_normalize(w, n_iter=30):
    """Divide w (Cout, Cin, kh, kw) by its spectral norm (power iteration on the
    (Cout, Cin*kh*kw) matrix).  Converged eval-mode equivalent, applied once."""
    W = w.reshape(w.shape[0], -1)
    u = jnp.ones((W.shape[0],), jnp.float32) / jnp.sqrt(float(W.shape[0]))
    v = None
    for _ in range(n_iter):
        v = W.T @ u
        v = v / (jnp.linalg.norm(v) + 1e-12)
        u = W @ v
        u = u / (jnp.linalg.norm(u) + 1e-12)
    sigma = u @ (W @ v)
    return w / sigma


def init_params(key, input_nc=3, ndf=64, n_layers=3):
    params = []
    for cin, cout, stride in _layer_cfgs(input_nc, ndf, n_layers):
        key, k_w, k_b = jax.random.split(key, 3)
        w = jax.random.normal(k_w, (cout, cin, 4, 4), jnp.float32) * 0.02
        w = spectral_normalize(w)
        b = jax.random.normal(k_b, (cout,), jnp.float32) * 0.02
        params.append({"w": w.astype(jnp.bfloat16), "b": b, "stride": stride})
    return params


# Pure-JAX reference (lax.conv) with matching bf16 rounding points.
def reference_forward(x_nchw, params):
    h = jnp.transpose(x_nchw, (0, 2, 3, 1))
    h = h.astype(jnp.bfloat16).astype(jnp.float32)
    last = len(params) - 1
    for idx, lyr in enumerate(params):
        w = lyr["w"].astype(jnp.float32)
        s = lyr["stride"]
        h = lax.conv_general_dilated(
            h, w, window_strides=(s, s), padding=((2, 2), (2, 2)),
            dimension_numbers=("NHWC", "OIHW", "NHWC"),
            precision=lax.Precision.HIGHEST)
        h = h + lyr["b"].reshape(1, 1, 1, -1)
        if idx != last:
            h = jnp.where(h >= 0, h, 0.2 * h)
            h = h.astype(jnp.bfloat16).astype(jnp.float32)
    return jnp.transpose(h, (0, 3, 1, 2))


if __name__ == "__main__":
    key = jax.random.PRNGKey(0)
    key, kx = jax.random.split(key)

    # Small config consistent with the module: batch=2, input_nc=3, 16x16, ndf=16.
    input_nc, ndf, n_layers = 3, 16, 3
    H = W = 16
    x = jax.random.normal(kx, (2, input_nc, H, W), jnp.float32)
    params = init_params(key, input_nc=input_nc, ndf=ndf, n_layers=n_layers)

    plan = build_plan(input_nc, ndf, n_layers, H, W)
    kws, kbs = prepare_kernel_params(params, plan)
    fwd = jax.jit(functools.partial(patchgan_forward_pallas,
                                    plan=plan, kws=kws, kbs=kbs))
    out = jax.block_until_ready(fwd(x))

    # 16 -> 9 -> 5 -> 3 (stride-2) -> 4 -> 5 (stride-1), 1 output channel.
    assert out.shape == (2, 1, 5, 5), out.shape
    assert bool(jnp.all(jnp.isfinite(out)))

    ref = reference_forward(x, params)
    err = float(jnp.max(jnp.abs(out - ref)))
    scale = float(jnp.max(jnp.abs(ref)))
    assert err <= 1e-2 * scale + 1e-4, (err, scale)

    print("KERNEL_OK")
</pallas_src>

<mosaic_0001>
module attributes {stable_mosaic.version = 11 : i64} {
  func.func @kernel(%arg0: i32, %arg1: memref<1x16x16x16xf32, #tpu.memory_space<vmem>>, %arg2: memref<4x64x16xbf16, #tpu.memory_space<vmem>>, %arg3: memref<4x64x32xbf16, #tpu.memory_space<vmem>>, %arg4: memref<4x128x64xbf16, #tpu.memory_space<vmem>>, %arg5: memref<16x64x128xbf16, #tpu.memory_space<vmem>>, %arg6: memref<16x128x8xbf16, #tpu.memory_space<vmem>>, %arg7: memref<1x16xf32, #tpu.memory_space<vmem>>, %arg8: memref<1x32xf32, #tpu.memory_space<vmem>>, %arg9: memref<1x64xf32, #tpu.memory_space<vmem>>, %arg10: memref<1x128xf32, #tpu.memory_space<vmem>>, %arg11: memref<1x8xf32, #tpu.memory_space<vmem>>, %arg12: memref<1x5x5x8xf32, #tpu.memory_space<vmem>>, %arg13: memref<100x64xf32, #tpu.memory_space<vmem>>, %arg14: memref<36x64xf32, #tpu.memory_space<vmem>>, %arg15: memref<16x128xf32, #tpu.memory_space<vmem>>, %arg16: memref<49x64xf32, #tpu.memory_space<vmem>>, %arg17: memref<64x128xf32, #tpu.memory_space<vmem>>) attributes {dimension_semantics = [#tpu.dimension_semantics<parallel>], iteration_bounds = array<i64: 2>, scalar_prefetch = 0 : i64, scratch_operands = 5 : i64, tpu.core_type = #tpu.core_type<tc>, window_params = [{transform_indices = @transform_0, window_bounds = array<i64: 1, 16, 16, 16>}, {pipeline_mode = #tpu.pipeline_mode<synchronous>, transform_indices = @transform_1, window_bounds = array<i64: 4, 64, 16>}, {pipeline_mode = #tpu.pipeline_mode<synchronous>, transform_indices = @transform_2, window_bounds = array<i64: 4, 64, 32>}, {pipeline_mode = #tpu.pipeline_mode<synchronous>, transform_indices = @transform_3, window_bounds = array<i64: 4, 128, 64>}, {pipeline_mode = #tpu.pipeline_mode<synchronous>, transform_indices = @transform_4, window_bounds = array<i64: 16, 64, 128>}, {pipeline_mode = #tpu.pipeline_mode<synchronous>, transform_indices = @transform_5, window_bounds = array<i64: 16, 128, 8>}, {pipeline_mode = #tpu.pipeline_mode<synchronous>, transform_indices = @transform_6, window_bounds = array<i64: 1, 16>}, {pipeline_mode = #tpu.pipeline_mode<synchronous>, transform_indices = @transform_7, window_bounds = array<i64: 1, 32>}, {pipeline_mode = #tpu.pipeline_mode<synchronous>, transform_indices = @transform_8, window_bounds = array<i64: 1, 64>}, {pipeline_mode = #tpu.pipeline_mode<synchronous>, transform_indices = @transform_9, window_bounds = array<i64: 1, 128>}, {pipeline_mode = #tpu.pipeline_mode<synchronous>, transform_indices = @transform_10, window_bounds = array<i64: 1, 8>}, {transform_indices = @transform_11, window_bounds = array<i64: 1, 5, 5, 8>}]} {
    %cst = arith.constant 0.000000e+00 : f32
    %0 = vector.broadcast %cst : f32 to vector<100x64xf32>
    %c0 = arith.constant 0 : index
    %c0_0 = arith.constant 0 : index
    %1 = vector.load %arg13[%c0, %c0_0] : memref<100x64xf32, #tpu.memory_space<vmem>>, vector<100x64xf32>
    tpu.vector_store %arg13[%c0, %c0_0], %0 {strides = array<i32>} : memref<100x64xf32, #tpu.memory_space<vmem>>, vector<100x64xf32>,
    %cst_1 = arith.constant 0.000000e+00 : f32
    %2 = vector.broadcast %cst_1 : f32 to vector<36x64xf32>
    %c0_2 = arith.constant 0 : index
    %c0_3 = arith.constant 0 : index
    %3 = vector.load %arg14[%c0_2, %c0_3] : memref<36x64xf32, #tpu.memory_space<vmem>>, vector<36x64xf32>
    tpu.vector_store %arg14[%c0_2, %c0_3], %2 {strides = array<i32>} : memref<36x64xf32, #tpu.memory_space<vmem>>, vector<36x64xf32>,
    %cst_4 = arith.constant 0.000000e+00 : f32
    %4 = vector.broadcast %cst_4 : f32 to vector<16x128xf32>
    %c0_5 = arith.constant 0 : index
    %c0_6 = arith.constant 0 : index
    %5 = vector.load %arg15[%c0_5, %c0_6] : memref<16x128xf32, #tpu.memory_space<vmem>>, vector<16x128xf32>
    tpu.vector_store %arg15[%c0_5, %c0_6], %4 {strides = array<i32>} : memref<16x128xf32, #tpu.memory_space<vmem>>, vector<16x128xf32>,
    %cst_7 = arith.constant 0.000000e+00 : f32
    %6 = vector.broadcast %cst_7 : f32 to vector<49x64xf32>
    %c0_8 = arith.constant 0 : index
    %c0_9 = arith.constant 0 : index
    %7 = vector.load %arg16[%c0_8, %c0_9] : memref<49x64xf32, #tpu.memory_space<vmem>>, vector<49x64xf32>
    tpu.vector_store %arg16[%c0_8, %c0_9], %6 {strides = array<i32>} : memref<49x64xf32, #tpu.memory_space<vmem>>, vector<49x64xf32>,
    %cst_10 = arith.constant 0.000000e+00 : f32
    %8 = vector.broadcast %cst_10 : f32 to vector<64x128xf32>
    %c0_11 = arith.constant 0 : index
    %c0_12 = arith.constant 0 : index
    %9 = vector.load %arg17[%c0_11, %c0_12] : memref<64x128xf32, #tpu.memory_space<vmem>>, vector<64x128xf32>
    tpu.vector_store %arg17[%c0_11, %c0_12], %8 {strides = array<i32>} : memref<64x128xf32, #tpu.memory_space<vmem>>, vector<64x128xf32>,
    %c0_13 = arith.constant 0 : index
    %c0_14 = arith.constant 0 : index
    %c0_15 = arith.constant 0 : index
    %c0_16 = arith.constant 0 : index
    %10 = vector.load %arg1[%c0_13, %c0_14, %c0_15, %c0_16] : memref<1x16x16x16xf32, #tpu.memory_space<vmem>>, vector<1x1x16x16xf32>
    %11 = vector.shape_cast %10 : vector<1x1x16x16xf32> to vector<16x16xf32>
    %c0_17 = arith.constant 0 : index
    %c1 = arith.constant 1 : index
    %c0_18 = arith.constant 0 : index
    %c0_19 = arith.constant 0 : index
    %12 = vector.load %arg1[%c0_17, %c1, %c0_18, %c0_19] : memref<1x16x16x16xf32, #tpu.memory_space<vmem>>, vector<1x1x16x16xf32>
    %13 = vector.shape_cast %12 : vector<1x1x16x16xf32> to vector<16x16xf32>
    %c0_20 = arith.constant 0 : index
    %c2 = arith.constant 2 : index
    %c0_21 = arith.constant 0 : index
    %c0_22 = arith.constant 0 : index
    %14 = vector.load %arg1[%c0_20, %c2, %c0_21, %c0_22] : memref<1x16x16x16xf32, #tpu.memory_space<vmem>>, vector<1x1x16x16xf32>
    %15 = vector.shape_cast %14 : vector<1x1x16x16xf32> to vector<16x16xf32>
    %c0_23 = arith.constant 0 : index
    %c3 = arith.constant 3 : index
    %c0_24 = arith.constant 0 : index
    %c0_25 = arith.constant 0 : index
    %16 = vector.load %arg1[%c0_23, %c3, %c0_24, %c0_25] : memref<1x16x16x16xf32, #tpu.memory_space<vmem>>, vector<1x1x16x16xf32>
    %17 = vector.shape_cast %16 : vector<1x1x16x16xf32> to vector<16x16xf32>
    %c0_26 = arith.constant 0 : index
    %c4 = arith.constant 4 : index
    %c0_27 = arith.constant 0 : index
    %c0_28 = arith.constant 0 : index
    %18 = vector.load %arg1[%c0_26, %c4, %c0_27, %c0_28] : memref<1x16x16x16xf32, #tpu.memory_space<vmem>>, vector<1x1x16x16xf32>
    %19 = vector.shape_cast %18 : vector<1x1x16x16xf32> to vector<16x16xf32>
    %c0_29 = arith.constant 0 : index
    %c5 = arith.constant 5 : index
    %c0_30 = arith.constant 0 : index
    %c0_31 = arith.constant 0 : index
    %20 = vector.load %arg1[%c0_29, %c5, %c0_30, %c0_31] : memref<1x16x16x16xf32, #tpu.memory_space<vmem>>, vector<1x1x16x16xf32>
    %21 = vector.shape_cast %20 : vector<1x1x16x16xf32> to vector<16x16xf32>
    %c0_32 = arith.constant 0 : index
    %c6 = arith.constant 6 : index
    %c0_33 = arith.constant 0 : index
    %c0_34 = arith.constant 0 : index
    %22 = vector.load %arg1[%c0_32, %c6, %c0_33, %c0_34] : memref<1x16x16x16xf32, #tpu.memory_space<vmem>>, vector<1x1x16x16xf32>
    %23 = vector.shape_cast %22 : vector<1x1x16x16xf32> to vector<16x16xf32>
    %c0_35 = arith.constant 0 : index
    %c7 = arith.constant 7 : index
    %c0_36 = arith.constant 0 : index
    %c0_37 = arith.constant 0 : index
    %24 = vector.load %arg1[%c0_35, %c7, %c0_36, %c0_37] : memref<1x16x16x16xf32, #tpu.memory_space<vmem>>, vector<1x1x16x16xf32>
    %25 = vector.shape_cast %24 : vector<1x1x16x16xf32> to vector<16x16xf32>
    %c0_38 = arith.constant 0 : index
    %c8 = arith.constant 8 : index
    %c0_39 = arith.constant 0 : index
    %c0_40 = arith.constant 0 : index
    %26 = vector.load %arg1[%c0_38, %c8, %c0_39, %c0_40] : memref<1x16x16x16xf32, #tpu.memory_space<vmem>>, vector<1x1x16x16xf32>
    %27 = vector.shape_cast %26 : vector<1x1x16x16xf32> to vector<16x16xf32>
    %c0_41 = arith.constant 0 : index
    %c9 = arith.constant 9 : index
    %c0_42 = arith.constant 0 : index
    %c0_43 = arith.constant 0 : index
    %28 = vector.load %arg1[%c0_41, %c9, %c0_42, %c0_43] : memref<1x16x16x16xf32, #tpu.memory_space<vmem>>, vector<1x1x16x16xf32>
    %29 = vector.shape_cast %28 : vector<1x1x16x16xf32> to vector<16x16xf32>
    %c0_44 = arith.constant 0 : index
    %c10 = arith.constant 10 : index
    %c0_45 = arith.constant 0 : index
    %c0_46 = arith.constant 0 : index
    %30 = vector.load %arg1[%c0_44, %c10, %c0_45, %c0_46] : memref<1x16x16x16xf32, #tpu.memory_space<vmem>>, vector<1x1x16x16xf32>
    %31 = vector.shape_cast %30 : vector<1x1x16x16xf32> to vector<16x16xf32>
    %c0_47 = arith.constant 0 : index
    %c11 = arith.constant 11 : index
    %c0_48 = arith.constant 0 : index
    %c0_49 = arith.constant 0 : index
    %32 = vector.load %arg1[%c0_47, %c11, %c0_48, %c0_49] : memref<1x16x16x16xf32, #tpu.memory_space<vmem>>, vector<1x1x16x16xf32>
    %33 = vector.shape_cast %32 : vector<1x1x16x16xf32> to vector<16x16xf32>
    %c0_50 = arith.constant 0 : index
    %c12 = arith.constant 12 : index
    %c0_51 = arith.constant 0 : index
    %c0_52 = arith.constant 0 : index
    %34 = vector.load %arg1[%c0_50, %c12, %c0_51, %c0_52] : memref<1x16x16x16xf32, #tpu.memory_space<vmem>>, vector<1x1x16x16xf32>
    %35 = vector.shape_cast %34 : vector<1x1x16x16xf32> to vector<16x16xf32>
    %c0_53 = arith.constant 0 : index
    %c13 = arith.constant 13 : index
    %c0_54 = arith.constant 0 : index
    %c0_55 = arith.constant 0 : index
    %36 = vector.load %arg1[%c0_53, %c13, %c0_54, %c0_55] : memref<1x16x16x16xf32, #tpu.memory_space<vmem>>, vector<1x1x16x16xf32>
    %37 = vector.shape_cast %36 : vector<1x1x16x16xf32> to vector<16x16xf32>
    %c0_56 = arith.constant 0 : index
    %c14 = arith.constant 14 : index
    %c0_57 = arith.constant 0 : index
    %c0_58 = arith.constant 0 : index
    %38 = vector.load %arg1[%c0_56, %c14, %c0_57, %c0_58] : memref<1x16x16x16xf32, #tpu.memory_space<vmem>>, vector<1x1x16x16xf32>
    %39 = vector.shape_cast %38 : vector<1x1x16x16xf32> to vector<16x16xf32>
    %c0_59 = arith.constant 0 : index
    %c15 = arith.constant 15 : index
    %c0_60 = arith.constant 0 : index
    %c0_61 = arith.constant 0 : index
    %40 = vector.load %arg1[%c0_59, %c15, %c0_60, %c0_61] : memref<1x16x16x16xf32, #tpu.memory_space<vmem>>, vector<1x1x16x16xf32>
    %41 = vector.shape_cast %40 : vector<1x1x16x16xf32> to vector<16x16xf32>
    %42 = tpu.iota {dimensions = array<i32: 0>} : vector<8x16xi32>
    %43 = tpu.iota {dimensions = array<i32: 1>} : vector<8x16xi32>
    %c2_i32 = arith.constant 2 : i32
    %44 = vector.broadcast %c2_i32 : i32 to vector<8x16xi32>
    %45 = arith.muli %44, %42 : vector<8x16xi32>
    %c0_i32 = arith.constant 0 : i32
    %46 = vector.broadcast %c0_i32 : i32 to vector<8x16xi32>
    %47 = arith.addi %45, %46 : vector<8x16xi32>
    %48 = arith.cmpi eq, %43, %47 : vector<8x16xi32>
    %49 = arith.extui %48 : vector<8x16xi1> to vector<8x16xi32>
    %50 = arith.sitofp %49 : vector<8x16xi32> to vector<8x16xf32>
    %51 = arith.truncf %50 : vector<8x16xf32> to vector<8x16xbf16>
    %52 = tpu.iota {dimensions = array<i32: 0>} : vector<8x16xi32>
    %53 = tpu.iota {dimensions = array<i32: 1>} : vector<8x16xi32>
    %c2_i32_62 = arith.constant 2 : i32
    %54 = vector.broadcast %c2_i32_62 : i32 to vector<8x16xi32>
    %55 = arith.muli %54, %52 : vector<8x16xi32>
    %c1_i32 = arith.constant 1 : i32
    %56 = vector.broadcast %c1_i32 : i32 to vector<8x16xi32>
    %57 = arith.addi %55, %56 : vector<8x16xi32>
    %58 = arith.cmpi eq, %53, %57 : vector<8x16xi32>
    %59 = arith.extui %58 : vector<8x16xi1> to vector<8x16xi32>
    %60 = arith.sitofp %59 : vector<8x16xi32> to vector<8x16xf32>
    %61 = arith.truncf %60 : vector<8x16xf32> to vector<8x16xbf16>
    %62 = arith.truncf %11 : vector<16x16xf32> to vector<16x16xbf16>
    %cst_63 = arith.constant dense<0.000000e+00> : vector<8x16xf32>
    %63 = tpu.matmul %51, %62, %cst_63 {dimension_numbers = #tpu.dot_dimension_numbers<[1], [0], [0], [1], [0, 0, 1, 1], [], []>} : vector<8x16xbf16>, vector<16x16xbf16>, vector<8x16xf32> -> vector<8x16xf32>
    %c11_64 = arith.constant 11 : index
    %c0_65 = arith.constant 0 : index
    %64 = vector.load %arg13[%c11_64, %c0_65] : memref<100x64xf32, #tpu.memory_space<vmem>>, vector<8x16xf32>
    tpu.vector_store %arg13[%c11_64, %c0_65], %63 {strides = array<i32>} : memref<100x64xf32, #tpu.memory_space<vmem>>, vector<8x16xf32>,
    %cst_66 = arith.constant dense<0.000000e+00> : vector<8x16xf32>
    %65 = tpu.matmul %61, %62, %cst_66 {dimension_numbers = #tpu.dot_dimension_numbers<[1], [0], [0], [1], [0, 0, 1, 1], [], []>} : vector<8x16xbf16>, vector<16x16xbf16>, vector<8x16xf32> -> vector<8x16xf32>
    %c11_67 = arith.constant 11 : index
    %c16 = arith.constant 16 : index
    %66 = vector.load %arg13[%c11_67, %c16] : memref<100x64xf32, #tpu.memory_space<vmem>>, vector<8x16xf32>
    tpu.vector_store %arg13[%c11_67, %c16], %65 {strides = array<i32>} : memref<100x64xf32, #tpu.memory_space<vmem>>, vector<8x16xf32>,
    %67 = arith.truncf %13 : vector<16x16xf32> to vector<16x16xbf16>
    %cst_68 = arith.constant dense<0.000000e+00> : vector<8x16xf32>
    %68 = tpu.matmul %51, %67, %cst_68 {dimension_numbers = #tpu.dot_dimension_numbers<[1], [0], [0], [1], [0, 0, 1, 1], [], []>} : vector<8x16xbf16>, vector<16x16xbf16>, vector<8x16xf32> -> vector<8x16xf32>
    %c11_69 = arith.constant 11 : index
    %c32 = arith.constant 32 : index
    %69 = vector.load %arg13[%c11_69, %c32] : memref<100x64xf32, #tpu.memory_space<vmem>>, vector<8x16xf32>
    tpu.vector_store %arg13[%c11_69, %c32], %68 {strides = array<i32>} : memref<100x64xf32, #tpu.memory_space<vmem>>, vector<8x16xf32>,
    %cst_70 = arith.constant dense<0.000000e+00> : vector<8x16xf32>
    %70 = tpu.matmul %61, %67, %cst_70 {dimension_numbers = #tpu.dot_dimension_numbers<[1], [0], [0], [1], [0, 0, 1, 1], [], []>} : vector<8x16xbf16>, vector<16x16xbf16>, vector<8x16xf32> -> vector<8x16xf32>
    %c11_71 = arith.constant 11 : index
    %c48 = arith.constant 48 : index
    %71 = vector.load %arg13[%c11_71, %c48] : memref<100x64xf32, #tpu.memory_space<vmem>>, vector<8x16xf32>
    tpu.vector_store %arg13[%c11_71, %c48], %70 {strides = array<i32>} : memref<100x64xf32, #tpu.memory_space<vmem>>, vector<8x16xf32>,
    %72 = arith.truncf %15 : vector<16x16xf32> to vector<16x16xbf16>
    %cst_72 = arith.constant dense<0.000000e+00> : vector<8x16xf32>
    %73 = tpu.matmul %51, %72, %cst_72 {dimension_numbers = #tpu.dot_dimension_numbers<[1], [0], [0], [1], [0, 0, 1, 1], [], []>} : vector<8x16xbf16>, vector<16x16xbf16>, vector<8x16xf32> -> vector<8x16xf32>
    %c21 = arith.constant 21 : index
    %c0_73 = arith.constant 0 : index
    %74 = vector.load %arg13[%c21, %c0_73] : memref<100x64xf32, #tpu.memory_space<vmem>>, vector<8x16xf32>
    tpu.vector_store %arg13[%c21, %c0_73], %73 {strides = array<i32>} : memref<100x64xf32, #tpu.memory_space<vmem>>, vector<8x16xf32>,
    %cst_74 = arith.constant dense<0.000000e+00> : vector<8x16xf32>
    %75 = tpu.matmul %61, %72, %cst_74 {dimension_numbers = #tpu.dot_dimension_numbers<[1], [0], [0], [1], [0, 0, 1, 1], [], []>} : vector<8x16xbf16>, vector<16x16xbf16>, vector<8x16xf32> -> vector<8x16xf32>
    %c21_75 = arith.constant 21 : index
    %c16_76 = arith.constant 16 : index
    %76 = vector.load %arg13[%c21_75, %c16_76] : memref<100x64xf32, #tpu.memory_space<vmem>>, vector<8x16xf32>
    tpu.vector_store %arg13[%c21_75, %c16_76], %75 {strides = array<i32>} : memref<100x64xf32, #tpu.memory_space<vmem>>, vector<8x16xf32>,
    %77 = arith.truncf %17 : vector<16x16xf32> to vector<16x16xbf16>
    %cst_77 = arith.constant dense<0.000000e+00> : vector<8x16xf32>
    %78 = tpu.matmul %51, %77, %cst_77 {dimension_numbers = #tpu.dot_dimension_numbers<[1], [0], [0], [1], [0, 0, 1, 1], [], []>} : vector<8x16xbf16>, vector<16x16xbf16>, vector<8x16xf32> -> vector<8x16xf32>
    %c21_78 = arith.constant 21 : index
    %c32_79 = arith.constant 32 : index
    %79 = vector.load %arg13[%c21_78, %c32_79] : memref<100x64xf32, #tpu.memory_space<vmem>>, vector<8x16xf32>
    tpu.vector_store %arg13[%c21_78, %c32_79], %78 {strides = array<i32>} : memref<100x64xf32, #tpu.memory_space<vmem>>, vector<8x16xf32>,
    %cst_80 = arith.constant dense<0.000000e+00> : vector<8x16xf32>
    %80 = tpu.matmul %61, %77, %cst_80 {dimension_numbers = #tpu.dot_dimension_numbers<[1], [0], [0], [1], [0, 0, 1, 1], [], []>} : vector<8x16xbf16>, vector<16x16xbf16>, vector<8x16xf32> -> vector<8x16xf32>
    %c21_81 = arith.constant 21 : index
    %c48_82 = arith.constant 48 : index
    %81 = vector.load %arg13[%c21_81, %c48_82] : memref<100x64xf32, #tpu.memory_space<vmem>>, vector<8x16xf32>
    tpu.vector_store %arg13[%c21_81, %c48_82], %80 {strides = array<i32>} : memref<100x64xf32, #tpu.memory_space<vmem>>, vector<8x16xf32>,
    %82 = arith.truncf %19 : vector<16x16xf32> to vector<16x16xbf16>
    %cst_83 = arith.constant dense<0.000000e+00> : vector<8x16xf32>
    %83 = tpu.matmul %51, %82, %cst_83 {dimension_numbers = #tpu.dot_dimension_numbers<[1], [0], [0], [1], [0, 0, 1, 1], [], []>} : vector<8x16xbf16>, vector<16x16xbf16>, vector<8x16xf32> -> vector<8x16xf32>
    %c31 = arith.constant 31 : index
    %c0_84 = arith.constant 0 : index
    %84 = vector.load %arg13[%c31, %c0_84] : memref<100x64xf32, #tpu.memory_space<vmem>>, vector<8x16xf32>
    tpu.vector_store %arg13[%c31, %c0_84], %83 {strides = array<i32>} : memref<100x64xf32, #tpu.memory_space<vmem>>, vector<8x16xf32>,
    %cst_85 = arith.constant dense<0.000000e+00> : vector<8x16xf32>
    %85 = tpu.matmul %61, %82, %cst_85 {dimension_numbers = #tpu.dot_dimension_numbers<[1], [0], [0], [1], [0, 0, 1, 1], [], []>} : vector<8x16xbf16>, vector<16x16xbf16>, vector<8x16xf32> -> vector<8x16xf32>
    %c31_86 = arith.constant 31 : index
    %c16_87 = arith.constant 16 : index
    %86 = vector.load %arg13[%c31_86, %c16_87] : memref<100x64xf32, #tpu.memory_space<vmem>>, vector<8x16xf32>
    tpu.vector_store %arg13[%c31_86, %c16_87], %85 {strides = array<i32>} : memref<100x64xf32, #tpu.memory_space<vmem>>, vector<8x16xf32>,
    %87 = arith.truncf %21 : vector<16x16xf32> to vector<16x16xbf16>
    %cst_88 = arith.constant dense<0.000000e+00> : vector<8x16xf32>
    %88 = tpu.matmul %51, %87, %cst_88 {dimension_numbers = #tpu.dot_dimension_numbers<[1], [0], [0], [1], [0, 0, 1, 1], [], []>} : vector<8x16xbf16>, vector<16x16xbf16>, vector<8x16xf32> -> vector<8x16xf32>
    %c31_89 = arith.constant 31 : index
    %c32_90 = arith.constant 32 : index
    %89 = vector.load %arg13[%c31_89, %c32_90] : memref<100x64xf32, #tpu.memory_space<vmem>>, vector<8x16xf32>
    tpu.vector_store %arg13[%c31_89, %c32_90], %88 {strides = array<i32>} : memref<100x64xf32, #tpu.memory_space<vmem>>, vector<8x16xf32>,
    %cst_91 = arith.constant dense<0.000000e+00> : vector<8x16xf32>
    %90 = tpu.matmul %61, %87, %cst_91 {dimension_numbers = #tpu.dot_dimension_numbers<[1], [0], [0], [1], [0, 0, 1, 1], [], []>} : vector<8x16xbf16>, vector<16x16xbf16>, vector<8x16xf32> -> vector<8x16xf32>
    %c31_92 = arith.constant 31 : index
    %c48_93 = arith.constant 48 : index
    %91 = vector.load %arg13[%c31_92, %c48_93] : memref<100x64xf32, #tpu.memory_space<vmem>>, vector<8x16xf32>
    tpu.vector_store %arg13[%c31_92, %c48_93], %90 {strides = array<i32>} : memref<100x64xf32, #tpu.memory_space<vmem>>, vector<8x16xf32>,
    %92 = arith.truncf %23 : vector<16x16xf32> to vector<16x16xbf16>
    %cst_94 = arith.constant dense<0.000000e+00> : vector<8x16xf32>
    %93 = tpu.matmul %51, %92, %cst_94 {dimension_numbers = #tpu.dot_dimension_numbers<[1], [0], [0], [1], [0, 0, 1, 1], [], []>} : vector<8x16xbf16>, vector<16x16xbf16>, vector<8x16xf32> -> vector<8x16xf32>
    %c41 = arith.constant 41 : index
    %c0_95 = arith.constant 0 : index
    %94 = vector.load %arg13[%c41, %c0_95] : memref<100x64xf32, #tpu.memory_space<vmem>>, vector<8x16xf32>
    tpu.vector_store %arg13[%c41, %c0_95], %93 {strides = array<i32>} : memref<100x64xf32, #tpu.memory_space<vmem>>, vector<8x16xf32>,
    %cst_96 = arith.constant dense<0.000000e+00> : vector<8x16xf32>
    %95 = tpu.matmul %61, %92, %cst_96 {dimension_numbers = #tpu.dot_dimension_numbers<[1], [0], [0], [1], [0, 0, 1, 1], [], []>} : vector<8x16xbf16>, vector<16x16xbf16>, vector<8x16xf32> -> vector<8x16xf32>
    %c41_97 = arith.constant 41 : index
    %c16_98 = arith.constant 16 : index
    %96 = vector.load %arg13[%c41_97, %c16_98] : memref<100x64xf32, #tpu.memory_space<vmem>>, vector<8x16xf32>
    tpu.vector_store %arg13[%c41_97, %c16_98], %95 {strides = array<i32>} : memref<100x64xf32, #tpu.memory_space<vmem>>, vector<8x16xf32>,
    %97 = arith.truncf %25 : vector<16x16xf32> to vector<16x16xbf16>
    %cst_99 = arith.constant dense<0.000000e+00> : vector<8x16xf32>
    %98 = tpu.matmul %51, %97, %cst_99 {dimension_numbers = #tpu.dot_dimension_numbers<[1], [0], [0], [1], [0, 0, 1, 1], [], []>} : vector<8x16xbf16>, vector<16x16xbf16>, vector<8x16xf32> -> vector<8x16xf32>
    %c41_100 = arith.constant 41 : index
    %c32_101 = arith.constant 32 : index
    %99 = vector.load %arg13[%c41_100, %c32_101] : memref<100x64xf32, #tpu.memory_space<vmem>>, vector<8x16xf32>
    tpu.vector_store %arg13[%c41_100, %c32_101], %98 {strides = array<i32>} : memref<100x64xf32, #tpu.memory_space<vmem>>, vector<8x16xf32>,
    %cst_102 = arith.constant dense<0.000000e+00> : vector<8x16xf32>
    %100 = tpu.matmul %61, %97, %cst_102 {dimension_numbers = #tpu.dot_dimension_numbers<[1], [0], [0], [1], [0, 0, 1, 1], [], []>} : vector<8x16xbf16>, vector<16x16xbf16>, vector<8x16xf32> -> vector<8x16xf32>
    %c41_103 = arith.constant 41 : index
    %c48_104 = arith.constant 48 : index
    %101 = vector.load %arg13[%c41_103, %c48_104] : memref<100x64xf32, #tpu.memory_space<vmem>>, vector<8x16xf32>
    tpu.vector_store %arg13[%c41_103, %c48_104], %100 {strides = array<i32>} : memref<100x64xf32, #tpu.memory_space<vmem>>, vector<8x16xf32>,
    %102 = arith.truncf %27 : vector<16x16xf32> to vector<16x16xbf16>
    %cst_105 = arith.constant dense<0.000000e+00> : vector<8x16xf32>
    %103 = tpu.matmul %51, %102, %cst_105 {dimension_numbers = #tpu.dot_dimension_numbers<[1], [0], [0], [1], [0, 0, 1, 1], [], []>} : vector<8x16xbf16>, vector<16x16xbf16>, vector<8x16xf32> -> vector<8x16xf32>
    %c51 = arith.constant 51 : index
    %c0_106 = arith.constant 0 : index
    %104 = vector.load %arg13[%c51, %c0_106] : memref<100x64xf32, #tpu.memory_space<vmem>>, vector<8x16xf32>
    tpu.vector_store %arg13[%c51, %c0_106], %103 {strides = array<i32>} : memref<100x64xf32, #tpu.memory_space<vmem>>, vector<8x16xf32>,
    %cst_107 = arith.constant dense<0.000000e+00> : vector<8x16xf32>
    %105 = tpu.matmul %61, %102, %cst_107 {dimension_numbers = #tpu.dot_dimension_numbers<[1], [0], [0], [1], [0, 0, 1, 1], [], []>} : vector<8x16xbf16>, vector<16x16xbf16>, vector<8x16xf32> -> vector<8x16xf32>
    %c51_108 = arith.constant 51 : index
    %c16_109 = arith.constant 16 : index
    %106 = vector.load %arg13[%c51_108, %c16_109] : memref<100x64xf32, #tpu.memory_space<vmem>>, vector<8x16xf32>
    tpu.vector_store %arg13[%c51_108, %c16_109], %105 {strides = array<i32>} : memref<100x64xf32, #tpu.memory_space<vmem>>, vector<8x16xf32>,
    %107 = arith.truncf %29 : vector<16x16xf32> to vector<16x16xbf16>
    %cst_110 = arith.constant dense<0.000000e+00> : vector<8x16xf32>
    %108 = tpu.matmul %51, %107, %cst_110 {dimension_numbers = #tpu.dot_dimension_numbers<[1], [0], [0], [1], [0, 0, 1, 1], [], []>} : vector<8x16xbf16>, vector<16x16xbf16>, vector<8x16xf32> -> vector<8x16xf32>
    %c51_111 = arith.constant 51 : index
    %c32_112 = arith.constant 32 : index
    %109 = vector.load %arg13[%c51_111, %c32_112] : memref<100x64xf32, #tpu.memory_space<vmem>>, vector<8x16xf32>
    tpu.vector_store %arg13[%c51_111, %c32_112], %108 {strides = array<i32>} : memref<100x64xf32, #tpu.memory_space<vmem>>, vector<8x16xf32>,
    %cst_113 = arith.constant dense<0.000000e+00> : vector<8x16xf32>
    %110 = tpu.matmul %61, %107, %cst_113 {dimension_numbers = #tpu.dot_dimension_numbers<[1], [0], [0], [1], [0, 0, 1, 1], [], []>} : vector<8x16xbf16>, vector<16x16xbf16>, vector<8x16xf32> -> vector<8x16xf32>
    %c51_114 = arith.constant 51 : index
    %c48_115 = arith.constant 48 : index
    %111 = vector.load %arg13[%c51_114, %c48_115] : memref<100x64xf32, #tpu.memory_space<vmem>>, vector<8x16xf32>
    tpu.vector_store %arg13[%c51_114, %c48_115], %110 {strides = array<i32>} : memref<100x64xf32, #tpu.memory_space<vmem>>, vector<8x16xf32>,
    %112 = arith.truncf %31 : vector<16x16xf32> to vector<16x16xbf16>
    %cst_116 = arith.constant dense<0.000000e+00> : vector<8x16xf32>
    %113 = tpu.matmul %51, %112, %cst_116 {dimension_numbers = #tpu.dot_dimension_numbers<[1], [0], [0], [1], [0, 0, 1, 1], [], []>} : vector<8x16xbf16>, vector<16x16xbf16>, vector<8x16xf32> -> vector<8x16xf32>
    %c61 = arith.constant 61 : index
    %c0_117 = arith.constant 0 : index
    %114 = vector.load %arg13[%c61, %c0_117] : memref<100x64xf32, #tpu.memory_space<vmem>>, vector<8x16xf32>
    tpu.vector_store %arg13[%c61, %c0_117], %113 {strides = array<i32>} : memref<100x64xf32, #tpu.memory_space<vmem>>, vector<8x16xf32>,
    %cst_118 = arith.constant dense<0.000000e+00> : vector<8x16xf32>
    %115 = tpu.matmul %61, %112, %cst_118 {dimension_numbers = #tpu.dot_dimension_numbers<[1], [0], [0], [1], [0, 0, 1, 1], [], []>} : vector<8x16xbf16>, vector<16x16xbf16>, vector<8x16xf32> -> vector<8x16xf32>
    %c61_119 = arith.constant 61 : index
    %c16_120 = arith.constant 16 : index
    %116 = vector.load %arg13[%c61_119, %c16_120] : memref<100x64xf32, #tpu.memory_space<vmem>>, vector<8x16xf32>
    tpu.vector_store %arg13[%c61_119, %c16_120], %115 {strides = array<i32>} : memref<100x64xf32, #tpu.memory_space<vmem>>, vector<8x16xf32>,
    %117 = arith.truncf %33 : vector<16x16xf32> to vector<16x16xbf16>
    %cst_121 = arith.constant dense<0.000000e+00> : vector<8x16xf32>
    %118 = tpu.matmul %51, %117, %cst_121 {dimension_numbers = #tpu.dot_dimension_numbers<[1], [0], [0], [1], [0, 0, 1, 1], [], []>} : vector<8x16xbf16>, vector<16x16xbf16>, vector<8x16xf32> -> vector<8x16xf32>
    %c61_122 = arith.constant 61 : index
    %c32_123 = arith.constant 32 : index
    %119 = vector.load %arg13[%c61_122, %c32_123] : memref<100x64xf32, #tpu.memory_space<vmem>>, vector<8x16xf32>
    tpu.vector_store %arg13[%c61_122, %c32_123], %118 {strides = array<i32>} : memref<100x64xf32, #tpu.memory_space<vmem>>, vector<8x16xf32>,
    %cst_124 = arith.constant dense<0.000000e+00> : vector<8x16xf32>
    %120 = tpu.matmul %61, %117, %cst_124 {dimension_numbers = #tpu.dot_dimension_numbers<[1], [0], [0], [1], [0, 0, 1, 1], [], []>} : vector<8x16xbf16>, vector<16x16xbf16>, vector<8x16xf32> -> vector<8x16xf32>
    %c61_125 = arith.constant 61 : index
    %c48_126 = arith.constant 48 : index
    %121 = vector.load %arg13[%c61_125, %c48_126] : memref<100x64xf32, #tpu.memory_space<vmem>>, vector<8x16xf32>
    tpu.vector_store %arg13[%c61_125, %c48_126], %120 {strides = array<i32>} : memref<100x64xf32, #tpu.memory_space<vmem>>, vector<8x16xf32>,
    %122 = arith.truncf %35 : vector<16x16xf32> to vector<16x16xbf16>
    %cst_127 = arith.constant dense<0.000000e+00> : vector<8x16xf32>
    %123 = tpu.matmul %51, %122, %cst_127 {dimension_numbers = #tpu.dot_dimension_numbers<[1], [0], [0], [1], [0, 0, 1, 1], [], []>} : vector<8x16xbf16>, vector<16x16xbf16>, vector<8x16xf32> -> vector<8x16xf32>
    %c71 = arith.constant 71 : index
    %c0_128 = arith.constant 0 : index
    %124 = vector.load %arg13[%c71, %c0_128] : memref<100x64xf32, #tpu.memory_space<vmem>>, vector<8x16xf32>
    tpu.vector_store %arg13[%c71, %c0_128], %123 {strides = array<i32>} : memref<100x64xf32, #tpu.memory_space<vmem>>, vector<8x16xf32>,
    %cst_129 = arith.constant dense<0.000000e+00> : vector<8x16xf32>
    %125 = tpu.matmul %61, %122, %cst_129 {dimension_numbers = #tpu.dot_dimension_numbers<[1], [0], [0], [1], [0, 0, 1, 1], [], []>} : vector<8x16xbf16>, vector<16x16xbf16>, vector<8x16xf32> -> vector<8x16xf32>
    %c71_130 = arith.constant 71 : index
    %c16_131 = arith.constant 16 : index
    %126 = vector.load %arg13[%c71_130, %c16_131] : memref<100x64xf32, #tpu.memory_space<vmem>>, vector<8x16xf32>
    tpu.vector_store %arg13[%c71_130, %c16_131], %125 {strides = array<i32>} : memref<100x64xf32, #tpu.memory_space<vmem>>, vector<8x16xf32>,
    %127 = arith.truncf %37 : vector<16x16xf32> to vector<16x16xbf16>
    %cst_132 = arith.constant dense<0.000000e+00> : vector<8x16xf32>
    %128 = tpu.matmul %51, %127, %cst_132 {dimension_numbers = #tpu.dot_dimension_numbers<[1], [0], [0], [1], [0, 0, 1, 1], [], []>} : vector<8x16xbf16>, vector<16x16xbf16>, vector<8x16xf32> -> vector<8x16xf32>
    %c71_133 = arith.constant 71 : index
    %c32_134 = arith.constant 32 : index
    %129 = vector.load %arg13[%c71_133, %c32_134] : memref<100x64xf32, #tpu.memory_space<vmem>>, vector<8x16xf32>
    tpu.vector_store %arg13[%c71_133, %c32_134], %128 {strides = array<i32>} : memref<100x64xf32, #tpu.memory_space<vmem>>, vector<8x16xf32>,
    %cst_135 = arith.constant dense<0.000000e+00> : vector<8x16xf32>
    %130 = tpu.matmul %61, %127, %cst_135 {dimension_numbers = #tpu.dot_dimension_numbers<[1], [0], [0], [1], [0, 0, 1, 1], [], []>} : vector<8x16xbf16>, vector<16x16xbf16>, vector<8x16xf32> -> vector<8x16xf32>
    %c71_136 = arith.constant 71 : index
    %c48_137 = arith.constant 48 : index
    %131 = vector.load %arg13[%c71_136, %c48_137] : memref<100x64xf32, #tpu.memory_space<vmem>>, vector<8x16xf32>
    tpu.vector_store %arg13[%c71_136, %c48_137], %130 {strides = array<i32>} : memref<100x64xf32, #tpu.memory_space<vmem>>, vector<8x16xf32>,
    %132 = arith.truncf %39 : vector<16x16xf32> to vector<16x16xbf16>
    %cst_138 = arith.constant dense<0.000000e+00> : vector<8x16xf32>
    %133 = tpu.matmul %51, %132, %cst_138 {dimension_numbers = #tpu.dot_dimension_numbers<[1], [0], [0], [1], [0, 0, 1, 1], [], []>} : vector<8x16xbf16>, vector<16x16xbf16>, vector<8x16xf32> -> vector<8x16xf32>
    %c81 = arith.constant 81 : index
    %c0_139 = arith.constant 0 : index
    %134 = vector.load %arg13[%c81, %c0_139] : memref<100x64xf32, #tpu.memory_space<vmem>>, vector<8x16xf32>
    tpu.vector_store %arg13[%c81, %c0_139], %133 {strides = array<i32>} : memref<100x64xf32, #tpu.memory_space<vmem>>, vector<8x16xf32>,
    %cst_140 = arith.constant dense<0.000000e+00> : vector<8x16xf32>
    %135 = tpu.matmul %61, %132, %cst_140 {dimension_numbers = #tpu.dot_dimension_numbers<[1], [0], [0], [1], [0, 0, 1, 1], [], []>} : vector<8x16xbf16>, vector<16x16xbf16>, vector<8x16xf32> -> vector<8x16xf32>
    %c81_141 = arith.constant 81 : index
    %c16_142 = arith.constant 16 : index
    %136 = vector.load %arg13[%c81_141, %c16_142] : memref<100x64xf32, #tpu.memory_space<vmem>>, vector<8x16xf32>
    tpu.vector_store %arg13[%c81_141, %c16_142], %135 {strides = array<i32>} : memref<100x64xf32, #tpu.memory_space<vmem>>, vector<8x16xf32>,
    %137 = arith.truncf %41 : vector<16x16xf32> to vector<16x16xbf16>
    %cst_143 = arith.constant dense<0.000000e+00> : vector<8x16xf32>
    %138 = tpu.matmul %51, %137, %cst_143 {dimension_numbers = #tpu.dot_dimension_numbers<[1], [0], [0], [1], [0, 0, 1, 1], [], []>} : vector<8x16xbf16>, vector<16x16xbf16>, vector<8x16xf32> -> vector<8x16xf32>
    %c81_144 = arith.constant 81 : index
    %c32_145 = arith.constant 32 : index
    %139 = vector.load %arg13[%c81_144, %c32_145] : memref<100x64xf32, #tpu.memory_space<vmem>>, vector<8x16xf32>
    tpu.vector_store %arg13[%c81_144, %c32_145], %138 {strides = array<i32>} : memref<100x64xf32, #tpu.memory_space<vmem>>, vector<8x16xf32>,
    %cst_146 = arith.constant dense<0.000000e+00> : vector<8x16xf32>
    %140 = tpu.matmul %61, %137, %cst_146 {dimension_numbers = #tpu.dot_dimension_numbers<[1], [0], [0], [1], [0, 0, 1, 1], [], []>} : vector<8x16xbf16>, vector<16x16xbf16>, vector<8x16xf32> -> vector<8x16xf32>
    %c81_147 = arith.constant 81 : index
    %c48_148 = arith.constant 48 : index
    %141 = vector.load %arg13[%c81_147, %c48_148] : memref<100x64xf32, #tpu.memory_space<vmem>>, vector<8x16xf32>
    tpu.vector_store %arg13[%c81_147, %c48_148], %140 {strides = array<i32>} : memref<100x64xf32, #tpu.memory_space<vmem>>, vector<8x16xf32>,
    %cst_149 = arith.constant 0.000000e+00 : f32
    %142 = vector.broadcast %cst_149 : f32 to vector<89x16xf32>
    %c0_150 = arith.constant 0 : index
    %c0_151 = arith.constant 0 : index
    %143 = vector.load %arg13[%c0_150, %c0_151] : memref<100x64xf32, #tpu.memory_space<vmem>>, vector<89x64xf32>
    %144 = arith.truncf %143 : vector<89x64xf32> to vector<89x64xbf16>
    %c0_152 = arith.constant 0 : index
    %c0_153 = arith.constant 0 : index
    %c0_154 = arith.constant 0 : index
    %145 = vector.load %arg2[%c0_152, %c0_153, %c0_154] : memref<4x64x16xbf16, #tpu.memory_space<vmem>>, vector<1x64x16xbf16>
    %146 = vector.shape_cast %145 : vector<1x64x16xbf16> to vector<64x16xbf16>
    %cst_155 = arith.constant dense<0.000000e+00> : vector<89x16xf32>
    %147 = tpu.matmul %144, %146, %cst_155 {dimension_numbers = #tpu.dot_dimension_numbers<[1], [0], [0], [1], [0, 0, 1, 1], [], []>} : vector<89x64xbf16>, vector<64x16xbf16>, vector<89x16xf32> -> vector<89x16xf32>
    %148 = arith.addf %142, %147 : vector<89x16xf32>
    %c1_156 = arith.constant 1 : index
    %c0_157 = arith.constant 0 : index
    %149 = vector.load %arg13[%c1_156, %c0_157] : memref<100x64xf32, #tpu.memory_space<vmem>>, vector<89x64xf32>
    %150 = arith.truncf %149 : vector<89x64xf32> to vector<89x64xbf16>
    %c1_158 = arith.constant 1 : index
    %c0_159 = arith.constant 0 : index
    %c0_160 = arith.constant 0 : index
    %151 = vector.load %arg2[%c1_158, %c0_159, %c0_160] : memref<4x64x16xbf16, #tpu.memory_space<vmem>>, vector<1x64x16xbf16>
    %152 = vector.shape_cast %151 : vector<1x64x16xbf16> to vector<64x16xbf16>
    %cst_161 = arith.constant dense<0.000000e+00> : vector<89x16xf32>
    %153 = tpu.matmul %150, %152, %cst_161 {dimension_numbers = #tpu.dot_dimension_numbers<[1], [0], [0], [1], [0, 0, 1, 1], [], []>} : vector<89x64xbf16>, vector<64x16xbf16>, vector<89x16xf32> -> vector<89x16xf32>
    %154 = arith.addf %148, %153 : vector<89x16xf32>
    %c10_162 = arith.constant 10 : index
    %c0_163 = arith.constant 0 : index
    %155 = vector.load %arg13[%c10_162, %c0_163] : memref<100x64xf32, #tpu.memory_space<vmem>>, vector<89x64xf32>
    %156 = arith.truncf %155 : vector<89x64xf32> to vector<89x64xbf16>
    %c2_164 = arith.constant 2 : index
    %c0_165 = arith.constant 0 : index
    %c0_166 = arith.constant 0 : index
    %157 = vector.load %arg2[%c2_164, %c0_165, %c0_166] : memref<4x64x16xbf16, #tpu.memory_space<vmem>>, vector<1x64x16xbf16>
    %158 = vector.shape_cast %157 : vector<1x64x16xbf16> to vector<64x16xbf16>
    %cst_167 = arith.constant dense<0.000000e+00> : vector<89x16xf32>
    %159 = tpu.matmul %156, %158, %cst_167 {dimension_numbers = #tpu.dot_dimension_numbers<[1], [0], [0], [1], [0, 0, 1, 1], [], []>} : vector<89x64xbf16>, vector<64x16xbf16>, vector<89x16xf32> -> vector<89x16xf32>
    %160 = arith.addf %154, %159 : vector<89x16xf32>
    %c11_168 = arith.constant 11 : index
    %c0_169 = arith.constant 0 : index
    %161 = vector.load %arg13[%c11_168, %c0_169] : memref<100x64xf32, #tpu.memory_space<vmem>>, vector<89x64xf32>
    %162 = arith.truncf %161 : vector<89x64xf32> to vector<89x64xbf16>
    %c3_170 = arith.constant 3 : index
    %c0_171 = arith.constant 0 : index
    %c0_172 = arith.constant 0 : index
    %163 = vector.load %arg2[%c3_170, %c0_171, %c0_172] : memref<4x64x16xbf16, #tpu.memory_space<vmem>>, vector<1x64x16xbf16>
    %164 = vector.shape_cast %163 : vector<1x64x16xbf16> to vector<64x16xbf16>
    %cst_173 = arith.constant dense<0.000000e+00> : vector<89x16xf32>
    %165 = tpu.matmul %162, %164, %cst_173 {dimension_numbers = #tpu.dot_dimension_numbers<[1], [0], [0], [1], [0, 0, 1, 1], [], []>} : vector<89x64xbf16>, vector<64x16xbf16>, vector<89x16xf32> -> vector<89x16xf32>
    %166 = arith.addf %160, %165 : vector<89x16xf32>
    %c0_174 = arith.constant 0 : index
    %c0_175 = arith.constant 0 : index
    %167 = vector.load %arg7[%c0_174, %c0_175] : memref<1x16xf32, #tpu.memory_space<vmem>>, vector<1x16xf32>
    %168 = vector.broadcast %167 : vector<1x16xf32> to vector<89x16xf32>
    %169 = arith.addf %166, %168 : vector<89x16xf32>
    %cst_176 = arith.constant 0.000000e+00 : f32
    %170 = vector.broadcast %cst_176 : f32 to vector<89x16xf32>
    %171 = arith.cmpf oge, %169, %170 : vector<89x16xf32>
    %cst_177 = arith.constant 2.000000e-01 : f32
    %172 = vector.broadcast %cst_177 : f32 to vector<89x16xf32>
    %173 = arith.mulf %172, %169 : vector<89x16xf32>
    %174 = arith.select %171, %169, %173 : vector<89x16xi1>, vector<89x16xf32>
    %175 = vector.extract_strided_slice %174 {offsets = [0, 0], sizes = [9, 16], strides = [1, 1]} : vector<89x16xf32> to vector<9x16xf32>
    %176 = vector.extract_strided_slice %174 {offsets = [10, 0], sizes = [9, 16], strides = [1, 1]} : vector<89x16xf32> to vector<9x16xf32>
    %177 = vector.extract_strided_slice %174 {offsets = [20, 0], sizes = [9, 16], strides = [1, 1]} : vector<89x16xf32> to vector<9x16xf32>
    %178 = vector.extract_strided_slice %174 {offsets = [30, 0], sizes = [9, 16], strides = [1, 1]} : vector<89x16xf32> to vector<9x16xf32>
    %179 = vector.extract_strided_slice %174 {offsets = [40, 0], sizes = [9, 16], strides = [1, 1]} : vector<89x16xf32> to vector<9x16xf32>
    %180 = vector.extract_strided_slice %174 {offsets = [50, 0], sizes = [9, 16], strides = [1, 1]} : vector<89x16xf32> to vector<9x16xf32>
    %181 = vector.extract_strided_slice %174 {offsets = [60, 0], sizes = [9, 16], strides = [1, 1]} : vector<89x16xf32> to vector<9x16xf32>
    %182 = vector.extract_strided_slice %174 {offsets = [70, 0], sizes = [9, 16], strides = [1, 1]} : vector<89x16xf32> to vector<9x16xf32>
    %183 = vector.extract_strided_slice %174 {offsets = [80, 0], sizes = [9, 16], strides = [1, 1]} : vector<89x16xf32> to vector<9x16xf32>
    %184 = tpu.iota {dimensions = array<i32: 0>} : vector<5x9xi32>
    %185 = tpu.iota {dimensions = array<i32: 1>} : vector<5x9xi32>
    %c2_i32_178 = arith.constant 2 : i32
    %186 = vector.broadcast %c2_i32_178 : i32 to vector<5x9xi32>
    %187 = arith.muli %186, %184 : vector<5x9xi32>
    %c0_i32_179 = arith.constant 0 : i32
    %188 = vector.broadcast %c0_i32_179 : i32 to vector<5x9xi32>
    %189 = arith.addi %187, %188 : vector<5x9xi32>
    %190 = arith.cmpi eq, %185, %189 : vector<5x9xi32>
    %191 = arith.extui %190 : vector<5x9xi1> to vector<5x9xi32>
    %192 = arith.sitofp %191 : vector<5x9xi32> to vector<5x9xf32>
    %193 = arith.truncf %192 : vector<5x9xf32> to vector<5x9xbf16>
    %194 = tpu.iota {dimensions = array<i32: 0>} : vector<4x9xi32>
    %195 = tpu.iota {dimensions = array<i32: 1>} : vector<4x9xi32>
    %c2_i32_180 = arith.constant 2 : i32
    %196 = vector.broadcast %c2_i32_180 : i32 to vector<4x9xi32>
    %197 = arith.muli %196, %194 : vector<4x9xi32>
    %c1_i32_181 = arith.constant 1 : i32
    %198 = vector.broadcast %c1_i32_181 : i32 to vector<4x9xi32>
    %199 = arith.addi %197, %198 : vector<4x9xi32>
    %200 = arith.cmpi eq, %195, %199 : vector<4x9xi32>
    %201 = arith.extui %200 : vector<4x9xi1> to vector<4x9xi32>
    %202 = arith.sitofp %201 : vector<4x9xi32> to vector<4x9xf32>
    %203 = arith.truncf %202 : vector<4x9xf32> to vector<4x9xbf16>
    %204 = arith.truncf %175 : vector<9x16xf32> to vector<9x16xbf16>
    %cst_182 = arith.constant dense<0.000000e+00> : vector<5x16xf32>
    %205 = tpu.matmul %193, %204, %cst_182 {dimension_numbers = #tpu.dot_dimension_numbers<[1], [0], [0], [1], [0, 0, 1, 1], [], []>} : vector<5x9xbf16>, vector<9x16xbf16>, vector<5x16xf32> -> vector<5x16xf32>
    %c7_183 = arith.constant 7 : index
    %c0_184 = arith.constant 0 : index
    %206 = vector.load %arg14[%c7_183, %c0_184] : memref<36x64xf32, #tpu.memory_space<vmem>>, vector<5x16xf32>
    tpu.vector_store %arg14[%c7_183, %c0_184], %205 {strides = array<i32>} : memref<36x64xf32, #tpu.memory_space<vmem>>, vector<5x16xf32>,
    %cst_185 = arith.constant dense<0.000000e+00> : vector<4x16xf32>
    %207 = tpu.matmul %203, %204, %cst_185 {dimension_numbers = #tpu.dot_dimension_numbers<[1], [0], [0], [1], [0, 0, 1, 1], [], []>} : vector<4x9xbf16>, vector<9x16xbf16>, vector<4x16xf32> -> vector<4x16xf32>
    %c7_186 = arith.constant 7 : index
    %c16_187 = arith.constant 16 : index
    %208 = vector.load %arg14[%c7_186, %c16_187] : memref<36x64xf32, #tpu.memory_space<vmem>>, vector<4x16xf32>
    tpu.vector_store %arg14[%c7_186, %c16_187], %207 {strides = array<i32>} : memref<36x64xf32, #tpu.memory_space<vmem>>, vector<4x16xf32>,
    %209 = arith.truncf %176 : vector<9x16xf32> to vector<9x16xbf16>
    %cst_188 = arith.constant dense<0.000000e+00> : vector<5x16xf32>
    %210 = tpu.matmul %193, %209, %cst_188 {dimension_numbers = #tpu.dot_dimension_numbers<[1], [0], [0], [1], [0, 0, 1, 1], [], []>} : vector<5x9xbf16>, vector<9x16xbf16>, vector<5x16xf32> -> vector<5x16xf32>
    %c7_189 = arith.constant 7 : index
    %c32_190 = arith.constant 32 : index
    %211 = vector.load %arg14[%c7_189, %c32_190] : memref<36x64xf32, #tpu.memory_space<vmem>>, vector<5x16xf32>
    tpu.vector_store %arg14[%c7_189, %c32_190], %210 {strides = array<i32>} : memref<36x64xf32, #tpu.memory_space<vmem>>, vector<5x16xf32>,
    %cst_191 = arith.constant dense<0.000000e+00> : vector<4x16xf32>
    %212 = tpu.matmul %203, %209, %cst_191 {dimension_numbers = #tpu.dot_dimension_numbers<[1], [0], [0], [1], [0, 0, 1, 1], [], []>} : vector<4x9xbf16>, vector<9x16xbf16>, vector<4x16xf32> -> vector<4x16xf32>
    %c7_192 = arith.constant 7 : index
    %c48_193 = arith.constant 48 : index
    %213 = vector.load %arg14[%c7_192, %c48_193] : memref<36x64xf32, #tpu.memory_space<vmem>>, vector<4x16xf32>
    tpu.vector_store %arg14[%c7_192, %c48_193], %212 {strides = array<i32>} : memref<36x64xf32, #tpu.memory_space<vmem>>, vector<4x16xf32>,
    %214 = arith.truncf %177 : vector<9x16xf32> to vector<9x16xbf16>
    %cst_194 = arith.constant dense<0.000000e+00> : vector<5x16xf32>
    %215 = tpu.matmul %193, %214, %cst_194 {dimension_numbers = #tpu.dot_dimension_numbers<[1], [0], [0], [1], [0, 0, 1, 1], [], []>} : vector<5x9xbf16>, vector<9x16xbf16>, vector<5x16xf32> -> vector<5x16xf32>
    %c13_195 = arith.constant 13 : index
    %c0_196 = arith.constant 0 : index
    %216 = vector.load %arg14[%c13_195, %c0_196] : memref<36x64xf32, #tpu.memory_space<vmem>>, vector<5x16xf32>
    tpu.vector_store %arg14[%c13_195, %c0_196], %215 {strides = array<i32>} : memref<36x64xf32, #tpu.memory_space<vmem>>, vector<5x16xf32>,
    %cst_197 = arith.constant dense<0.000000e+00> : vector<4x16xf32>
    %217 = tpu.matmul %203, %214, %cst_197 {dimension_numbers = #tpu.dot_dimension_numbers<[1], [0], [0], [1], [0, 0, 1, 1], [], []>} : vector<4x9xbf16>, vector<9x16xbf16>, vector<4x16xf32> -> vector<4x16xf32>
    %c13_198 = arith.constant 13 : index
    %c16_199 = arith.constant 16 : index
    %218 = vector.load %arg14[%c13_198, %c16_199] : memref<36x64xf32, #tpu.memory_space<vmem>>, vector<4x16xf32>
    tpu.vector_store %arg14[%c13_198, %c16_199], %217 {strides = array<i32>} : memref<36x64xf32, #tpu.memory_space<vmem>>, vector<4x16xf32>,
    %219 = arith.truncf %178 : vector<9x16xf32> to vector<9x16xbf16>
    %cst_200 = arith.constant dense<0.000000e+00> : vector<5x16xf32>
    %220 = tpu.matmul %193, %219, %cst_200 {dimension_numbers = #tpu.dot_dimension_numbers<[1], [0], [0], [1], [0, 0, 1, 1], [], []>} : vector<5x9xbf16>, vector<9x16xbf16>, vector<5x16xf32> -> vector<5x16xf32>
    %c13_201 = arith.constant 13 : index
    %c32_202 = arith.constant 32 : index
    %221 = vector.load %arg14[%c13_201, %c32_202] : memref<36x64xf32, #tpu.memory_space<vmem>>, vector<5x16xf32>
    tpu.vector_store %arg14[%c13_201, %c32_202], %220 {strides = array<i32>} : memref<36x64xf32, #tpu.memory_space<vmem>>, vector<5x16xf32>,
    %cst_203 = arith.constant dense<0.000000e+00> : vector<4x16xf32>
    %222 = tpu.matmul %203, %219, %cst_203 {dimension_numbers = #tpu.dot_dimension_numbers<[1], [0], [0], [1], [0, 0, 1, 1], [], []>} : vector<4x9xbf16>, vector<9x16xbf16>, vector<4x16xf32> -> vector<4x16xf32>
    %c13_204 = arith.constant 13 : index
    %c48_205 = arith.constant 48 : index
    %223 = vector.load %arg14[%c13_204, %c48_205] : memref<36x64xf32, #tpu.memory_space<vmem>>, vector<4x16xf32>
    tpu.vector_store %arg14[%c13_204, %c48_205], %222 {strides = array<i32>} : memref<36x64xf32, #tpu.memory_space<vmem>>, vector<4x16xf32>,
    %224 = arith.truncf %179 : vector<9x16xf32> to vector<9x16xbf16>
    %cst_206 = arith.constant dense<0.000000e+00> : vector<5x16xf32>
    %225 = tpu.matmul %193, %224, %cst_206 {dimension_numbers = #tpu.dot_dimension_numbers<[1], [0], [0], [1], [0, 0, 1, 1], [], []>} : vector<5x9xbf16>, vector<9x16xbf16>, vector<5x16xf32> -> vector<5x16xf32>
    %c19 = arith.constant 19 : index
    %c0_207 = arith.constant 0 : index
    %226 = vector.load %arg14[%c19, %c0_207] : memref<36x64xf32, #tpu.memory_space<vmem>>, vector<5x16xf32>
    tpu.vector_store %arg14[%c19, %c0_207], %225 {strides = array<i32>} : memref<36x64xf32, #tpu.memory_space<vmem>>, vector<5x16xf32>,
    %cst_208 = arith.constant dense<0.000000e+00> : vector<4x16xf32>
    %227 = tpu.matmul %203, %224, %cst_208 {dimension_numbers = #tpu.dot_dimension_numbers<[1], [0], [0], [1], [0, 0, 1, 1], [], []>} : vector<4x9xbf16>, vector<9x16xbf16>, vector<4x16xf32> -> vector<4x16xf32>
    %c19_209 = arith.constant 19 : index
    %c16_210 = arith.constant 16 : index
    %228 = vector.load %arg14[%c19_209, %c16_210] : memref<36x64xf32, #tpu.memory_space<vmem>>, vector<4x16xf32>
    tpu.vector_store %arg14[%c19_209, %c16_210], %227 {strides = array<i32>} : memref<36x64xf32, #tpu.memory_space<vmem>>, vector<4x16xf32>,
    %229 = arith.truncf %180 : vector<9x16xf32> to vector<9x16xbf16>
    %cst_211 = arith.constant dense<0.000000e+00> : vector<5x16xf32>
    %230 = tpu.matmul %193, %229, %cst_211 {dimension_numbers = #tpu.dot_dimension_numbers<[1], [0], [0], [1], [0, 0, 1, 1], [], []>} : vector<5x9xbf16>, vector<9x16xbf16>, vector<5x16xf32> -> vector<5x16xf32>
    %c19_212 = arith.constant 19 : index
    %c32_213 = arith.constant 32 : index
    %231 = vector.load %arg14[%c19_212, %c32_213] : memref<36x64xf32, #tpu.memory_space<vmem>>, vector<5x16xf32>
    tpu.vector_store %arg14[%c19_212, %c32_213], %230 {strides = array<i32>} : memref<36x64xf32, #tpu.memory_space<vmem>>, vector<5x16xf32>,
    %cst_214 = arith.constant dense<0.000000e+00> : vector<4x16xf32>
    %232 = tpu.matmul %203, %229, %cst_214 {dimension_numbers = #tpu.dot_dimension_numbers<[1], [0], [0], [1], [0, 0, 1, 1], [], []>} : vector<4x9xbf16>, vector<9x16xbf16>, vector<4x16xf32> -> vector<4x16xf32>
    %c19_215 = arith.constant 19 : index
    %c48_216 = arith.constant 48 : index
    %233 = vector.load %arg14[%c19_215, %c48_216] : memref<36x64xf32, #tpu.memory_space<vmem>>, vector<4x16xf32>
    tpu.vector_store %arg14[%c19_215, %c48_216], %232 {strides = array<i32>} : memref<36x64xf32, #tpu.memory_space<vmem>>, vector<4x16xf32>,
    %234 = arith.truncf %181 : vector<9x16xf32> to vector<9x16xbf16>
    %cst_217 = arith.constant dense<0.000000e+00> : vector<5x16xf32>
    %235 = tpu.matmul %193, %234, %cst_217 {dimension_numbers = #tpu.dot_dimension_numbers<[1], [0], [0], [1], [0, 0, 1, 1], [], []>} : vector<5x9xbf16>, vector<9x16xbf16>, vector<5x16xf32> -> vector<5x16xf32>
    %c25 = arith.constant 25 : index
    %c0_218 = arith.constant 0 : index
    %236 = vector.load %arg14[%c25, %c0_218] : memref<36x64xf32, #tpu.memory_space<vmem>>, vector<5x16xf32>
    tpu.vector_store %arg14[%c25, %c0_218], %235 {strides = array<i32>} : memref<36x64xf32, #tpu.memory_space<vmem>>, vector<5x16xf32>,
    %cst_219 = arith.constant dense<0.000000e+00> : vector<4x16xf32>
    %237 = tpu.matmul %203, %234, %cst_219 {dimension_numbers = #tpu.dot_dimension_numbers<[1], [0], [0], [1], [0, 0, 1, 1], [], []>} : vector<4x9xbf16>, vector<9x16xbf16>, vector<4x16xf32> -> vector<4x16xf32>
    %c25_220 = arith.constant 25 : index
    %c16_221 = arith.constant 16 : index
    %238 = vector.load %arg14[%c25_220, %c16_221] : memref<36x64xf32, #tpu.memory_space<vmem>>, vector<4x16xf32>
    tpu.vector_store %arg14[%c25_220, %c16_221], %237 {strides = array<i32>} : memref<36x64xf32, #tpu.memory_space<vmem>>, vector<4x16xf32>,
    %239 = arith.truncf %182 : vector<9x16xf32> to vector<9x16xbf16>
    %cst_222 = arith.constant dense<0.000000e+00> : vector<5x16xf32>
    %240 = tpu.matmul %193, %239, %cst_222 {dimension_numbers = #tpu.dot_dimension_numbers<[1], [0], [0], [1], [0, 0, 1, 1], [], []>} : vector<5x9xbf16>, vector<9x16xbf16>, vector<5x16xf32> -> vector<5x16xf32>
    %c25_223 = arith.constant 25 : index
    %c32_224 = arith.constant 32 : index
    %241 = vector.load %arg14[%c25_223, %c32_224] : memref<36x64xf32, #tpu.memory_space<vmem>>, vector<5x16xf32>
    tpu.vector_store %arg14[%c25_223, %c32_224], %240 {strides = array<i32>} : memref<36x64xf32, #tpu.memory_space<vmem>>, vector<5x16xf32>,
    %cst_225 = arith.constant dense<0.000000e+00> : vector<4x16xf32>
    %242 = tpu.matmul %203, %239, %cst_225 {dimension_numbers = #tpu.dot_dimension_numbers<[1], [0], [0], [1], [0, 0, 1, 1], [], []>} : vector<4x9xbf16>, vector<9x16xbf16>, vector<4x16xf32> -> vector<4x16xf32>
    %c25_226 = arith.constant 25 : index
    %c48_227 = arith.constant 48 : index
    %243 = vector.load %arg14[%c25_226, %c48_227] : memref<36x64xf32, #tpu.memory_space<vmem>>, vector<4x16xf32>
    tpu.vector_store %arg14[%c25_226, %c48_227], %242 {strides = array<i32>} : memref<36x64xf32, #tpu.memory_space<vmem>>, vector<4x16xf32>,
    %244 = arith.truncf %183 : vector<9x16xf32> to vector<9x16xbf16>
    %cst_228 = arith.constant dense<0.000000e+00> : vector<5x16xf32>
    %245 = tpu.matmul %193, %244, %cst_228 {dimension_numbers = #tpu.dot_dimension_numbers<[1], [0], [0], [1], [0, 0, 1, 1], [], []>} : vector<5x9xbf16>, vector<9x16xbf16>, vector<5x16xf32> -> vector<5x16xf32>
    %c31_229 = arith.constant 31 : index
    %c0_230 = arith.constant 0 : index
    %246 = vector.load %arg14[%c31_229, %c0_230] : memref<36x64xf32, #tpu.memory_space<vmem>>, vector<5x16xf32>
    tpu.vector_store %arg14[%c31_229, %c0_230], %245 {strides = array<i32>} : memref<36x64xf32, #tpu.memory_space<vmem>>, vector<5x16xf32>,
    %cst_231 = arith.constant dense<0.000000e+00> : vector<4x16xf32>
    %247 = tpu.matmul %203, %244, %cst_231 {dimension_numbers = #tpu.dot_dimension_numbers<[1], [0], [0], [1], [0, 0, 1, 1], [], []>} : vector<4x9xbf16>, vector<9x16xbf16>, vector<4x16xf32> -> vector<4x16xf32>
    %c31_232 = arith.constant 31 : index
    %c16_233 = arith.constant 16 : index
    %248 = vector.load %arg14[%c31_232, %c16_233] : memref<36x64xf32, #tpu.memory_space<vmem>>, vector<4x16xf32>
    tpu.vector_store %arg14[%c31_232, %c16_233], %247 {strides = array<i32>} : memref<36x64xf32, #tpu.memory_space<vmem>>, vector<4x16xf32>,
    %cst_234 = arith.constant 0.000000e+00 : f32
    %249 = vector.broadcast %cst_234 : f32 to vector<29x32xf32>
    %c0_235 = arith.constant 0 : index
    %c0_236 = arith.constant 0 : index
    %250 = vector.load %arg14[%c0_235, %c0_236] : memref<36x64xf32, #tpu.memory_space<vmem>>, vector<29x64xf32>
    %251 = arith.truncf %250 : vector<29x64xf32> to vector<29x64xbf16>
    %c0_237 = arith.constant 0 : index
    %c0_238 = arith.constant 0 : index
    %c0_239 = arith.constant 0 : index
    %252 = vector.load %arg3[%c0_237, %c0_238, %c0_239] : memref<4x64x32xbf16, #tpu.memory_space<vmem>>, vector<1x64x32xbf16>
    %253 = vector.shape_cast %252 : vector<1x64x32xbf16> to vector<64x32xbf16>
    %cst_240 = arith.constant dense<0.000000e+00> : vector<29x32xf32>
    %254 = tpu.matmul %251, %253, %cst_240 {dimension_numbers = #tpu.dot_dimension_numbers<[1], [0], [0], [1], [0, 0, 1, 1], [], []>} : vector<29x64xbf16>, vector<64x32xbf16>, vector<29x32xf32> -> vector<29x32xf32>
    %255 = arith.addf %249, %254 : vector<29x32xf32>
    %c1_241 = arith.constant 1 : index
    %c0_242 = arith.constant 0 : index
    %256 = vector.load %arg14[%c1_241, %c0_242] : memref<36x64xf32, #tpu.memory_space<vmem>>, vector<29x64xf32>
    %257 = arith.truncf %256 : vector<29x64xf32> to vector<29x64xbf16>
    %c1_243 = arith.constant 1 : index
    %c0_244 = arith.constant 0 : index
    %c0_245 = arith.constant 0 : index
    %258 = vector.load %arg3[%c1_243, %c0_244, %c0_245] : memref<4x64x32xbf16, #tpu.memory_space<vmem>>, vector<1x64x32xbf16>
    %259 = vector.shape_cast %258 : vector<1x64x32xbf16> to vector<64x32xbf16>
    %cst_246 = arith.constant dense<0.000000e+00> : vector<29x32xf32>
    %260 = tpu.matmul %257, %259, %cst_246 {dimension_numbers = #tpu.dot_dimension_numbers<[1], [0], [0], [1], [0, 0, 1, 1], [], []>} : vector<29x64xbf16>, vector<64x32xbf16>, vector<29x32xf32> -> vector<29x32xf32>
    %261 = arith.addf %255, %260 : vector<29x32xf32>
    %c6_247 = arith.constant 6 : index
    %c0_248 = arith.constant 0 : index
    %262 = vector.load %arg14[%c6_247, %c0_248] : memref<36x64xf32, #tpu.memory_space<vmem>>, vector<29x64xf32>
    %263 = arith.truncf %262 : vector<29x64xf32> to vector<29x64xbf16>
    %c2_249 = arith.constant 2 : index
    %c0_250 = arith.constant 0 : index
    %c0_251 = arith.constant 0 : index
    %264 = vector.load %arg3[%c2_249, %c0_250, %c0_251] : memref<4x64x32xbf16, #tpu.memory_space<vmem>>, vector<1x64x32xbf16>
    %265 = vector.shape_cast %264 : vector<1x64x32xbf16> to vector<64x32xbf16>
    %cst_252 = arith.constant dense<0.000000e+00> : vector<29x32xf32>
    %266 = tpu.matmul %263, %265, %cst_252 {dimension_numbers = #tpu.dot_dimension_numbers<[1], [0], [0], [1], [0, 0, 1, 1], [], []>} : vector<29x64xbf16>, vector<64x32xbf16>, vector<29x32xf32> -> vector<29x32xf32>
    %267 = arith.addf %261, %266 : vector<29x32xf32>
    %c7_253 = arith.constant 7 : index
    %c0_254 = arith.constant 0 : index
    %268 = vector.load %arg14[%c7_253, %c0_254] : memref<36x64xf32, #tpu.memory_space<vmem>>, vector<29x64xf32>
    %269 = arith.truncf %268 : vector<29x64xf32> to vector<29x64xbf16>
    %c3_255 = arith.constant 3 : index
    %c0_256 = arith.constant 0 : index
    %c0_257 = arith.constant 0 : index
    %270 = vector.load %arg3[%c3_255, %c0_256, %c0_257] : memref<4x64x32xbf16, #tpu.memory_space<vmem>>, vector<1x64x32xbf16>
    %271 = vector.shape_cast %270 : vector<1x64x32xbf16> to vector<64x32xbf16>
    %cst_258 = arith.constant dense<0.000000e+00> : vector<29x32xf32>
    %272 = tpu.matmul %269, %271, %cst_258 {dimension_numbers = #tpu.dot_dimension_numbers<[1], [0], [0], [1], [0, 0, 1, 1], [], []>} : vector<29x64xbf16>, vector<64x32xbf16>, vector<29x32xf32> -> vector<29x32xf32>
    %273 = arith.addf %267, %272 : vector<29x32xf32>
    %c0_259 = arith.constant 0 : index
    %c0_260 = arith.constant 0 : index
    %274 = vector.load %arg8[%c0_259, %c0_260] : memref<1x32xf32, #tpu.memory_space<vmem>>, vector<1x32xf32>
    %275 = vector.broadcast %274 : vector<1x32xf32> to vector<29x32xf32>
    %276 = arith.addf %273, %275 : vector<29x32xf32>
    %cst_261 = arith.constant 0.000000e+00 : f32
    %277 = vector.broadcast %cst_261 : f32 to vector<29x32xf32>
    %278 = arith.cmpf oge, %276, %277 : vector<29x32xf32>
    %cst_262 = arith.constant 2.000000e-01 : f32
    %279 = vector.broadcast %cst_262 : f32 to vector<29x32xf32>
    %280 = arith.mulf %279, %276 : vector<29x32xf32>
    %281 = arith.select %278, %276, %280 : vector<29x32xi1>, vector<29x32xf32>
    %282 = vector.extract_strided_slice %281 {offsets = [0, 0], sizes = [5, 32], strides = [1, 1]} : vector<29x32xf32> to vector<5x32xf32>
    %283 = vector.extract_strided_slice %281 {offsets = [6, 0], sizes = [5, 32], strides = [1, 1]} : vector<29x32xf32> to vector<5x32xf32>
    %284 = vector.extract_strided_slice %281 {offsets = [12, 0], sizes = [5, 32], strides = [1, 1]} : vector<29x32xf32> to vector<5x32xf32>
    %285 = vector.extract_strided_slice %281 {offsets = [18, 0], sizes = [5, 32], strides = [1, 1]} : vector<29x32xf32> to vector<5x32xf32>
    %286 = vector.extract_strided_slice %281 {offsets = [24, 0], sizes = [5, 32], strides = [1, 1]} : vector<29x32xf32> to vector<5x32xf32>
    %287 = tpu.iota {dimensions = array<i32: 0>} : vector<3x5xi32>
    %288 = tpu.iota {dimensions = array<i32: 1>} : vector<3x5xi32>
    %c2_i32_263 = arith.constant 2 : i32
    %289 = vector.broadcast %c2_i32_263 : i32 to vector<3x5xi32>
    %290 = arith.muli %289, %287 : vector<3x5xi32>
    %c0_i32_264 = arith.constant 0 : i32
    %291 = vector.broadcast %c0_i32_264 : i32 to vector<3x5xi32>
    %292 = arith.addi %290, %291 : vector<3x5xi32>
    %293 = arith.cmpi eq, %288, %292 : vector<3x5xi32>
    %294 = arith.extui %293 : vector<3x5xi1> to vector<3x5xi32>
    %295 = arith.sitofp %294 : vector<3x5xi32> to vector<3x5xf32>
    %296 = arith.truncf %295 : vector<3x5xf32> to vector<3x5xbf16>
    %297 = tpu.iota {dimensions = array<i32: 0>} : vector<2x5xi32>
    %298 = tpu.iota {dimensions = array<i32: 1>} : vector<2x5xi32>
    %c2_i32_265 = arith.constant 2 : i32
    %299 = vector.broadcast %c2_i32_265 : i32 to vector<2x5xi32>
    %300 = arith.muli %299, %297 : vector<2x5xi32>
    %c1_i32_266 = arith.constant 1 : i32
    %301 = vector.broadcast %c1_i32_266 : i32 to vector<2x5xi32>
    %302 = arith.addi %300, %301 : vector<2x5xi32>
    %303 = arith.cmpi eq, %298, %302 : vector<2x5xi32>
    %304 = arith.extui %303 : vector<2x5xi1> to vector<2x5xi32>
    %305 = arith.sitofp %304 : vector<2x5xi32> to vector<2x5xf32>
    %306 = arith.truncf %305 : vector<2x5xf32> to vector<2x5xbf16>
    %307 = arith.truncf %282 : vector<5x32xf32> to vector<5x32xbf16>
    %cst_267 = arith.constant dense<0.000000e+00> : vector<3x32xf32>
    %308 = tpu.matmul %296, %307, %cst_267 {dimension_numbers = #tpu.dot_dimension_numbers<[1], [0], [0], [1], [0, 0, 1, 1], [], []>} : vector<3x5xbf16>, vector<5x32xbf16>, vector<3x32xf32> -> vector<3x32xf32>
    %c5_268 = arith.constant 5 : index
    %c0_269 = arith.constant 0 : index
    %309 = vector.load %arg15[%c5_268, %c0_269] : memref<16x128xf32, #tpu.memory_space<vmem>>, vector<3x32xf32>
    tpu.vector_store %arg15[%c5_268, %c0_269], %308 {strides = array<i32>} : memref<16x128xf32, #tpu.memory_space<vmem>>, vector<3x32xf32>,
    %cst_270 = arith.constant dense<0.000000e+00> : vector<2x32xf32>
    %310 = tpu.matmul %306, %307, %cst_270 {dimension_numbers = #tpu.dot_dimension_numbers<[1], [0], [0], [1], [0, 0, 1, 1], [], []>} : vector<2x5xbf16>, vector<5x32xbf16>, vector<2x32xf32> -> vector<2x32xf32>
    %c5_271 = arith.constant 5 : index
    %c32_272 = arith.constant 32 : index
    %311 = vector.load %arg15[%c5_271, %c32_272] : memref<16x128xf32, #tpu.memory_space<vmem>>, vector<2x32xf32>
    tpu.vector_store %arg15[%c5_271, %c32_272], %310 {strides = array<i32>} : memref<16x128xf32, #tpu.memory_space<vmem>>, vector<2x32xf32>,
    %312 = arith.truncf %283 : vector<5x32xf32> to vector<5x32xbf16>
    %cst_273 = arith.constant dense<0.000000e+00> : vector<3x32xf32>
    %313 = tpu.matmul %296, %312, %cst_273 {dimension_numbers = #tpu.dot_dimension_numbers<[1], [0], [0], [1], [0, 0, 1, 1], [], []>} : vector<3x5xbf16>, vector<5x32xbf16>, vector<3x32xf32> -> vector<3x32xf32>
    %c5_274 = arith.constant 5 : index
    %c64 = arith.constant 64 : index
    %314 = vector.load %arg15[%c5_274, %c64] : memref<16x128xf32, #tpu.memory_space<vmem>>, vector<3x32xf32>
    tpu.vector_store %arg15[%c5_274, %c64], %313 {strides = array<i32>} : memref<16x128xf32, #tpu.memory_space<vmem>>, vector<3x32xf32>,
    %cst_275 = arith.constant dense<0.000000e+00> : vector<2x32xf32>
    %315 = tpu.matmul %306, %312, %cst_275 {dimension_numbers = #tpu.dot_dimension_numbers<[1], [0], [0], [1], [0, 0, 1, 1], [], []>} : vector<2x5xbf16>, vector<5x32xbf16>, vector<2x32xf32> -> vector<2x32xf32>
    %c5_276 = arith.constant 5 : index
    %c96 = arith.constant 96 : index
    %316 = vector.load %arg15[%c5_276, %c96] : memref<16x128xf32, #tpu.memory_space<vmem>>, vector<2x32xf32>
    tpu.vector_store %arg15[%c5_276, %c96], %315 {strides = array<i32>} : memref<16x128xf32, #tpu.memory_space<vmem>>, vector<2x32xf32>,
    %317 = arith.truncf %284 : vector<5x32xf32> to vector<5x32xbf16>
    %cst_277 = arith.constant dense<0.000000e+00> : vector<3x32xf32>
    %318 = tpu.matmul %296, %317, %cst_277 {dimension_numbers = #tpu.dot_dimension_numbers<[1], [0], [0], [1], [0, 0, 1, 1], [], []>} : vector<3x5xbf16>, vector<5x32xbf16>, vector<3x32xf32> -> vector<3x32xf32>
    %c9_278 = arith.constant 9 : index
    %c0_279 = arith.constant 0 : index
    %319 = vector.load %arg15[%c9_278, %c0_279] : memref<16x128xf32, #tpu.memory_space<vmem>>, vector<3x32xf32>
    tpu.vector_store %arg15[%c9_278, %c0_279], %318 {strides = array<i32>} : memref<16x128xf32, #tpu.memory_space<vmem>>, vector<3x32xf32>,
    %cst_280 = arith.constant dense<0.000000e+00> : vector<2x32xf32>
    %320 = tpu.matmul %306, %317, %cst_280 {dimension_numbers = #tpu.dot_dimension_numbers<[1], [0], [0], [1], [0, 0, 1, 1], [], []>} : vector<2x5xbf16>, vector<5x32xbf16>, vector<2x32xf32> -> vector<2x32xf32>
    %c9_281 = arith.constant 9 : index
    %c32_282 = arith.constant 32 : index
    %321 = vector.load %arg15[%c9_281, %c32_282] : memref<16x128xf32, #tpu.memory_space<vmem>>, vector<2x32xf32>
    tpu.vector_store %arg15[%c9_281, %c32_282], %320 {strides = array<i32>} : memref<16x128xf32, #tpu.memory_space<vmem>>, vector<2x32xf32>,
    %322 = arith.truncf %285 : vector<5x32xf32> to vector<5x32xbf16>
    %cst_283 = arith.constant dense<0.000000e+00> : vector<3x32xf32>
    %323 = tpu.matmul %296, %322, %cst_283 {dimension_numbers = #tpu.dot_dimension_numbers<[1], [0], [0], [1], [0, 0, 1, 1], [], []>} : vector<3x5xbf16>, vector<5x32xbf16>, vector<3x32xf32> -> vector<3x32xf32>
    %c9_284 = arith.constant 9 : index
    %c64_285 = arith.constant 64 : index
    %324 = vector.load %arg15[%c9_284, %c64_285] : memref<16x128xf32, #tpu.memory_space<vmem>>, vector<3x32xf32>
    tpu.vector_store %arg15[%c9_284, %c64_285], %323 {strides = array<i32>} : memref<16x128xf32, #tpu.memory_space<vmem>>, vector<3x32xf32>,
    %cst_286 = arith.constant dense<0.000000e+00> : vector<2x32xf32>
    %325 = tpu.matmul %306, %322, %cst_286 {dimension_numbers = #tpu.dot_dimension_numbers<[1], [0], [0], [1], [0, 0, 1, 1], [], []>} : vector<2x5xbf16>, vector<5x32xbf16>, vector<2x32xf32> -> vector<2x32xf32>
    %c9_287 = arith.constant 9 : index
    %c96_288 = arith.constant 96 : index
    %326 = vector.load %arg15[%c9_287, %c96_288] : memref<16x128xf32, #tpu.memory_space<vmem>>, vector<2x32xf32>
    tpu.vector_store %arg15[%c9_287, %c96_288], %325 {strides = array<i32>} : memref<16x128xf32, #tpu.memory_space<vmem>>, vector<2x32xf32>,
    %327 = arith.truncf %286 : vector<5x32xf32> to vector<5x32xbf16>
    %cst_289 = arith.constant dense<0.000000e+00> : vector<3x32xf32>
    %328 = tpu.matmul %296, %327, %cst_289 {dimension_numbers = #tpu.dot_dimension_numbers<[1], [0], [0], [1], [0, 0, 1, 1], [], []>} : vector<3x5xbf16>, vector<5x32xbf16>, vector<3x32xf32> -> vector<3x32xf32>
    %c13_290 = arith.constant 13 : index
    %c0_291 = arith.constant 0 : index
    %329 = vector.load %arg15[%c13_290, %c0_291] : memref<16x128xf32, #tpu.memory_space<vmem>>, vector<3x32xf32>
    tpu.vector_store %arg15[%c13_290, %c0_291], %328 {strides = array<i32>} : memref<16x128xf32, #tpu.memory_space<vmem>>, vector<3x32xf32>,
    %cst_292 = arith.constant dense<0.000000e+00> : vector<2x32xf32>
    %330 = tpu.matmul %306, %327, %cst_292 {dimension_numbers = #tpu.dot_dimension_numbers<[1], [0], [0], [1], [0, 0, 1, 1], [], []>} : vector<2x5xbf16>, vector<5x32xbf16>, vector<2x32xf32> -> vector<2x32xf32>
    %c13_293 = arith.constant 13 : index
    %c32_294 = arith.constant 32 : index
    %331 = vector.load %arg15[%c13_293, %c32_294] : memref<16x128xf32, #tpu.memory_space<vmem>>, vector<2x32xf32>
    tpu.vector_store %arg15[%c13_293, %c32_294], %330 {strides = array<i32>} : memref<16x128xf32, #tpu.memory_space<vmem>>, vector<2x32xf32>,
    %cst_295 = arith.constant 0.000000e+00 : f32
    %332 = vector.broadcast %cst_295 : f32 to vector<11x64xf32>
    %c0_296 = arith.constant 0 : index
    %c0_297 = arith.constant 0 : index
    %333 = vector.load %arg15[%c0_296, %c0_297] : memref<16x128xf32, #tpu.memory_space<vmem>>, vector<11x128xf32>
    %334 = arith.truncf %333 : vector<11x128xf32> to vector<11x128xbf16>
    %c0_298 = arith.constant 0 : index
    %c0_299 = arith.constant 0 : index
    %c0_300 = arith.constant 0 : index
    %335 = vector.load %arg4[%c0_298, %c0_299, %c0_300] : memref<4x128x64xbf16, #tpu.memory_space<vmem>>, vector<1x128x64xbf16>
    %336 = vector.shape_cast %335 : vector<1x128x64xbf16> to vector<128x64xbf16>
    %cst_301 = arith.constant dense<0.000000e+00> : vector<11x64xf32>
    %337 = tpu.matmul %334, %336, %cst_301 {dimension_numbers = #tpu.dot_dimension_numbers<[1], [0], [0], [1], [0, 0, 1, 1], [], []>} : vector<11x128xbf16>, vector<128x64xbf16>, vector<11x64xf32> -> vector<11x64xf32>
    %338 = arith.addf %332, %337 : vector<11x64xf32>
    %c1_302 = arith.constant 1 : index
    %c0_303 = arith.constant 0 : index
    %339 = vector.load %arg15[%c1_302, %c0_303] : memref<16x128xf32, #tpu.memory_space<vmem>>, vector<11x128xf32>
    %340 = arith.truncf %339 : vector<11x128xf32> to vector<11x128xbf16>
    %c1_304 = arith.constant 1 : index
    %c0_305 = arith.constant 0 : index
    %c0_306 = arith.constant 0 : index
    %341 = vector.load %arg4[%c1_304, %c0_305, %c0_306] : memref<4x128x64xbf16, #tpu.memory_space<vmem>>, vector<1x128x64xbf16>
    %342 = vector.shape_cast %341 : vector<1x128x64xbf16> to vector<128x64xbf16>
    %cst_307 = arith.constant dense<0.000000e+00> : vector<11x64xf32>
    %343 = tpu.matmul %340, %342, %cst_307 {dimension_numbers = #tpu.dot_dimension_numbers<[1], [0], [0], [1], [0, 0, 1, 1], [], []>} : vector<11x128xbf16>, vector<128x64xbf16>, vector<11x64xf32> -> vector<11x64xf32>
    %344 = arith.addf %338, %343 : vector<11x64xf32>
    %c4_308 = arith.constant 4 : index
    %c0_309 = arith.constant 0 : index
    %345 = vector.load %arg15[%c4_308, %c0_309] : memref<16x128xf32, #tpu.memory_space<vmem>>, vector<11x128xf32>
    %346 = arith.truncf %345 : vector<11x128xf32> to vector<11x128xbf16>
    %c2_310 = arith.constant 2 : index
    %c0_311 = arith.constant 0 : index
    %c0_312 = arith.constant 0 : index
    %347 = vector.load %arg4[%c2_310, %c0_311, %c0_312] : memref<4x128x64xbf16, #tpu.memory_space<vmem>>, vector<1x128x64xbf16>
    %348 = vector.shape_cast %347 : vector<1x128x64xbf16> to vector<128x64xbf16>
    %cst_313 = arith.constant dense<0.000000e+00> : vector<11x64xf32>
    %349 = tpu.matmul %346, %348, %cst_313 {dimension_numbers = #tpu.dot_dimension_numbers<[1], [0], [0], [1], [0, 0, 1, 1], [], []>} : vector<11x128xbf16>, vector<128x64xbf16>, vector<11x64xf32> -> vector<11x64xf32>
    %350 = arith.addf %344, %349 : vector<11x64xf32>
    %c5_314 = arith.constant 5 : index
    %c0_315 = arith.constant 0 : index
    %351 = vector.load %arg15[%c5_314, %c0_315] : memref<16x128xf32, #tpu.memory_space<vmem>>, vector<11x128xf32>
    %352 = arith.truncf %351 : vector<11x128xf32> to vector<11x128xbf16>
    %c3_316 = arith.constant 3 : index
    %c0_317 = arith.constant 0 : index
    %c0_318 = arith.constant 0 : index
    %353 = vector.load %arg4[%c3_316, %c0_317, %c0_318] : memref<4x128x64xbf16, #tpu.memory_space<vmem>>, vector<1x128x64xbf16>
    %354 = vector.shape_cast %353 : vector<1x128x64xbf16> to vector<128x64xbf16>
    %cst_319 = arith.constant dense<0.000000e+00> : vector<11x64xf32>
    %355 = tpu.matmul %352, %354, %cst_319 {dimension_numbers = #tpu.dot_dimension_numbers<[1], [0], [0], [1], [0, 0, 1, 1], [], []>} : vector<11x128xbf16>, vector<128x64xbf16>, vector<11x64xf32> -> vector<11x64xf32>
    %356 = arith.addf %350, %355 : vector<11x64xf32>
    %c0_320 = arith.constant 0 : index
    %c0_321 = arith.constant 0 : index
    %357 = vector.load %arg9[%c0_320, %c0_321] : memref<1x64xf32, #tpu.memory_space<vmem>>, vector<1x64xf32>
    %358 = vector.broadcast %357 : vector<1x64xf32> to vector<11x64xf32>
    %359 = arith.addf %356, %358 : vector<11x64xf32>
    %cst_322 = arith.constant 0.000000e+00 : f32
    %360 = vector.broadcast %cst_322 : f32 to vector<11x64xf32>
    %361 = arith.cmpf oge, %359, %360 : vector<11x64xf32>
    %cst_323 = arith.constant 2.000000e-01 : f32
    %362 = vector.broadcast %cst_323 : f32 to vector<11x64xf32>
    %363 = arith.mulf %362, %359 : vector<11x64xf32>
    %364 = arith.select %361, %359, %363 : vector<11x64xi1>, vector<11x64xf32>
    %365 = vector.extract_strided_slice %364 {offsets = [0, 0], sizes = [3, 64], strides = [1, 1]} : vector<11x64xf32> to vector<3x64xf32>
    %366 = vector.extract_strided_slice %364 {offsets = [4, 0], sizes = [3, 64], strides = [1, 1]} : vector<11x64xf32> to vector<3x64xf32>
    %367 = vector.extract_strided_slice %364 {offsets = [8, 0], sizes = [3, 64], strides = [1, 1]} : vector<11x64xf32> to vector<3x64xf32>
    %c16_324 = arith.constant 16 : index
    %c0_325 = arith.constant 0 : index
    %368 = vector.load %arg16[%c16_324, %c0_325] : memref<49x64xf32, #tpu.memory_space<vmem>>, vector<3x64xf32>
    tpu.vector_store %arg16[%c16_324, %c0_325], %365 {strides = array<i32>} : memref<49x64xf32, #tpu.memory_space<vmem>>, vector<3x64xf32>,
    %c23 = arith.constant 23 : index
    %c0_326 = arith.constant 0 : index
    %369 = vector.load %arg16[%c23, %c0_326] : memref<49x64xf32, #tpu.memory_space<vmem>>, vector<3x64xf32>
    tpu.vector_store %arg16[%c23, %c0_326], %366 {strides = array<i32>} : memref<49x64xf32, #tpu.memory_space<vmem>>, vector<3x64xf32>,
    %c30 = arith.constant 30 : index
    %c0_327 = arith.constant 0 : index
    %370 = vector.load %arg16[%c30, %c0_327] : memref<49x64xf32, #tpu.memory_space<vmem>>, vector<3x64xf32>
    tpu.vector_store %arg16[%c30, %c0_327], %367 {strides = array<i32>} : memref<49x64xf32, #tpu.memory_space<vmem>>, vector<3x64xf32>,
    %cst_328 = arith.constant 0.000000e+00 : f32
    %371 = vector.broadcast %cst_328 : f32 to vector<25x128xf32>
    %c0_329 = arith.constant 0 : index
    %c0_330 = arith.constant 0 : index
    %372 = vector.load %arg16[%c0_329, %c0_330] : memref<49x64xf32, #tpu.memory_space<vmem>>, vector<25x64xf32>
    %373 = arith.truncf %372 : vector<25x64xf32> to vector<25x64xbf16>
    %c0_331 = arith.constant 0 : index
    %c0_332 = arith.constant 0 : index
    %c0_333 = arith.constant 0 : index
    %374 = vector.load %arg5[%c0_331, %c0_332, %c0_333] : memref<16x64x128xbf16, #tpu.memory_space<vmem>>, vector<1x64x128xbf16>
    %375 = vector.shape_cast %374 : vector<1x64x128xbf16> to vector<64x128xbf16>
    %cst_334 = arith.constant dense<0.000000e+00> : vector<25x128xf32>
    %376 = tpu.matmul %373, %375, %cst_334 {dimension_numbers = #tpu.dot_dimension_numbers<[1], [0], [0], [1], [0, 0, 1, 1], [], []>} : vector<25x64xbf16>, vector<64x128xbf16>, vector<25x128xf32> -> vector<25x128xf32>
    %377 = arith.addf %371, %376 : vector<25x128xf32>
    %c1_335 = arith.constant 1 : index
    %c0_336 = arith.constant 0 : index
    %378 = vector.load %arg16[%c1_335, %c0_336] : memref<49x64xf32, #tpu.memory_space<vmem>>, vector<25x64xf32>
    %379 = arith.truncf %378 : vector<25x64xf32> to vector<25x64xbf16>
    %c1_337 = arith.constant 1 : index
    %c0_338 = arith.constant 0 : index
    %c0_339 = arith.constant 0 : index
    %380 = vector.load %arg5[%c1_337, %c0_338, %c0_339] : memref<16x64x128xbf16, #tpu.memory_space<vmem>>, vector<1x64x128xbf16>
    %381 = vector.shape_cast %380 : vector<1x64x128xbf16> to vector<64x128xbf16>
    %cst_340 = arith.constant dense<0.000000e+00> : vector<25x128xf32>
    %382 = tpu.matmul %379, %381, %cst_340 {dimension_numbers = #tpu.dot_dimension_numbers<[1], [0], [0], [1], [0, 0, 1, 1], [], []>} : vector<25x64xbf16>, vector<64x128xbf16>, vector<25x128xf32> -> vector<25x128xf32>
    %383 = arith.addf %377, %382 : vector<25x128xf32>
    %c2_341 = arith.constant 2 : index
    %c0_342 = arith.constant 0 : index
    %384 = vector.load %arg16[%c2_341, %c0_342] : memref<49x64xf32, #tpu.memory_space<vmem>>, vector<25x64xf32>
    %385 = arith.truncf %384 : vector<25x64xf32> to vector<25x64xbf16>
    %c2_343 = arith.constant 2 : index
    %c0_344 = arith.constant 0 : index
    %c0_345 = arith.constant 0 : index
    %386 = vector.load %arg5[%c2_343, %c0_344, %c0_345] : memref<16x64x128xbf16, #tpu.memory_space<vmem>>, vector<1x64x128xbf16>
    %387 = vector.shape_cast %386 : vector<1x64x128xbf16> to vector<64x128xbf16>
    %cst_346 = arith.constant dense<0.000000e+00> : vector<25x128xf32>
    %388 = tpu.matmul %385, %387, %cst_346 {dimension_numbers = #tpu.dot_dimension_numbers<[1], [0], [0], [1], [0, 0, 1, 1], [], []>} : vector<25x64xbf16>, vector<64x128xbf16>, vector<25x128xf32> -> vector<25x128xf32>
    %389 = arith.addf %383, %388 : vector<25x128xf32>
    %c3_347 = arith.constant 3 : index
    %c0_348 = arith.constant 0 : index
    %390 = vector.load %arg16[%c3_347, %c0_348] : memref<49x64xf32, #tpu.memory_space<vmem>>, vector<25x64xf32>
    %391 = arith.truncf %390 : vector<25x64xf32> to vector<25x64xbf16>
    %c3_349 = arith.constant 3 : index
    %c0_350 = arith.constant 0 : index
    %c0_351 = arith.constant 0 : index
    %392 = vector.load %arg5[%c3_349, %c0_350, %c0_351] : memref<16x64x128xbf16, #tpu.memory_space<vmem>>, vector<1x64x128xbf16>
    %393 = vector.shape_cast %392 : vector<1x64x128xbf16> to vector<64x128xbf16>
    %cst_352 = arith.constant dense<0.000000e+00> : vector<25x128xf32>
    %394 = tpu.matmul %391, %393, %cst_352 {dimension_numbers = #tpu.dot_dimension_numbers<[1], [0], [0], [1], [0, 0, 1, 1], [], []>} : vector<25x64xbf16>, vector<64x128xbf16>, vector<25x128xf32> -> vector<25x128xf32>
    %395 = arith.addf %389, %394 : vector<25x128xf32>
    %c7_353 = arith.constant 7 : index
    %c0_354 = arith.constant 0 : index
    %396 = vector.load %arg16[%c7_353, %c0_354] : memref<49x64xf32, #tpu.memory_space<vmem>>, vector<25x64xf32>
    %397 = arith.truncf %396 : vector<25x64xf32> to vector<25x64xbf16>
    %c4_355 = arith.constant 4 : index
    %c0_356 = arith.constant 0 : index
    %c0_357 = arith.constant 0 : index
    %398 = vector.load %arg5[%c4_355, %c0_356, %c0_357] : memref<16x64x128xbf16, #tpu.memory_space<vmem>>, vector<1x64x128xbf16>
    %399 = vector.shape_cast %398 : vector<1x64x128xbf16> to vector<64x128xbf16>
    %cst_358 = arith.constant dense<0.000000e+00> : vector<25x128xf32>
    %400 = tpu.matmul %397, %399, %cst_358 {dimension_numbers = #tpu.dot_dimension_numbers<[1], [0], [0], [1], [0, 0, 1, 1], [], []>} : vector<25x64xbf16>, vector<64x128xbf16>, vector<25x128xf32> -> vector<25x128xf32>
    %401 = arith.addf %395, %400 : vector<25x128xf32>
    %c8_359 = arith.constant 8 : index
    %c0_360 = arith.constant 0 : index
    %402 = vector.load %arg16[%c8_359, %c0_360] : memref<49x64xf32, #tpu.memory_space<vmem>>, vector<25x64xf32>
    %403 = arith.truncf %402 : vector<25x64xf32> to vector<25x64xbf16>
    %c5_361 = arith.constant 5 : index
    %c0_362 = arith.constant 0 : index
    %c0_363 = arith.constant 0 : index
    %404 = vector.load %arg5[%c5_361, %c0_362, %c0_363] : memref<16x64x128xbf16, #tpu.memory_space<vmem>>, vector<1x64x128xbf16>
    %405 = vector.shape_cast %404 : vector<1x64x128xbf16> to vector<64x128xbf16>
    %cst_364 = arith.constant dense<0.000000e+00> : vector<25x128xf32>
    %406 = tpu.matmul %403, %405, %cst_364 {dimension_numbers = #tpu.dot_dimension_numbers<[1], [0], [0], [1], [0, 0, 1, 1], [], []>} : vector<25x64xbf16>, vector<64x128xbf16>, vector<25x128xf32> -> vector<25x128xf32>
    %407 = arith.addf %401, %406 : vector<25x128xf32>
    %c9_365 = arith.constant 9 : index
    %c0_366 = arith.constant 0 : index
    %408 = vector.load %arg16[%c9_365, %c0_366] : memref<49x64xf32, #tpu.memory_space<vmem>>, vector<25x64xf32>
    %409 = arith.truncf %408 : vector<25x64xf32> to vector<25x64xbf16>
    %c6_367 = arith.constant 6 : index
    %c0_368 = arith.constant 0 : index
    %c0_369 = arith.constant 0 : index
    %410 = vector.load %arg5[%c6_367, %c0_368, %c0_369] : memref<16x64x128xbf16, #tpu.memory_space<vmem>>, vector<1x64x128xbf16>
    %411 = vector.shape_cast %410 : vector<1x64x128xbf16> to vector<64x128xbf16>
    %cst_370 = arith.constant dense<0.000000e+00> : vector<25x128xf32>
    %412 = tpu.matmul %409, %411, %cst_370 {dimension_numbers = #tpu.dot_dimension_numbers<[1], [0], [0], [1], [0, 0, 1, 1], [], []>} : vector<25x64xbf16>, vector<64x128xbf16>, vector<25x128xf32> -> vector<25x128xf32>
    %413 = arith.addf %407, %412 : vector<25x128xf32>
    %c10_371 = arith.constant 10 : index
    %c0_372 = arith.constant 0 : index
    %414 = vector.load %arg16[%c10_371, %c0_372] : memref<49x64xf32, #tpu.memory_space<vmem>>, vector<25x64xf32>
    %415 = arith.truncf %414 : vector<25x64xf32> to vector<25x64xbf16>
    %c7_373 = arith.constant 7 : index
    %c0_374 = arith.constant 0 : index
    %c0_375 = arith.constant 0 : index
    %416 = vector.load %arg5[%c7_373, %c0_374, %c0_375] : memref<16x64x128xbf16, #tpu.memory_space<vmem>>, vector<1x64x128xbf16>
    %417 = vector.shape_cast %416 : vector<1x64x128xbf16> to vector<64x128xbf16>
    %cst_376 = arith.constant dense<0.000000e+00> : vector<25x128xf32>
    %418 = tpu.matmul %415, %417, %cst_376 {dimension_numbers = #tpu.dot_dimension_numbers<[1], [0], [0], [1], [0, 0, 1, 1], [], []>} : vector<25x64xbf16>, vector<64x128xbf16>, vector<25x128xf32> -> vector<25x128xf32>
    %419 = arith.addf %413, %418 : vector<25x128xf32>
    %c14_377 = arith.constant 14 : index
    %c0_378 = arith.constant 0 : index
    %420 = vector.load %arg16[%c14_377, %c0_378] : memref<49x64xf32, #tpu.memory_space<vmem>>, vector<25x64xf32>
    %421 = arith.truncf %420 : vector<25x64xf32> to vector<25x64xbf16>
    %c8_379 = arith.constant 8 : index
    %c0_380 = arith.constant 0 : index
    %c0_381 = arith.constant 0 : index
    %422 = vector.load %arg5[%c8_379, %c0_380, %c0_381] : memref<16x64x128xbf16, #tpu.memory_space<vmem>>, vector<1x64x128xbf16>
    %423 = vector.shape_cast %422 : vector<1x64x128xbf16> to vector<64x128xbf16>
    %cst_382 = arith.constant dense<0.000000e+00> : vector<25x128xf32>
    %424 = tpu.matmul %421, %423, %cst_382 {dimension_numbers = #tpu.dot_dimension_numbers<[1], [0], [0], [1], [0, 0, 1, 1], [], []>} : vector<25x64xbf16>, vector<64x128xbf16>, vector<25x128xf32> -> vector<25x128xf32>
    %425 = arith.addf %419, %424 : vector<25x128xf32>
    %c15_383 = arith.constant 15 : index
    %c0_384 = arith.constant 0 : index
    %426 = vector.load %arg16[%c15_383, %c0_384] : memref<49x64xf32, #tpu.memory_space<vmem>>, vector<25x64xf32>
    %427 = arith.truncf %426 : vector<25x64xf32> to vector<25x64xbf16>
    %c9_385 = arith.constant 9 : index
    %c0_386 = arith.constant 0 : index
    %c0_387 = arith.constant 0 : index
    %428 = vector.load %arg5[%c9_385, %c0_386, %c0_387] : memref<16x64x128xbf16, #tpu.memory_space<vmem>>, vector<1x64x128xbf16>
    %429 = vector.shape_cast %428 : vector<1x64x128xbf16> to vector<64x128xbf16>
    %cst_388 = arith.constant dense<0.000000e+00> : vector<25x128xf32>
    %430 = tpu.matmul %427, %429, %cst_388 {dimension_numbers = #tpu.dot_dimension_numbers<[1], [0], [0], [1], [0, 0, 1, 1], [], []>} : vector<25x64xbf16>, vector<64x128xbf16>, vector<25x128xf32> -> vector<25x128xf32>
    %431 = arith.addf %425, %430 : vector<25x128xf32>
    %c16_389 = arith.constant 16 : index
    %c0_390 = arith.constant 0 : index
    %432 = vector.load %arg16[%c16_389, %c0_390] : memref<49x64xf32, #tpu.memory_space<vmem>>, vector<25x64xf32>
    %433 = arith.truncf %432 : vector<25x64xf32> to vector<25x64xbf16>
    %c10_391 = arith.constant 10 : index
    %c0_392 = arith.constant 0 : index
    %c0_393 = arith.constant 0 : index
    %434 = vector.load %arg5[%c10_391, %c0_392, %c0_393] : memref<16x64x128xbf16, #tpu.memory_space<vmem>>, vector<1x64x128xbf16>
    %435 = vector.shape_cast %434 : vector<1x64x128xbf16> to vector<64x128xbf16>
    %cst_394 = arith.constant dense<0.000000e+00> : vector<25x128xf32>
    %436 = tpu.matmul %433, %435, %cst_394 {dimension_numbers = #tpu.dot_dimension_numbers<[1], [0], [0], [1], [0, 0, 1, 1], [], []>} : vector<25x64xbf16>, vector<64x128xbf16>, vector<25x128xf32> -> vector<25x128xf32>
    %437 = arith.addf %431, %436 : vector<25x128xf32>
    %c17 = arith.constant 17 : index
    %c0_395 = arith.constant 0 : index
    %438 = vector.load %arg16[%c17, %c0_395] : memref<49x64xf32, #tpu.memory_space<vmem>>, vector<25x64xf32>
    %439 = arith.truncf %438 : vector<25x64xf32> to vector<25x64xbf16>
    %c11_396 = arith.constant 11 : index
    %c0_397 = arith.constant 0 : index
    %c0_398 = arith.constant 0 : index
    %440 = vector.load %arg5[%c11_396, %c0_397, %c0_398] : memref<16x64x128xbf16, #tpu.memory_space<vmem>>, vector<1x64x128xbf16>
    %441 = vector.shape_cast %440 : vector<1x64x128xbf16> to vector<64x128xbf16>
    %cst_399 = arith.constant dense<0.000000e+00> : vector<25x128xf32>
    %442 = tpu.matmul %439, %441, %cst_399 {dimension_numbers = #tpu.dot_dimension_numbers<[1], [0], [0], [1], [0, 0, 1, 1], [], []>} : vector<25x64xbf16>, vector<64x128xbf16>, vector<25x128xf32> -> vector<25x128xf32>
    %443 = arith.addf %437, %442 : vector<25x128xf32>
    %c21_400 = arith.constant 21 : index
    %c0_401 = arith.constant 0 : index
    %444 = vector.load %arg16[%c21_400, %c0_401] : memref<49x64xf32, #tpu.memory_space<vmem>>, vector<25x64xf32>
    %445 = arith.truncf %444 : vector<25x64xf32> to vector<25x64xbf16>
    %c12_402 = arith.constant 12 : index
    %c0_403 = arith.constant 0 : index
    %c0_404 = arith.constant 0 : index
    %446 = vector.load %arg5[%c12_402, %c0_403, %c0_404] : memref<16x64x128xbf16, #tpu.memory_space<vmem>>, vector<1x64x128xbf16>
    %447 = vector.shape_cast %446 : vector<1x64x128xbf16> to vector<64x128xbf16>
    %cst_405 = arith.constant dense<0.000000e+00> : vector<25x128xf32>
    %448 = tpu.matmul %445, %447, %cst_405 {dimension_numbers = #tpu.dot_dimension_numbers<[1], [0], [0], [1], [0, 0, 1, 1], [], []>} : vector<25x64xbf16>, vector<64x128xbf16>, vector<25x128xf32> -> vector<25x128xf32>
    %449 = arith.addf %443, %448 : vector<25x128xf32>
    %c22 = arith.constant 22 : index
    %c0_406 = arith.constant 0 : index
    %450 = vector.load %arg16[%c22, %c0_406] : memref<49x64xf32, #tpu.memory_space<vmem>>, vector<25x64xf32>
    %451 = arith.truncf %450 : vector<25x64xf32> to vector<25x64xbf16>
    %c13_407 = arith.constant 13 : index
    %c0_408 = arith.constant 0 : index
    %c0_409 = arith.constant 0 : index
    %452 = vector.load %arg5[%c13_407, %c0_408, %c0_409] : memref<16x64x128xbf16, #tpu.memory_space<vmem>>, vector<1x64x128xbf16>
    %453 = vector.shape_cast %452 : vector<1x64x128xbf16> to vector<64x128xbf16>
    %cst_410 = arith.constant dense<0.000000e+00> : vector<25x128xf32>
    %454 = tpu.matmul %451, %453, %cst_410 {dimension_numbers = #tpu.dot_dimension_numbers<[1], [0], [0], [1], [0, 0, 1, 1], [], []>} : vector<25x64xbf16>, vector<64x128xbf16>, vector<25x128xf32> -> vector<25x128xf32>
    %455 = arith.addf %449, %454 : vector<25x128xf32>
    %c23_411 = arith.constant 23 : index
    %c0_412 = arith.constant 0 : index
    %456 = vector.load %arg16[%c23_411, %c0_412] : memref<49x64xf32, #tpu.memory_space<vmem>>, vector<25x64xf32>
    %457 = arith.truncf %456 : vector<25x64xf32> to vector<25x64xbf16>
    %c14_413 = arith.constant 14 : index
    %c0_414 = arith.constant 0 : index
    %c0_415 = arith.constant 0 : index
    %458 = vector.load %arg5[%c14_413, %c0_414, %c0_415] : memref<16x64x128xbf16, #tpu.memory_space<vmem>>, vector<1x64x128xbf16>
    %459 = vector.shape_cast %458 : vector<1x64x128xbf16> to vector<64x128xbf16>
    %cst_416 = arith.constant dense<0.000000e+00> : vector<25x128xf32>
    %460 = tpu.matmul %457, %459, %cst_416 {dimension_numbers = #tpu.dot_dimension_numbers<[1], [0], [0], [1], [0, 0, 1, 1], [], []>} : vector<25x64xbf16>, vector<64x128xbf16>, vector<25x128xf32> -> vector<25x128xf32>
    %461 = arith.addf %455, %460 : vector<25x128xf32>
    %c24 = arith.constant 24 : index
    %c0_417 = arith.constant 0 : index
    %462 = vector.load %arg16[%c24, %c0_417] : memref<49x64xf32, #tpu.memory_space<vmem>>, vector<25x64xf32>
    %463 = arith.truncf %462 : vector<25x64xf32> to vector<25x64xbf16>
    %c15_418 = arith.constant 15 : index
    %c0_419 = arith.constant 0 : index
    %c0_420 = arith.constant 0 : index
    %464 = vector.load %arg5[%c15_418, %c0_419, %c0_420] : memref<16x64x128xbf16, #tpu.memory_space<vmem>>, vector<1x64x128xbf16>
    %465 = vector.shape_cast %464 : vector<1x64x128xbf16> to vector<64x128xbf16>
    %cst_421 = arith.constant dense<0.000000e+00> : vector<25x128xf32>
    %466 = tpu.matmul %463, %465, %cst_421 {dimension_numbers = #tpu.dot_dimension_numbers<[1], [0], [0], [1], [0, 0, 1, 1], [], []>} : vector<25x64xbf16>, vector<64x128xbf16>, vector<25x128xf32> -> vector<25x128xf32>
    %467 = arith.addf %461, %466 : vector<25x128xf32>
    %c0_422 = arith.constant 0 : index
    %c0_423 = arith.constant 0 : index
    %468 = vector.load %arg10[%c0_422, %c0_423] : memref<1x128xf32, #tpu.memory_space<vmem>>, vector<1x128xf32>
    %469 = vector.broadcast %468 : vector<1x128xf32> to vector<25x128xf32>
    %470 = arith.addf %467, %469 : vector<25x128xf32>
    %cst_424 = arith.constant 0.000000e+00 : f32
    %471 = vector.broadcast %cst_424 : f32 to vector<25x128xf32>
    %472 = arith.cmpf oge, %470, %471 : vector<25x128xf32>
    %cst_425 = arith.constant 2.000000e-01 : f32
    %473 = vector.broadcast %cst_425 : f32 to vector<25x128xf32>
    %474 = arith.mulf %473, %470 : vector<25x128xf32>
    %475 = arith.select %472, %470, %474 : vector<25x128xi1>, vector<25x128xf32>
    %476 = vector.extract_strided_slice %475 {offsets = [0, 0], sizes = [4, 128], strides = [1, 1]} : vector<25x128xf32> to vector<4x128xf32>
    %477 = vector.extract_strided_slice %475 {offsets = [7, 0], sizes = [4, 128], strides = [1, 1]} : vector<25x128xf32> to vector<4x128xf32>
    %478 = vector.extract_strided_slice %475 {offsets = [14, 0], sizes = [4, 128], strides = [1, 1]} : vector<25x128xf32> to vector<4x128xf32>
    %479 = vector.extract_strided_slice %475 {offsets = [21, 0], sizes = [4, 128], strides = [1, 1]} : vector<25x128xf32> to vector<4x128xf32>
    %c18 = arith.constant 18 : index
    %c0_426 = arith.constant 0 : index
    %480 = vector.load %arg17[%c18, %c0_426] : memref<64x128xf32, #tpu.memory_space<vmem>>, vector<4x128xf32>
    tpu.vector_store %arg17[%c18, %c0_426], %476 {strides = array<i32>} : memref<64x128xf32, #tpu.memory_space<vmem>>, vector<4x128xf32>,
    %c26 = arith.constant 26 : index
    %c0_427 = arith.constant 0 : index
    %481 = vector.load %arg17[%c26, %c0_427] : memref<64x128xf32, #tpu.memory_space<vmem>>, vector<4x128xf32>
    tpu.vector_store %arg17[%c26, %c0_427], %477 {strides = array<i32>} : memref<64x128xf32, #tpu.memory_space<vmem>>, vector<4x128xf32>,
    %c34 = arith.constant 34 : index
    %c0_428 = arith.constant 0 : index
    %482 = vector.load %arg17[%c34, %c0_428] : memref<64x128xf32, #tpu.memory_space<vmem>>, vector<4x128xf32>
    tpu.vector_store %arg17[%c34, %c0_428], %478 {strides = array<i32>} : memref<64x128xf32, #tpu.memory_space<vmem>>, vector<4x128xf32>,
    %c42 = arith.constant 42 : index
    %c0_429 = arith.constant 0 : index
    %483 = vector.load %arg17[%c42, %c0_429] : memref<64x128xf32, #tpu.memory_space<vmem>>, vector<4x128xf32>
    tpu.vector_store %arg17[%c42, %c0_429], %479 {strides = array<i32>} : memref<64x128xf32, #tpu.memory_space<vmem>>, vector<4x128xf32>,
    %cst_430 = arith.constant 0.000000e+00 : f32
    %484 = vector.broadcast %cst_430 : f32 to vector<37x8xf32>
    %c0_431 = arith.constant 0 : index
    %c0_432 = arith.constant 0 : index
    %485 = vector.load %arg17[%c0_431, %c0_432] : memref<64x128xf32, #tpu.memory_space<vmem>>, vector<37x128xf32>
    %486 = arith.truncf %485 : vector<37x128xf32> to vector<37x128xbf16>
    %c0_433 = arith.constant 0 : index
    %c0_434 = arith.constant 0 : index
    %c0_435 = arith.constant 0 : index
    %487 = vector.load %arg6[%c0_433, %c0_434, %c0_435] : memref<16x128x8xbf16, #tpu.memory_space<vmem>>, vector<1x128x8xbf16>
    %488 = vector.shape_cast %487 : vector<1x128x8xbf16> to vector<128x8xbf16>
    %cst_436 = arith.constant dense<0.000000e+00> : vector<37x8xf32>
    %489 = tpu.matmul %486, %488, %cst_436 {dimension_numbers = #tpu.dot_dimension_numbers<[1], [0], [0], [1], [0, 0, 1, 1], [], []>} : vector<37x128xbf16>, vector<128x8xbf16>, vector<37x8xf32> -> vector<37x8xf32>
    %490 = arith.addf %484, %489 : vector<37x8xf32>
    %c1_437 = arith.constant 1 : index
    %c0_438 = arith.constant 0 : index
    %491 = vector.load %arg17[%c1_437, %c0_438] : memref<64x128xf32, #tpu.memory_space<vmem>>, vector<37x128xf32>
    %492 = arith.truncf %491 : vector<37x128xf32> to vector<37x128xbf16>
    %c1_439 = arith.constant 1 : index
    %c0_440 = arith.constant 0 : index
    %c0_441 = arith.constant 0 : index
    %493 = vector.load %arg6[%c1_439, %c0_440, %c0_441] : memref<16x128x8xbf16, #tpu.memory_space<vmem>>, vector<1x128x8xbf16>
    %494 = vector.shape_cast %493 : vector<1x128x8xbf16> to vector<128x8xbf16>
    %cst_442 = arith.constant dense<0.000000e+00> : vector<37x8xf32>
    %495 = tpu.matmul %492, %494, %cst_442 {dimension_numbers = #tpu.dot_dimension_numbers<[1], [0], [0], [1], [0, 0, 1, 1], [], []>} : vector<37x128xbf16>, vector<128x8xbf16>, vector<37x8xf32> -> vector<37x8xf32>
    %496 = arith.addf %490, %495 : vector<37x8xf32>
    %c2_443 = arith.constant 2 : index
    %c0_444 = arith.constant 0 : index
    %497 = vector.load %arg17[%c2_443, %c0_444] : memref<64x128xf32, #tpu.memory_space<vmem>>, vector<37x128xf32>
    %498 = arith.truncf %497 : vector<37x128xf32> to vector<37x128xbf16>
    %c2_445 = arith.constant 2 : index
    %c0_446 = arith.constant 0 : index
    %c0_447 = arith.constant 0 : index
    %499 = vector.load %arg6[%c2_445, %c0_446, %c0_447] : memref<16x128x8xbf16, #tpu.memory_space<vmem>>, vector<1x128x8xbf16>
    %500 = vector.shape_cast %499 : vector<1x128x8xbf16> to vector<128x8xbf16>
    %cst_448 = arith.constant dense<0.000000e+00> : vector<37x8xf32>
    %501 = tpu.matmul %498, %500, %cst_448 {dimension_numbers = #tpu.dot_dimension_numbers<[1], [0], [0], [1], [0, 0, 1, 1], [], []>} : vector<37x128xbf16>, vector<128x8xbf16>, vector<37x8xf32> -> vector<37x8xf32>
    %502 = arith.addf %496, %501 : vector<37x8xf32>
    %c3_449 = arith.constant 3 : index
    %c0_450 = arith.constant 0 : index
    %503 = vector.load %arg17[%c3_449, %c0_450] : memref<64x128xf32, #tpu.memory_space<vmem>>, vector<37x128xf32>
    %504 = arith.truncf %503 : vector<37x128xf32> to vector<37x128xbf16>
    %c3_451 = arith.constant 3 : index
    %c0_452 = arith.constant 0 : index
    %c0_453 = arith.constant 0 : index
    %505 = vector.load %arg6[%c3_451, %c0_452, %c0_453] : memref<16x128x8xbf16, #tpu.memory_space<vmem>>, vector<1x128x8xbf16>
    %506 = vector.shape_cast %505 : vector<1x128x8xbf16> to vector<128x8xbf16>
    %cst_454 = arith.constant dense<0.000000e+00> : vector<37x8xf32>
    %507 = tpu.matmul %504, %506, %cst_454 {dimension_numbers = #tpu.dot_dimension_numbers<[1], [0], [0], [1], [0, 0, 1, 1], [], []>} : vector<37x128xbf16>, vector<128x8xbf16>, vector<37x8xf32> -> vector<37x8xf32>
    %508 = arith.addf %502, %507 : vector<37x8xf32>
    %c8_455 = arith.constant 8 : index
    %c0_456 = arith.constant 0 : index
    %509 = vector.load %arg17[%c8_455, %c0_456] : memref<64x128xf32, #tpu.memory_space<vmem>>, vector<37x128xf32>
    %510 = arith.truncf %509 : vector<37x128xf32> to vector<37x128xbf16>
    %c4_457 = arith.constant 4 : index
    %c0_458 = arith.constant 0 : index
    %c0_459 = arith.constant 0 : index
    %511 = vector.load %arg6[%c4_457, %c0_458, %c0_459] : memref<16x128x8xbf16, #tpu.memory_space<vmem>>, vector<1x128x8xbf16>
    %512 = vector.shape_cast %511 : vector<1x128x8xbf16> to vector<128x8xbf16>
    %cst_460 = arith.constant dense<0.000000e+00> : vector<37x8xf32>
    %513 = tpu.matmul %510, %512, %cst_460 {dimension_numbers = #tpu.dot_dimension_numbers<[1], [0], [0], [1], [0, 0, 1, 1], [], []>} : vector<37x128xbf16>, vector<128x8xbf16>, vector<37x8xf32> -> vector<37x8xf32>
    %514 = arith.addf %508, %513 : vector<37x8xf32>
    %c9_461 = arith.constant 9 : index
    %c0_462 = arith.constant 0 : index
    %515 = vector.load %arg17[%c9_461, %c0_462] : memref<64x128xf32, #tpu.memory_space<vmem>>, vector<37x128xf32>
    %516 = arith.truncf %515 : vector<37x128xf32> to vector<37x128xbf16>
    %c5_463 = arith.constant 5 : index
    %c0_464 = arith.constant 0 : index
    %c0_465 = arith.constant 0 : index
    %517 = vector.load %arg6[%c5_463, %c0_464, %c0_465] : memref<16x128x8xbf16, #tpu.memory_space<vmem>>, vector<1x128x8xbf16>
    %518 = vector.shape_cast %517 : vector<1x128x8xbf16> to vector<128x8xbf16>
    %cst_466 = arith.constant dense<0.000000e+00> : vector<37x8xf32>
    %519 = tpu.matmul %516, %518, %cst_466 {dimension_numbers = #tpu.dot_dimension_numbers<[1], [0], [0], [1], [0, 0, 1, 1], [], []>} : vector<37x128xbf16>, vector<128x8xbf16>, vector<37x8xf32> -> vector<37x8xf32>
    %520 = arith.addf %514, %519 : vector<37x8xf32>
    %c10_467 = arith.constant 10 : index
    %c0_468 = arith.constant 0 : index
    %521 = vector.load %arg17[%c10_467, %c0_468] : memref<64x128xf32, #tpu.memory_space<vmem>>, vector<37x128xf32>
    %522 = arith.truncf %521 : vector<37x128xf32> to vector<37x128xbf16>
    %c6_469 = arith.constant 6 : index
    %c0_470 = arith.constant 0 : index
    %c0_471 = arith.constant 0 : index
    %523 = vector.load %arg6[%c6_469, %c0_470, %c0_471] : memref<16x128x8xbf16, #tpu.memory_space<vmem>>, vector<1x128x8xbf16>
    %524 = vector.shape_cast %523 : vector<1x128x8xbf16> to vector<128x8xbf16>
    %cst_472 = arith.constant dense<0.000000e+00> : vector<37x8xf32>
    %525 = tpu.matmul %522, %524, %cst_472 {dimension_numbers = #tpu.dot_dimension_numbers<[1], [0], [0], [1], [0, 0, 1, 1], [], []>} : vector<37x128xbf16>, vector<128x8xbf16>, vector<37x8xf32> -> vector<37x8xf32>
    %526 = arith.addf %520, %525 : vector<37x8xf32>
    %c11_473 = arith.constant 11 : index
    %c0_474 = arith.constant 0 : index
    %527 = vector.load %arg17[%c11_473, %c0_474] : memref<64x128xf32, #tpu.memory_space<vmem>>, vector<37x128xf32>
    %528 = arith.truncf %527 : vector<37x128xf32> to vector<37x128xbf16>
    %c7_475 = arith.constant 7 : index
    %c0_476 = arith.constant 0 : index
    %c0_477 = arith.constant 0 : index
    %529 = vector.load %arg6[%c7_475, %c0_476, %c0_477] : memref<16x128x8xbf16, #tpu.memory_space<vmem>>, vector<1x128x8xbf16>
    %530 = vector.shape_cast %529 : vector<1x128x8xbf16> to vector<128x8xbf16>
    %cst_478 = arith.constant dense<0.000000e+00> : vector<37x8xf32>
    %531 = tpu.matmul %528, %530, %cst_478 {dimension_numbers = #tpu.dot_dimension_numbers<[1], [0], [0], [1], [0, 0, 1, 1], [], []>} : vector<37x128xbf16>, vector<128x8xbf16>, vector<37x8xf32> -> vector<37x8xf32>
    %532 = arith.addf %526, %531 : vector<37x8xf32>
    %c16_479 = arith.constant 16 : index
    %c0_480 = arith.constant 0 : index
    %533 = vector.load %arg17[%c16_479, %c0_480] : memref<64x128xf32, #tpu.memory_space<vmem>>, vector<37x128xf32>
    %534 = arith.truncf %533 : vector<37x128xf32> to vector<37x128xbf16>
    %c8_481 = arith.constant 8 : index
    %c0_482 = arith.constant 0 : index
    %c0_483 = arith.constant 0 : index
    %535 = vector.load %arg6[%c8_481, %c0_482, %c0_483] : memref<16x128x8xbf16, #tpu.memory_space<vmem>>, vector<1x128x8xbf16>
    %536 = vector.shape_cast %535 : vector<1x128x8xbf16> to vector<128x8xbf16>
    %cst_484 = arith.constant dense<0.000000e+00> : vector<37x8xf32>
    %537 = tpu.matmul %534, %536, %cst_484 {dimension_numbers = #tpu.dot_dimension_numbers<[1], [0], [0], [1], [0, 0, 1, 1], [], []>} : vector<37x128xbf16>, vector<128x8xbf16>, vector<37x8xf32> -> vector<37x8xf32>
    %538 = arith.addf %532, %537 : vector<37x8xf32>
    %c17_485 = arith.constant 17 : index
    %c0_486 = arith.constant 0 : index
    %539 = vector.load %arg17[%c17_485, %c0_486] : memref<64x128xf32, #tpu.memory_space<vmem>>, vector<37x128xf32>
    %540 = arith.truncf %539 : vector<37x128xf32> to vector<37x128xbf16>
    %c9_487 = arith.constant 9 : index
    %c0_488 = arith.constant 0 : index
    %c0_489 = arith.constant 0 : index
    %541 = vector.load %arg6[%c9_487, %c0_488, %c0_489] : memref<16x128x8xbf16, #tpu.memory_space<vmem>>, vector<1x128x8xbf16>
    %542 = vector.shape_cast %541 : vector<1x128x8xbf16> to vector<128x8xbf16>
    %cst_490 = arith.constant dense<0.000000e+00> : vector<37x8xf32>
    %543 = tpu.matmul %540, %542, %cst_490 {dimension_numbers = #tpu.dot_dimension_numbers<[1], [0], [0], [1], [0, 0, 1, 1], [], []>} : vector<37x128xbf16>, vector<128x8xbf16>, vector<37x8xf32> -> vector<37x8xf32>
    %544 = arith.addf %538, %543 : vector<37x8xf32>
    %c18_491 = arith.constant 18 : index
    %c0_492 = arith.constant 0 : index
    %545 = vector.load %arg17[%c18_491, %c0_492] : memref<64x128xf32, #tpu.memory_space<vmem>>, vector<37x128xf32>
    %546 = arith.truncf %545 : vector<37x128xf32> to vector<37x128xbf16>
    %c10_493 = arith.constant 10 : index
    %c0_494 = arith.constant 0 : index
    %c0_495 = arith.constant 0 : index
    %547 = vector.load %arg6[%c10_493, %c0_494, %c0_495] : memref<16x128x8xbf16, #tpu.memory_space<vmem>>, vector<1x128x8xbf16>
    %548 = vector.shape_cast %547 : vector<1x128x8xbf16> to vector<128x8xbf16>
    %cst_496 = arith.constant dense<0.000000e+00> : vector<37x8xf32>
    %549 = tpu.matmul %546, %548, %cst_496 {dimension_numbers = #tpu.dot_dimension_numbers<[1], [0], [0], [1], [0, 0, 1, 1], [], []>} : vector<37x128xbf16>, vector<128x8xbf16>, vector<37x8xf32> -> vector<37x8xf32>
    %550 = arith.addf %544, %549 : vector<37x8xf32>
    %c19_497 = arith.constant 19 : index
    %c0_498 = arith.constant 0 : index
    %551 = vector.load %arg17[%c19_497, %c0_498] : memref<64x128xf32, #tpu.memory_space<vmem>>, vector<37x128xf32>
    %552 = arith.truncf %551 : vector<37x128xf32> to vector<37x128xbf16>
    %c11_499 = arith.constant 11 : index
    %c0_500 = arith.constant 0 : index
    %c0_501 = arith.constant 0 : index
    %553 = vector.load %arg6[%c11_499, %c0_500, %c0_501] : memref<16x128x8xbf16, #tpu.memory_space<vmem>>, vector<1x128x8xbf16>
    %554 = vector.shape_cast %553 : vector<1x128x8xbf16> to vector<128x8xbf16>
    %cst_502 = arith.constant dense<0.000000e+00> : vector<37x8xf32>
    %555 = tpu.matmul %552, %554, %cst_502 {dimension_numbers = #tpu.dot_dimension_numbers<[1], [0], [0], [1], [0, 0, 1, 1], [], []>} : vector<37x128xbf16>, vector<128x8xbf16>, vector<37x8xf32> -> vector<37x8xf32>
    %556 = arith.addf %550, %555 : vector<37x8xf32>
    %c24_503 = arith.constant 24 : index
    %c0_504 = arith.constant 0 : index
    %557 = vector.load %arg17[%c24_503, %c0_504] : memref<64x128xf32, #tpu.memory_space<vmem>>, vector<37x128xf32>
    %558 = arith.truncf %557 : vector<37x128xf32> to vector<37x128xbf16>
    %c12_505 = arith.constant 12 : index
    %c0_506 = arith.constant 0 : index
    %c0_507 = arith.constant 0 : index
    %559 = vector.load %arg6[%c12_505, %c0_506, %c0_507] : memref<16x128x8xbf16, #tpu.memory_space<vmem>>, vector<1x128x8xbf16>
    %560 = vector.shape_cast %559 : vector<1x128x8xbf16> to vector<128x8xbf16>
    %cst_508 = arith.constant dense<0.000000e+00> : vector<37x8xf32>
    %561 = tpu.matmul %558, %560, %cst_508 {dimension_numbers = #tpu.dot_dimension_numbers<[1], [0], [0], [1], [0, 0, 1, 1], [], []>} : vector<37x128xbf16>, vector<128x8xbf16>, vector<37x8xf32> -> vector<37x8xf32>
    %562 = arith.addf %556, %561 : vector<37x8xf32>
    %c25_509 = arith.constant 25 : index
    %c0_510 = arith.constant 0 : index
    %563 = vector.load %arg17[%c25_509, %c0_510] : memref<64x128xf32, #tpu.memory_space<vmem>>, vector<37x128xf32>
    %564 = arith.truncf %563 : vector<37x128xf32> to vector<37x128xbf16>
    %c13_511 = arith.constant 13 : index
    %c0_512 = arith.constant 0 : index
    %c0_513 = arith.constant 0 : index
    %565 = vector.load %arg6[%c13_511, %c0_512, %c0_513] : memref<16x128x8xbf16, #tpu.memory_space<vmem>>, vector<1x128x8xbf16>
    %566 = vector.shape_cast %565 : vector<1x128x8xbf16> to vector<128x8xbf16>
    %cst_514 = arith.constant dense<0.000000e+00> : vector<37x8xf32>
    %567 = tpu.matmul %564, %566, %cst_514 {dimension_numbers = #tpu.dot_dimension_numbers<[1], [0], [0], [1], [0, 0, 1, 1], [], []>} : vector<37x128xbf16>, vector<128x8xbf16>, vector<37x8xf32> -> vector<37x8xf32>
    %568 = arith.addf %562, %567 : vector<37x8xf32>
    %c26_515 = arith.constant 26 : index
    %c0_516 = arith.constant 0 : index
    %569 = vector.load %arg17[%c26_515, %c0_516] : memref<64x128xf32, #tpu.memory_space<vmem>>, vector<37x128xf32>
    %570 = arith.truncf %569 : vector<37x128xf32> to vector<37x128xbf16>
    %c14_517 = arith.constant 14 : index
    %c0_518 = arith.constant 0 : index
    %c0_519 = arith.constant 0 : index
    %571 = vector.load %arg6[%c14_517, %c0_518, %c0_519] : memref<16x128x8xbf16, #tpu.memory_space<vmem>>, vector<1x128x8xbf16>
    %572 = vector.shape_cast %571 : vector<1x128x8xbf16> to vector<128x8xbf16>
    %cst_520 = arith.constant dense<0.000000e+00> : vector<37x8xf32>
    %573 = tpu.matmul %570, %572, %cst_520 {dimension_numbers = #tpu.dot_dimension_numbers<[1], [0], [0], [1], [0, 0, 1, 1], [], []>} : vector<37x128xbf16>, vector<128x8xbf16>, vector<37x8xf32> -> vector<37x8xf32>
    %574 = arith.addf %568, %573 : vector<37x8xf32>
    %c27 = arith.constant 27 : index
    %c0_521 = arith.constant 0 : index
    %575 = vector.load %arg17[%c27, %c0_521] : memref<64x128xf32, #tpu.memory_space<vmem>>, vector<37x128xf32>
    %576 = arith.truncf %575 : vector<37x128xf32> to vector<37x128xbf16>
    %c15_522 = arith.constant 15 : index
    %c0_523 = arith.constant 0 : index
    %c0_524 = arith.constant 0 : index
    %577 = vector.load %arg6[%c15_522, %c0_523, %c0_524] : memref<16x128x8xbf16, #tpu.memory_space<vmem>>, vector<1x128x8xbf16>
    %578 = vector.shape_cast %577 : vector<1x128x8xbf16> to vector<128x8xbf16>
    %cst_525 = arith.constant dense<0.000000e+00> : vector<37x8xf32>
    %579 = tpu.matmul %576, %578, %cst_525 {dimension_numbers = #tpu.dot_dimension_numbers<[1], [0], [0], [1], [0, 0, 1, 1], [], []>} : vector<37x128xbf16>, vector<128x8xbf16>, vector<37x8xf32> -> vector<37x8xf32>
    %580 = arith.addf %574, %579 : vector<37x8xf32>
    %c0_526 = arith.constant 0 : index
    %c0_527 = arith.constant 0 : index
    %581 = vector.load %arg11[%c0_526, %c0_527] : memref<1x8xf32, #tpu.memory_space<vmem>>, vector<1x8xf32>
    %582 = vector.broadcast %581 : vector<1x8xf32> to vector<37x8xf32>
    %583 = arith.addf %580, %582 : vector<37x8xf32>
    %584 = vector.extract_strided_slice %583 {offsets = [0, 0], sizes = [5, 8], strides = [1, 1]} : vector<37x8xf32> to vector<5x8xf32>
    %585 = vector.extract_strided_slice %583 {offsets = [8, 0], sizes = [5, 8], strides = [1, 1]} : vector<37x8xf32> to vector<5x8xf32>
    %586 = vector.extract_strided_slice %583 {offsets = [16, 0], sizes = [5, 8], strides = [1, 1]} : vector<37x8xf32> to vector<5x8xf32>
    %587 = vector.extract_strided_slice %583 {offsets = [24, 0], sizes = [5, 8], strides = [1, 1]} : vector<37x8xf32> to vector<5x8xf32>
    %588 = vector.extract_strided_slice %583 {offsets = [32, 0], sizes = [5, 8], strides = [1, 1]} : vector<37x8xf32> to vector<5x8xf32>
    %c0_528 = arith.constant 0 : index
    %c0_529 = arith.constant 0 : index
    %c0_530 = arith.constant 0 : index
    %c0_531 = arith.constant 0 : index
    %589 = vector.load %arg12[%c0_528, %c0_529, %c0_530, %c0_531] : memref<1x5x5x8xf32, #tpu.memory_space<vmem>>, vector<1x1x5x8xf32>
    %590 = vector.shape_cast %589 : vector<1x1x5x8xf32> to vector<5x8xf32>
    %591 = vector.shape_cast %584 : vector<5x8xf32> to vector<1x1x5x8xf32>
    tpu.vector_store %arg12[%c0_528, %c0_529, %c0_530, %c0_531], %591 {strides = array<i32>} : memref<1x5x5x8xf32, #tpu.memory_space<vmem>>, vector<1x1x5x8xf32>,
    %c0_532 = arith.constant 0 : index
    %c1_533 = arith.constant 1 : index
    %c0_534 = arith.constant 0 : index
    %c0_535 = arith.constant 0 : index
    %592 = vector.load %arg12[%c0_532, %c1_533, %c0_534, %c0_535] : memref<1x5x5x8xf32, #tpu.memory_space<vmem>>, vector<1x1x5x8xf32>
    %593 = vector.shape_cast %592 : vector<1x1x5x8xf32> to vector<5x8xf32>
    %594 = vector.shape_cast %585 : vector<5x8xf32> to vector<1x1x5x8xf32>
    tpu.vector_store %arg12[%c0_532, %c1_533, %c0_534, %c0_535], %594 {strides = array<i32>} : memref<1x5x5x8xf32, #tpu.memory_space<vmem>>, vector<1x1x5x8xf32>,
    %c0_536 = arith.constant 0 : index
    %c2_537 = arith.constant 2 : index
    %c0_538 = arith.constant 0 : index
    %c0_539 = arith.constant 0 : index
    %595 = vector.load %arg12[%c0_536, %c2_537, %c0_538, %c0_539] : memref<1x5x5x8xf32, #tpu.memory_space<vmem>>, vector<1x1x5x8xf32>
    %596 = vector.shape_cast %595 : vector<1x1x5x8xf32> to vector<5x8xf32>
    %597 = vector.shape_cast %586 : vector<5x8xf32> to vector<1x1x5x8xf32>
    tpu.vector_store %arg12[%c0_536, %c2_537, %c0_538, %c0_539], %597 {strides = array<i32>} : memref<1x5x5x8xf32, #tpu.memory_space<vmem>>, vector<1x1x5x8xf32>,
    %c0_540 = arith.constant 0 : index
    %c3_541 = arith.constant 3 : index
    %c0_542 = arith.constant 0 : index
    %c0_543 = arith.constant 0 : index
    %598 = vector.load %arg12[%c0_540, %c3_541, %c0_542, %c0_543] : memref<1x5x5x8xf32, #tpu.memory_space<vmem>>, vector<1x1x5x8xf32>
    %599 = vector.shape_cast %598 : vector<1x1x5x8xf32> to vector<5x8xf32>
    %600 = vector.shape_cast %587 : vector<5x8xf32> to vector<1x1x5x8xf32>
    tpu.vector_store %arg12[%c0_540, %c3_541, %c0_542, %c0_543], %600 {strides = array<i32>} : memref<1x5x5x8xf32, #tpu.memory_space<vmem>>, vector<1x1x5x8xf32>,
    %c0_544 = arith.constant 0 : index
    %c4_545 = arith.constant 4 : index
    %c0_546 = arith.constant 0 : index
    %c0_547 = arith.constant 0 : index
    %601 = vector.load %arg12[%c0_544, %c4_545, %c0_546, %c0_547] : memref<1x5x5x8xf32, #tpu.memory_space<vmem>>, vector<1x1x5x8xf32>
    %602 = vector.shape_cast %601 : vector<1x1x5x8xf32> to vector<5x8xf32>
    %603 = vector.shape_cast %588 : vector<5x8xf32> to vector<1x1x5x8xf32>
    tpu.vector_store %arg12[%c0_544, %c4_545, %c0_546, %c0_547], %603 {strides = array<i32>} : memref<1x5x5x8xf32, #tpu.memory_space<vmem>>, vector<1x1x5x8xf32>,
    return
  }
  func.func @transform_0(%arg0: i32) -> (i32, i32, i32, i32) {
    %c0_i32 = arith.constant 0 : i32
    %c0_i32_0 = arith.constant 0 : i32
    %c0_i32_1 = arith.constant 0 : i32
    %c0_i32_2 = arith.constant 0 : i32
    return %arg0, %c0_i32, %c0_i32_0, %c0_i32_1 : i32, i32, i32, i32
  }
  func.func @transform_1(%arg0: i32) -> (i32, i32, i32) {
    %c0_i32 = arith.constant 0 : i32
    %c0_i32_0 = arith.constant 0 : i32
    %c0_i32_1 = arith.constant 0 : i32
    %c0_i32_2 = arith.constant 0 : i32
    return %c0_i32, %c0_i32_0, %c0_i32_1 : i32, i32, i32
  }
  func.func @transform_2(%arg0: i32) -> (i32, i32, i32) {
    %c0_i32 = arith.constant 0 : i32
    %c0_i32_0 = arith.constant 0 : i32
    %c0_i32_1 = arith.constant 0 : i32
    %c0_i32_2 = arith.constant 0 : i32
    return %c0_i32, %c0_i32_0, %c0_i32_1 : i32, i32, i32
  }
  func.func @transform_3(%arg0: i32) -> (i32, i32, i32) {
    %c0_i32 = arith.constant 0 : i32
    %c0_i32_0 = arith.constant 0 : i32
    %c0_i32_1 = arith.constant 0 : i32
    %c0_i32_2 = arith.constant 0 : i32
    return %c0_i32, %c0_i32_0, %c0_i32_1 : i32, i32, i32
  }
  func.func @transform_4(%arg0: i32) -> (i32, i32, i32) {
    %c0_i32 = arith.constant 0 : i32
    %c0_i32_0 = arith.constant 0 : i32
    %c0_i32_1 = arith.constant 0 : i32
    %c0_i32_2 = arith.constant 0 : i32
    return %c0_i32, %c0_i32_0, %c0_i32_1 : i32, i32, i32
  }
  func.func @transform_5(%arg0: i32) -> (i32, i32, i32) {
    %c0_i32 = arith.constant 0 : i32
    %c0_i32_0 = arith.constant 0 : i32
    %c0_i32_1 = arith.constant 0 : i32
    %c0_i32_2 = arith.constant 0 : i32
    return %c0_i32, %c0_i32_0, %c0_i32_1 : i32, i32, i32
  }
  func.func @transform_6(%arg0: i32) -> (i32, i32) {
    %c0_i32 = arith.constant 0 : i32
    %c0_i32_0 = arith.constant 0 : i32
    %c0_i32_1 = arith.constant 0 : i32
    return %c0_i32, %c0_i32_0 : i32, i32
  }
  func.func @transform_7(%arg0: i32) -> (i32, i32) {
    %c0_i32 = arith.constant 0 : i32
    %c0_i32_0 = arith.constant 0 : i32
    %c0_i32_1 = arith.constant 0 : i32
    return %c0_i32, %c0_i32_0 : i32, i32
  }
  func.func @transform_8(%arg0: i32) -> (i32, i32) {
    %c0_i32 = arith.constant 0 : i32
    %c0_i32_0 = arith.constant 0 : i32
    %c0_i32_1 = arith.constant 0 : i32
    return %c0_i32, %c0_i32_0 : i32, i32
  }
  func.func @transform_9(%arg0: i32) -> (i32, i32) {
    %c0_i32 = arith.constant 0 : i32
    %c0_i32_0 = arith.constant 0 : i32
    %c0_i32_1 = arith.constant 0 : i32
    return %c0_i32, %c0_i32_0 : i32, i32
  }
  func.func @transform_10(%arg0: i32) -> (i32, i32) {
    %c0_i32 = arith.constant 0 : i32
    %c0_i32_0 = arith.constant 0 : i32
    %c0_i32_1 = arith.constant 0 : i32
    return %c0_i32, %c0_i32_0 : i32, i32
  }
  func.func @transform_11(%arg0: i32) -> (i32, i32, i32, i32) {
    %c0_i32 = arith.constant 0 : i32
    %c0_i32_0 = arith.constant 0 : i32
    %c0_i32_1 = arith.constant 0 : i32
    %c0_i32_2 = arith.constant 0 : i32
    return %arg0, %c0_i32, %c0_i32_0, %c0_i32_1 : i32, i32, i32, i32
  }
}

</mosaic_0001>

<llo_original>
// kernel: patchgan_forward_pallas.1
$region0: #{patchgan_forward_pallas.1}
  #allocation0 [shape = 'u32[]', space=smem, size = 0x4, offset = 0x4, fixed_abs, tag = 'smem constant byte address 0x4 - core index']
  #allocation1 [shape = 'u32[144,128]{1,0:T(1,128)}', space=vmem, size = 0x12000, scoped, tag = 'internal scratch']
  #allocation2 [shape = 'f32[100,64]{1,0:T(8,128)}', space=vmem, size = 0xd000, scoped, tag = 'scratch operand']
  #allocation3 [shape = 'f32[36,64]{1,0:T(8,128)}', space=vmem, size = 0x5000, scoped, tag = 'scratch operand']
  #allocation4 [shape = 'f32[16,128]{1,0:T(8,128)}', space=vmem, size = 0x2000, scoped, tag = 'scratch operand']
  #allocation5 [shape = 'f32[49,64]{1,0:T(8,128)}', space=vmem, size = 0x7000, scoped, tag = 'scratch operand']
  #allocation6 [shape = 'f32[64,128]{1,0:T(8,128)}', space=vmem, size = 0x8000, scoped, tag = 'scratch operand']
  %s0 = inlined_call_operand.vmem [shape: f32[2,16,16,16], index: 0, kind: input, shape index: {}]
  %s1 = inlined_call_operand.hbm [shape: bf16[4,64,16], index: 1, kind: input, shape index: {}]
  %s2 = inlined_call_operand.vmem [shape: bf16[4,64,32], index: 2, kind: input, shape index: {}]
  %s3 = inlined_call_operand.hbm [shape: bf16[4,128,64], index: 3, kind: input, shape index: {}]
  %s4 = inlined_call_operand.vmem [shape: bf16[16,64,128], index: 4, kind: input, shape index: {}]
  %s5 = inlined_call_operand.vmem [shape: bf16[16,128,8], index: 5, kind: input, shape index: {}]
  %s6 = inlined_call_operand.vmem [shape: f32[1,16], index: 6, kind: input, shape index: {}]
  %s7 = inlined_call_operand.vmem [shape: f32[1,32], index: 7, kind: input, shape index: {}]
  %s8 = inlined_call_operand.vmem [shape: f32[1,64], index: 8, kind: input, shape index: {}]
  %s9 = inlined_call_operand.vmem [shape: f32[1,128], index: 9, kind: input, shape index: {}]
  %s10 = inlined_call_operand.vmem [shape: f32[1,8], index: 10, kind: input, shape index: {}]
  %s11 = inlined_call_operand.vmem [shape: f32[2,5,5,8], index: 11, kind: output, shape index: {}]
  %s12 = sld [smem:[#allocation0]]
  $region85: #{patchgan_forward_pallas.1} parent=0
    _
  %s14 = ssub.s32 1, %s12
  %s15 = scalar_select 0, %s14, %s12
  $region1: #{patchgan_forward_pallas.1} parent=0
    #allocation7 [shape = 'u8[65536]{0}', space=vmem, size = 0x10000, scoped, tag = 'input window, operand 1, single buffered']
    #allocation8 [shape = 's32[2]{0}', space=sflag, size = 0x8, scoped, tag = 'scoped memory for patchgan_forward_pallas.1']
    #allocation9 [shape = 'u8[131072]{0}', space=vmem, size = 0x20000, scoped, tag = 'input window, operand 3, single buffered']
    #allocation10 [shape = 's32[1]{0}', space=sflag, size = 0x4, scoped, tag = 'scoped memory for patchgan_forward_pallas.1']
    %16 = vsyncpa [#allocation8], 0
    %17 = vsyncpa [#allocation10], 0
    loop: start=0, step=1, limit=4
    $region2: #{patchgan_forward_pallas.1} parent=1 // loop_pre_header
      _
    $region3: #{patchgan_forward_pallas.1} parent=1 // loop_header
      %s19 = sphi 0, %s23
      %p20 = scmp.ge.s32.totalorder %s19, 4
      %s29 = sphi 0, %s31
      %s32 = sphi 0, %s29
      %s33 = sphi 0, %s32
      %s49 = sphi 0, %s33
      %s53 = sphi 0, %s53
      %s55 = sphi 0, %s53
      %s56 = sphi 0, %s55
      %s70 = sphi 0, %s56
      %s74 = sphi 0, %s74
      %s76 = sphi 0, %s74
      %s77 = sphi 0, %s76
      %s91 = sphi 0, %s77
      %s95 = sphi 0, %s95
      %s97 = sphi 0, %s95
      %s98 = sphi 0, %s97
      %s112 = sphi 0, %s98
      %s116 = sphi 0, %s116
      %s118 = sphi 0, %s116
      %s119 = sphi 0, %s118
      %s133 = sphi 0, %s119
      %s137 = sphi 0, %s137
      %s139 = sphi 0, %s137
      %s140 = sphi 0, %s139
      %s154 = sphi 0, %s140
      %s158 = sphi 0, %s158
      %s160 = sphi 0, %s158
      %s161 = sphi 0, %s160
      %s175 = sphi 0, %s161
      %s179 = sphi 0, %s179
      %s181 = sphi 0, %s179
      %s182 = sphi 0, %s181
      %s196 = sphi 0, %s182
      %s200 = sphi 0, %s200
      %s202 = sphi 0, %s200
      %s203 = sphi 0, %s202
      %s217 = sphi 0, %s203
      %s221 = sphi 0, %s221
      %s223 = sphi 0, %s221
      %s224 = sphi 0, %s223
      %s238 = sphi 0, %s224
      %s242 = sphi 0, %s242
      %s244 = sphi 0, %s242
      %s245 = sphi 0, %s244
      %s259 = sphi 0, %s245
      %s265 = sphi 0, %s267
      %s268 = sphi 0, %s265
      %s269 = sphi 0, %s268
      %s285 = sphi 0, %s269
    $region4: #{patchgan_forward_pallas.1} parent=1 // loop_header_branch
      %22 = sbr.rel (%p20) target = $region8
    $region5: #{patchgan_forward_pallas.1} parent=1 // loop_body
      %s24 = ssub.s32 %s19, 1
      %s25 = ssub.s32 %s19, 2
      %s26 = sadd.s32 %s19, 1
      %s27 = ssub.s32 %s19, %s26
      %p28 = scmp.eq.s32.totalorder %s27, 0
      %s30 = sadd.s32 %s29, 1
      %s31 = scalar_select %p28, %s29, %s30
      %p34 = pneg %p28
      %p35 = scmp.eq.s32.totalorder %s19, 1
      %p36 = por %p34, %p35
      %p37 = scmp.ne.s32.totalorder %s29, %s32
      %p38 = scmp.eq.s32.totalorder %s19, 0
      %p39 = por %p37, %p38
      %p40 = scmp.ne.s32.totalorder %s29, %s32
      %p41 = scmp.eq.s32.totalorder %s24, 1
      %p42 = por %p40, %p41
      %p43 = scmp.ne.s32.totalorder %s32, %s33
      %p44 = scmp.eq.s32.totalorder %s24, 0
      %p45 = por %p43, %p44
      %p46 = scmp.ne.s32.totalorder %s32, %s33
      %p47 = scmp.eq.s32.totalorder %s25, 1
      %p48 = por %p46, %p47
      %p50 = scmp.ne.s32.totalorder %s33, %s49
      %p51 = scmp.eq.s32.totalorder %s25, 0
      %p52 = por %p50, %p51
      %s54 = sadd.s32 %s53, 1
      %p57 = scmp.eq.s32.totalorder %s19, 1
      %p58 = scmp.ne.s32.totalorder %s53, %s55
      %p59 = scmp.eq.s32.totalorder %s19, 0
      %p60 = por %p58, %p59
      %p61 = scmp.ne.s32.totalorder %s53, %s55
      %p62 = scmp.eq.s32.totalorder %s24, 1
      %p63 = por %p61, %p62
      %p64 = scmp.ne.s32.totalorder %s55, %s56
      %p65 = scmp.eq.s32.totalorder %s24, 0
      %p66 = por %p64, %p65
      %p67 = scmp.ne.s32.totalorder %s55, %s56
      %p68 = scmp.eq.s32.totalorder %s25, 1
      %p69 = por %p67, %p68
      %p71 = scmp.ne.s32.totalorder %s56, %s70
      %p72 = scmp.eq.s32.totalorder %s25, 0
      %p73 = por %p71, %p72
      %s75 = sadd.s32 %s74, 1
      %p78 = scmp.eq.s32.totalorder %s19, 1
      %p79 = scmp.ne.s32.totalorder %s74, %s76
      %p80 = scmp.eq.s32.totalorder %s19, 0
      %p81 = por %p79, %p80
      %p82 = scmp.ne.s32.totalorder %s74, %s76
      %p83 = scmp.eq.s32.totalorder %s24, 1
      %p84 = por %p82, %p83
      %p85 = scmp.ne.s32.totalorder %s76, %s77
      %p86 = scmp.eq.s32.totalorder %s24, 0
      %p87 = por %p85, %p86
      %p88 = scmp.ne.s32.totalorder %s76, %s77
      %p89 = scmp.eq.s32.totalorder %s25, 1
      %p90 = por %p88, %p89
      %p92 = scmp.ne.s32.totalorder %s77, %s91
      %p93 = scmp.eq.s32.totalorder %s25, 0
      %p94 = por %p92, %p93
      %s96 = sadd.s32 %s95, 1
      %p99 = scmp.eq.s32.totalorder %s19, 1
      %p100 = scmp.ne.s32.totalorder %s95, %s97
      %p101 = scmp.eq.s32.totalorder %s19, 0
      %p102 = por %p100, %p101
      %p103 = scmp.ne.s32.totalorder %s95, %s97
      %p104 = scmp.eq.s32.totalorder %s24, 1
      %p105 = por %p103, %p104
      %p106 = scmp.ne.s32.totalorder %s97, %s98
      %p107 = scmp.eq.s32.totalorder %s24, 0
      %p108 = por %p106, %p107
      %p109 = scmp.ne.s32.totalorder %s97, %s98
      %p110 = scmp.eq.s32.totalorder %s25, 1
      %p111 = por %p109, %p110
      %p113 = scmp.ne.s32.totalorder %s98, %s112
      %p114 = scmp.eq.s32.totalorder %s25, 0
      %p115 = por %p113, %p114
      %s117 = sadd.s32 %s116, 1
      %p120 = scmp.eq.s32.totalorder %s19, 1
      %p121 = scmp.ne.s32.totalorder %s116, %s118
      %p122 = scmp.eq.s32.totalorder %s19, 0
      %p123 = por %p121, %p122
      %p124 = scmp.ne.s32.totalorder %s116, %s118
      %p125 = scmp.eq.s32.totalorder %s24, 1
      %p126 = por %p124, %p125
      %p127 = scmp.ne.s32.totalorder %s118, %s119
      %p128 = scmp.eq.s32.totalorder %s24, 0
      %p129 = por %p127, %p128
      %p130 = scmp.ne.s32.totalorder %s118, %s119
      %p131 = scmp.eq.s32.totalorder %s25, 1
      %p132 = por %p130, %p131
      %p134 = scmp.ne.s32.totalorder %s119, %s133
      %p135 = scmp.eq.s32.totalorder %s25, 0
      %p136 = por %p134, %p135
      %s138 = sadd.s32 %s137, 1
      %p141 = scmp.eq.s32.totalorder %s19, 1
      %p142 = scmp.ne.s32.totalorder %s137, %s139
      %p143 = scmp.eq.s32.totalorder %s19, 0
      %p144 = por %p142, %p143
      %p145 = scmp.ne.s32.totalorder %s137, %s139
      %p146 = scmp.eq.s32.totalorder %s24, 1
      %p147 = por %p145, %p146
      %p148 = scmp.ne.s32.totalorder %s139, %s140
      %p149 = scmp.eq.s32.totalorder %s24, 0
      %p150 = por %p148, %p149
      %p151 = scmp.ne.s32.totalorder %s139, %s140
      %p152 = scmp.eq.s32.totalorder %s25, 1
      %p153 = por %p151, %p152
      %p155 = scmp.ne.s32.totalorder %s140, %s154
      %p156 = scmp.eq.s32.totalorder %s25, 0
      %p157 = por %p155, %p156
      %s159 = sadd.s32 %s158, 1
      %p162 = scmp.eq.s32.totalorder %s19, 1
      %p163 = scmp.ne.s32.totalorder %s158, %s160
      %p164 = scmp.eq.s32.totalorder %s19, 0
      %p165 = por %p163, %p164
      %p166 = scmp.ne.s32.totalorder %s158, %s160
      %p167 = scmp.eq.s32.totalorder %s24, 1
      %p168 = por %p166, %p167
      %p169 = scmp.ne.s32.totalorder %s160, %s161
      %p170 = scmp.eq.s32.totalorder %s24, 0
      %p171 = por %p169, %p170
      %p172 = scmp.ne.s32.totalorder %s160, %s161
      %p173 = scmp.eq.s32.totalorder %s25, 1
      %p174 = por %p172, %p173
      %p176 = scmp.ne.s32.totalorder %s161, %s175
      %p177 = scmp.eq.s32.totalorder %s25, 0
      %p178 = por %p176, %p177
      %s180 = sadd.s32 %s179, 1
      %p183 = scmp.eq.s32.totalorder %s19, 1
      %p184 = scmp.ne.s32.totalorder %s179, %s181
      %p185 = scmp.eq.s32.totalorder %s19, 0
      %p186 = por %p184, %p185
      %p187 = scmp.ne.s32.totalorder %s179, %s181
      %p188 = scmp.eq.s32.totalorder %s24, 1
      %p189 = por %p187, %p188
      %p190 = scmp.ne.s32.totalorder %s181, %s182
      %p191 = scmp.eq.s32.totalorder %s24, 0
      %p192 = por %p190, %p191
      %p193 = scmp.ne.s32.totalorder %s181, %s182
      %p194 = scmp.eq.s32.totalorder %s25, 1
      %p195 = por %p193, %p194
      %p197 = scmp.ne.s32.totalorder %s182, %s196
      %p198 = scmp.eq.s32.totalorder %s25, 0
      %p199 = por %p197, %p198
      %s201 = sadd.s32 %s200, 1
      %p204 = scmp.eq.s32.totalorder %s19, 1
      %p205 = scmp.ne.s32.totalorder %s200, %s202
      %p206 = scmp.eq.s32.totalorder %s19, 0
      %p207 = por %p205, %p206
      %p208 = scmp.ne.s32.totalorder %s200, %s202
      %p209 = scmp.eq.s32.totalorder %s24, 1
      %p210 = por %p208, %p209
      %p211 = scmp.ne.s32.totalorder %s202, %s203
      %p212 = scmp.eq.s32.totalorder %s24, 0
      %p213 = por %p211, %p212
      %p214 = scmp.ne.s32.totalorder %s202, %s203
      %p215 = scmp.eq.s32.totalorder %s25, 1
      %p216 = por %p214, %p215
      %p218 = scmp.ne.s32.totalorder %s203, %s217
      %p219 = scmp.eq.s32.totalorder %s25, 0
      %p220 = por %p218, %p219
      %s222 = sadd.s32 %s221, 1
      %p225 = scmp.eq.s32.totalorder %s19, 1
      %p226 = scmp.ne.s32.totalorder %s221, %s223
      %p227 = scmp.eq.s32.totalorder %s19, 0
      %p228 = por %p226, %p227
      %p229 = scmp.ne.s32.totalorder %s221, %s223
      %p230 = scmp.eq.s32.totalorder %s24, 1
      %p231 = por %p229, %p230
      %p232 = scmp.ne.s32.totalorder %s223, %s224
      %p233 = scmp.eq.s32.totalorder %s24, 0
      %p234 = por %p232, %p233
      %p235 = scmp.ne.s32.totalorder %s223, %s224
      %p236 = scmp.eq.s32.totalorder %s25, 1
      %p237 = por %p235, %p236
      %p239 = scmp.ne.s32.totalorder %s224, %s238
      %p240 = scmp.eq.s32.totalorder %s25, 0
      %p241 = por %p239, %p240
      %s243 = sadd.s32 %s242, 1
      %p246 = scmp.eq.s32.totalorder %s19, 1
      %p247 = scmp.ne.s32.totalorder %s242, %s244
      %p248 = scmp.eq.s32.totalorder %s19, 0
      %p249 = por %p247, %p248
      %p250 = scmp.ne.s32.totalorder %s242, %s244
      %p251 = scmp.eq.s32.totalorder %s24, 1
      %p252 = por %p250, %p251
      %p253 = scmp.ne.s32.totalorder %s244, %s245
      %p254 = scmp.eq.s32.totalorder %s24, 0
      %p255 = por %p253, %p254
      %p256 = scmp.ne.s32.totalorder %s244, %s245
      %p257 = scmp.eq.s32.totalorder %s25, 1
      %p258 = por %p256, %p257
      %p260 = scmp.ne.s32.totalorder %s245, %s259
      %p261 = scmp.eq.s32.totalorder %s25, 0
      %p262 = por %p260, %p261
      %s263 = ssub.s32 %s19, %s26
      %p264 = scmp.eq.s32.totalorder %s263, 0
      %s266 = sadd.s32 %s265, 1
      %s267 = scalar_select %p264, %s265, %s266
      %p270 = pneg %p264
      %p271 = scmp.eq.s32.totalorder %s19, 1
      %p272 = por %p270, %p271
      %p273 = scmp.ne.s32.totalorder %s265, %s268
      %p274 = scmp.eq.s32.totalorder %s19, 0
      %p275 = por %p273, %p274
      %p276 = scmp.ne.s32.totalorder %s265, %s268
      %p277 = scmp.eq.s32.totalorder %s24, 1
      %p278 = por %p276, %p277
      %p279 = scmp.ne.s32.totalorder %s268, %s269
      %p280 = scmp.eq.s32.totalorder %s24, 0
      %p281 = por %p279, %p280
      %p282 = scmp.ne.s32.totalorder %s268, %s269
      %p283 = scmp.eq.s32.totalorder %s25, 1
      %p284 = por %p282, %p283
      %p286 = scmp.ne.s32.totalorder %s269, %s285
      %p287 = scmp.eq.s32.totalorder %s25, 0
      %p288 = por %p286, %p287
      %p289 = scmp.le.s32.totalorder 1, %s19
      %p290 = scmp.lt.s32.totalorder %s19, 3
      %p291 = pnand %p289, %p290
      %p292 = pneg %p291
      // Predicated region
      $region9: #{patchgan_forward_pallas.1} parent=5 // pred_check
        _
      $region10: #{patchgan_forward_pallas.1} parent=5 // pred_check_branch
        %294 = sbr.rel (%p291) target = $region12
      $region11: #{patchgan_forward_pallas.1} parent=5 // pred_region
        %s295 = ssub.s32 %s19, 1
        // Predicated region
        $region13: #{patchgan_forward_pallas.1} parent=11 // pred_check
          %p296 = pneg %p66
        $region14: #{patchgan_forward_pallas.1} parent=11 // pred_check_branch
          %298 = sbr.rel (%p296) target = $region16
        $region15: #{patchgan_forward_pallas.1} parent=11 // pred_region
          %s300 = ssub.s32 2048, 2048
          %301 = vsyncadd [#allocation8], %s300
          %s302 = sshll.u32 [#allocation7], 4
          %s303 = int_to_ptr.vmem [resolvable:$true] %s302
          %308 = dma.hbm_to_vmem [thread:$0]  %s1, 2048, %s303, [#allocation8], 64, 64, 4
        $region16: #{patchgan_forward_pallas.1} parent=11 // pred_fallthru
          _
        // Predicated region
        $region17: #{patchgan_forward_pallas.1} parent=11 // pred_check
          %p309 = pneg %p87
        $region18: #{patchgan_forward_pallas.1} parent=11 // pred_check_branch
          %311 = sbr.rel (%p309) target = $region20
        $region19: #{patchgan_forward_pallas.1} parent=11 // pred_region
          _
        $region20: #{patchgan_forward_pallas.1} parent=11 // pred_fallthru
          _
        // Predicated region
        $region21: #{patchgan_forward_pallas.1} parent=11 // pred_check
          %p312 = pneg %p108
        $region22: #{patchgan_forward_pallas.1} parent=11 // pred_check_branch
          %314 = sbr.rel (%p312) target = $region24
        $region23: #{patchgan_forward_pallas.1} parent=11 // pred_region
          %s316 = ssub.s32 4096, 4096
          %317 = vsyncadd [#allocation10], %s316
          %s318 = sshll.u32 [#allocation9], 4
          %s319 = int_to_ptr.vmem [resolvable:$true] %s318
          %324 = dma.hbm_to_vmem [thread:$0]  %s3, 4096, %s319, [#allocation10], 64, 64, 4
        $region24: #{patchgan_forward_pallas.1} parent=11 // pred_fallthru
          _
        // Predicated region
        $region25: #{patchgan_forward_pallas.1} parent=11 // pred_check
          %p325 = pneg %p129
        $region26: #{patchgan_forward_pallas.1} parent=11 // pred_check_branch
          %327 = sbr.rel (%p325) target = $region28
        $region27: #{patchgan_forward_pallas.1} parent=11 // pred_region
          _
        $region28: #{patchgan_forward_pallas.1} parent=11 // pred_fallthru
          _
        // Predicated region
        $region29: #{patchgan_forward_pallas.1} parent=11 // pred_check
          %p328 = pneg %p150
        $region30: #{patchgan_forward_pallas.1} parent=11 // pred_check_branch
          %330 = sbr.rel (%p328) target = $region32
        $region31: #{patchgan_forward_pallas.1} parent=11 // pred_region
          _
        $region32: #{patchgan_forward_pallas.1} parent=11 // pred_fallthru
          _
        // Predicated region
        $region33: #{patchgan_forward_pallas.1} parent=11 // pred_check
          %p331 = pneg %p171
        $region34: #{patchgan_forward_pallas.1} parent=11 // pred_check_branch
          %333 = sbr.rel (%p331) target = $region36
        $region35: #{patchgan_forward_pallas.1} parent=11 // pred_region
          _
        $region36: #{patchgan_forward_pallas.1} parent=11 // pred_fallthru
          _
        // Predicated region
        $region37: #{patchgan_forward_pallas.1} parent=11 // pred_check
          %p334 = pneg %p192
        $region38: #{patchgan_forward_pallas.1} parent=11 // pred_check_branch
          %336 = sbr.rel (%p334) target = $region40
        $region39: #{patchgan_forward_pallas.1} parent=11 // pred_region
          _
        $region40: #{patchgan_forward_pallas.1} parent=11 // pred_fallthru
          _
        // Predicated region
        $region41: #{patchgan_forward_pallas.1} parent=11 // pred_check
          %p337 = pneg %p213
        $region42: #{patchgan_forward_pallas.1} parent=11 // pred_check_branch
          %339 = sbr.rel (%p337) target = $region44
        $region43: #{patchgan_forward_pallas.1} parent=11 // pred_region
          _
        $region44: #{patchgan_forward_pallas.1} parent=11 // pred_fallthru
          _
        // Predicated region
        $region45: #{patchgan_forward_pallas.1} parent=11 // pred_check
          %p340 = pneg %p234
        $region46: #{patchgan_forward_pallas.1} parent=11 // pred_check_branch
          %342 = sbr.rel (%p340) target = $region48
        $region47: #{patchgan_forward_pallas.1} parent=11 // pred_region
          _
        $region48: #{patchgan_forward_pallas.1} parent=11 // pred_fallthru
          _
        // Predicated region
        $region49: #{patchgan_forward_pallas.1} parent=11 // pred_check
          %p343 = pneg %p255
        $region50: #{patchgan_forward_pallas.1} parent=11 // pred_check_branch
          %345 = sbr.rel (%p343) target = $region52
        $region51: #{patchgan_forward_pallas.1} parent=11 // pred_region
          _
        $region52: #{patchgan_forward_pallas.1} parent=11 // pred_fallthru
          _
      $region12: #{patchgan_forward_pallas.1} parent=5 // pred_fallthru
        _
      %p346 = scmp.lt.s32.totalorder %s19, 2
      // Predicated region
      $region53: #{patchgan_forward_pallas.1} parent=5 // pred_check
        %p347 = pneg %p346
      $region54: #{patchgan_forward_pallas.1} parent=5 // pred_check_branch
        %349 = sbr.rel (%p347) target = $region56
      $region55: #{patchgan_forward_pallas.1} parent=5 // pred_region
        // Predicated region
        $region57: #{patchgan_forward_pallas.1} parent=55 // pred_check
          %p350 = pneg %p39
        $region58: #{patchgan_forward_pallas.1} parent=55 // pred_check_branch
          %352 = sbr.rel (%p350) target = $region60
        $region59: #{patchgan_forward_pallas.1} parent=55 // pred_region
          %p353 = scmp.lt.s32.totalorder %s19, 1
          %s354 = scalar_select %p353, %s19, 1
          %s355 = smul.addr %s354, 32
          %s356 = smul.addr %s355, 8
          %s357 = scalar_lea.vmem %s0, %s356
        $region60: #{patchgan_forward_pallas.1} parent=55 // pred_fallthru
          _
      $region56: #{patchgan_forward_pallas.1} parent=5 // pred_fallthru
        _
      %p358 = scmp.le.s32.totalorder 1, %s19
      %p359 = scmp.lt.s32.totalorder %s19, 3
      %p360 = pnand %p358, %p359
      %p361 = pneg %p360
      // Predicated region
      $region61: #{patchgan_forward_pallas.1} parent=5 // pred_check
        _
      $region62: #{patchgan_forward_pallas.1} parent=5 // pred_check_branch
        %363 = sbr.rel (%p360) target = $region64
      $region63: #{patchgan_forward_pallas.1} parent=5 // pred_region
        %s364 = ssub.s32 %s19, 1
        // Predicated region
        $region65: #{patchgan_forward_pallas.1} parent=63 // pred_check
          %p365 = pneg %p66
        $region66: #{patchgan_forward_pallas.1} parent=63 // pred_check_branch
          %367 = sbr.rel (%p365) target = $region68
        $region67: #{patchgan_forward_pallas.1} parent=63 // pred_region
          %368 = dma.done [#allocation8], 2048
        $region68: #{patchgan_forward_pallas.1} parent=63 // pred_fallthru
          _
        // Predicated region
        $region69: #{patchgan_forward_pallas.1} parent=63 // pred_check
          %p369 = pneg %p108
        $region70: #{patchgan_forward_pallas.1} parent=63 // pred_check_branch
          %371 = sbr.rel (%p369) target = $region72
        $region71: #{patchgan_forward_pallas.1} parent=63 // pred_region
          %372 = dma.done [#allocation10], 4096
        $region72: #{patchgan_forward_pallas.1} parent=63 // pred_fallthru
          _
        %p373 = scmp.lt.s32.totalorder %s24, 1
        %s374 = scalar_select %p373, %s24, 1
        %s375 = smul.addr %s374, 32
        %s376 = smul.addr %s375, 8
        %s377 = scalar_lea.vmem %s0, %s376
        %p378 = pneg %p45
        %p379 = pneg %p42
        %p380 = pneg %p66
        %p381 = pneg %p63
        %p382 = pneg %p87
        %p383 = pneg %p84
        %p384 = pneg %p108
        %p385 = pneg %p105
        %p386 = pneg %p129
        %p387 = pneg %p126
        %p388 = pneg %p150
        %p389 = pneg %p147
        %p390 = pneg %p171
        %p391 = pneg %p168
        %p392 = pneg %p192
        %p393 = pneg %p189
        %p394 = pneg %p213
        %p395 = pneg %p210
        %p396 = pneg %p234
        %p397 = pneg %p231
        %p398 = pneg %p255
        %p399 = pneg %p252
        %p400 = pneg %p281
        %p401 = pneg %p278
        %p402 = scmp.lt.s32.totalorder %s24, 1
        %s403 = scalar_select %p402, %s24, 1
        %s404 = smul.addr %s403, 5
        %s405 = smul.addr %s404, 8
        %s406 = scalar_lea.vmem %s11, %s405
        %p407 = scmp.lt.s32.totalorder %s24, 1
        %s408 = scalar_select %p407, %s24, 1
        %s409 = smul.addr %s408, 32
        %s410 = smul.addr %s409, 8
        %s411 = scalar_lea.vmem %s0, %s410
        %p412 = scmp.lt.s32.totalorder %s24, 1
        %s413 = scalar_select %p412, %s24, 1
        %s414 = smul.addr %s413, 5
        %s415 = smul.addr %s414, 8
        %s416 = scalar_lea.vmem %s11, %s415
        %vm418 = vcmask 523264
        %419 = vst.msk [vmem:[#allocation2] sm:$0xff] %vm418, 0.0
        %420 = vst.msk [vmem:[#allocation2 + $0x8] sm:$0xff] %vm418, 0.0
        %421 = vst.msk [vmem:[#allocation2 + $0x10] sm:$0xff] %vm418, 0.0
        %422 = vst.msk [vmem:[#allocation2 + $0x18] sm:$0xff] %vm418, 0.0
        %423 = vst.msk [vmem:[#allocation2 + $0x20] sm:$0xff] %vm418, 0.0
        %424 = vst.msk [vmem:[#allocation2 + $0x28] sm:$0xff] %vm418, 0.0
        %425 = vst.msk [vmem:[#allocation2 + $0x30] sm:$0xff] %vm418, 0.0
        %426 = vst.msk [vmem:[#allocation2 + $0x38] sm:$0xff] %vm418, 0.0
        %427 = vst.msk [vmem:[#allocation2 + $0x40] sm:$0xff] %vm418, 0.0
        %428 = vst.msk [vmem:[#allocation2 + $0x48] sm:$0xff] %vm418, 0.0
        %429 = vst.msk [vmem:[#allocation2 + $0x50] sm:$0xff] %vm418, 0.0
        %430 = vst.msk [vmem:[#allocation2 + $0x58] sm:$0xff] %vm418, 0.0
        %vm431 = vcmask 519168
        %432 = vst.msk [vmem:[#allocation2 + $0x60] sm:$0xf] %vm431, 0.0
        %433 = vst.msk [vmem:[#allocation3] sm:$0xff] %vm418, 0.0
        %434 = vst.msk [vmem:[#allocation3 + $0x8] sm:$0xff] %vm418, 0.0
        %435 = vst.msk [vmem:[#allocation3 + $0x10] sm:$0xff] %vm418, 0.0
        %436 = vst.msk [vmem:[#allocation3 + $0x18] sm:$0xff] %vm418, 0.0
        %437 = vst.msk [vmem:[#allocation3 + $0x20] sm:$0xf] %vm431, 0.0
        %438 = vst [vmem:[#allocation4] sm:$0xff] 0.0
        %439 = vst [vmem:[#allocation4 + $0x8] sm:$0xff] 0.0
        %440 = vst.msk [vmem:[#allocation5] sm:$0xff] %vm418, 0.0
        %441 = vst.msk [vmem:[#allocation5 + $0x8] sm:$0xff] %vm418, 0.0
        %442 = vst.msk [vmem:[#allocation5 + $0x10] sm:$0xff] %vm418, 0.0
        %443 = vst.msk [vmem:[#allocation5 + $0x18] sm:$0xff] %vm418, 0.0
        %444 = vst.msk [vmem:[#allocation5 + $0x20] sm:$0xff] %vm418, 0.0
        %445 = vst.msk [vmem:[#allocation5 + $0x28] sm:$0xff] %vm418, 0.0
        %vm446 = vcmask 516096
        %447 = vst.msk [vmem:[#allocation5 + $0x30] sm:$0x1] %vm446, 0.0
        %448 = vst [vmem:[#allocation6] sm:$0xff] 0.0
        %449 = vst [vmem:[#allocation6 + $0x8] sm:$0xff] 0.0
        %450 = vst [vmem:[#allocation6 + $0x10] sm:$0xff] 0.0
        %451 = vst [vmem:[#allocation6 + $0x18] sm:$0xff] 0.0
        %452 = vst [vmem:[#allocation6 + $0x20] sm:$0xff] 0.0
        %453 = vst [vmem:[#allocation6 + $0x28] sm:$0xff] 0.0
        %454 = vst [vmem:[#allocation6 + $0x30] sm:$0xff] 0.0
        %455 = vst [vmem:[#allocation6 + $0x38] sm:$0xff] 0.0
        %v456 = vld [vmem:[%s411] sm:$0xff]
        %v457 = vld [vmem:[%s411 + $0x8] sm:$0xff]
        %s458 = scalar_lea.vmem %s411, 16
        %v459 = vld [vmem:[%s458] sm:$0xff]
        %v460 = vld [vmem:[%s458 + $0x8] sm:$0xff]
        %s461 = scalar_lea.vmem %s411, 32
        %v462 = vld [vmem:[%s461] sm:$0xff]
        %v463 = vld [vmem:[%s461 + $0x8] sm:$0xff]
        %s464 = scalar_lea.vmem %s411, 48
        %v465 = vld [vmem:[%s464] sm:$0xff]
        %v466 = vld [vmem:[%s464 + $0x8] sm:$0xff]
        %s467 = scalar_lea.vmem %s411, 64
        %v468 = vld [vmem:[%s467] sm:$0xff]
        %v469 = vld [vmem:[%s467 + $0x8] sm:$0xff]
        %s470 = scalar_lea.vmem %s411, 80
        %v471 = vld [vmem:[%s470] sm:$0xff]
        %v472 = vld [vmem:[%s470 + $0x8] sm:$0xff]
        %s473 = scalar_lea.vmem %s411, 96
        %v474 = vld [vmem:[%s473] sm:$0xff]
        %v475 = vld [vmem:[%s473 + $0x8] sm:$0xff]
        %s476 = scalar_lea.vmem %s411, 112
        %v477 = vld [vmem:[%s476] sm:$0xff]
        %v478 = vld [vmem:[%s476 + $0x8] sm:$0xff]
        %s479 = scalar_lea.vmem %s411, 128
        %v480 = vld [vmem:[%s479] sm:$0xff]
        %v481 = vld [vmem:[%s479 + $0x8] sm:$0xff]
        %s482 = scalar_lea.vmem %s411, 144
        %v483 = vld [vmem:[%s482] sm:$0xff]
        %v484 = vld [vmem:[%s482 + $0x8] sm:$0xff]
        %s485 = scalar_lea.vmem %s411, 160
        %v486 = vld [vmem:[%s485] sm:$0xff]
        %v487 = vld [vmem:[%s485 + $0x8] sm:$0xff]
        %s488 = scalar_lea.vmem %s411, 176
        %v489 = vld [vmem:[%s488] sm:$0xff]
        %v490 = vld [vmem:[%s488 + $0x8] sm:$0xff]
        %s491 = scalar_lea.vmem %s411, 192
        %v492 = vld [vmem:[%s491] sm:$0xff]
        %v493 = vld [vmem:[%s491 + $0x8] sm:$0xff]
        %s494 = scalar_lea.vmem %s411, 208
        %v495 = vld [vmem:[%s494] sm:$0xff]
        %v496 = vld [vmem:[%s494 + $0x8] sm:$0xff]
        %s497 = scalar_lea.vmem %s411, 224
        %v498 = vld [vmem:[%s497] sm:$0xff]
        %v499 = vld [vmem:[%s497 + $0x8] sm:$0xff]
        %s500 = scalar_lea.vmem %s411, 240
        %v501 = vld [vmem:[%s500] sm:$0xff]
        %v502 = vld [vmem:[%s500 + $0x8] sm:$0xff]
        %v503 = vlaneseq
        %v504 = vshrl.u32 %v503, 7
        %v505 = vlaneseq
        %v506 = vand.u32 %v505, 127
        %v507 = vmul.u32 %v504, 2
        %vm508 = vcmp.eq.s32.totalorder %v506, %v507
        %v509 = vsel %vm508, 1, 0
        %v510 = vcvt.s32.f32 %v509
        %v511 = vpack.c.bf16 %v510, %v510
        %v512 = vadd.s32 %v507, 1
        %vm513 = vcmp.eq.s32.totalorder %v506, %v512
        %v514 = vsel %vm513, 1, 0
        %v515 = vcvt.s32.f32 %v514
        %v516 = vpack.c.bf16 %v515, %v515
        %v517 = vpack.c.bf16 %v457, %v456
        %vm518 = vcmask 130048
        %v520 = vsel %vm518, %v511, 0
        %522 = vmatprep.subr.bf16.mxu0 0
        %523 = vmatpush1.bf16.msra.mxu0 %v517
        %524 = vmatprep.subr.bf16.mxu0 0
        %525 = vmatpush1.bf16.msra.mxu0 0
        %526 = vmatprep.subr.bf16.mxu0 0
        %527 = vmatpush1.bf16.msra.mxu0 0
        %528 = vmatprep.subr.bf16.mxu0 0
        %529 = vmatpush1.bf16.msra.mxu0 0
        %530 = vmatprep.subr.bf16.mxu0 0
        %531 = vmatpush1.bf16.msra.mxu0 0
        %532 = vmatprep.subr.bf16.mxu0 0
        %533 = vmatpush1.bf16.msra.mxu0 0
        %534 = vmatprep.subr.bf16.mxu0 0
        %535 = vmatpush1.bf16.msra.mxu0 0
        %536 = vmatprep.subr.bf16.mxu0 0
        %537 = vmatpush1.bf16.msra.mxu0 0
        %538 = vmatprep.subr.bf16.mxu0 0
        %539 = vmatpush1.bf16.msra.mxu0 0
        %540 = vmatprep.subr.bf16.mxu0 0
        %541 = vmatpush1.bf16.msra.mxu0 0
        %542 = vmatprep.subr.bf16.mxu0 0
        %543 = vmatpush1.bf16.msra.mxu0 0
        %544 = vmatprep.subr.bf16.mxu0 0
        %545 = vmatpush1.bf16.msra.mxu0 0
        %546 = vmatprep.subr.bf16.mxu0 0
        %547 = vmatpush1.bf16.msra.mxu0 0
        %548 = vmatprep.subr.bf16.mxu0 0
        %549 = vmatpush1.bf16.msra.mxu0 0
        %550 = vmatprep.subr.bf16.mxu0 0
        %551 = vmatpush1.bf16.msra.mxu0 0
        %552 = vmatprep.subr.bf16.mxu0 0
        %553 = vmatpush1.bf16.msra.mxu0 0
        %554 = vmatprep.mubr.bf16.mxu0 0
        %555 = vmatmul.mubr.bf16.gmra.mrb[0].mxu0 %v520
        %v556 = vpop.f32.mrb[0].mxu0
        %v557 = vadd.f32 0.0, %v556
        %v558 = vpop.f32.mrb[0].mxu0
        %v559 = vpop.f32.mrb[0].mxu0
        %v560 = vpop.f32.mrb[0].mxu0
        %561 = vdwg.mxu0
        %562 = vst.msk [vmem:[#allocation2 + $0xb] sm:$0xff] %vm518, %v557
        %v564 = vsel %vm518, %v516, 0
        %566 = vmatprep.subr.bf16.mxu0 0
        %567 = vmatpush1.bf16.msra.mxu0 %v517
        %568 = vmatprep.subr.bf16.mxu0 0
        %569 = vmatpush1.bf16.msra.mxu0 0
        %570 = vmatprep.subr.bf16.mxu0 0
        %571 = vmatpush1.bf16.msra.mxu0 0
        %572 = vmatprep.subr.bf16.mxu0 0
        %573 = vmatpush1.bf16.msra.mxu0 0
        %574 = vmatprep.subr.bf16.mxu0 0
        %575 = vmatpush1.bf16.msra.mxu0 0
        %576 = vmatprep.subr.bf16.mxu0 0
        %577 = vmatpush1.bf16.msra.mxu0 0
        %578 = vmatprep.subr.bf16.mxu0 0
        %579 = vmatpush1.bf16.msra.mxu0 0
        %580 = vmatprep.subr.bf16.mxu0 0
        %581 = vmatpush1.bf16.msra.mxu0 0
        %582 = vmatprep.subr.bf16.mxu0 0
        %583 = vmatpush1.bf16.msra.mxu0 0
        %584 = vmatprep.subr.bf16.mxu0 0
        %585 = vmatpush1.bf16.msra.mxu0 0
        %586 = vmatprep.subr.bf16.mxu0 0
        %587 = vmatpush1.bf16.msra.mxu0 0
        %588 = vmatprep.subr.bf16.mxu0 0
        %589 = vmatpush1.bf16.msra.mxu0 0
        %590 = vmatprep.subr.bf16.mxu0 0
        %591 = vmatpush1.bf16.msra.mxu0 0
        %592 = vmatprep.subr.bf16.mxu0 0
        %593 = vmatpush1.bf16.msra.mxu0 0
        %594 = vmatprep.subr.bf16.mxu0 0
        %595 = vmatpush1.bf16.msra.mxu0 0
        %596 = vmatprep.subr.bf16.mxu0 0
        %597 = vmatpush1.bf16.msra.mxu0 0
        %598 = vmatprep.mubr.bf16.mxu0 0
        %599 = vmatmul.mubr.bf16.gmra.mrb[0].mxu0 %v564
        %v600 = vpop.f32.mrb[0].mxu0
        %v601 = vadd.f32 0.0, %v600
        %v602 = vpop.f32.mrb[0].mxu0
        %v603 = vpop.f32.mrb[0].mxu0
        %v604 = vpop.f32.mrb[0].mxu0
        %605 = vdwg.mxu0
        %607 = vrot.lane.b32.xlu0 %v601, 16
        %v608 = vpop.permute.xlu0 %607
        %vm610 = vcmask 261248
        %611 = vst.msk [vmem:[#allocation2 + $0xb] sm:$0xff] %vm610, %v608
        %v612 = vpack.c.bf16 %v460, %v459
        %613 = vmatprep.subr.bf16.mxu0 0
        %614 = vmatpush1.bf16.msra.mxu0 %v612
        %615 = vmatprep.subr.bf16.mxu0 0
        %616 = vmatpush1.bf16.msra.mxu0 0
        %617 = vmatprep.subr.bf16.mxu0 0
        %618 = vmatpush1.bf16.msra.mxu0 0
        %619 = vmatprep.subr.bf16.mxu0 0
        %620 = vmatpush1.bf16.msra.mxu0 0
        %621 = vmatprep.subr.bf16.mxu0 0
        %622 = vmatpush1.bf16.msra.mxu0 0
        %623 = vmatprep.subr.bf16.mxu0 0
        %624 = vmatpush1.bf16.msra.mxu0 0
        %625 = vmatprep.subr.bf16.mxu0 0
        %626 = vmatpush1.bf16.msra.mxu0 0
        %627 = vmatprep.subr.bf16.mxu0 0
        %628 = vmatpush1.bf16.msra.mxu0 0
        %629 = vmatprep.subr.bf16.mxu0 0
        %630 = vmatpush1.bf16.msra.mxu0 0
        %631 = vmatprep.subr.bf16.mxu0 0
        %632 = vmatpush1.bf16.msra.mxu0 0
        %633 = vmatprep.subr.bf16.mxu0 0
        %634 = vmatpush1.bf16.msra.mxu0 0
        %635 = vmatprep.subr.bf16.mxu0 0
        %636 = vmatpush1.bf16.msra.mxu0 0
        %637 = vmatprep.subr.bf16.mxu0 0
        %638 = vmatpush1.bf16.msra.mxu0 0
        %639 = vmatprep.subr.bf16.mxu0 0
        %640 = vmatpush1.bf16.msra.mxu0 0
        %641 = vmatprep.subr.bf16.mxu0 0
        %642 = vmatpush1.bf16.msra.mxu0 0
        %643 = vmatprep.subr.bf16.mxu0 0
        %644 = vmatpush1.bf16.msra.mxu0 0
        %645 = vmatprep.mubr.bf16.mxu0 0
        %646 = vmatmul.mubr.bf16.gmra.mrb[0].mxu0 %v520
        %v647 = vpop.f32.mrb[0].mxu0
        %v648 = vadd.f32 0.0, %v647
        %v649 = vpop.f32.mrb[0].mxu0
        %v650 = vpop.f32.mrb[0].mxu0
        %v651 = vpop.f32.mrb[0].mxu0
        %652 = vdwg.mxu0
        %654 = vrot.lane.b32.xlu0 %v648, 32
        %v655 = vpop.permute.xlu0 %654
        %vm657 = vcmask 392448
        %658 = vst.msk [vmem:[#allocation2 + $0xb] sm:$0xff] %vm657, %v655
        %659 = vmatprep.subr.bf16.mxu0 0
        %660 = vmatpush1.bf16.msra.mxu0 %v612
        %661 = vmatprep.subr.bf16.mxu0 0
        %662 = vmatpush1.bf16.msra.mxu0 0
        %663 = vmatprep.subr.bf16.mxu0 0
        %664 = vmatpush1.bf16.msra.mxu0 0
        %665 = vmatprep.subr.bf16.mxu0 0
        %666 = vmatpush1.bf16.msra.mxu0 0
        %667 = vmatprep.subr.bf16.mxu0 0
        %668 = vmatpush1.bf16.msra.mxu0 0
        %669 = vmatprep.subr.bf16.mxu0 0
        %670 = vmatpush1.bf16.msra.mxu0 0
        %671 = vmatprep.subr.bf16.mxu0 0
        %672 = vmatpush1.bf16.msra.mxu0 0
        %673 = vmatprep.subr.bf16.mxu0 0
        %674 = vmatpush1.bf16.msra.mxu0 0
        %675 = vmatprep.subr.bf16.mxu0 0
        %676 = vmatpush1.bf16.msra.mxu0 0
        %677 = vmatprep.subr.bf16.mxu0 0
        %678 = vmatpush1.bf16.msra.mxu0 0
        %679 = vmatprep.subr.bf16.mxu0 0
        %680 = vmatpush1.bf16.msra.mxu0 0
        %681 = vmatprep.subr.bf16.mxu0 0
        %682 = vmatpush1.bf16.msra.mxu0 0
        %683 = vmatprep.subr.bf16.mxu0 0
        %684 = vmatpush1.bf16.msra.mxu0 0
        %685 = vmatprep.subr.bf16.mxu0 0
        %686 = vmatpush1.bf16.msra.mxu0 0
        %687 = vmatprep.subr.bf16.mxu0 0
        %688 = vmatpush1.bf16.msra.mxu0 0
        %689 = vmatprep.subr.bf16.mxu0 0
        %690 = vmatpush1.bf16.msra.mxu0 0
        %691 = vmatprep.mubr.bf16.mxu0 0
        %692 = vmatmul.mubr.bf16.gmra.mrb[0].mxu0 %v564
        %v693 = vpop.f32.mrb[0].mxu0
        %v694 = vadd.f32 0.0, %v693
        %v695 = vpop.f32.mrb[0].mxu0
        %v696 = vpop.f32.mrb[0].mxu0
        %v697 = vpop.f32.mrb[0].mxu0
        %698 = vdwg.mxu0
        %700 = vrot.lane.b32.xlu0 %v694, 48
        %v701 = vpop.permute.xlu0 %700
        %vm703 = vcmask 523648
        %704 = vst.msk [vmem:[#allocation2 + $0xb] sm:$0xff] %vm703, %v701
        %v705 = vpack.c.bf16 %v463, %v462
        %706 = vmatprep.subr.bf16.mxu0 0
        %707 = vmatpush1.bf16.msra.mxu0 %v705
        %708 = vmatprep.subr.bf16.mxu0 0
        %709 = vmatpush1.bf16.msra.mxu0 0
        %710 = vmatprep.subr.bf16.mxu0 0
        %711 = vmatpush1.bf16.msra.mxu0 0
        %712 = vmatprep.subr.bf16.mxu0 0
        %713 = vmatpush1.bf16.msra.mxu0 0
        %714 = vmatprep.subr.bf16.mxu0 0
        %715 = vmatpush1.bf16.msra.mxu0 0
        %716 = vmatprep.subr.bf16.mxu0 0
        %717 = vmatpush1.bf16.msra.mxu0 0
        %718 = vmatprep.subr.bf16.mxu0 0
        %719 = vmatpush1.bf16.msra.mxu0 0
        %720 = vmatprep.subr.bf16.mxu0 0
        %721 = vmatpush1.bf16.msra.mxu0 0
        %722 = vmatprep.subr.bf16.mxu0 0
        %723 = vmatpush1.bf16.msra.mxu0 0
        %724 = vmatprep.subr.bf16.mxu0 0
        %725 = vmatpush1.bf16.msra.mxu0 0
        %726 = vmatprep.subr.bf16.mxu0 0
        %727 = vmatpush1.bf16.msra.mxu0 0
        %728 = vmatprep.subr.bf16.mxu0 0
        %729 = vmatpush1.bf16.msra.mxu0 0
        %730 = vmatprep.subr.bf16.mxu0 0
        %731 = vmatpush1.bf16.msra.mxu0 0
        %732 = vmatprep.subr.bf16.mxu0 0
        %733 = vmatpush1.bf16.msra.mxu0 0
        %734 = vmatprep.subr.bf16.mxu0 0
        %735 = vmatpush1.bf16.msra.mxu0 0
        %736 = vmatprep.subr.bf16.mxu0 0
        %737 = vmatpush1.bf16.msra.mxu0 0
        %738 = vmatprep.mubr.bf16.mxu0 0
        %739 = vmatmul.mubr.bf16.gmra.mrb[0].mxu0 %v520
        %v740 = vpop.f32.mrb[0].mxu0
        %v741 = vadd.f32 0.0, %v740
        %v742 = vpop.f32.mrb[0].mxu0
        %v743 = vpop.f32.mrb[0].mxu0
        %v744 = vpop.f32.mrb[0].mxu0
        %745 = vdwg.mxu0
        %746 = vst.msk [vmem:[#allocation2 + $0x15] sm:$0xff] %vm518, %v741
        %747 = vmatprep.subr.bf16.mxu0 0
        %748 = vmatpush1.bf16.msra.mxu0 %v705
        %749 = vmatprep.subr.bf16.mxu0 0
        %750 = vmatpush1.bf16.msra.mxu0 0
        %751 = vmatprep.subr.bf16.mxu0 0
        %752 = vmatpush1.bf16.msra.mxu0 0
        %753 = vmatprep.subr.bf16.mxu0 0
        %754 = vmatpush1.bf16.msra.mxu0 0
        %755 = vmatprep.subr.bf16.mxu0 0
        %756 = vmatpush1.bf16.msra.mxu0 0
        %757 = vmatprep.subr.bf16.mxu0 0
        %758 = vmatpush1.bf16.msra.mxu0 0
        %759 = vmatprep.subr.bf16.mxu0 0
        %760 = vmatpush1.bf16.msra.mxu0 0
        %761 = vmatprep.subr.bf16.mxu0 0
        %762 = vmatpush1.bf16.msra.mxu0 0
        %763 = vmatprep.subr.bf16.mxu0 0
        %764 = vmatpush1.bf16.msra.mxu0 0
        %765 = vmatprep.subr.bf16.mxu0 0
        %766 = vmatpush1.bf16.msra.mxu0 0
        %767 = vmatprep.subr.bf16.mxu0 0
        %768 = vmatpush1.bf16.msra.mxu0 0
        %769 = vmatprep.subr.bf16.mxu0 0
        %770 = vmatpush1.bf16.msra.mxu0 0
        %771 = vmatprep.subr.bf16.mxu0 0
        %772 = vmatpush1.bf16.msra.mxu0 0
        %773 = vmatprep.subr.bf16.mxu0 0
        %774 = vmatpush1.bf16.msra.mxu0 0
        %775 = vmatprep.subr.bf16.mxu0 0
        %776 = vmatpush1.bf16.msra.mxu0 0
        %777 = vmatprep.subr.bf16.mxu0 0
        %778 = vmatpush1.bf16.msra.mxu0 0
        %779 = vmatprep.mubr.bf16.mxu0 0
        %780 = vmatmul.mubr.bf16.gmra.mrb[0].mxu0 %v564
        %v781 = vpop.f32.mrb[0].mxu0
        %v782 = vadd.f32 0.0, %v781
        %v783 = vpop.f32.mrb[0].mxu0
        %v784 = vpop.f32.mrb[0].mxu0
        %v785 = vpop.f32.mrb[0].mxu0
        %786 = vdwg.mxu0
        %788 = vrot.lane.b32.xlu0 %v782, 16
        %v789 = vpop.permute.xlu0 %788
        %791 = vst.msk [vmem:[#allocation2 + $0x15] sm:$0xff] %vm610, %v789
        %v792 = vpack.c.bf16 %v466, %v465
        %793 = vmatprep.subr.bf16.mxu0 0
        %794 = vmatpush1.bf16.msra.mxu0 %v792
        %795 = vmatprep.subr.bf16.mxu0 0
        %796 = vmatpush1.bf16.msra.mxu0 0
        %797 = vmatprep.subr.bf16.mxu0 0
        %798 = vmatpush1.bf16.msra.mxu0 0
        %799 = vmatprep.subr.bf16.mxu0 0
        %800 = vmatpush1.bf16.msra.mxu0 0
        %801 = vmatprep.subr.bf16.mxu0 0
        %802 = vmatpush1.bf16.msra.mxu0 0
        %803 = vmatprep.subr.bf16.mxu0 0
        %804 = vmatpush1.bf16.msra.mxu0 0
        %805 = vmatprep.subr.bf16.mxu0 0
        %806 = vmatpush1.bf16.msra.mxu0 0
        %807 = vmatprep.subr.bf16.mxu0 0
        %808 = vmatpush1.bf16.msra.mxu0 0
        %809 = vmatprep.subr.bf16.mxu0 0
        %810 = vmatpush1.bf16.msra.mxu0 0
        %811 = vmatprep.subr.bf16.mxu0 0
        %812 = vmatpush1.bf16.msra.mxu0 0
        %813 = vmatprep.subr.bf16.mxu0 0
        %814 = vmatpush1.bf16.msra.mxu0 0
        %815 = vmatprep.subr.bf16.mxu0 0
        %816 = vmatpush1.bf16.msra.mxu0 0
        %817 = vmatprep.subr.bf16.mxu0 0
        %818 = vmatpush1.bf16.msra.mxu0 0
        %819 = vmatprep.subr.bf16.mxu0 0
        %820 = vmatpush1.bf16.msra.mxu0 0
        %821 = vmatprep.subr.bf16.mxu0 0
        %822 = vmatpush1.bf16.msra.mxu0 0
        %823 = vmatprep.subr.bf16.mxu0 0
        %824 = vmatpush1.bf16.msra.mxu0 0
        %825 = vmatprep.mubr.bf16.mxu0 0
        %826 = vmatmul.mubr.bf16.gmra.mrb[0].mxu0 %v520
        %v827 = vpop.f32.mrb[0].mxu0
        %v828 = vadd.f32 0.0, %v827
        %v829 = vpop.f32.mrb[0].mxu0
        %v830 = vpop.f32.mrb[0].mxu0
        %v831 = vpop.f32.mrb[0].mxu0
        %832 = vdwg.mxu0
        %834 = vrot.lane.b32.xlu0 %v828, 32
        %v835 = vpop.permute.xlu0 %834
        %837 = vst.msk [vmem:[#allocation2 + $0x15] sm:$0xff] %vm657, %v835
        %838 = vmatprep.subr.bf16.mxu0 0
        %839 = vmatpush1.bf16.msra.mxu0 %v792
        %840 = vmatprep.subr.bf16.mxu0 0
        %841 = vmatpush1.bf16.msra.mxu0 0
        %842 = vmatprep.subr.bf16.mxu0 0
        %843 = vmatpush1.bf16.msra.mxu0 0
        %844 = vmatprep.subr.bf16.mxu0 0
        %845 = vmatpush1.bf16.msra.mxu0 0
        %846 = vmatprep.subr.bf16.mxu0 0
        %847 = vmatpush1.bf16.msra.mxu0 0
        %848 = vmatprep.subr.bf16.mxu0 0
        %849 = vmatpush1.bf16.msra.mxu0 0
        %850 = vmatprep.subr.bf16.mxu0 0
        %851 = vmatpush1.bf16.msra.mxu0 0
        %852 = vmatprep.subr.bf16.mxu0 0
        %853 = vmatpush1.bf16.msra.mxu0 0
        %854 = vmatprep.subr.bf16.mxu0 0
        %855 = vmatpush1.bf16.msra.mxu0 0
        %856 = vmatprep.subr.bf16.mxu0 0
        %857 = vmatpush1.bf16.msra.mxu0 0
        %858 = vmatprep.subr.bf16.mxu0 0
        %859 = vmatpush1.bf16.msra.mxu0 0
        %860 = vmatprep.subr.bf16.mxu0 0
        %861 = vmatpush1.bf16.msra.mxu0 0
        %862 = vmatprep.subr.bf16.mxu0 0
        %863 = vmatpush1.bf16.msra.mxu0 0
        %864 = vmatprep.subr.bf16.mxu0 0
        %865 = vmatpush1.bf16.msra.mxu0 0
        %866 = vmatprep.subr.bf16.mxu0 0
        %867 = vmatpush1.bf16.msra.mxu0 0
        %868 = vmatprep.subr.bf16.mxu0 0
        %869 = vmatpush1.bf16.msra.mxu0 0
        %870 = vmatprep.mubr.bf16.mxu0 0
        %871 = vmatmul.mubr.bf16.gmra.mrb[0].mxu0 %v564
        %v872 = vpop.f32.mrb[0].mxu0
        %v873 = vadd.f32 0.0, %v872
        %v874 = vpop.f32.mrb[0].mxu0
        %v875 = vpop.f32.mrb[0].mxu0
        %v876 = vpop.f32.mrb[0].mxu0
        %877 = vdwg.mxu0
        %879 = vrot.lane.b32.xlu0 %v873, 48
        %v880 = vpop.permute.xlu0 %879
        %882 = vst.msk [vmem:[#allocation2 + $0x15] sm:$0xff] %vm703, %v880
        %v883 = vpack.c.bf16 %v469, %v468
        %884 = vmatprep.subr.bf16.mxu0 0
        %885 = vmatpush1.bf16.msra.mxu0 %v883
        %886 = vmatprep.subr.bf16.mxu0 0
        %887 = vmatpush1.bf16.msra.mxu0 0
        %888 = vmatprep.subr.bf16.mxu0 0
        %889 = vmatpush1.bf16.msra.mxu0 0
        %890 = vmatprep.subr.bf16.mxu0 0
        %891 = vmatpush1.bf16.msra.mxu0 0
        %892 = vmatprep.subr.bf16.mxu0 0
        %893 = vmatpush1.bf16.msra.mxu0 0
        %894 = vmatprep.subr.bf16.mxu0 0
        %895 = vmatpush1.bf16.msra.mxu0 0
        %896 = vmatprep.subr.bf16.mxu0 0
        %897 = vmatpush1.bf16.msra.mxu0 0
        %898 = vmatprep.subr.bf16.mxu0 0
        %899 = vmatpush1.bf16.msra.mxu0 0
        %900 = vmatprep.subr.bf16.mxu0 0
        %901 = vmatpush1.bf16.msra.mxu0 0
        %902 = vmatprep.subr.bf16.mxu0 0
        %903 = vmatpush1.bf16.msra.mxu0 0
        %904 = vmatprep.subr.bf16.mxu0 0
        %905 = vmatpush1.bf16.msra.mxu0 0
        %906 = vmatprep.subr.bf16.mxu0 0
        %907 = vmatpush1.bf16.msra.mxu0 0
        %908 = vmatprep.subr.bf16.mxu0 0
        %909 = vmatpush1.bf16.msra.mxu0 0
        %910 = vmatprep.subr.bf16.mxu0 0
        %911 = vmatpush1.bf16.msra.mxu0 0
        %912 = vmatprep.subr.bf16.mxu0 0
        %913 = vmatpush1.bf16.msra.mxu0 0
        %914 = vmatprep.subr.bf16.mxu0 0
        %915 = vmatpush1.bf16.msra.mxu0 0
        %916 = vmatprep.mubr.bf16.mxu0 0
        %917 = vmatmul.mubr.bf16.gmra.mrb[0].mxu0 %v520
        %v918 = vpop.f32.mrb[0].mxu0
        %v919 = vadd.f32 0.0, %v918
        %v920 = vpop.f32.mrb[0].mxu0
        %v921 = vpop.f32.mrb[0].mxu0
        %v922 = vpop.f32.mrb[0].mxu0
        %923 = vdwg.mxu0
        %924 = vst.msk [vmem:[#allocation2 + $0x1f] sm:$0xff] %vm518, %v919
        %925 = vmatprep.subr.bf16.mxu0 0
        %926 = vmatpush1.bf16.msra.mxu0 %v883
        %927 = vmatprep.subr.bf16.mxu0 0
        %928 = vmatpush1.bf16.msra.mxu0 0
        %929 = vmatprep.subr.bf16.mxu0 0
        %930 = vmatpush1.bf16.msra.mxu0 0
        %931 = vmatprep.subr.bf16.mxu0 0
        %932 = vmatpush1.bf16.msra.mxu0 0
        %933 = vmatprep.subr.bf16.mxu0 0
        %934 = vmatpush1.bf16.msra.mxu0 0
        %935 = vmatprep.subr.bf16.mxu0 0
        %936 = vmatpush1.bf16.msra.mxu0 0
        %937 = vmatprep.subr.bf16.mxu0 0
        %938 = vmatpush1.bf16.msra.mxu0 0
        %939 = vmatprep.subr.bf16.mxu0 0
        %940 = vmatpush1.bf16.msra.mxu0 0
        %941 = vmatprep.subr.bf16.mxu0 0
        %942 = vmatpush1.bf16.msra.mxu0 0
        %943 = vmatprep.subr.bf16.mxu0 0
        %944 = vmatpush1.bf16.msra.mxu0 0
        %945 = vmatprep.subr.bf16.mxu0 0
        %946 = vmatpush1.bf16.msra.mxu0 0
        %947 = vmatprep.subr.bf16.mxu0 0
        %948 = vmatpush1.bf16.msra.mxu0 0
        %949 = vmatprep.subr.bf16.mxu0 0
        %950 = vmatpush1.bf16.msra.mxu0 0
        %951 = vmatprep.subr.bf16.mxu0 0
        %952 = vmatpush1.bf16.msra.mxu0 0
        %953 = vmatprep.subr.bf16.mxu0 0
        %954 = vmatpush1.bf16.msra.mxu0 0
        %955 = vmatprep.subr.bf16.mxu0 0
        %956 = vmatpush1.bf16.msra.mxu0 0
        %957 = vmatprep.mubr.bf16.mxu0 0
        %958 = vmatmul.mubr.bf16.gmra.mrb[0].mxu0 %v564
        %v959 = vpop.f32.mrb[0].mxu0
        %v960 = vadd.f32 0.0, %v959
        %v961 = vpop.f32.mrb[0].mxu0
        %v962 = vpop.f32.mrb[0].mxu0
        %v963 = vpop.f32.mrb[0].mxu0
        %964 = vdwg.mxu0
        %966 = vrot.lane.b32.xlu0 %v960, 16
        %v967 = vpop.permute.xlu0 %966
        %969 = vst.msk [vmem:[#allocation2 + $0x1f] sm:$0xff] %vm610, %v967
        %v970 = vpack.c.bf16 %v472, %v471
        %971 = vmatprep.subr.bf16.mxu0 0
        %972 = vmatpush1.bf16.msra.mxu0 %v970
        %973 = vmatprep.subr.bf16.mxu0 0
        %974 = vmatpush1.bf16.msra.mxu0 0
        %975 = vmatprep.subr.bf16.mxu0 0
        %976 = vmatpush1.bf16.msra.mxu0 0
        %977 = vmatprep.subr.bf16.mxu0 0
        %978 = vmatpush1.bf16.msra.mxu0 0
        %979 = vmatprep.subr.bf16.mxu0 0
        %980 = vmatpush1.bf16.msra.mxu0 0
        %981 = vmatprep.subr.bf16.mxu0 0
        %982 = vmatpush1.bf16.msra.mxu0 0
        %983 = vmatprep.subr.bf16.mxu0 0
        %984 = vmatpush1.bf16.msra.mxu0 0
        %985 = vmatprep.subr.bf16.mxu0 0
        %986 = vmatpush1.bf16.msra.mxu0 0
        %987 = vmatprep.subr.bf16.mxu0 0
        %988 = vmatpush1.bf16.msra.mxu0 0
        %989 = vmatprep.subr.bf16.mxu0 0
        %990 = vmatpush1.bf16.msra.mxu0 0
        %991 = vmatprep.subr.bf16.mxu0 0
        %992 = vmatpush1.bf16.msra.mxu0 0
        %993 = vmatprep.subr.bf16.mxu0 0
        %994 = vmatpush1.bf16.msra.mxu0 0
        %995 = vmatprep.subr.bf16.mxu0 0
        %996 = vmatpush1.bf16.msra.mxu0 0
        %997 = vmatprep.subr.bf16.mxu0 0
        %998 = vmatpush1.bf16.msra.mxu0 0
        %999 = vmatprep.subr.bf16.mxu0 0
        %1000 = vmatpush1.bf16.msra.mxu0 0
        %1001 = vmatprep.subr.bf16.mxu0 0
        %1002 = vmatpush1.bf16.msra.mxu0 0
        %1003 = vmatprep.mubr.bf16.mxu0 0
        %1004 = vmatmul.mubr.bf16.gmra.mrb[0].mxu0 %v520
        %v1005 = vpop.f32.mrb[0].mxu0
        %v1006 = vadd.f32 0.0, %v1005
        %v1007 = vpop.f32.mrb[0].mxu0
        %v1008 = vpop.f32.mrb[0].mxu0
        %v1009 = vpop.f32.mrb[0].mxu0
        %1010 = vdwg.mxu0
        %1012 = vrot.lane.b32.xlu0 %v1006, 32
        %v1013 = vpop.permute.xlu0 %1012
        %1015 = vst.msk [vmem:[#allocation2 + $0x1f] sm:$0xff] %vm657, %v1013
        %1016 = vmatprep.subr.bf16.mxu0 0
        %1017 = vmatpush1.bf16.msra.mxu0 %v970
        %1018 = vmatprep.subr.bf16.mxu0 0
        %1019 = vmatpush1.bf16.msra.mxu0 0
        %1020 = vmatprep.subr.bf16.mxu0 0
        %1021 = vmatpush1.bf16.msra.mxu0 0
        %1022 = vmatprep.subr.bf16.mxu0 0
        %1023 = vmatpush1.bf16.msra.mxu0 0
        %1024 = vmatprep.subr.bf16.mxu0 0
        %1025 = vmatpush1.bf16.msra.mxu0 0
        %1026 = vmatprep.subr.bf16.mxu0 0
        %1027 = vmatpush1.bf16.msra.mxu0 0
        %1028 = vmatprep.subr.bf16.mxu0 0
        %1029 = vmatpush1.bf16.msra.mxu0 0
        %1030 = vmatprep.subr.bf16.mxu0 0
        %1031 = vmatpush1.bf16.msra.mxu0 0
        %1032 = vmatprep.subr.bf16.mxu0 0
        %1033 = vmatpush1.bf16.msra.mxu0 0
        %1034 = vmatprep.subr.bf16.mxu0 0
        %1035 = vmatpush1.bf16.msra.mxu0 0
        %1036 = vmatprep.subr.bf16.mxu0 0
        %1037 = vmatpush1.bf16.msra.mxu0 0
        %1038 = vmatprep.subr.bf16.mxu0 0
        %1039 = vmatpush1.bf16.msra.mxu0 0
        %1040 = vmatprep.subr.bf16.mxu0 0
        %1041 = vmatpush1.bf16.msra.mxu0 0
        %1042 = vmatprep.subr.bf16.mxu0 0
        %1043 = vmatpush1.bf16.msra.mxu0 0
        %1044 = vmatprep.subr.bf16.mxu0 0
        %1045 = vmatpush1.bf16.msra.mxu0 0
        %1046 = vmatprep.subr.bf16.mxu0 0
        %1047 = vmatpush1.bf16.msra.mxu0 0
        %1048 = vmatprep.mubr.bf16.mxu0 0
        %1049 = vmatmul.mubr.bf16.gmra.mrb[0].mxu0 %v564
        %v1050 = vpop.f32.mrb[0].mxu0
        %v1051 = vadd.f32 0.0, %v1050
        %v1052 = vpop.f32.mrb[0].mxu0
        %v1053 = vpop.f32.mrb[0].mxu0
        %v1054 = vpop.f32.mrb[0].mxu0
        %1055 = vdwg.mxu0
        %1057 = vrot.lane.b32.xlu0 %v1051, 48
        %v1058 = vpop.permute.xlu0 %1057
        %1060 = vst.msk [vmem:[#allocation2 + $0x1f] sm:$0xff] %vm703, %v1058
        %v1061 = vpack.c.bf16 %v475, %v474
        %1062 = vmatprep.subr.bf16.mxu0 0
        %1063 = vmatpush1.bf16.msra.mxu0 %v1061
        %1064 = vmatprep.subr.bf16.mxu0 0
        %1065 = vmatpush1.bf16.msra.mxu0 0
        %1066 = vmatprep.subr.bf16.mxu0 0
        %1067 = vmatpush1.bf16.msra.mxu0 0
        %1068 = vmatprep.subr.bf16.mxu0 0
        %1069 = vmatpush1.bf16.msra.mxu0 0
        %1070 = vmatprep.subr.bf16.mxu0 0
        %1071 = vmatpush1.bf16.msra.mxu0 0
        %1072 = vmatprep.subr.bf16.mxu0 0
        %1073 = vmatpush1.bf16.msra.mxu0 0
        %1074 = vmatprep.subr.bf16.mxu0 0
        %1075 = vmatpush1.bf16.msra.mxu0 0
        %1076 = vmatprep.subr.bf16.mxu0 0
        %1077 = vmatpush1.bf16.msra.mxu0 0
        %1078 = vmatprep.subr.bf16.mxu0 0
        %1079 = vmatpush1.bf16.msra.mxu0 0
        %1080 = vmatprep.subr.bf16.mxu0 0
        %1081 = vmatpush1.bf16.msra.mxu0 0
        %1082 = vmatprep.subr.bf16.mxu0 0
        %1083 = vmatpush1.bf16.msra.mxu0 0
        %1084 = vmatprep.subr.bf16.mxu0 0
        %1085 = vmatpush1.bf16.msra.mxu0 0
        %1086 = vmatprep.subr.bf16.mxu0 0
        %1087 = vmatpush1.bf16.msra.mxu0 0
        %1088 = vmatprep.subr.bf16.mxu0 0
        %1089 = vmatpush1.bf16.msra.mxu0 0
        %1090 = vmatprep.subr.bf16.mxu0 0
        %1091 = vmatpush1.bf16.msra.mxu0 0
        %1092 = vmatprep.subr.bf16.mxu0 0
        %1093 = vmatpush1.bf16.msra.mxu0 0
        %1094 = vmatprep.mubr.bf16.mxu0 0
        %1095 = vmatmul.mubr.bf16.gmra.mrb[0].mxu0 %v520
        %v1096 = vpop.f32.mrb[0].mxu0
        %v1097 = vadd.f32 0.0, %v1096
        %v1098 = vpop.f32.mrb[0].mxu0
        %v1099 = vpop.f32.mrb[0].mxu0
        %v1100 = vpop.f32.mrb[0].mxu0
        %1101 = vdwg.mxu0
        %1102 = vst.msk [vmem:[#allocation2 + $0x29] sm:$0xff] %vm518, %v1097
        %1103 = vmatprep.subr.bf16.mxu0 0
        %1104 = vmatpush1.bf16.msra.mxu0 %v1061
        %1105 = vmatprep.subr.bf16.mxu0 0
        %1106 = vmatpush1.bf16.msra.mxu0 0
        %1107 = vmatprep.subr.bf16.mxu0 0
        %1108 = vmatpush1.bf16.msra.mxu0 0
        %1109 = vmatprep.subr.bf16.mxu0 0
        %1110 = vmatpush1.bf16.msra.mxu0 0
        %1111 = vmatprep.subr.bf16.mxu0 0
        %1112 = vmatpush1.bf16.msra.mxu0 0
        %1113 = vmatprep.subr.bf16.mxu0 0
        %1114 = vmatpush1.bf16.msra.mxu0 0
        %1115 = vmatprep.subr.bf16.mxu0 0
        %1116 = vmatpush1.bf16.msra.mxu0 0
        %1117 = vmatprep.subr.bf16.mxu0 0
        %1118 = vmatpush1.bf16.msra.mxu0 0
        %1119 = vmatprep.subr.bf16.mxu0 0
        %1120 = vmatpush1.bf16.msra.mxu0 0
        %1121 = vmatprep.subr.bf16.mxu0 0
        %1122 = vmatpush1.bf16.msra.mxu0 0
        %1123 = vmatprep.subr.bf16.mxu0 0
        %1124 = vmatpush1.bf16.msra.mxu0 0
        %1125 = vmatprep.subr.bf16.mxu0 0
        %1126 = vmatpush1.bf16.msra.mxu0 0
        %1127 = vmatprep.subr.bf16.mxu0 0
        %1128 = vmatpush1.bf16.msra.mxu0 0
        %1129 = vmatprep.subr.bf16.mxu0 0
        %1130 = vmatpush1.bf16.msra.mxu0 0
        %1131 = vmatprep.subr.bf16.mxu0 0
        %1132 = vmatpush1.bf16.msra.mxu0 0
        %1133 = vmatprep.subr.bf16.mxu0 0
        %1134 = vmatpush1.bf16.msra.mxu0 0
        %1135 = vmatprep.mubr.bf16.mxu0 0
        %1136 = vmatmul.mubr.bf16.gmra.mrb[0].mxu0 %v564
        %v1137 = vpop.f32.mrb[0].mxu0
        %v1138 = vadd.f32 0.0, %v1137
        %v1139 = vpop.f32.mrb[0].mxu0
        %v1140 = vpop.f32.mrb[0].mxu0
        %v1141 = vpop.f32.mrb[0].mxu0
        %1142 = vdwg.mxu0
        %1144 = vrot.lane.b32.xlu0 %v1138, 16
        %v1145 = vpop.permute.xlu0 %1144
        %1147 = vst.msk [vmem:[#allocation2 + $0x29] sm:$0xff] %vm610, %v1145
        %v1148 = vpack.c.bf16 %v478, %v477
        %1149 = vmatprep.subr.bf16.mxu0 0
        %1150 = vmatpush1.bf16.msra.mxu0 %v1148
        %1151 = vmatprep.subr.bf16.mxu0 0
        %1152 = vmatpush1.bf16.msra.mxu0 0
        %1153 = vmatprep.subr.bf16.mxu0 0
        %1154 = vmatpush1.bf16.msra.mxu0 0
        %1155 = vmatprep.subr.bf16.mxu0 0
        %1156 = vmatpush1.bf16.msra.mxu0 0
        %1157 = vmatprep.subr.bf16.mxu0 0
        %1158 = vmatpush1.bf16.msra.mxu0 0
        %1159 = vmatprep.subr.bf16.mxu0 0
        %1160 = vmatpush1.bf16.msra.mxu0 0
        %1161 = vmatprep.subr.bf16.mxu0 0
        %1162 = vmatpush1.bf16.msra.mxu0 0
        %1163 = vmatprep.subr.bf16.mxu0 0
        %1164 = vmatpush1.bf16.msra.mxu0 0
        %1165 = vmatprep.subr.bf16.mxu0 0
        %1166 = vmatpush1.bf16.msra.mxu0 0
        %1167 = vmatprep.subr.bf16.mxu0 0
        %1168 = vmatpush1.bf16.msra.mxu0 0
        %1169 = vmatprep.subr.bf16.mxu0 0
        %1170 = vmatpush1.bf16.msra.mxu0 0
        %1171 = vmatprep.subr.bf16.mxu0 0
        %1172 = vmatpush1.bf16.msra.mxu0 0
        %1173 = vmatprep.subr.bf16.mxu0 0
        %1174 = vmatpush1.bf16.msra.mxu0 0
        %1175 = vmatprep.subr.bf16.mxu0 0
        %1176 = vmatpush1.bf16.msra.mxu0 0
        %1177 = vmatprep.subr.bf16.mxu0 0
        %1178 = vmatpush1.bf16.msra.mxu0 0
        %1179 = vmatprep.subr.bf16.mxu0 0
        %1180 = vmatpush1.bf16.msra.mxu0 0
        %1181 = vmatprep.mubr.bf16.mxu0 0
        %1182 = vmatmul.mubr.bf16.gmra.mrb[0].mxu0 %v520
        %v1183 = vpop.f32.mrb[0].mxu0
        %v1184 = vadd.f32 0.0, %v1183
        %v1185 = vpop.f32.mrb[0].mxu0
        %v1186 = vpop.f32.mrb[0].mxu0
        %v1187 = vpop.f32.mrb[0].mxu0
        %1188 = vdwg.mxu0
        %1190 = vrot.lane.b32.xlu0 %v1184, 32
        %v1191 = vpop.permute.xlu0 %1190
        %1193 = vst.msk [vmem:[#allocation2 + $0x29] sm:$0xff] %vm657, %v1191
        %1194 = vmatprep.subr.bf16.mxu0 0
        %1195 = vmatpush1.bf16.msra.mxu0 %v1148
        %1196 = vmatprep.subr.bf16.mxu0 0
        %1197 = vmatpush1.bf16.msra.mxu0 0
        %1198 = vmatprep.subr.bf16.mxu0 0
        %1199 = vmatpush1.bf16.msra.mxu0 0
        %1200 = vmatprep.subr.bf16.mxu0 0
        %1201 = vmatpush1.bf16.msra.mxu0 0
        %1202 = vmatprep.subr.bf16.mxu0 0
        %1203 = vmatpush1.bf16.msra.mxu0 0
        %1204 = vmatprep.subr.bf16.mxu0 0
        %1205 = vmatpush1.bf16.msra.mxu0 0
        %1206 = vmatprep.subr.bf16.mxu0 0
        %1207 = vmatpush1.bf16.msra.mxu0 0
        %1208 = vmatprep.subr.bf16.mxu0 0
        %1209 = vmatpush1.bf16.msra.mxu0 0
        %1210 = vmatprep.subr.bf16.mxu0 0
        %1211 = vmatpush1.bf16.msra.mxu0 0
        %1212 = vmatprep.subr.bf16.mxu0 0
        %1213 = vmatpush1.bf16.msra.mxu0 0
        %1214 = vmatprep.subr.bf16.mxu0 0
        %1215 = vmatpush1.bf16.msra.mxu0 0
        %1216 = vmatprep.subr.bf16.mxu0 0
        %1217 = vmatpush1.bf16.msra.mxu0 0
        %1218 = vmatprep.subr.bf16.mxu0 0
        %1219 = vmatpush1.bf16.msra.mxu0 0
        %1220 = vmatprep.subr.bf16.mxu0 0
        %1221 = vmatpush1.bf16.msra.mxu0 0
        %1222 = vmatprep.subr.bf16.mxu0 0
        %1223 = vmatpush1.bf16.msra.mxu0 0
        %1224 = vmatprep.subr.bf16.mxu0 0
        %1225 = vmatpush1.bf16.msra.mxu0 0
        %1226 = vmatprep.mubr.bf16.mxu0 0
        %1227 = vmatmul.mubr.bf16.gmra.mrb[0].mxu0 %v564
        %v1228 = vpop.f32.mrb[0].mxu0
        %v1229 = vadd.f32 0.0, %v1228
        %v1230 = vpop.f32.mrb[0].mxu0
        %v1231 = vpop.f32.mrb[0].mxu0
        %v1232 = vpop.f32.mrb[0].mxu0
        %1233 = vdwg.mxu0
        %1235 = vrot.lane.b32.xlu0 %v1229, 48
        %v1236 = vpop.permute.xlu0 %1235
        %1238 = vst.msk [vmem:[#allocation2 + $0x29] sm:$0xff] %vm703, %v1236
        %v1239 = vpack.c.bf16 %v481, %v480
        %1240 = vmatprep.subr.bf16.mxu0 0
        %1241 = vmatpush1.bf16.msra.mxu0 %v1239
        %1242 = vmatprep.subr.bf16.mxu0 0
        %1243 = vmatpush1.bf16.msra.mxu0 0
        %1244 = vmatprep.subr.bf16.mxu0 0
        %1245 = vmatpush1.bf16.msra.mxu0 0
        %1246 = vmatprep.subr.bf16.mxu0 0
        %1247 = vmatpush1.bf16.msra.mxu0 0
        %1248 = vmatprep.subr.bf16.mxu0 0
        %1249 = vmatpush1.bf16.msra.mxu0 0
        %1250 = vmatprep.subr.bf16.mxu0 0
        %1251 = vmatpush1.bf16.msra.mxu0 0
        %1252 = vmatprep.subr.bf16.mxu0 0
        %1253 = vmatpush1.bf16.msra.mxu0 0
        %1254 = vmatprep.subr.bf16.mxu0 0
        %1255 = vmatpush1.bf16.msra.mxu0 0
        %1256 = vmatprep.subr.bf16.mxu0 0
        %1257 = vmatpush1.bf16.msra.mxu0 0
        %1258 = vmatprep.subr.bf16.mxu0 0
        %1259 = vmatpush1.bf16.msra.mxu0 0
        %1260 = vmatprep.subr.bf16.mxu0 0
        %1261 = vmatpush1.bf16.msra.mxu0 0
        %1262 = vmatprep.subr.bf16.mxu0 0
        %1263 = vmatpush1.bf16.msra.mxu0 0
        %1264 = vmatprep.subr.bf16.mxu0 0
        %1265 = vmatpush1.bf16.msra.mxu0 0
        %1266 = vmatprep.subr.bf16.mxu0 0
        %1267 = vmatpush1.bf16.msra.mxu0 0
        %1268 = vmatprep.subr.bf16.mxu0 0
        %1269 = vmatpush1.bf16.msra.mxu0 0
        %1270 = vmatprep.subr.bf16.mxu0 0
        %1271 = vmatpush1.bf16.msra.mxu0 0
        %1272 = vmatprep.mubr.bf16.mxu0 0
        %1273 = vmatmul.mubr.bf16.gmra.mrb[0].mxu0 %v520
        %v1274 = vpop.f32.mrb[0].mxu0
        %v1275 = vadd.f32 0.0, %v1274
        %v1276 = vpop.f32.mrb[0].mxu0
        %v1277 = vpop.f32.mrb[0].mxu0
        %v1278 = vpop.f32.mrb[0].mxu0
        %1279 = vdwg.mxu0
        %1280 = vst.msk [vmem:[#allocation2 + $0x33] sm:$0xff] %vm518, %v1275
        %1281 = vmatprep.subr.bf16.mxu0 0
        %1282 = vmatpush1.bf16.msra.mxu0 %v1239
        %1283 = vmatprep.subr.bf16.mxu0 0
        %1284 = vmatpush1.bf16.msra.mxu0 0
        %1285 = vmatprep.subr.bf16.mxu0 0
        %1286 = vmatpush1.bf16.msra.mxu0 0
        %1287 = vmatprep.subr.bf16.mxu0 0
        %1288 = vmatpush1.bf16.msra.mxu0 0
        %1289 = vmatprep.subr.bf16.mxu0 0
        %1290 = vmatpush1.bf16.msra.mxu0 0
        %1291 = vmatprep.subr.bf16.mxu0 0
        %1292 = vmatpush1.bf16.msra.mxu0 0
        %1293 = vmatprep.subr.bf16.mxu0 0
        %1294 = vmatpush1.bf16.msra.mxu0 0
        %1295 = vmatprep.subr.bf16.mxu0 0
        %1296 = vmatpush1.bf16.msra.mxu0 0
        %1297 = vmatprep.subr.bf16.mxu0 0
        %1298 = vmatpush1.bf16.msra.mxu0 0
        %1299 = vmatprep.subr.bf16.mxu0 0
        %1300 = vmatpush1.bf16.msra.mxu0 0
        %1301 = vmatprep.subr.bf16.mxu0 0
        %1302 = vmatpush1.bf16.msra.mxu0 0
        %1303 = vmatprep.subr.bf16.mxu0 0
        %1304 = vmatpush1.bf16.msra.mxu0 0
        %1305 = vmatprep.subr.bf16.mxu0 0
        %1306 = vmatpush1.bf16.msra.mxu0 0
        %1307 = vmatprep.subr.bf16.mxu0 0
        %1308 = vmatpush1.bf16.msra.mxu0 0
        %1309 = vmatprep.subr.bf16.mxu0 0
        %1310 = vmatpush1.bf16.msra.mxu0 0
        %1311 = vmatprep.subr.bf16.mxu0 0
        %1312 = vmatpush1.bf16.msra.mxu0 0
        %1313 = vmatprep.mubr.bf16.mxu0 0
        %1314 = vmatmul.mubr.bf16.gmra.mrb[0].mxu0 %v564
        %v1315 = vpop.f32.mrb[0].mxu0
        %v1316 = vadd.f32 0.0, %v1315
        %v1317 = vpop.f32.mrb[0].mxu0
        %v1318 = vpop.f32.mrb[0].mxu0
        %v1319 = vpop.f32.mrb[0].mxu0
        %1320 = vdwg.mxu0
        %1322 = vrot.lane.b32.xlu0 %v1316, 16
        %v1323 = vpop.permute.xlu0 %1322
        %1325 = vst.msk [vmem:[#allocation2 + $0x33] sm:$0xff] %vm610, %v1323
        %v1326 = vpack.c.bf16 %v484, %v483
        %1327 = vmatprep.subr.bf16.mxu0 0
        %1328 = vmatpush1.bf16.msra.mxu0 %v1326
        %1329 = vmatprep.subr.bf16.mxu0 0
        %1330 = vmatpush1.bf16.msra.mxu0 0
        %1331 = vmatprep.subr.bf16.mxu0 0
        %1332 = vmatpush1.bf16.msra.mxu0 0
        %1333 = vmatprep.subr.bf16.mxu0 0
        %1334 = vmatpush1.bf16.msra.mxu0 0
        %1335 = vmatprep.subr.bf16.mxu0 0
        %1336 = vmatpush1.bf16.msra.mxu0 0
        %1337 = vmatprep.subr.bf16.mxu0 0
        %1338 = vmatpush1.bf16.msra.mxu0 0
        %1339 = vmatprep.subr.bf16.mxu0 0
        %1340 = vmatpush1.bf16.msra.mxu0 0
        %1341 = vmatprep.subr.bf16.mxu0 0
        %1342 = vmatpush1.bf16.msra.mxu0 0
        %1343 = vmatprep.subr.bf16.mxu0 0
        %1344 = vmatpush1.bf16.msra.mxu0 0
        %1345 = vmatprep.subr.bf16.mxu0 0
        %1346 = vmatpush1.bf16.msra.mxu0 0
        %1347 = vmatprep.subr.bf16.mxu0 0
        %1348 = vmatpush1.bf16.msra.mxu0 0
        %1349 = vmatprep.subr.bf16.mxu0 0
        %1350 = vmatpush1.bf16.msra.mxu0 0
        %1351 = vmatprep.subr.bf16.mxu0 0
        %1352 = vmatpush1.bf16.msra.mxu0 0
        %1353 = vmatprep.subr.bf16.mxu0 0
        %1354 = vmatpush1.bf16.msra.mxu0 0
        %1355 = vmatprep.subr.bf16.mxu0 0
        %1356 = vmatpush1.bf16.msra.mxu0 0
        %1357 = vmatprep.subr.bf16.mxu0 0
        %1358 = vmatpush1.bf16.msra.mxu0 0
        %1359 = vmatprep.mubr.bf16.mxu0 0
        %1360 = vmatmul.mubr.bf16.gmra.mrb[0].mxu0 %v520
        %v1361 = vpop.f32.mrb[0].mxu0
        %v1362 = vadd.f32 0.0, %v1361
        %v1363 = vpop.f32.mrb[0].mxu0
        %v1364 = vpop.f32.mrb[0].mxu0
        %v1365 = vpop.f32.mrb[0].mxu0
        %1366 = vdwg.mxu0
        %1368 = vrot.lane.b32.xlu0 %v1362, 32
        %v1369 = vpop.permute.xlu0 %1368
        %1371 = vst.msk [vmem:[#allocation2 + $0x33] sm:$0xff] %vm657, %v1369
        %1372 = vmatprep.subr.bf16.mxu0 0
        %1373 = vmatpush1.bf16.msra.mxu0 %v1326
        %1374 = vmatprep.subr.bf16.mxu0 0
        %1375 = vmatpush1.bf16.msra.mxu0 0
        %1376 = vmatprep.subr.bf16.mxu0 0
        %1377 = vmatpush1.bf16.msra.mxu0 0
        %1378 = vmatprep.subr.bf16.mxu0 0
        %1379 = vmatpush1.bf16.msra.mxu0 0
        %1380 = vmatprep.subr.bf16.mxu0 0
        %1381 = vmatpush1.bf16.msra.mxu0 0
        %1382 = vmatprep.subr.bf16.mxu0 0
        %1383 = vmatpush1.bf16.msra.mxu0 0
        %1384 = vmatprep.subr.bf16.mxu0 0
        %1385 = vmatpush1.bf16.msra.mxu0 0
        %1386 = vmatprep.subr.bf16.mxu0 0
        %1387 = vmatpush1.bf16.msra.mxu0 0
        %1388 = vmatprep.subr.bf16.mxu0 0
        %1389 = vmatpush1.bf16.msra.mxu0 0
        %1390 = vmatprep.subr.bf16.mxu0 0
        %1391 = vmatpush1.bf16.msra.mxu0 0
        %1392 = vmatprep.subr.bf16.mxu0 0
        %1393 = vmatpush1.bf16.msra.mxu0 0
        %1394 = vmatprep.subr.bf16.mxu0 0
        %1395 = vmatpush1.bf16.msra.mxu0 0
        %1396 = vmatprep.subr.bf16.mxu0 0
        %1397 = vmatpush1.bf16.msra.mxu0 0
        %1398 = vmatprep.subr.bf16.mxu0 0
        %1399 = vmatpush1.bf16.msra.mxu0 0
        %1400 = vmatprep.subr.bf16.mxu0 0
        %1401 = vmatpush1.bf16.msra.mxu0 0
        %1402 = vmatprep.subr.bf16.mxu0 0
        %1403 = vmatpush1.bf16.msra.mxu0 0
        %1404 = vmatprep.mubr.bf16.mxu0 0
        %1405 = vmatmul.mubr.bf16.gmra.mrb[0].mxu0 %v564
        %v1406 = vpop.f32.mrb[0].mxu0
        %v1407 = vadd.f32 0.0, %v1406
        %v1408 = vpop.f32.mrb[0].mxu0
        %v1409 = vpop.f32.mrb[0].mxu0
        %v1410 = vpop.f32.mrb[0].mxu0
        %1411 = vdwg.mxu0
        %1413 = vrot.lane.b32.xlu0 %v1407, 48
        %v1414 = vpop.permute.xlu0 %1413
        %1416 = vst.msk [vmem:[#allocation2 + $0x33] sm:$0xff] %vm703, %v1414
        %v1417 = vpack.c.bf16 %v487, %v486
        %1418 = vmatprep.subr.bf16.mxu0 0
        %1419 = vmatpush1.bf16.msra.mxu0 %v1417
        %1420 = vmatprep.subr.bf16.mxu0 0
        %1421 = vmatpush1.bf16.msra.mxu0 0
        %1422 = vmatprep.subr.bf16.mxu0 0
        %1423 = vmatpush1.bf16.msra.mxu0 0
        %1424 = vmatprep.subr.bf16.mxu0 0
        %1425 = vmatpush1.bf16.msra.mxu0 0
        %1426 = vmatprep.subr.bf16.mxu0 0
        %1427 = vmatpush1.bf16.msra.mxu0 0
        %1428 = vmatprep.subr.bf16.mxu0 0
        %1429 = vmatpush1.bf16.msra.mxu0 0
        %1430 = vmatprep.subr.bf16.mxu0 0
        %1431 = vmatpush1.bf16.msra.mxu0 0
        %1432 = vmatprep.subr.bf16.mxu0 0
        %1433 = vmatpush1.bf16.msra.mxu0 0
        %1434 = vmatprep.subr.bf16.mxu0 0
        %1435 = vmatpush1.bf16.msra.mxu0 0
        %1436 = vmatprep.subr.bf16.mxu0 0
        %1437 = vmatpush1.bf16.msra.mxu0 0
        %1438 = vmatprep.subr.bf16.mxu0 0
        %1439 = vmatpush1.bf16.msra.mxu0 0
        %1440 = vmatprep.subr.bf16.mxu0 0
        %1441 = vmatpush1.bf16.msra.mxu0 0
        %1442 = vmatprep.subr.bf16.mxu0 0
        %1443 = vmatpush1.bf16.msra.mxu0 0
        %1444 = vmatprep.subr.bf16.mxu0 0
        %1445 = vmatpush1.bf16.msra.mxu0 0
        %1446 = vmatprep.subr.bf16.mxu0 0
        %1447 = vmatpush1.bf16.msra.mxu0 0
        %1448 = vmatprep.subr.bf16.mxu0 0
        %1449 = vmatpush1.bf16.msra.mxu0 0
        %1450 = vmatprep.mubr.bf16.mxu0 0
        %1451 = vmatmul.mubr.bf16.gmra.mrb[0].mxu0 %v520
        %v1452 = vpop.f32.mrb[0].mxu0
        %v1453 = vadd.f32 0.0, %v1452
        %v1454 = vpop.f32.mrb[0].mxu0
        %v1455 = vpop.f32.mrb[0].mxu0
        %v1456 = vpop.f32.mrb[0].mxu0
        %1457 = vdwg.mxu0
        %1458 = vst.msk [vmem:[#allocation2 + $0x3d] sm:$0xff] %vm518, %v1453
        %1459 = vmatprep.subr.bf16.mxu0 0
        %1460 = vmatpush1.bf16.msra.mxu0 %v1417
        %1461 = vmatprep.subr.bf16.mxu0 0
        %1462 = vmatpush1.bf16.msra.mxu0 0
        %1463 = vmatprep.subr.bf16.mxu0 0
        %1464 = vmatpush1.bf16.msra.mxu0 0
        %1465 = vmatprep.subr.bf16.mxu0 0
        %1466 = vmatpush1.bf16.msra.mxu0 0
        %1467 = vmatprep.subr.bf16.mxu0 0
        %1468 = vmatpush1.bf16.msra.mxu0 0
        %1469 = vmatprep.subr.bf16.mxu0 0
        %1470 = vmatpush1.bf16.msra.mxu0 0
        %1471 = vmatprep.subr.bf16.mxu0 0
        %1472 = vmatpush1.bf16.msra.mxu0 0
        %1473 = vmatprep.subr.bf16.mxu0 0
        %1474 = vmatpush1.bf16.msra.mxu0 0
        %1475 = vmatprep.subr.bf16.mxu0 0
        %1476 = vmatpush1.bf16.msra.mxu0 0
        %1477 = vmatprep.subr.bf16.mxu0 0
        %1478 = vmatpush1.bf16.msra.mxu0 0
        %1479 = vmatprep.subr.bf16.mxu0 0
        %1480 = vmatpush1.bf16.msra.mxu0 0
        %1481 = vmatprep.subr.bf16.mxu0 0
        %1482 = vmatpush1.bf16.msra.mxu0 0
        %1483 = vmatprep.subr.bf16.mxu0 0
        %1484 = vmatpush1.bf16.msra.mxu0 0
        %1485 = vmatprep.subr.bf16.mxu0 0
        %1486 = vmatpush1.bf16.msra.mxu0 0
        %1487 = vmatprep.subr.bf16.mxu0 0
        %1488 = vmatpush1.bf16.msra.mxu0 0
        %1489 = vmatprep.subr.bf16.mxu0 0
        %1490 = vmatpush1.bf16.msra.mxu0 0
        %1491 = vmatprep.mubr.bf16.mxu0 0
        %1492 = vmatmul.mubr.bf16.gmra.mrb[0].mxu0 %v564
        %v1493 = vpop.f32.mrb[0].mxu0
        %v1494 = vadd.f32 0.0, %v1493
        %v1495 = vpop.f32.mrb[0].mxu0
        %v1496 = vpop.f32.mrb[0].mxu0
        %v1497 = vpop.f32.mrb[0].mxu0
        %1498 = vdwg.mxu0
        %1500 = vrot.lane.b32.xlu0 %v1494, 16
        %v1501 = vpop.permute.xlu0 %1500
        %1503 = vst.msk [vmem:[#allocation2 + $0x3d] sm:$0xff] %vm610, %v1501
        %v1504 = vpack.c.bf16 %v490, %v489
        %1505 = vmatprep.subr.bf16.mxu0 0
        %1506 = vmatpush1.bf16.msra.mxu0 %v1504
        %1507 = vmatprep.subr.bf16.mxu0 0
        %1508 = vmatpush1.bf16.msra.mxu0 0
        %1509 = vmatprep.subr.bf16.mxu0 0
        %1510 = vmatpush1.bf16.msra.mxu0 0
        %1511 = vmatprep.subr.bf16.mxu0 0
        %1512 = vmatpush1.bf16.msra.mxu0 0
        %1513 = vmatprep.subr.bf16.mxu0 0
        %1514 = vmatpush1.bf16.msra.mxu0 0
        %1515 = vmatprep.subr.bf16.mxu0 0
        %1516 = vmatpush1.bf16.msra.mxu0 0
        %1517 = vmatprep.subr.bf16.mxu0 0
        %1518 = vmatpush1.bf16.msra.mxu0 0
        %1519 = vmatprep.subr.bf16.mxu0 0
        %1520 = vmatpush1.bf16.msra.mxu0 0
        %1521 = vmatprep.subr.bf16.mxu0 0
        %1522 = vmatpush1.bf16.msra.mxu0 0
        %1523 = vmatprep.subr.bf16.mxu0 0
        %1524 = vmatpush1.bf16.msra.mxu0 0
        %1525 = vmatprep.subr.bf16.mxu0 0
        %1526 = vmatpush1.bf16.msra.mxu0 0
        %1527 = vmatprep.subr.bf16.mxu0 0
        %1528 = vmatpush1.bf16.msra.mxu0 0
        %1529 = vmatprep.subr.bf16.mxu0 0
        %1530 = vmatpush1.bf16.msra.mxu0 0
        %1531 = vmatprep.subr.bf16.mxu0 0
        %1532 = vmatpush1.bf16.msra.mxu0 0
        %1533 = vmatprep.subr.bf16.mxu0 0
        %1534 = vmatpush1.bf16.msra.mxu0 0
        %1535 = vmatprep.subr.bf16.mxu0 0
        %1536 = vmatpush1.bf16.msra.mxu0 0
        %1537 = vmatprep.mubr.bf16.mxu0 0
        %1538 = vmatmul.mubr.bf16.gmra.mrb[0].mxu0 %v520
        %v1539 = vpop.f32.mrb[0].mxu0
        %v1540 = vadd.f32 0.0, %v1539
        %v1541 = vpop.f32.mrb[0].mxu0
        %v1542 = vpop.f32.mrb[0].mxu0
        %v1543 = vpop.f32.mrb[0].mxu0
        %1544 = vdwg.mxu0
        %1546 = vrot.lane.b32.xlu0 %v1540, 32
        %v1547 = vpop.permute.xlu0 %1546
        %1549 = vst.msk [vmem:[#allocation2 + $0x3d] sm:$0xff] %vm657, %v1547
        %1550 = vmatprep.subr.bf16.mxu0 0
        %1551 = vmatpush1.bf16.msra.mxu0 %v1504
        %1552 = vmatprep.subr.bf16.mxu0 0
        %1553 = vmatpush1.bf16.msra.mxu0 0
        %1554 = vmatprep.subr.bf16.mxu0 0
        %1555 = vmatpush1.bf16.msra.mxu0 0
        %1556 = vmatprep.subr.bf16.mxu0 0
        %1557 = vmatpush1.bf16.msra.mxu0 0
        %1558 = vmatprep.subr.bf16.mxu0 0
        %1559 = vmatpush1.bf16.msra.mxu0 0
        %1560 = vmatprep.subr.bf16.mxu0 0
        %1561 = vmatpush1.bf16.msra.mxu0 0
        %1562 = vmatprep.subr.bf16.mxu0 0
        %1563 = vmatpush1.bf16.msra.mxu0 0
        %1564 = vmatprep.subr.bf16.mxu0 0
        %1565 = vmatpush1.bf16.msra.mxu0 0
        %1566 = vmatprep.subr.bf16.mxu0 0
        %1567 = vmatpush1.bf16.msra.mxu0 0
        %1568 = vmatprep.subr.bf16.mxu0 0
        %1569 = vmatpush1.bf16.msra.mxu0 0
        %1570 = vmatprep.subr.bf16.mxu0 0
        %1571 = vmatpush1.bf16.msra.mxu0 0
        %1572 = vmatprep.subr.bf16.mxu0 0
        %1573 = vmatpush1.bf16.msra.mxu0 0
        %1574 = vmatprep.subr.bf16.mxu0 0
        %1575 = vmatpush1.bf16.msra.mxu0 0
        %1576 = vmatprep.subr.bf16.mxu0 0
        %1577 = vmatpush1.bf16.msra.mxu0 0
        %1578 = vmatprep.subr.bf16.mxu0 0
        %1579 = vmatpush1.bf16.msra.mxu0 0
        %1580 = vmatprep.subr.bf16.mxu0 0
        %1581 = vmatpush1.bf16.msra.mxu0 0
        %1582 = vmatprep.mubr.bf16.mxu0 0
        %1583 = vmatmul.mubr.bf16.gmra.mrb[0].mxu0 %v564
        %v1584 = vpop.f32.mrb[0].mxu0
        %v1585 = vadd.f32 0.0, %v1584
        %v1586 = vpop.f32.mrb[0].mxu0
        %v1587 = vpop.f32.mrb[0].mxu0
        %v1588 = vpop.f32.mrb[0].mxu0
        %1589 = vdwg.mxu0
        %1591 = vrot.lane.b32.xlu0 %v1585, 48
        %v1592 = vpop.permute.xlu0 %1591
        %1594 = vst.msk [vmem:[#allocation2 + $0x3d] sm:$0xff] %vm703, %v1592
        %v1595 = vpack.c.bf16 %v493, %v492
        %1596 = vmatprep.subr.bf16.mxu0 0
        %1597 = vmatpush1.bf16.msra.mxu0 %v1595
        %1598 = vmatprep.subr.bf16.mxu0 0
        %1599 = vmatpush1.bf16.msra.mxu0 0
        %1600 = vmatprep.subr.bf16.mxu0 0
        %1601 = vmatpush1.bf16.msra.mxu0 0
        %1602 = vmatprep.subr.bf16.mxu0 0
        %1603 = vmatpush1.bf16.msra.mxu0 0
        %1604 = vmatprep.subr.bf16.mxu0 0
        %1605 = vmatpush1.bf16.msra.mxu0 0
        %1606 = vmatprep.subr.bf16.mxu0 0
        %1607 = vmatpush1.bf16.msra.mxu0 0
        %1608 = vmatprep.subr.bf16.mxu0 0
        %1609 = vmatpush1.bf16.msra.mxu0 0
        %1610 = vmatprep.subr.bf16.mxu0 0
        %1611 = vmatpush1.bf16.msra.mxu0 0
        %1612 = vmatprep.subr.bf16.mxu0 0
        %1613 = vmatpush1.bf16.msra.mxu0 0
        %1614 = vmatprep.subr.bf16.mxu0 0
        %1615 = vmatpush1.bf16.msra.mxu0 0
        %1616 = vmatprep.subr.bf16.mxu0 0
        %1617 = vmatpush1.bf16.msra.mxu0 0
        %1618 = vmatprep.subr.bf16.mxu0 0
        %1619 = vmatpush1.bf16.msra.mxu0 0
        %1620 = vmatprep.subr.bf16.mxu0 0
        %1621 = vmatpush1.bf16.msra.mxu0 0
        %1622 = vmatprep.subr.bf16.mxu0 0
        %1623 = vmatpush1.bf16.msra.mxu0 0
        %1624 = vmatprep.subr.bf16.mxu0 0
        %1625 = vmatpush1.bf16.msra.mxu0 0
        %1626 = vmatprep.subr.bf16.mxu0 0
        %1627 = vmatpush1.bf16.msra.mxu0 0
        %1628 = vmatprep.mubr.bf16.mxu0 0
        %1629 = vmatmul.mubr.bf16.gmra.mrb[0].mxu0 %v520
        %v1630 = vpop.f32.mrb[0].mxu0
        %v1631 = vadd.f32 0.0, %v1630
        %v1632 = vpop.f32.mrb[0].mxu0
        %v1633 = vpop.f32.mrb[0].mxu0
        %v1634 = vpop.f32.mrb[0].mxu0
        %1635 = vdwg.mxu0
        %1636 = vst.msk [vmem:[#allocation2 + $0x47] sm:$0xff] %vm518, %v1631
        %1637 = vmatprep.subr.bf16.mxu0 0
        %1638 = vmatpush1.bf16.msra.mxu0 %v1595
        %1639 = vmatprep.subr.bf16.mxu0 0
        %1640 = vmatpush1.bf16.msra.mxu0 0
        %1641 = vmatprep.subr.bf16.mxu0 0
        %1642 = vmatpush1.bf16.msra.mxu0 0
        %1643 = vmatprep.subr.bf16.mxu0 0
        %1644 = vmatpush1.bf16.msra.mxu0 0
        %1645 = vmatprep.subr.bf16.mxu0 0
        %1646 = vmatpush1.bf16.msra.mxu0 0
        %1647 = vmatprep.subr.bf16.mxu0 0
        %1648 = vmatpush1.bf16.msra.mxu0 0
        %1649 = vmatprep.subr.bf16.mxu0 0
        %1650 = vmatpush1.bf16.msra.mxu0 0
        %1651 = vmatprep.subr.bf16.mxu0 0
        %1652 = vmatpush1.bf16.msra.mxu0 0
        %1653 = vmatprep.subr.bf16.mxu0 0
        %1654 = vmatpush1.bf16.msra.mxu0 0
        %1655 = vmatprep.subr.bf16.mxu0 0
        %1656 = vmatpush1.bf16.msra.mxu0 0
        %1657 = vmatprep.subr.bf16.mxu0 0
        %1658 = vmatpush1.bf16.msra.mxu0 0
        %1659 = vmatprep.subr.bf16.mxu0 0
        %1660 = vmatpush1.bf16.msra.mxu0 0
        %1661 = vmatprep.subr.bf16.mxu0 0
        %1662 = vmatpush1.bf16.msra.mxu0 0
        %1663 = vmatprep.subr.bf16.mxu0 0
        %1664 = vmatpush1.bf16.msra.mxu0 0
        %1665 = vmatprep.subr.bf16.mxu0 0
        %1666 = vmatpush1.bf16.msra.mxu0 0
        %1667 = vmatprep.subr.bf16.mxu0 0
        %1668 = vmatpush1.bf16.msra.mxu0 0
        %1669 = vmatprep.mubr.bf16.mxu0 0
        %1670 = vmatmul.mubr.bf16.gmra.mrb[0].mxu0 %v564
        %v1671 = vpop.f32.mrb[0].mxu0
        %v1672 = vadd.f32 0.0, %v1671
        %v1673 = vpop.f32.mrb[0].mxu0
        %v1674 = vpop.f32.mrb[0].mxu0
        %v1675 = vpop.f32.mrb[0].mxu0
        %1676 = vdwg.mxu0
        %1678 = vrot.lane.b32.xlu0 %v1672, 16
        %v1679 = vpop.permute.xlu0 %1678
        %1681 = vst.msk [vmem:[#allocation2 + $0x47] sm:$0xff] %vm610, %v1679
        %v1682 = vpack.c.bf16 %v496, %v495
        %1683 = vmatprep.subr.bf16.mxu0 0
        %1684 = vmatpush1.bf16.msra.mxu0 %v1682
        %1685 = vmatprep.subr.bf16.mxu0 0
        %1686 = vmatpush1.bf16.msra.mxu0 0
        %1687 = vmatprep.subr.bf16.mxu0 0
        %1688 = vmatpush1.bf16.msra.mxu0 0
        %1689 = vmatprep.subr.bf16.mxu0 0
        %1690 = vmatpush1.bf16.msra.mxu0 0
        %1691 = vmatprep.subr.bf16.mxu0 0
        %1692 = vmatpush1.bf16.msra.mxu0 0
        %1693 = vmatprep.subr.bf16.mxu0 0
        %1694 = vmatpush1.bf16.msra.mxu0 0
        %1695 = vmatprep.subr.bf16.mxu0 0
        %1696 = vmatpush1.bf16.msra.mxu0 0
        %1697 = vmatprep.subr.bf16.mxu0 0
        %1698 = vmatpush1.bf16.msra.mxu0 0
        %1699 = vmatprep.subr.bf16.mxu0 0
        %1700 = vmatpush1.bf16.msra.mxu0 0
        %1701 = vmatprep.subr.bf16.mxu0 0
        %1702 = vmatpush1.bf16.msra.mxu0 0
        %1703 = vmatprep.subr.bf16.mxu0 0
        %1704 = vmatpush1.bf16.msra.mxu0 0
        %1705 = vmatprep.subr.bf16.mxu0 0
        %1706 = vmatpush1.bf16.msra.mxu0 0
        %1707 = vmatprep.subr.bf16.mxu0 0
        %1708 = vmatpush1.bf16.msra.mxu0 0
        %1709 = vmatprep.subr.bf16.mxu0 0
        %1710 = vmatpush1.bf16.msra.mxu0 0
        %1711 = vmatprep.subr.bf16.mxu0 0
        %1712 = vmatpush1.bf16.msra.mxu0 0
        %1713 = vmatprep.subr.bf16.mxu0 0
        %1714 = vmatpush1.bf16.msra.mxu0 0
        %1715 = vmatprep.mubr.bf16.mxu0 0
        %1716 = vmatmul.mubr.bf16.gmra.mrb[0].mxu0 %v520
        %v1717 = vpop.f32.mrb[0].mxu0
        %v1718 = vadd.f32 0.0, %v1717
        %v1719 = vpop.f32.mrb[0].mxu0
        %v1720 = vpop.f32.mrb[0].mxu0
        %v1721 = vpop.f32.mrb[0].mxu0
        %1722 = vdwg.mxu0
        %1724 = vrot.lane.b32.xlu0 %v1718, 32
        %v1725 = vpop.permute.xlu0 %1724
        %1727 = vst.msk [vmem:[#allocation2 + $0x47] sm:$0xff] %vm657, %v1725
        %1728 = vmatprep.subr.bf16.mxu0 0
        %1729 = vmatpush1.bf16.msra.mxu0 %v1682
        %1730 = vmatprep.subr.bf16.mxu0 0
        %1731 = vmatpush1.bf16.msra.mxu0 0
        %1732 = vmatprep.subr.bf16.mxu0 0
        %1733 = vmatpush1.bf16.msra.mxu0 0
        %1734 = vmatprep.subr.bf16.mxu0 0
        %1735 = vmatpush1.bf16.msra.mxu0 0
        %1736 = vmatprep.subr.bf16.mxu0 0
        %1737 = vmatpush1.bf16.msra.mxu0 0
        %1738 = vmatprep.subr.bf16.mxu0 0
        %1739 = vmatpush1.bf16.msra.mxu0 0
        %1740 = vmatprep.subr.bf16.mxu0 0
        %1741 = vmatpush1.bf16.msra.mxu0 0
        %1742 = vmatprep.subr.bf16.mxu0 0
        %1743 = vmatpush1.bf16.msra.mxu0 0
        %1744 = vmatprep.subr.bf16.mxu0 0
        %1745 = vmatpush1.bf16.msra.mxu0 0
        %1746 = vmatprep.subr.bf16.mxu0 0
        %1747 = vmatpush1.bf16.msra.mxu0 0
        %1748 = vmatprep.subr.bf16.mxu0 0
        %1749 = vmatpush1.bf16.msra.mxu0 0
        %1750 = vmatprep.subr.bf16.mxu0 0
        %1751 = vmatpush1.bf16.msra.mxu0 0
        %1752 = vmatprep.subr.bf16.mxu0 0
        %1753 = vmatpush1.bf16.msra.mxu0 0
        %1754 = vmatprep.subr.bf16.mxu0 0
        %1755 = vmatpush1.bf16.msra.mxu0 0
        %1756 = vmatprep.subr.bf16.mxu0 0
        %1757 = vmatpush1.bf16.msra.mxu0 0
        %1758 = vmatprep.subr.bf16.mxu0 0
        %1759 = vmatpush1.bf16.msra.mxu0 0
        %1760 = vmatprep.mubr.bf16.mxu0 0
        %1761 = vmatmul.mubr.bf16.gmra.mrb[0].mxu0 %v564
        %v1762 = vpop.f32.mrb[0].mxu0
        %v1763 = vadd.f32 0.0, %v1762
        %v1764 = vpop.f32.mrb[0].mxu0
        %v1765 = vpop.f32.mrb[0].mxu0
        %v1766 = vpop.f32.mrb[0].mxu0
        %1767 = vdwg.mxu0
        %1769 = vrot.lane.b32.xlu0 %v1763, 48
        %v1770 = vpop.permute.xlu0 %1769
        %1772 = vst.msk [vmem:[#allocation2 + $0x47] sm:$0xff] %vm703, %v1770
        %v1773 = vpack.c.bf16 %v499, %v498
        %1774 = vmatprep.subr.bf16.mxu0 0
        %1775 = vmatpush1.bf16.msra.mxu0 %v1773
        %1776 = vmatprep.subr.bf16.mxu0 0
        %1777 = vmatpush1.bf16.msra.mxu0 0
        %1778 = vmatprep.subr.bf16.mxu0 0
        %1779 = vmatpush1.bf16.msra.mxu0 0
        %1780 = vmatprep.subr.bf16.mxu0 0
        %1781 = vmatpush1.bf16.msra.mxu0 0
        %1782 = vmatprep.subr.bf16.mxu0 0
        %1783 = vmatpush1.bf16.msra.mxu0 0
        %1784 = vmatprep.subr.bf16.mxu0 0
        %1785 = vmatpush1.bf16.msra.mxu0 0
        %1786 = vmatprep.subr.bf16.mxu0 0
        %1787 = vmatpush1.bf16.msra.mxu0 0
        %1788 = vmatprep.subr.bf16.mxu0 0
        %1789 = vmatpush1.bf16.msra.mxu0 0
        %1790 = vmatprep.subr.bf16.mxu0 0
        %1791 = vmatpush1.bf16.msra.mxu0 0
        %1792 = vmatprep.subr.bf16.mxu0 0
        %1793 = vmatpush1.bf16.msra.mxu0 0
        %1794 = vmatprep.subr.bf16.mxu0 0
        %1795 = vmatpush1.bf16.msra.mxu0 0
        %1796 = vmatprep.subr.bf16.mxu0 0
        %1797 = vmatpush1.bf16.msra.mxu0 0
        %1798 = vmatprep.subr.bf16.mxu0 0
        %1799 = vmatpush1.bf16.msra.mxu0 0
        %1800 = vmatprep.subr.bf16.mxu0 0
        %1801 = vmatpush1.bf16.msra.mxu0 0
        %1802 = vmatprep.subr.bf16.mxu0 0
        %1803 = vmatpush1.bf16.msra.mxu0 0
        %1804 = vmatprep.subr.bf16.mxu0 0
        %1805 = vmatpush1.bf16.msra.mxu0 0
        %1806 = vmatprep.mubr.bf16.mxu0 0
        %1807 = vmatmul.mubr.bf16.gmra.mrb[0].mxu0 %v520
        %v1808 = vpop.f32.mrb[0].mxu0
        %v1809 = vadd.f32 0.0, %v1808
        %v1810 = vpop.f32.mrb[0].mxu0
        %v1811 = vpop.f32.mrb[0].mxu0
        %v1812 = vpop.f32.mrb[0].mxu0
        %1813 = vdwg.mxu0
        %1814 = vst.msk [vmem:[#allocation2 + $0x51] sm:$0xff] %vm518, %v1809
        %1815 = vmatprep.subr.bf16.mxu0 0
        %1816 = vmatpush1.bf16.msra.mxu0 %v1773
        %1817 = vmatprep.subr.bf16.mxu0 0
        %1818 = vmatpush1.bf16.msra.mxu0 0
        %1819 = vmatprep.subr.bf16.mxu0 0
        %1820 = vmatpush1.bf16.msra.mxu0 0
        %1821 = vmatprep.subr.bf16.mxu0 0
        %1822 = vmatpush1.bf16.msra.mxu0 0
        %1823 = vmatprep.subr.bf16.mxu0 0
        %1824 = vmatpush1.bf16.msra.mxu0 0
        %1825 = vmatprep.subr.bf16.mxu0 0
        %1826 = vmatpush1.bf16.msra.mxu0 0
        %1827 = vmatprep.subr.bf16.mxu0 0
        %1828 = vmatpush1.bf16.msra.mxu0 0
        %1829 = vmatprep.subr.bf16.mxu0 0
        %1830 = vmatpush1.bf16.msra.mxu0 0
        %1831 = vmatprep.subr.bf16.mxu0 0
        %1832 = vmatpush1.bf16.msra.mxu0 0
        %1833 = vmatprep.subr.bf16.mxu0 0
        %1834 = vmatpush1.bf16.msra.mxu0 0
        %1835 = vmatprep.subr.bf16.mxu0 0
        %1836 = vmatpush1.bf16.msra.mxu0 0
        %1837 = vmatprep.subr.bf16.mxu0 0
        %1838 = vmatpush1.bf16.msra.mxu0 0
        %1839 = vmatprep.subr.bf16.mxu0 0
        %1840 = vmatpush1.bf16.msra.mxu0 0
        %1841 = vmatprep.subr.bf16.mxu0 0
        %1842 = vmatpush1.bf16.msra.mxu0 0
        %1843 = vmatprep.subr.bf16.mxu0 0
        %1844 = vmatpush1.bf16.msra.mxu0 0
        %1845 = vmatprep.subr.bf16.mxu0 0
        %1846 = vmatpush1.bf16.msra.mxu0 0
        %1847 = vmatprep.mubr.bf16.mxu0 0
        %1848 = vmatmul.mubr.bf16.gmra.mrb[0].mxu0 %v564
        %v1849 = vpop.f32.mrb[0].mxu0
        %v1850 = vadd.f32 0.0, %v1849
        %v1851 = vpop.f32.mrb[0].mxu0
        %v1852 = vpop.f32.mrb[0].mxu0
        %v1853 = vpop.f32.mrb[0].mxu0
        %1854 = vdwg.mxu0
        %1856 = vrot.lane.b32.xlu0 %v1850, 16
        %v1857 = vpop.permute.xlu0 %1856
        %1859 = vst.msk [vmem:[#allocation2 + $0x51] sm:$0xff] %vm610, %v1857
        %v1860 = vpack.c.bf16 %v502, %v501
        %1861 = vmatprep.subr.bf16.mxu0 0
        %1862 = vmatpush1.bf16.msra.mxu0 %v1860
        %1863 = vmatprep.subr.bf16.mxu0 0
        %1864 = vmatpush1.bf16.msra.mxu0 0
        %1865 = vmatprep.subr.bf16.mxu0 0
        %1866 = vmatpush1.bf16.msra.mxu0 0
        %1867 = vmatprep.subr.bf16.mxu0 0
        %1868 = vmatpush1.bf16.msra.mxu0 0
        %1869 = vmatprep.subr.bf16.mxu0 0
        %1870 = vmatpush1.bf16.msra.mxu0 0
        %1871 = vmatprep.subr.bf16.mxu0 0
        %1872 = vmatpush1.bf16.msra.mxu0 0
        %1873 = vmatprep.subr.bf16.mxu0 0
        %1874 = vmatpush1.bf16.msra.mxu0 0
        %1875 = vmatprep.subr.bf16.mxu0 0
        %1876 = vmatpush1.bf16.msra.mxu0 0
        %1877 = vmatprep.subr.bf16.mxu0 0
        %1878 = vmatpush1.bf16.msra.mxu0 0
        %1879 = vmatprep.subr.bf16.mxu0 0
        %1880 = vmatpush1.bf16.msra.mxu0 0
        %1881 = vmatprep.subr.bf16.mxu0 0
        %1882 = vmatpush1.bf16.msra.mxu0 0
        %1883 = vmatprep.subr.bf16.mxu0 0
        %1884 = vmatpush1.bf16.msra.mxu0 0
        %1885 = vmatprep.subr.bf16.mxu0 0
        %1886 = vmatpush1.bf16.msra.mxu0 0
        %1887 = vmatprep.subr.bf16.mxu0 0
        %1888 = vmatpush1.bf16.msra.mxu0 0
        %1889 = vmatprep.subr.bf16.mxu0 0
        %1890 = vmatpush1.bf16.msra.mxu0 0
        %1891 = vmatprep.subr.bf16.mxu0 0
        %1892 = vmatpush1.bf16.msra.mxu0 0
        %1893 = vmatprep.mubr.bf16.mxu0 0
        %1894 = vmatmul.mubr.bf16.gmra.mrb[0].mxu0 %v520
        %v1895 = vpop.f32.mrb[0].mxu0
        %v1896 = vadd.f32 0.0, %v1895
        %v1897 = vpop.f32.mrb[0].mxu0
        %v1898 = vpop.f32.mrb[0].mxu0
        %v1899 = vpop.f32.mrb[0].mxu0
        %1900 = vdwg.mxu0
        %1902 = vrot.lane.b32.xlu0 %v1896, 32
        %v1903 = vpop.permute.xlu0 %1902
        %1905 = vst.msk [vmem:[#allocation2 + $0x51] sm:$0xff] %vm657, %v1903
        %1906 = vmatprep.subr.bf16.mxu0 0
        %1907 = vmatpush1.bf16.msra.mxu0 %v1860
        %1908 = vmatprep.subr.bf16.mxu0 0
        %1909 = vmatpush1.bf16.msra.mxu0 0
        %1910 = vmatprep.subr.bf16.mxu0 0
        %1911 = vmatpush1.bf16.msra.mxu0 0
        %1912 = vmatprep.subr.bf16.mxu0 0
        %1913 = vmatpush1.bf16.msra.mxu0 0
        %1914 = vmatprep.subr.bf16.mxu0 0
        %1915 = vmatpush1.bf16.msra.mxu0 0
        %1916 = vmatprep.subr.bf16.mxu0 0
        %1917 = vmatpush1.bf16.msra.mxu0 0
        %1918 = vmatprep.subr.bf16.mxu0 0
        %1919 = vmatpush1.bf16.msra.mxu0 0
        %1920 = vmatprep.subr.bf16.mxu0 0
        %1921 = vmatpush1.bf16.msra.mxu0 0
        %1922 = vmatprep.subr.bf16.mxu0 0
        %1923 = vmatpush1.bf16.msra.mxu0 0
        %1924 = vmatprep.subr.bf16.mxu0 0
        %1925 = vmatpush1.bf16.msra.mxu0 0
        %1926 = vmatprep.subr.bf16.mxu0 0
        %1927 = vmatpush1.bf16.msra.mxu0 0
        %1928 = vmatprep.subr.bf16.mxu0 0
        %1929 = vmatpush1.bf16.msra.mxu0 0
        %1930 = vmatprep.subr.bf16.mxu0 0
        %1931 = vmatpush1.bf16.msra.mxu0 0
        %1932 = vmatprep.subr.bf16.mxu0 0
        %1933 = vmatpush1.bf16.msra.mxu0 0
        %1934 = vmatprep.subr.bf16.mxu0 0
        %1935 = vmatpush1.bf16.msra.mxu0 0
        %1936 = vmatprep.subr.bf16.mxu0 0
        %1937 = vmatpush1.bf16.msra.mxu0 0
        %1938 = vmatprep.mubr.bf16.mxu0 0
        %1939 = vmatmul.mubr.bf16.gmra.mrb[0].mxu0 %v564
        %v1940 = vpop.f32.mrb[0].mxu0
        %v1941 = vadd.f32 0.0, %v1940
        %v1942 = vpop.f32.mrb[0].mxu0
        %v1943 = vpop.f32.mrb[0].mxu0
        %v1944 = vpop.f32.mrb[0].mxu0
        %1945 = vdwg.mxu0
        %1947 = vrot.lane.b32.xlu0 %v1941, 48
        %v1948 = vpop.permute.xlu0 %1947
        %1950 = vst.msk [vmem:[#allocation2 + $0x51] sm:$0xff] %vm703, %v1948
        %v1951 = vld [vmem:[#allocation2] sm:$0xff]
        %v1952 = vld [vmem:[#allocation2 + $0x8] sm:$0xff]
        %v1953 = vld [vmem:[#allocation2 + $0x10] sm:$0xff]
        %v1954 = vld [vmem:[#allocation2 + $0x18] sm:$0xff]
        %v1955 = vld [vmem:[#allocation2 + $0x20] sm:$0xff]
        %v1956 = vld [vmem:[#allocation2 + $0x28] sm:$0xff]
        %v1957 = vld [vmem:[#allocation2 + $0x30] sm:$0xff]
        %v1958 = vld [vmem:[#allocation2 + $0x38] sm:$0xff]
        %v1959 = vld [vmem:[#allocation2 + $0x40] sm:$0xff]
        %v1960 = vld [vmem:[#allocation2 + $0x48] sm:$0xff]
        %v1961 = vld [vmem:[#allocation2 + $0x50] sm:$0xff]
        %v1962 = vld [vmem:[#allocation2 + $0x58] sm:$0x1]
        %v1963 = vpack.c.bf16 %v1952, %v1951
        %v1964 = vpack.c.bf16 %v1954, %v1953
        %v1965 = vpack.c.bf16 %v1956, %v1955
        %v1966 = vpack.c.bf16 %v1958, %v1957
        %v1967 = vpack.c.bf16 %v1960, %v1959
        %v1968 = vpack.c.bf16 %v1962, %v1961
        %v1969 = vld [vmem:[#allocation7] sm:$0xf]
        %v1970 = vld [vmem:[#allocation7 + $0x4] sm:$0xf]
        %v1971 = vld [vmem:[#allocation7 + $0x8] sm:$0xf]
        %v1972 = vld [vmem:[#allocation7 + $0xc] sm:$0xf]
        %v1973 = vld [vmem:[#allocation7 + $0x10] sm:$0xf]
        %v1974 = vld [vmem:[#allocation7 + $0x14] sm:$0xf]
        %v1975 = vld [vmem:[#allocation7 + $0x18] sm:$0xf]
        %v1976 = vld [vmem:[#allocation7 + $0x1c] sm:$0xf]
        %v1977 = vld [vmem:[#allocation2 + $0x1] sm:$0xff]
        %v1978 = vld [vmem:[#allocation2 + $0x9] sm:$0xff]
        %v1979 = vld [vmem:[#allocation2 + $0x11] sm:$0xff]
        %v1980 = vld [vmem:[#allocation2 + $0x19] sm:$0xff]
        %v1981 = vld [vmem:[#allocation2 + $0x21] sm:$0xff]
        %v1982 = vld [vmem:[#allocation2 + $0x29] sm:$0xff]
        %v1983 = vld [vmem:[#allocation2 + $0x31] sm:$0xff]
        %v1984 = vld [vmem:[#allocation2 + $0x39] sm:$0xff]
        %v1985 = vld [vmem:[#allocation2 + $0x41] sm:$0xff]
        %v1986 = vld [vmem:[#allocation2 + $0x49] sm:$0xff]
        %v1987 = vld [vmem:[#allocation2 + $0x51] sm:$0xff]
        %v1988 = vld [vmem:[#allocation2 + $0x59] sm:$0x1]
        %v1989 = vpack.c.bf16 %v1978, %v1977
        %v1990 = vpack.c.bf16 %v1980, %v1979
        %v1991 = vpack.c.bf16 %v1982, %v1981
        %v1992 = vpack.c.bf16 %v1984, %v1983
        %v1993 = vpack.c.bf16 %v1986, %v1985
        %v1994 = vpack.c.bf16 %v1988, %v1987
        %s1995 = scalar_lea.vmem [#allocation7], 32
        %v1996 = vld [vmem:[%s1995] sm:$0xf]
        %v1997 = vld [vmem:[%s1995 + $0x4] sm:$0xf]
        %v1998 = vld [vmem:[%s1995 + $0x8] sm:$0xf]
        %v1999 = vld [vmem:[%s1995 + $0xc] sm:$0xf]
        %v2000 = vld [vmem:[%s1995 + $0x10] sm:$0xf]
        %v2001 = vld [vmem:[%s1995 + $0x14] sm:$0xf]
        %v2002 = vld [vmem:[%s1995 + $0x18] sm:$0xf]
        %v2003 = vld [vmem:[%s1995 + $0x1c] sm:$0xf]
        %v2012 = vunpack.c.l.b16 %v1996
        %v2013 = vunpack.c.l.b16 %v1997
        %v2014 = vunpack.c.l.b16 %v1998
        %v2015 = vunpack.c.l.b16 %v1999
        %v2016 = vunpack.c.l.b16 %v2000
        %v2017 = vunpack.c.l.b16 %v2001
        %v2018 = vunpack.c.l.b16 %v2002
        %v2019 = vunpack.c.l.b16 %v2003
        %v2020 = vpack.c.b16 %v2013, %v2012
        %v2021 = vpack.c.b16 %v2015, %v2014
        %v2022 = vpack.c.b16 %v2017, %v2016
        %v2023 = vpack.c.b16 %v2019, %v2018
        %v2029 = vsel %vm418, %v1989, 0
        %v2032 = vsel %vm418, %v1990, 0
        %v2035 = vsel %vm418, %v1991, 0
        %v2038 = vsel %vm418, %v1992, 0
        %v2041 = vsel %vm418, %v1993, 0
        %v2044 = vsel %vm418, %v1994, 0
        %2046 = vmatprep.subr.bf16.mxu0 0
        %2047 = vmatpush1.bf16.msra.mxu0 %v2020
        %2048 = vmatprep.subr.bf16.mxu0 0
        %2049 = vmatpush1.bf16.msra.mxu0 %v2021
        %2050 = vmatprep.subr.bf16.mxu0 0
        %2051 = vmatpush1.bf16.msra.mxu0 %v2022
        %2052 = vmatprep.subr.bf16.mxu0 0
        %2053 = vmatpush1.bf16.msra.mxu0 %v2023
        %2054 = vmatprep.subr.bf16.mxu0 0
        %2055 = vmatpush1.bf16.msra.mxu0 0
        %2056 = vmatprep.subr.bf16.mxu0 0
        %2057 = vmatpush1.bf16.msra.mxu0 0
        %2058 = vmatprep.subr.bf16.mxu0 0
        %2059 = vmatpush1.bf16.msra.mxu0 0
        %2060 = vmatprep.subr.bf16.mxu0 0
        %2061 = vmatpush1.bf16.msra.mxu0 0
        %2062 = vmatprep.subr.bf16.mxu0 0
        %2063 = vmatpush1.bf16.msra.mxu0 0
        %2064 = vmatprep.subr.bf16.mxu0 0
        %2065 = vmatpush1.bf16.msra.mxu0 0
        %2066 = vmatprep.subr.bf16.mxu0 0
        %2067 = vmatpush1.bf16.msra.mxu0 0
        %2068 = vmatprep.subr.bf16.mxu0 0
        %2069 = vmatpush1.bf16.msra.mxu0 0
        %2070 = vmatprep.subr.bf16.mxu0 0
        %2071 = vmatpush1.bf16.msra.mxu0 0
        %2072 = vmatprep.subr.bf16.mxu0 0
        %2073 = vmatpush1.bf16.msra.mxu0 0
        %2074 = vmatprep.subr.bf16.mxu0 0
        %2075 = vmatpush1.bf16.msra.mxu0 0
        %2076 = vmatprep.subr.bf16.mxu0 0
        %2077 = vmatpush1.bf16.msra.mxu0 0
        %2078 = vmatprep.mubr.bf16.mxu0 0
        %2079 = vmatmul.mubr.bf16.gmra.mrb[0].mxu0 %v2029
        %v2080 = vpop.f32.mrb[0].mxu0
        %v2081 = vadd.f32 0.0, %v2080
        %v2082 = vpop.f32.mrb[0].mxu0
        %v2083 = vpop.f32.mrb[0].mxu0
        %v2084 = vadd.f32 0.0, %v2083
        %v2085 = vpop.f32.mrb[0].mxu0
        %2086 = vmatprep.mubr.bf16.mxu0 0
        %2087 = vmatmul.mubr.bf16.gmra.mrb[0].mxu0 %v2032
        %v2088 = vpop.f32.mrb[0].mxu0
        %v2089 = vadd.f32 0.0, %v2088
        %v2090 = vpop.f32.mrb[0].mxu0
        %v2091 = vpop.f32.mrb[0].mxu0
        %v2092 = vadd.f32 0.0, %v2091
        %v2093 = vpop.f32.mrb[0].mxu0
        %2094 = vmatprep.mubr.bf16.mxu0 0
        %2095 = vmatmul.mubr.bf16.gmra.mrb[0].mxu0 %v2035
        %v2096 = vpop.f32.mrb[0].mxu0
        %v2097 = vadd.f32 0.0, %v2096
        %v2098 = vpop.f32.mrb[0].mxu0
        %v2099 = vpop.f32.mrb[0].mxu0
        %v2100 = vadd.f32 0.0, %v2099
        %v2101 = vpop.f32.mrb[0].mxu0
        %2102 = vmatprep.mubr.bf16.mxu0 0
        %2103 = vmatmul.mubr.bf16.gmra.mrb[0].mxu0 %v2038
        %v2104 = vpop.f32.mrb[0].mxu0
        %v2105 = vadd.f32 0.0, %v2104
        %v2106 = vpop.f32.mrb[0].mxu0
        %v2107 = vpop.f32.mrb[0].mxu0
        %v2108 = vadd.f32 0.0, %v2107
        %v2109 = vpop.f32.mrb[0].mxu0
        %2110 = vmatprep.mubr.bf16.mxu0 0
        %2111 = vmatmul.mubr.bf16.gmra.mrb[0].mxu0 %v2041
        %v2112 = vpop.f32.mrb[0].mxu0
        %v2113 = vadd.f32 0.0, %v2112
        %v2114 = vpop.f32.mrb[0].mxu0
        %v2115 = vpop.f32.mrb[0].mxu0
        %v2116 = vadd.f32 0.0, %v2115
        %v2117 = vpop.f32.mrb[0].mxu0
        %2118 = vmatprep.mubr.bf16.mxu0 0
        %2119 = vmatmul.mubr.bf16.gmra.mrb[0].mxu0 %v2044
        %v2120 = vpop.f32.mrb[0].mxu0
        %v2121 = vadd.f32 0.0, %v2120
        %v2122 = vpop.f32.mrb[0].mxu0
        %v2123 = vpop.f32.mrb[0].mxu0
        %v2124 = vadd.f32 0.0, %v2123
        %v2125 = vpop.f32.mrb[0].mxu0
        %2126 = vdwg.mxu0
        %v2135 = vunpack.c.l.b16 %v1969
        %v2136 = vunpack.c.l.b16 %v1970
        %v2137 = vunpack.c.l.b16 %v1971
        %v2138 = vunpack.c.l.b16 %v1972
        %v2139 = vunpack.c.l.b16 %v1973
        %v2140 = vunpack.c.l.b16 %v1974
        %v2141 = vunpack.c.l.b16 %v1975
        %v2142 = vunpack.c.l.b16 %v1976
        %v2143 = vpack.c.b16 %v2136, %v2135
        %v2144 = vpack.c.b16 %v2138, %v2137
        %v2145 = vpack.c.b16 %v2140, %v2139
        %v2146 = vpack.c.b16 %v2142, %v2141
        %v2152 = vsel %vm418, %v1963, 0
        %v2155 = vsel %vm418, %v1964, 0
        %v2158 = vsel %vm418, %v1965, 0
        %v2161 = vsel %vm418, %v1966, 0
        %v2164 = vsel %vm418, %v1967, 0
        %v2167 = vsel %vm418, %v1968, 0
        %2169 = vmatprep.subr.bf16.mxu0 0
        %2170 = vmatpush1.bf16.msra.mxu0 %v2143
        %2171 = vmatprep.subr.bf16.mxu0 0
        %2172 = vmatpush1.bf16.msra.mxu0 %v2144
        %2173 = vmatprep.subr.bf16.mxu0 0
        %2174 = vmatpush1.bf16.msra.mxu0 %v2145
        %2175 = vmatprep.subr.bf16.mxu0 0
        %2176 = vmatpush1.bf16.msra.mxu0 %v2146
        %2177 = vmatprep.subr.bf16.mxu0 0
        %2178 = vmatpush1.bf16.msra.mxu0 0
        %2179 = vmatprep.subr.bf16.mxu0 0
        %2180 = vmatpush1.bf16.msra.mxu0 0
        %2181 = vmatprep.subr.bf16.mxu0 0
        %2182 = vmatpush1.bf16.msra.mxu0 0
        %2183 = vmatprep.subr.bf16.mxu0 0
        %2184 = vmatpush1.bf16.msra.mxu0 0
        %2185 = vmatprep.subr.bf16.mxu0 0
        %2186 = vmatpush1.bf16.msra.mxu0 0
        %2187 = vmatprep.subr.bf16.mxu0 0
        %2188 = vmatpush1.bf16.msra.mxu0 0
        %2189 = vmatprep.subr.bf16.mxu0 0
        %2190 = vmatpush1.bf16.msra.mxu0 0
        %2191 = vmatprep.subr.bf16.mxu0 0
        %2192 = vmatpush1.bf16.msra.mxu0 0
        %2193 = vmatprep.subr.bf16.mxu0 0
        %2194 = vmatpush1.bf16.msra.mxu0 0
        %2195 = vmatprep.subr.bf16.mxu0 0
        %2196 = vmatpush1.bf16.msra.mxu0 0
        %2197 = vmatprep.subr.bf16.mxu0 0
        %2198 = vmatpush1.bf16.msra.mxu0 0
        %2199 = vmatprep.subr.bf16.mxu0 0
        %2200 = vmatpush1.bf16.msra.mxu0 0
        %2201 = vmatprep.mubr.bf16.mxu0 0
        %2202 = vmatmul.mubr.bf16.gmra.mrb[0].mxu0 %v2152
        %v2203 = vpop.f32.mrb[0].mxu0
        %v2204 = vadd.f32 %v2081, %v2203
        %v2205 = vpop.f32.mrb[0].mxu0
        %v2206 = vpop.f32.mrb[0].mxu0
        %v2207 = vadd.f32 %v2084, %v2206
        %v2208 = vpop.f32.mrb[0].mxu0
        %2209 = vmatprep.mubr.bf16.mxu0 0
        %2210 = vmatmul.mubr.bf16.gmra.mrb[0].mxu0 %v2155
        %v2211 = vpop.f32.mrb[0].mxu0
        %v2212 = vadd.f32 %v2089, %v2211
        %v2213 = vpop.f32.mrb[0].mxu0
        %v2214 = vpop.f32.mrb[0].mxu0
        %v2215 = vadd.f32 %v2092, %v2214
        %v2216 = vpop.f32.mrb[0].mxu0
        %2217 = vmatprep.mubr.bf16.mxu0 0
        %2218 = vmatmul.mubr.bf16.gmra.mrb[0].mxu0 %v2158
        %v2219 = vpop.f32.mrb[0].mxu0
        %v2220 = vadd.f32 %v2097, %v2219
        %v2221 = vpop.f32.mrb[0].mxu0
        %v2222 = vpop.f32.mrb[0].mxu0
        %v2223 = vadd.f32 %v2100, %v2222
        %v2224 = vpop.f32.mrb[0].mxu0
        %2225 = vmatprep.mubr.bf16.mxu0 0
        %2226 = vmatmul.mubr.bf16.gmra.mrb[0].mxu0 %v2161
        %v2227 = vpop.f32.mrb[0].mxu0
        %v2228 = vadd.f32 %v2105, %v2227
        %v2229 = vpop.f32.mrb[0].mxu0
        %v2230 = vpop.f32.mrb[0].mxu0
        %v2231 = vadd.f32 %v2108, %v2230
        %v2232 = vpop.f32.mrb[0].mxu0
        %2233 = vmatprep.mubr.bf16.mxu0 0
        %2234 = vmatmul.mubr.bf16.gmra.mrb[0].mxu0 %v2164
        %v2235 = vpop.f32.mrb[0].mxu0
        %v2236 = vadd.f32 %v2113, %v2235
        %v2237 = vpop.f32.mrb[0].mxu0
        %v2238 = vpop.f32.mrb[0].mxu0
        %v2239 = vadd.f32 %v2116, %v2238
        %v2240 = vpop.f32.mrb[0].mxu0
        %2241 = vmatprep.mubr.bf16.mxu0 0
        %2242 = vmatmul.mubr.bf16.gmra.mrb[0].mxu0 %v2167
        %v2243 = vpop.f32.mrb[0].mxu0
        %v2244 = vadd.f32 %v2121, %v2243
        %v2245 = vpop.f32.mrb[0].mxu0
        %v2246 = vpop.f32.mrb[0].mxu0
        %v2247 = vadd.f32 %v2124, %v2246
        %v2248 = vpop.f32.mrb[0].mxu0
        %2249 = vdwg.mxu0
        %v2250 = vld [vmem:[#allocation2 + $0xa] sm:$0xff]
        %v2251 = vld [vmem:[#allocation2 + $0x12] sm:$0xff]
        %v2252 = vld [vmem:[#allocation2 + $0x1a] sm:$0xff]
        %v2253 = vld [vmem:[#allocation2 + $0x22] sm:$0xff]
        %v2254 = vld [vmem:[#allocation2 + $0x2a] sm:$0xff]
        %v2255 = vld [vmem:[#allocation2 + $0x32] sm:$0xff]
        %v2256 = vld [vmem:[#allocation2 + $0x3a] sm:$0xff]
        %v2257 = vld [vmem:[#allocation2 + $0x42] sm:$0xff]
        %v2258 = vld [vmem:[#allocation2 + $0x4a] sm:$0xff]
        %v2259 = vld [vmem:[#allocation2 + $0x52] sm:$0xff]
        %v2260 = vld [vmem:[#allocation2 + $0x5a] sm:$0xff]
        %v2261 = vld [vmem:[#allocation2 + $0x62] sm:$0x1]
        %v2262 = vpack.c.bf16 %v2251, %v2250
        %v2263 = vpack.c.bf16 %v2253, %v2252
        %v2264 = vpack.c.bf16 %v2255, %v2254
        %v2265 = vpack.c.bf16 %v2257, %v2256
        %v2266 = vpack.c.bf16 %v2259, %v2258
        %v2267 = vpack.c.bf16 %v2261, %v2260
        %s2268 = scalar_lea.vmem [#allocation7], 64
        %v2269 = vld [vmem:[%s2268] sm:$0xf]
        %v2270 = vld [vmem:[%s2268 + $0x4] sm:$0xf]
        %v2271 = vld [vmem:[%s2268 + $0x8] sm:$0xf]
        %v2272 = vld [vmem:[%s2268 + $0xc] sm:$0xf]
        %v2273 = vld [vmem:[%s2268 + $0x10] sm:$0xf]
        %v2274 = vld [vmem:[%s2268 + $0x14] sm:$0xf]
        %v2275 = vld [vmem:[%s2268 + $0x18] sm:$0xf]
        %v2276 = vld [vmem:[%s2268 + $0x1c] sm:$0xf]
        %v2285 = vunpack.c.l.b16 %v2269
        %v2286 = vunpack.c.l.b16 %v2270
        %v2287 = vunpack.c.l.b16 %v2271
        %v2288 = vunpack.c.l.b16 %v2272
        %v2289 = vunpack.c.l.b16 %v2273
        %v2290 = vunpack.c.l.b16 %v2274
        %v2291 = vunpack.c.l.b16 %v2275
        %v2292 = vunpack.c.l.b16 %v2276
        %v2293 = vpack.c.b16 %v2286, %v2285
        %v2294 = vpack.c.b16 %v2288, %v2287
        %v2295 = vpack.c.b16 %v2290, %v2289
        %v2296 = vpack.c.b16 %v2292, %v2291
        %v2302 = vsel %vm418, %v2262, 0
        %v2305 = vsel %vm418, %v2263, 0
        %v2308 = vsel %vm418, %v2264, 0
        %v2311 = vsel %vm418, %v2265, 0
        %v2314 = vsel %vm418, %v2266, 0
        %v2317 = vsel %vm418, %v2267, 0
        %2319 = vmatprep.subr.bf16.mxu0 0
        %2320 = vmatpush1.bf16.msra.mxu0 %v2293
        %2321 = vmatprep.subr.bf16.mxu0 0
        %2322 = vmatpush1.bf16.msra.mxu0 %v2294
        %2323 = vmatprep.subr.bf16.mxu0 0
        %2324 = vmatpush1.bf16.msra.mxu0 %v2295
        %2325 = vmatprep.subr.bf16.mxu0 0
        %2326 = vmatpush1.bf16.msra.mxu0 %v2296
        %2327 = vmatprep.subr.bf16.mxu0 0
        %2328 = vmatpush1.bf16.msra.mxu0 0
        %2329 = vmatprep.subr.bf16.mxu0 0
        %2330 = vmatpush1.bf16.msra.mxu0 0
        %2331 = vmatprep.subr.bf16.mxu0 0
        %2332 = vmatpush1.bf16.msra.mxu0 0
        %2333 = vmatprep.subr.bf16.mxu0 0
        %2334 = vmatpush1.bf16.msra.mxu0 0
        %2335 = vmatprep.subr.bf16.mxu0 0
        %2336 = vmatpush1.bf16.msra.mxu0 0
        %2337 = vmatprep.subr.bf16.mxu0 0
        %2338 = vmatpush1.bf16.msra.mxu0 0
        %2339 = vmatprep.subr.bf16.mxu0 0
        %2340 = vmatpush1.bf16.msra.mxu0 0
        %2341 = vmatprep.subr.bf16.mxu0 0
        %2342 = vmatpush1.bf16.msra.mxu0 0
        %2343 = vmatprep.subr.bf16.mxu0 0
        %2344 = vmatpush1.bf16.msra.mxu0 0
        %2345 = vmatprep.subr.bf16.mxu0 0
        %2346 = vmatpush1.bf16.msra.mxu0 0
        %2347 = vmatprep.subr.bf16.mxu0 0
        %2348 = vmatpush1.bf16.msra.mxu0 0
        %2349 = vmatprep.subr.bf16.mxu0 0
        %2350 = vmatpush1.bf16.msra.mxu0 0
        %2351 = vmatprep.mubr.bf16.mxu0 0
        %2352 = vmatmul.mubr.bf16.gmra.mrb[0].mxu0 %v2302
        %v2353 = vpop.f32.mrb[0].mxu0
        %v2354 = vadd.f32 0.0, %v2353
        %v2355 = vpop.f32.mrb[0].mxu0
        %v2356 = vpop.f32.mrb[0].mxu0
        %v2357 = vadd.f32 0.0, %v2356
        %v2358 = vpop.f32.mrb[0].mxu0
        %2359 = vmatprep.mubr.bf16.mxu0 0
        %2360 = vmatmul.mubr.bf16.gmra.mrb[0].mxu0 %v2305
        %v2361 = vpop.f32.mrb[0].mxu0
        %v2362 = vadd.f32 0.0, %v2361
        %v2363 = vpop.f32.mrb[0].mxu0
        %v2364 = vpop.f32.mrb[0].mxu0
        %v2365 = vadd.f32 0.0, %v2364
        %v2366 = vpop.f32.mrb[0].mxu0
        %2367 = vmatprep.mubr.bf16.mxu0 0
        %2368 = vmatmul.mubr.bf16.gmra.mrb[0].mxu0 %v2308
        %v2369 = vpop.f32.mrb[0].mxu0
        %v2370 = vadd.f32 0.0, %v2369
        %v2371 = vpop.f32.mrb[0].mxu0
        %v2372 = vpop.f32.mrb[0].mxu0
        %v2373 = vadd.f32 0.0, %v2372
        %v2374 = vpop.f32.mrb[0].mxu0
        %2375 = vmatprep.mubr.bf16.mxu0 0
        %2376 = vmatmul.mubr.bf16.gmra.mrb[0].mxu0 %v2311
        %v2377 = vpop.f32.mrb[0].mxu0
        %v2378 = vadd.f32 0.0, %v2377
        %v2379 = vpop.f32.mrb[0].mxu0
        %v2380 = vpop.f32.mrb[0].mxu0
        %v2381 = vadd.f32 0.0, %v2380
        %v2382 = vpop.f32.mrb[0].mxu0
        %2383 = vmatprep.mubr.bf16.mxu0 0
        %2384 = vmatmul.mubr.bf16.gmra.mrb[0].mxu0 %v2314
        %v2385 = vpop.f32.mrb[0].mxu0
        %v2386 = vadd.f32 0.0, %v2385
        %v2387 = vpop.f32.mrb[0].mxu0
        %v2388 = vpop.f32.mrb[0].mxu0
        %v2389 = vadd.f32 0.0, %v2388
        %v2390 = vpop.f32.mrb[0].mxu0
        %2391 = vmatprep.mubr.bf16.mxu0 0
        %2392 = vmatmul.mubr.bf16.gmra.mrb[0].mxu0 %v2317
        %v2393 = vpop.f32.mrb[0].mxu0
        %v2394 = vadd.f32 0.0, %v2393
        %v2395 = vpop.f32.mrb[0].mxu0
        %v2396 = vpop.f32.mrb[0].mxu0
        %v2397 = vadd.f32 0.0, %v2396
        %v2398 = vpop.f32.mrb[0].mxu0
        %2399 = vdwg.mxu0
        %v2400 = vadd.f32 %v2204, %v2354
        %v2401 = vadd.f32 %v2207, %v2357
        %v2402 = vadd.f32 %v2212, %v2362
        %v2403 = vadd.f32 %v2215, %v2365
        %v2404 = vadd.f32 %v2220, %v2370
        %v2405 = vadd.f32 %v2223, %v2373
        %v2406 = vadd.f32 %v2228, %v2378
        %v2407 = vadd.f32 %v2231, %v2381
        %v2408 = vadd.f32 %v2236, %v2386
        %v2409 = vadd.f32 %v2239, %v2389
        %v2410 = vadd.f32 %v2244, %v2394
        %v2411 = vadd.f32 %v2247, %v2397
        %v2412 = vld [vmem:[#allocation2 + $0xb] sm:$0xff]
        %v2413 = vld [vmem:[#allocation2 + $0x13] sm:$0xff]
        %v2414 = vld [vmem:[#allocation2 + $0x1b] sm:$0xff]
        %v2415 = vld [vmem:[#allocation2 + $0x23] sm:$0xff]
        %v2416 = vld [vmem:[#allocation2 + $0x2b] sm:$0xff]
        %v2417 = vld [vmem:[#allocation2 + $0x33] sm:$0xff]
        %v2418 = vld [vmem:[#allocation2 + $0x3b] sm:$0xff]
        %v2419 = vld [vmem:[#allocation2 + $0x43] sm:$0xff]
        %v2420 = vld [vmem:[#allocation2 + $0x4b] sm:$0xff]
        %v2421 = vld [vmem:[#allocation2 + $0x53] sm:$0xff]
        %v2422 = vld [vmem:[#allocation2 + $0x5b] sm:$0xff]
        %v2423 = vld [vmem:[#allocation2 + $0x63] sm:$0x1]
        %v2424 = vpack.c.bf16 %v2413, %v2412
        %v2425 = vpack.c.bf16 %v2415, %v2414
        %v2426 = vpack.c.bf16 %v2417, %v2416
        %v2427 = vpack.c.bf16 %v2419, %v2418
        %v2428 = vpack.c.bf16 %v2421, %v2420
        %v2429 = vpack.c.bf16 %v2423, %v2422
        %s2430 = scalar_lea.vmem [#allocation7], 96
        %v2431 = vld [vmem:[%s2430] sm:$0xf]
        %v2432 = vld [vmem:[%s2430 + $0x4] sm:$0xf]
        %v2433 = vld [vmem:[%s2430 + $0x8] sm:$0xf]
        %v2434 = vld [vmem:[%s2430 + $0xc] sm:$0xf]
        %v2435 = vld [vmem:[%s2430 + $0x10] sm:$0xf]
        %v2436 = vld [vmem:[%s2430 + $0x14] sm:$0xf]
        %v2437 = vld [vmem:[%s2430 + $0x18] sm:$0xf]
        %v2438 = vld [vmem:[%s2430 + $0x1c] sm:$0xf]
        %v2447 = vunpack.c.l.b16 %v2431
        %v2448 = vunpack.c.l.b16 %v2432
        %v2449 = vunpack.c.l.b16 %v2433
        %v2450 = vunpack.c.l.b16 %v2434
        %v2451 = vunpack.c.l.b16 %v2435
        %v2452 = vunpack.c.l.b16 %v2436
        %v2453 = vunpack.c.l.b16 %v2437
        %v2454 = vunpack.c.l.b16 %v2438
        %v2455 = vpack.c.b16 %v2448, %v2447
        %v2456 = vpack.c.b16 %v2450, %v2449
        %v2457 = vpack.c.b16 %v2452, %v2451
        %v2458 = vpack.c.b16 %v2454, %v2453
        %v2464 = vsel %vm418, %v2424, 0
        %v2467 = vsel %vm418, %v2425, 0
        %v2470 = vsel %vm418, %v2426, 0
        %v2473 = vsel %vm418, %v2427, 0
        %v2476 = vsel %vm418, %v2428, 0
        %v2479 = vsel %vm418, %v2429, 0
        %2481 = vmatprep.subr.bf16.mxu0 0
        %2482 = vmatpush1.bf16.msra.mxu0 %v2455
        %2483 = vmatprep.subr.bf16.mxu0 0
        %2484 = vmatpush1.bf16.msra.mxu0 %v2456
        %2485 = vmatprep.subr.bf16.mxu0 0
        %2486 = vmatpush1.bf16.msra.mxu0 %v2457
        %2487 = vmatprep.subr.bf16.mxu0 0
        %2488 = vmatpush1.bf16.msra.mxu0 %v2458
        %2489 = vmatprep.subr.bf16.mxu0 0
        %2490 = vmatpush1.bf16.msra.mxu0 0
        %2491 = vmatprep.subr.bf16.mxu0 0
        %2492 = vmatpush1.bf16.msra.mxu0 0
        %2493 = vmatprep.subr.bf16.mxu0 0
        %2494 = vmatpush1.bf16.msra.mxu0 0
        %2495 = vmatprep.subr.bf16.mxu0 0
        %2496 = vmatpush1.bf16.msra.mxu0 0
        %2497 = vmatprep.subr.bf16.mxu0 0
        %2498 = vmatpush1.bf16.msra.mxu0 0
        %2499 = vmatprep.subr.bf16.mxu0 0
        %2500 = vmatpush1.bf16.msra.mxu0 0
        %2501 = vmatprep.subr.bf16.mxu0 0
        %2502 = vmatpush1.bf16.msra.mxu0 0
        %2503 = vmatprep.subr.bf16.mxu0 0
        %2504 = vmatpush1.bf16.msra.mxu0 0
        %2505 = vmatprep.subr.bf16.mxu0 0
        %2506 = vmatpush1.bf16.msra.mxu0 0
        %2507 = vmatprep.subr.bf16.mxu0 0
        %2508 = vmatpush1.bf16.msra.mxu0 0
        %2509 = vmatprep.subr.bf16.mxu0 0
        %2510 = vmatpush1.bf16.msra.mxu0 0
        %2511 = vmatprep.subr.bf16.mxu0 0
        %2512 = vmatpush1.bf16.msra.mxu0 0
        %2513 = vmatprep.mubr.bf16.mxu0 0
        %2514 = vmatmul.mubr.bf16.gmra.mrb[0].mxu0 %v2464
        %v2515 = vpop.f32.mrb[0].mxu0
        %v2516 = vadd.f32 0.0, %v2515
        %v2517 = vpop.f32.mrb[0].mxu0
        %v2518 = vpop.f32.mrb[0].mxu0
        %v2519 = vadd.f32 0.0, %v2518
        %v2520 = vpop.f32.mrb[0].mxu0
        %2521 = vmatprep.mubr.bf16.mxu0 0
        %2522 = vmatmul.mubr.bf16.gmra.mrb[0].mxu0 %v2467
        %v2523 = vpop.f32.mrb[0].mxu0
        %v2524 = vadd.f32 0.0, %v2523
        %v2525 = vpop.f32.mrb[0].mxu0
        %v2526 = vpop.f32.mrb[0].mxu0
        %v2527 = vadd.f32 0.0, %v2526
        %v2528 = vpop.f32.mrb[0].mxu0
        %2529 = vmatprep.mubr.bf16.mxu0 0
        %2530 = vmatmul.mubr.bf16.gmra.mrb[0].mxu0 %v2470
        %v2531 = vpop.f32.mrb[0].mxu0
        %v2532 = vadd.f32 0.0, %v2531
        %v2533 = vpop.f32.mrb[0].mxu0
        %v2534 = vpop.f32.mrb[0].mxu0
        %v2535 = vadd.f32 0.0, %v2534
        %v2536 = vpop.f32.mrb[0].mxu0
        %2537 = vmatprep.mubr.bf16.mxu0 0
        %2538 = vmatmul.mubr.bf16.gmra.mrb[0].mxu0 %v2473
        %v2539 = vpop.f32.mrb[0].mxu0
        %v2540 = vadd.f32 0.0, %v2539
        %v2541 = vpop.f32.mrb[0].mxu0
        %v2542 = vpop.f32.mrb[0].mxu0
        %v2543 = vadd.f32 0.0, %v2542
        %v2544 = vpop.f32.mrb[0].mxu0
        %2545 = vmatprep.mubr.bf16.mxu0 0
        %2546 = vmatmul.mubr.bf16.gmra.mrb[0].mxu0 %v2476
        %v2547 = vpop.f32.mrb[0].mxu0
        %v2548 = vadd.f32 0.0, %v2547
        %v2549 = vpop.f32.mrb[0].mxu0
        %v2550 = vpop.f32.mrb[0].mxu0
        %v2551 = vadd.f32 0.0, %v2550
        %v2552 = vpop.f32.mrb[0].mxu0
        %2553 = vmatprep.mubr.bf16.mxu0 0
        %2554 = vmatmul.mubr.bf16.gmra.mrb[0].mxu0 %v2479
        %v2555 = vpop.f32.mrb[0].mxu0
        %v2556 = vadd.f32 0.0, %v2555
        %v2557 = vpop.f32.mrb[0].mxu0
        %v2558 = vpop.f32.mrb[0].mxu0
        %v2559 = vadd.f32 0.0, %v2558
        %v2560 = vpop.f32.mrb[0].mxu0
        %2561 = vdwg.mxu0
        %v2562 = vadd.f32 %v2400, %v2516
        %v2563 = vadd.f32 %v2401, %v2519
        %v2564 = vadd.f32 %v2402, %v2524
        %v2565 = vadd.f32 %v2403, %v2527
        %v2566 = vadd.f32 %v2404, %v2532
        %v2567 = vadd.f32 %v2405, %v2535
        %v2568 = vadd.f32 %v2406, %v2540
        %v2569 = vadd.f32 %v2407, %v2543
        %v2570 = vadd.f32 %v2408, %v2548
        %v2571 = vadd.f32 %v2409, %v2551
        %v2572 = vadd.f32 %v2410, %v2556
        %v2573 = vadd.f32 %v2411, %v2559
        %v2574 = vld [vmem:[%s6] sm:$0x1]
        %v2576 = vlaneseq
        %v2577 = vshrl.u32 %v2576, 7
        %v2578 = vsub.s32 0, %v2577
        %v2579 = vrot.slane %v2574, %v2578
        %v2581 = vadd.f32 %v2562, %v2579
        %v2582 = vadd.f32 %v2563, %v2579
        %v2583 = vadd.f32 %v2564, %v2579
        %v2584 = vadd.f32 %v2565, %v2579
        %v2585 = vadd.f32 %v2566, %v2579
        %v2586 = vadd.f32 %v2567, %v2579
        %v2587 = vadd.f32 %v2568, %v2579
        %v2588 = vadd.f32 %v2569, %v2579
        %v2589 = vadd.f32 %v2570, %v2579
        %v2590 = vadd.f32 %v2571, %v2579
        %v2591 = vadd.f32 %v2572, %v2579
        %v2592 = vadd.f32 %v2573, %v2579
        %vm2593 = vcmp.ge.f32.partialorder %v2581, 0.0
        %vm2594 = vcmp.ge.f32.partialorder %v2582, 0.0
        %vm2595 = vcmp.ge.f32.partialorder %v2583, 0.0
        %vm2596 = vcmp.ge.f32.partialorder %v2584, 0.0
        %vm2597 = vcmp.ge.f32.partialorder %v2585, 0.0
        %vm2598 = vcmp.ge.f32.partialorder %v2586, 0.0
        %vm2599 = vcmp.ge.f32.partialorder %v2587, 0.0
        %vm2600 = vcmp.ge.f32.partialorder %v2588, 0.0
        %vm2601 = vcmp.ge.f32.partialorder %v2589, 0.0
        %vm2602 = vcmp.ge.f32.partialorder %v2590, 0.0
        %vm2603 = vcmp.ge.f32.partialorder %v2591, 0.0
        %vm2604 = vcmp.ge.f32.partialorder %v2592, 0.0
        %v2605 = vmul.f32 %v2581, 0.2
        %v2606 = vmul.f32 %v2582, 0.2
        %v2607 = vmul.f32 %v2583, 0.2
        %v2608 = vmul.f32 %v2584, 0.2
        %v2609 = vmul.f32 %v2585, 0.2
        %v2610 = vmul.f32 %v2586, 0.2
        %v2611 = vmul.f32 %v2587, 0.2
        %v2612 = vmul.f32 %v2588, 0.2
        %v2613 = vmul.f32 %v2589, 0.2
        %v2614 = vmul.f32 %v2590, 0.2
        %v2615 = vmul.f32 %v2591, 0.2
        %v2616 = vmul.f32 %v2592, 0.2
        %v2617 = vsel %vm2593, %v2581, %v2605
        %v2618 = vsel %vm2594, %v2582, %v2606
        %v2619 = vsel %vm2595, %v2583, %v2607
        %v2620 = vsel %vm2596, %v2584, %v2608
        %v2621 = vsel %vm2597, %v2585, %v2609
        %v2622 = vsel %vm2598, %v2586, %v2610
        %v2623 = vsel %vm2599, %v2587, %v2611
        %v2624 = vsel %vm2600, %v2588, %v2612
        %v2625 = vsel %vm2601, %v2589, %v2613
        %v2626 = vsel %vm2602, %v2590, %v2614
        %v2627 = vsel %vm2603, %v2591, %v2615
        %v2628 = vsel %vm2604, %v2592, %v2616
        %v2629 = vpack.c.bf16 %v2618, %v2617
        %vm2630 = vcmask 72704
        %v2631 = vsel %vm2630, %v511, 0
        %vm2633 = vcmask 1043456
        %vm2634 = vcmask 1044480
        %v2635 = vsel %vm2633, 4294967295, 65535
        %v2636 = vsel %vm2634, %v2635, 0
        %v2638 = vand.u32 %v2629, %v2636
        %2640 = vmatprep.subr.bf16.mxu0 0
        %2641 = vmatpush1.bf16.msra.mxu0 %v2638
        %2642 = vmatprep.subr.bf16.mxu0 0
        %2643 = vmatpush1.bf16.msra.mxu0 0
        %2644 = vmatprep.subr.bf16.mxu0 0
        %2645 = vmatpush1.bf16.msra.mxu0 0
        %2646 = vmatprep.subr.bf16.mxu0 0
        %2647 = vmatpush1.bf16.msra.mxu0 0
        %2648 = vmatprep.subr.bf16.mxu0 0
        %2649 = vmatpush1.bf16.msra.mxu0 0
        %2650 = vmatprep.subr.bf16.mxu0 0
        %2651 = vmatpush1.bf16.msra.mxu0 0
        %2652 = vmatprep.subr.bf16.mxu0 0
        %2653 = vmatpush1.bf16.msra.mxu0 0
        %2654 = vmatprep.subr.bf16.mxu0 0
        %2655 = vmatpush1.bf16.msra.mxu0 0
        %2656 = vmatprep.subr.bf16.mxu0 0
        %2657 = vmatpush1.bf16.msra.mxu0 0
        %2658 = vmatprep.subr.bf16.mxu0 0
        %2659 = vmatpush1.bf16.msra.mxu0 0
        %2660 = vmatprep.subr.bf16.mxu0 0
        %2661 = vmatpush1.bf16.msra.mxu0 0
        %2662 = vmatprep.subr.bf16.mxu0 0
        %2663 = vmatpush1.bf16.msra.mxu0 0
        %2664 = vmatprep.subr.bf16.mxu0 0
        %2665 = vmatpush1.bf16.msra.mxu0 0
        %2666 = vmatprep.subr.bf16.mxu0 0
        %2667 = vmatpush1.bf16.msra.mxu0 0
        %2668 = vmatprep.subr.bf16.mxu0 0
        %2669 = vmatpush1.bf16.msra.mxu0 0
        %2670 = vmatprep.subr.bf16.mxu0 0
        %2671 = vmatpush1.bf16.msra.mxu0 0
        %2672 = vmatprep.mubr.bf16.mxu0 0
        %2673 = vmatmul.mubr.bf16.gmra.mrb[0].mxu0 %v2631
        %v2674 = vpop.f32.mrb[0].mxu0
        %v2675 = vadd.f32 0.0, %v2674
        %v2676 = vpop.f32.mrb[0].mxu0
        %v2677 = vpop.f32.mrb[0].mxu0
        %v2678 = vpop.f32.mrb[0].mxu0
        %2679 = vdwg.mxu0
        %vm2680 = vcmask 126976
        %2681 = vst.msk [vmem:[#allocation3 + $0x7] sm:$0x1f] %vm2680, %v2675
        %v2682 = vsel %vm2630, %v516, 0
        %2684 = vmatprep.subr.bf16.mxu0 0
        %2685 = vmatpush1.bf16.msra.mxu0 %v2638
        %2686 = vmatprep.subr.bf16.mxu0 0
        %2687 = vmatpush1.bf16.msra.mxu0 0
        %2688 = vmatprep.subr.bf16.mxu0 0
        %2689 = vmatpush1.bf16.msra.mxu0 0
        %2690 = vmatprep.subr.bf16.mxu0 0
        %2691 = vmatpush1.bf16.msra.mxu0 0
        %2692 = vmatprep.subr.bf16.mxu0 0
        %2693 = vmatpush1.bf16.msra.mxu0 0
        %2694 = vmatprep.subr.bf16.mxu0 0
        %2695 = vmatpush1.bf16.msra.mxu0 0
        %2696 = vmatprep.subr.bf16.mxu0 0
        %2697 = vmatpush1.bf16.msra.mxu0 0
        %2698 = vmatprep.subr.bf16.mxu0 0
        %2699 = vmatpush1.bf16.msra.mxu0 0
        %2700 = vmatprep.subr.bf16.mxu0 0
        %2701 = vmatpush1.bf16.msra.mxu0 0
        %2702 = vmatprep.subr.bf16.mxu0 0
        %2703 = vmatpush1.bf16.msra.mxu0 0
        %2704 = vmatprep.subr.bf16.mxu0 0
        %2705 = vmatpush1.bf16.msra.mxu0 0
        %2706 = vmatprep.subr.bf16.mxu0 0
        %2707 = vmatpush1.bf16.msra.mxu0 0
        %2708 = vmatprep.subr.bf16.mxu0 0
        %2709 = vmatpush1.bf16.msra.mxu0 0
        %2710 = vmatprep.subr.bf16.mxu0 0
        %2711 = vmatpush1.bf16.msra.mxu0 0
        %2712 = vmatprep.subr.bf16.mxu0 0
        %2713 = vmatpush1.bf16.msra.mxu0 0
        %2714 = vmatprep.subr.bf16.mxu0 0
        %2715 = vmatpush1.bf16.msra.mxu0 0
        %2716 = vmatprep.mubr.bf16.mxu0 0
        %2717 = vmatmul.mubr.bf16.gmra.mrb[0].mxu0 %v2682
        %v2718 = vpop.f32.mrb[0].mxu0
        %v2719 = vadd.f32 0.0, %v2718
        %v2720 = vpop.f32.mrb[0].mxu0
        %v2721 = vpop.f32.mrb[0].mxu0
        %v2722 = vpop.f32.mrb[0].mxu0
        %2723 = vdwg.mxu0
        %2725 = vrot.lane.b32.xlu0 %v2719, 16
        %v2726 = vpop.permute.xlu0 %2725
        %vm2728 = vcmask 257152
        %2729 = vst.msk [vmem:[#allocation3 + $0x7] sm:$0xf] %vm2728, %v2726
        %v2730 = vpack.c.bf16 %v2619, %v2618
        %v2732 = vrot.slane %v2730, 1
        %v2734 = vand.u32 %v2732, %v2636
        %2736 = vmatprep.subr.bf16.mxu0 0
        %2737 = vmatpush1.bf16.msra.mxu0 %v2734
        %2738 = vmatprep.subr.bf16.mxu0 0
        %2739 = vmatpush1.bf16.msra.mxu0 0
        %2740 = vmatprep.subr.bf16.mxu0 0
        %2741 = vmatpush1.bf16.msra.mxu0 0
        %2742 = vmatprep.subr.bf16.mxu0 0
        %2743 = vmatpush1.bf16.msra.mxu0 0
        %2744 = vmatprep.subr.bf16.mxu0 0
        %2745 = vmatpush1.bf16.msra.mxu0 0
        %2746 = vmatprep.subr.bf16.mxu0 0
        %2747 = vmatpush1.bf16.msra.mxu0 0
        %2748 = vmatprep.subr.bf16.mxu0 0
        %2749 = vmatpush1.bf16.msra.mxu0 0
        %2750 = vmatprep.subr.bf16.mxu0 0
        %2751 = vmatpush1.bf16.msra.mxu0 0
        %2752 = vmatprep.subr.bf16.mxu0 0
        %2753 = vmatpush1.bf16.msra.mxu0 0
        %2754 = vmatprep.subr.bf16.mxu0 0
        %2755 = vmatpush1.bf16.msra.mxu0 0
        %2756 = vmatprep.subr.bf16.mxu0 0
        %2757 = vmatpush1.bf16.msra.mxu0 0
        %2758 = vmatprep.subr.bf16.mxu0 0
        %2759 = vmatpush1.bf16.msra.mxu0 0
        %2760 = vmatprep.subr.bf16.mxu0 0
        %2761 = vmatpush1.bf16.msra.mxu0 0
        %2762 = vmatprep.subr.bf16.mxu0 0
        %2763 = vmatpush1.bf16.msra.mxu0 0
        %2764 = vmatprep.subr.bf16.mxu0 0
        %2765 = vmatpush1.bf16.msra.mxu0 0
        %2766 = vmatprep.subr.bf16.mxu0 0
        %2767 = vmatpush1.bf16.msra.mxu0 0
        %2768 = vmatprep.mubr.bf16.mxu0 0
        %2769 = vmatmul.mubr.bf16.gmra.mrb[0].mxu0 %v2631
        %v2770 = vpop.f32.mrb[0].mxu0
        %v2771 = vadd.f32 0.0, %v2770
        %v2772 = vpop.f32.mrb[0].mxu0
        %v2773 = vpop.f32.mrb[0].mxu0
        %v2774 = vpop.f32.mrb[0].mxu0
        %2775 = vdwg.mxu0
        %2777 = vrot.lane.b32.xlu0 %v2771, 32
        %v2778 = vpop.permute.xlu0 %2777
        %vm2780 = vcmask 389376
        %2781 = vst.msk [vmem:[#allocation3 + $0x7] sm:$0x1f] %vm2780, %v2778
        %2782 = vmatprep.subr.bf16.mxu0 0
        %2783 = vmatpush1.bf16.msra.mxu0 %v2734
        %2784 = vmatprep.subr.bf16.mxu0 0
        %2785 = vmatpush1.bf16.msra.mxu0 0
        %2786 = vmatprep.subr.bf16.mxu0 0
        %2787 = vmatpush1.bf16.msra.mxu0 0
        %2788 = vmatprep.subr.bf16.mxu0 0
        %2789 = vmatpush1.bf16.msra.mxu0 0
        %2790 = vmatprep.subr.bf16.mxu0 0
        %2791 = vmatpush1.bf16.msra.mxu0 0
        %2792 = vmatprep.subr.bf16.mxu0 0
        %2793 = vmatpush1.bf16.msra.mxu0 0
        %2794 = vmatprep.subr.bf16.mxu0 0
        %2795 = vmatpush1.bf16.msra.mxu0 0
        %2796 = vmatprep.subr.bf16.mxu0 0
        %2797 = vmatpush1.bf16.msra.mxu0 0
        %2798 = vmatprep.subr.bf16.mxu0 0
        %2799 = vmatpush1.bf16.msra.mxu0 0
        %2800 = vmatprep.subr.bf16.mxu0 0
        %2801 = vmatpush1.bf16.msra.mxu0 0
        %2802 = vmatprep.subr.bf16.mxu0 0
        %2803 = vmatpush1.bf16.msra.mxu0 0
        %2804 = vmatprep.subr.bf16.mxu0 0
        %2805 = vmatpush1.bf16.msra.mxu0 0
        %2806 = vmatprep.subr.bf16.mxu0 0
        %2807 = vmatpush1.bf16.msra.mxu0 0
        %2808 = vmatprep.subr.bf16.mxu0 0
        %2809 = vmatpush1.bf16.msra.mxu0 0
        %2810 = vmatprep.subr.bf16.mxu0 0
        %2811 = vmatpush1.bf16.msra.mxu0 0
        %2812 = vmatprep.subr.bf16.mxu0 0
        %2813 = vmatpush1.bf16.msra.mxu0 0
        %2814 = vmatprep.mubr.bf16.mxu0 0
        %2815 = vmatmul.mubr.bf16.gmra.mrb[0].mxu0 %v2682
        %v2816 = vpop.f32.mrb[0].mxu0
        %v2817 = vadd.f32 0.0, %v2816
        %v2818 = vpop.f32.mrb[0].mxu0
        %v2819 = vpop.f32.mrb[0].mxu0
        %v2820 = vpop.f32.mrb[0].mxu0
        %2821 = vdwg.mxu0
        %2823 = vrot.lane.b32.xlu0 %v2817, 48
        %v2824 = vpop.permute.xlu0 %2823
        %vm2826 = vcmask 519552
        %2827 = vst.msk [vmem:[#allocation3 + $0x7] sm:$0xf] %vm2826, %v2824
        %v2828 = vpack.c.bf16 %v2620, %v2619
        %v2830 = vrot.slane %v2828, 2
        %v2832 = vand.u32 %v2830, %v2636
        %2834 = vmatprep.subr.bf16.mxu0 0
        %2835 = vmatpush1.bf16.msra.mxu0 %v2832
        %2836 = vmatprep.subr.bf16.mxu0 0
        %2837 = vmatpush1.bf16.msra.mxu0 0
        %2838 = vmatprep.subr.bf16.mxu0 0
        %2839 = vmatpush1.bf16.msra.mxu0 0
        %2840 = vmatprep.subr.bf16.mxu0 0
        %2841 = vmatpush1.bf16.msra.mxu0 0
        %2842 = vmatprep.subr.bf16.mxu0 0
        %2843 = vmatpush1.bf16.msra.mxu0 0
        %2844 = vmatprep.subr.bf16.mxu0 0
        %2845 = vmatpush1.bf16.msra.mxu0 0
        %2846 = vmatprep.subr.bf16.mxu0 0
        %2847 = vmatpush1.bf16.msra.mxu0 0
        %2848 = vmatprep.subr.bf16.mxu0 0
        %2849 = vmatpush1.bf16.msra.mxu0 0
        %2850 = vmatprep.subr.bf16.mxu0 0
        %2851 = vmatpush1.bf16.msra.mxu0 0
        %2852 = vmatprep.subr.bf16.mxu0 0
        %2853 = vmatpush1.bf16.msra.mxu0 0
        %2854 = vmatprep.subr.bf16.mxu0 0
        %2855 = vmatpush1.bf16.msra.mxu0 0
        %2856 = vmatprep.subr.bf16.mxu0 0
        %2857 = vmatpush1.bf16.msra.mxu0 0
        %2858 = vmatprep.subr.bf16.mxu0 0
        %2859 = vmatpush1.bf16.msra.mxu0 0
        %2860 = vmatprep.subr.bf16.mxu0 0
        %2861 = vmatpush1.bf16.msra.mxu0 0
        %2862 = vmatprep.subr.bf16.mxu0 0
        %2863 = vmatpush1.bf16.msra.mxu0 0
        %2864 = vmatprep.subr.bf16.mxu0 0
        %2865 = vmatpush1.bf16.msra.mxu0 0
        %2866 = vmatprep.mubr.bf16.mxu0 0
        %2867 = vmatmul.mubr.bf16.gmra.mrb[0].mxu0 %v2631
        %v2868 = vpop.f32.mrb[0].mxu0
        %v2869 = vadd.f32 0.0, %v2868
        %v2870 = vpop.f32.mrb[0].mxu0
        %v2871 = vpop.f32.mrb[0].mxu0
        %v2872 = vpop.f32.mrb[0].mxu0
        %2873 = vdwg.mxu0
        %2874 = vst.msk [vmem:[#allocation3 + $0xd] sm:$0x1f] %vm2680, %v2869
        %2875 = vmatprep.subr.bf16.mxu0 0
        %2876 = vmatpush1.bf16.msra.mxu0 %v2832
        %2877 = vmatprep.subr.bf16.mxu0 0
        %2878 = vmatpush1.bf16.msra.mxu0 0
        %2879 = vmatprep.subr.bf16.mxu0 0
        %2880 = vmatpush1.bf16.msra.mxu0 0
        %2881 = vmatprep.subr.bf16.mxu0 0
        %2882 = vmatpush1.bf16.msra.mxu0 0
        %2883 = vmatprep.subr.bf16.mxu0 0
        %2884 = vmatpush1.bf16.msra.mxu0 0
        %2885 = vmatprep.subr.bf16.mxu0 0
        %2886 = vmatpush1.bf16.msra.mxu0 0
        %2887 = vmatprep.subr.bf16.mxu0 0
        %2888 = vmatpush1.bf16.msra.mxu0 0
        %2889 = vmatprep.subr.bf16.mxu0 0
        %2890 = vmatpush1.bf16.msra.mxu0 0
        %2891 = vmatprep.subr.bf16.mxu0 0
        %2892 = vmatpush1.bf16.msra.mxu0 0
        %2893 = vmatprep.subr.bf16.mxu0 0
        %2894 = vmatpush1.bf16.msra.mxu0 0
        %2895 = vmatprep.subr.bf16.mxu0 0
        %2896 = vmatpush1.bf16.msra.mxu0 0
        %2897 = vmatprep.subr.bf16.mxu0 0
        %2898 = vmatpush1.bf16.msra.mxu0 0
        %2899 = vmatprep.subr.bf16.mxu0 0
        %2900 = vmatpush1.bf16.msra.mxu0 0
        %2901 = vmatprep.subr.bf16.mxu0 0
        %2902 = vmatpush1.bf16.msra.mxu0 0
        %2903 = vmatprep.subr.bf16.mxu0 0
        %2904 = vmatpush1.bf16.msra.mxu0 0
        %2905 = vmatprep.subr.bf16.mxu0 0
        %2906 = vmatpush1.bf16.msra.mxu0 0
        %2907 = vmatprep.mubr.bf16.mxu0 0
        %2908 = vmatmul.mubr.bf16.gmra.mrb[0].mxu0 %v2682
        %v2909 = vpop.f32.mrb[0].mxu0
        %v2910 = vadd.f32 0.0, %v2909
        %v2911 = vpop.f32.mrb[0].mxu0
        %v2912 = vpop.f32.mrb[0].mxu0
        %v2913 = vpop.f32.mrb[0].mxu0
        %2914 = vdwg.mxu0
        %2916 = vrot.lane.b32.xlu0 %v2910, 16
        %v2917 = vpop.permute.xlu0 %2916
        %2919 = vst.msk [vmem:[#allocation3 + $0xd] sm:$0xf] %vm2728, %v2917
        %v2920 = vpack.c.bf16 %v2621, %v2620
        %v2922 = vrot.slane %v2920, 3
        %v2924 = vand.u32 %v2922, %v2636
        %2926 = vmatprep.subr.bf16.mxu0 0
        %2927 = vmatpush1.bf16.msra.mxu0 %v2924
        %2928 = vmatprep.subr.bf16.mxu0 0
        %2929 = vmatpush1.bf16.msra.mxu0 0
        %2930 = vmatprep.subr.bf16.mxu0 0
        %2931 = vmatpush1.bf16.msra.mxu0 0
        %2932 = vmatprep.subr.bf16.mxu0 0
        %2933 = vmatpush1.bf16.msra.mxu0 0
        %2934 = vmatprep.subr.bf16.mxu0 0
        %2935 = vmatpush1.bf16.msra.mxu0 0
        %2936 = vmatprep.subr.bf16.mxu0 0
        %2937 = vmatpush1.bf16.msra.mxu0 0
        %2938 = vmatprep.subr.bf16.mxu0 0
        %2939 = vmatpush1.bf16.msra.mxu0 0
        %2940 = vmatprep.subr.bf16.mxu0 0
        %2941 = vmatpush1.bf16.msra.mxu0 0
        %2942 = vmatprep.subr.bf16.mxu0 0
        %2943 = vmatpush1.bf16.msra.mxu0 0
        %2944 = vmatprep.subr.bf16.mxu0 0
        %2945 = vmatpush1.bf16.msra.mxu0 0
        %2946 = vmatprep.subr.bf16.mxu0 0
        %2947 = vmatpush1.bf16.msra.mxu0 0
        %2948 = vmatprep.subr.bf16.mxu0 0
        %2949 = vmatpush1.bf16.msra.mxu0 0
        %2950 = vmatprep.subr.bf16.mxu0 0
        %2951 = vmatpush1.bf16.msra.mxu0 0
        %2952 = vmatprep.subr.bf16.mxu0 0
        %2953 = vmatpush1.bf16.msra.mxu0 0
        %2954 = vmatprep.subr.bf16.mxu0 0
        %2955 = vmatpush1.bf16.msra.mxu0 0
        %2956 = vmatprep.subr.bf16.mxu0 0
        %2957 = vmatpush1.bf16.msra.mxu0 0
        %2958 = vmatprep.mubr.bf16.mxu0 0
        %2959 = vmatmul.mubr.bf16.gmra.mrb[0].mxu0 %v2631
        %v2960 = vpop.f32.mrb[0].mxu0
        %v2961 = vadd.f32 0.0, %v2960
        %v2962 = vpop.f32.mrb[0].mxu0
        %v2963 = vpop.f32.mrb[0].mxu0
        %v2964 = vpop.f32.mrb[0].mxu0
        %2965 = vdwg.mxu0
        %2967 = vrot.lane.b32.xlu0 %v2961, 32
        %v2968 = vpop.permute.xlu0 %2967
        %2970 = vst.msk [vmem:[#allocation3 + $0xd] sm:$0x1f] %vm2780, %v2968
        %2971 = vmatprep.subr.bf16.mxu0 0
        %2972 = vmatpush1.bf16.msra.mxu0 %v2924
        %2973 = vmatprep.subr.bf16.mxu0 0
        %2974 = vmatpush1.bf16.msra.mxu0 0
        %2975 = vmatprep.subr.bf16.mxu0 0
        %2976 = vmatpush1.bf16.msra.mxu0 0
        %2977 = vmatprep.subr.bf16.mxu0 0
        %2978 = vmatpush1.bf16.msra.mxu0 0
        %2979 = vmatprep.subr.bf16.mxu0 0
        %2980 = vmatpush1.bf16.msra.mxu0 0
        %2981 = vmatprep.subr.bf16.mxu0 0
        %2982 = vmatpush1.bf16.msra.mxu0 0
        %2983 = vmatprep.subr.bf16.mxu0 0
        %2984 = vmatpush1.bf16.msra.mxu0 0
        %2985 = vmatprep.subr.bf16.mxu0 0
        %2986 = vmatpush1.bf16.msra.mxu0 0
        %2987 = vmatprep.subr.bf16.mxu0 0
        %2988 = vmatpush1.bf16.msra.mxu0 0
        %2989 = vmatprep.subr.bf16.mxu0 0
        %2990 = vmatpush1.bf16.msra.mxu0 0
        %2991 = vmatprep.subr.bf16.mxu0 0
        %2992 = vmatpush1.bf16.msra.mxu0 0
        %2993 = vmatprep.subr.bf16.mxu0 0
        %2994 = vmatpush1.bf16.msra.mxu0 0
        %2995 = vmatprep.subr.bf16.mxu0 0
        %2996 = vmatpush1.bf16.msra.mxu0 0
        %2997 = vmatprep.subr.bf16.mxu0 0
        %2998 = vmatpush1.bf16.msra.mxu0 0
        %2999 = vmatprep.subr.bf16.mxu0 0
        %3000 = vmatpush1.bf16.msra.mxu0 0
        %3001 = vmatprep.subr.bf16.mxu0 0
        %3002 = vmatpush1.bf16.msra.mxu0 0
        %3003 = vmatprep.mubr.bf16.mxu0 0
        %3004 = vmatmul.mubr.bf16.gmra.mrb[0].mxu0 %v2682
        %v3005 = vpop.f32.mrb[0].mxu0
        %v3006 = vadd.f32 0.0, %v3005
        %v3007 = vpop.f32.mrb[0].mxu0
        %v3008 = vpop.f32.mrb[0].mxu0
        %v3009 = vpop.f32.mrb[0].mxu0
        %3010 = vdwg.mxu0
        %3012 = vrot.lane.b32.xlu0 %v3006, 48
        %v3013 = vpop.permute.xlu0 %3012
        %3015 = vst.msk [vmem:[#allocation3 + $0xd] sm:$0xf] %vm2826, %v3013
        %v3016 = vpack.c.bf16 %v2623, %v2622
        %v3018 = vand.u32 %v3016, %v2636
        %3020 = vmatprep.subr.bf16.mxu0 0
        %3021 = vmatpush1.bf16.msra.mxu0 %v3018
        %3022 = vmatprep.subr.bf16.mxu0 0
        %3023 = vmatpush1.bf16.msra.mxu0 0
        %3024 = vmatprep.subr.bf16.mxu0 0
        %3025 = vmatpush1.bf16.msra.mxu0 0
        %3026 = vmatprep.subr.bf16.mxu0 0
        %3027 = vmatpush1.bf16.msra.mxu0 0
        %3028 = vmatprep.subr.bf16.mxu0 0
        %3029 = vmatpush1.bf16.msra.mxu0 0
        %3030 = vmatprep.subr.bf16.mxu0 0
        %3031 = vmatpush1.bf16.msra.mxu0 0
        %3032 = vmatprep.subr.bf16.mxu0 0
        %3033 = vmatpush1.bf16.msra.mxu0 0
        %3034 = vmatprep.subr.bf16.mxu0 0
        %3035 = vmatpush1.bf16.msra.mxu0 0
        %3036 = vmatprep.subr.bf16.mxu0 0
        %3037 = vmatpush1.bf16.msra.mxu0 0
        %3038 = vmatprep.subr.bf16.mxu0 0
        %3039 = vmatpush1.bf16.msra.mxu0 0
        %3040 = vmatprep.subr.bf16.mxu0 0
        %3041 = vmatpush1.bf16.msra.mxu0 0
        %3042 = vmatprep.subr.bf16.mxu0 0
        %3043 = vmatpush1.bf16.msra.mxu0 0
        %3044 = vmatprep.subr.bf16.mxu0 0
        %3045 = vmatpush1.bf16.msra.mxu0 0
        %3046 = vmatprep.subr.bf16.mxu0 0
        %3047 = vmatpush1.bf16.msra.mxu0 0
        %3048 = vmatprep.subr.bf16.mxu0 0
        %3049 = vmatpush1.bf16.msra.mxu0 0
        %3050 = vmatprep.subr.bf16.mxu0 0
        %3051 = vmatpush1.bf16.msra.mxu0 0
        %3052 = vmatprep.mubr.bf16.mxu0 0
        %3053 = vmatmul.mubr.bf16.gmra.mrb[0].mxu0 %v2631
        %v3054 = vpop.f32.mrb[0].mxu0
        %v3055 = vadd.f32 0.0, %v3054
        %v3056 = vpop.f32.mrb[0].mxu0
        %v3057 = vpop.f32.mrb[0].mxu0
        %v3058 = vpop.f32.mrb[0].mxu0
        %3059 = vdwg.mxu0
        %3060 = vst.msk [vmem:[#allocation3 + $0x13] sm:$0x1f] %vm2680, %v3055
        %3061 = vmatprep.subr.bf16.mxu0 0
        %3062 = vmatpush1.bf16.msra.mxu0 %v3018
        %3063 = vmatprep.subr.bf16.mxu0 0
        %3064 = vmatpush1.bf16.msra.mxu0 0
        %3065 = vmatprep.subr.bf16.mxu0 0
        %3066 = vmatpush1.bf16.msra.mxu0 0
        %3067 = vmatprep.subr.bf16.mxu0 0
        %3068 = vmatpush1.bf16.msra.mxu0 0
        %3069 = vmatprep.subr.bf16.mxu0 0
        %3070 = vmatpush1.bf16.msra.mxu0 0
        %3071 = vmatprep.subr.bf16.mxu0 0
        %3072 = vmatpush1.bf16.msra.mxu0 0
        %3073 = vmatprep.subr.bf16.mxu0 0
        %3074 = vmatpush1.bf16.msra.mxu0 0
        %3075 = vmatprep.subr.bf16.mxu0 0
        %3076 = vmatpush1.bf16.msra.mxu0 0
        %3077 = vmatprep.subr.bf16.mxu0 0
        %3078 = vmatpush1.bf16.msra.mxu0 0
        %3079 = vmatprep.subr.bf16.mxu0 0
        %3080 = vmatpush1.bf16.msra.mxu0 0
        %3081 = vmatprep.subr.bf16.mxu0 0
        %3082 = vmatpush1.bf16.msra.mxu0 0
        %3083 = vmatprep.subr.bf16.mxu0 0
        %3084 = vmatpush1.bf16.msra.mxu0 0
        %3085 = vmatprep.subr.bf16.mxu0 0
        %3086 = vmatpush1.bf16.msra.mxu0 0
        %3087 = vmatprep.subr.bf16.mxu0 0
        %3088 = vmatpush1.bf16.msra.mxu0 0
        %3089 = vmatprep.subr.bf16.mxu0 0
        %3090 = vmatpush1.bf16.msra.mxu0 0
        %3091 = vmatprep.subr.bf16.mxu0 0
        %3092 = vmatpush1.bf16.msra.mxu0 0
        %3093 = vmatprep.mubr.bf16.mxu0 0
        %3094 = vmatmul.mubr.bf16.gmra.mrb[0].mxu0 %v2682
        %v3095 = vpop.f32.mrb[0].mxu0
        %v3096 = vadd.f32 0.0, %v3095
        %v3097 = vpop.f32.mrb[0].mxu0
        %v3098 = vpop.f32.mrb[0].mxu0
        %v3099 = vpop.f32.mrb[0].mxu0
        %3100 = vdwg.mxu0
        %3102 = vrot.lane.b32.xlu0 %v3096, 16
        %v3103 = vpop.permute.xlu0 %3102
        %3105 = vst.msk [vmem:[#allocation3 + $0x13] sm:$0xf] %vm2728, %v3103
        %v3106 = vpack.c.bf16 %v2624, %v2623
        %v3108 = vrot.slane %v3106, 1
        %v3110 = vand.u32 %v3108, %v2636
        %3112 = vmatprep.subr.bf16.mxu0 0
        %3113 = vmatpush1.bf16.msra.mxu0 %v3110
        %3114 = vmatprep.subr.bf16.mxu0 0
        %3115 = vmatpush1.bf16.msra.mxu0 0
        %3116 = vmatprep.subr.bf16.mxu0 0
        %3117 = vmatpush1.bf16.msra.mxu0 0
        %3118 = vmatprep.subr.bf16.mxu0 0
        %3119 = vmatpush1.bf16.msra.mxu0 0
        %3120 = vmatprep.subr.bf16.mxu0 0
        %3121 = vmatpush1.bf16.msra.mxu0 0
        %3122 = vmatprep.subr.bf16.mxu0 0
        %3123 = vmatpush1.bf16.msra.mxu0 0
        %3124 = vmatprep.subr.bf16.mxu0 0
        %3125 = vmatpush1.bf16.msra.mxu0 0
        %3126 = vmatprep.subr.bf16.mxu0 0
        %3127 = vmatpush1.bf16.msra.mxu0 0
        %3128 = vmatprep.subr.bf16.mxu0 0
        %3129 = vmatpush1.bf16.msra.mxu0 0
        %3130 = vmatprep.subr.bf16.mxu0 0
        %3131 = vmatpush1.bf16.msra.mxu0 0
        %3132 = vmatprep.subr.bf16.mxu0 0
        %3133 = vmatpush1.bf16.msra.mxu0 0
        %3134 = vmatprep.subr.bf16.mxu0 0
        %3135 = vmatpush1.bf16.msra.mxu0 0
        %3136 = vmatprep.subr.bf16.mxu0 0
        %3137 = vmatpush1.bf16.msra.mxu0 0
        %3138 = vmatprep.subr.bf16.mxu0 0
        %3139 = vmatpush1.bf16.msra.mxu0 0
        %3140 = vmatprep.subr.bf16.mxu0 0
        %3141 = vmatpush1.bf16.msra.mxu0 0
        %3142 = vmatprep.subr.bf16.mxu0 0
        %3143 = vmatpush1.bf16.msra.mxu0 0
        %3144 = vmatprep.mubr.bf16.mxu0 0
        %3145 = vmatmul.mubr.bf16.gmra.mrb[0].mxu0 %v2631
        %v3146 = vpop.f32.mrb[0].mxu0
        %v3147 = vadd.f32 0.0, %v3146
        %v3148 = vpop.f32.mrb[0].mxu0
        %v3149 = vpop.f32.mrb[0].mxu0
        %v3150 = vpop.f32.mrb[0].mxu0
        %3151 = vdwg.mxu0
        %3153 = vrot.lane.b32.xlu0 %v3147, 32
        %v3154 = vpop.permute.xlu0 %3153
        %3156 = vst.msk [vmem:[#allocation3 + $0x13] sm:$0x1f] %vm2780, %v3154
        %3157 = vmatprep.subr.bf16.mxu0 0
        %3158 = vmatpush1.bf16.msra.mxu0 %v3110
        %3159 = vmatprep.subr.bf16.mxu0 0
        %3160 = vmatpush1.bf16.msra.mxu0 0
        %3161 = vmatprep.subr.bf16.mxu0 0
        %3162 = vmatpush1.bf16.msra.mxu0 0
        %3163 = vmatprep.subr.bf16.mxu0 0
        %3164 = vmatpush1.bf16.msra.mxu0 0
        %3165 = vmatprep.subr.bf16.mxu0 0
        %3166 = vmatpush1.bf16.msra.mxu0 0
        %3167 = vmatprep.subr.bf16.mxu0 0
        %3168 = vmatpush1.bf16.msra.mxu0 0
        %3169 = vmatprep.subr.bf16.mxu0 0
        %3170 = vmatpush1.bf16.msra.mxu0 0
        %3171 = vmatprep.subr.bf16.mxu0 0
        %3172 = vmatpush1.bf16.msra.mxu0 0
        %3173 = vmatprep.subr.bf16.mxu0 0
        %3174 = vmatpush1.bf16.msra.mxu0 0
        %3175 = vmatprep.subr.bf16.mxu0 0
        %3176 = vmatpush1.bf16.msra.mxu0 0
        %3177 = vmatprep.subr.bf16.mxu0 0
        %3178 = vmatpush1.bf16.msra.mxu0 0
        %3179 = vmatprep.subr.bf16.mxu0 0
        %3180 = vmatpush1.bf16.msra.mxu0 0
        %3181 = vmatprep.subr.bf16.mxu0 0
        %3182 = vmatpush1.bf16.msra.mxu0 0
        %3183 = vmatprep.subr.bf16.mxu0 0
        %3184 = vmatpush1.bf16.msra.mxu0 0
        %3185 = vmatprep.subr.bf16.mxu0 0
        %3186 = vmatpush1.bf16.msra.mxu0 0
        %3187 = vmatprep.subr.bf16.mxu0 0
        %3188 = vmatpush1.bf16.msra.mxu0 0
        %3189 = vmatprep.mubr.bf16.mxu0 0
        %3190 = vmatmul.mubr.bf16.gmra.mrb[0].mxu0 %v2682
        %v3191 = vpop.f32.mrb[0].mxu0
        %v3192 = vadd.f32 0.0, %v3191
        %v3193 = vpop.f32.mrb[0].mxu0
        %v3194 = vpop.f32.mrb[0].mxu0
        %v3195 = vpop.f32.mrb[0].mxu0
        %3196 = vdwg.mxu0
        %3198 = vrot.lane.b32.xlu0 %v3192, 48
        %v3199 = vpop.permute.xlu0 %3198
        %3201 = vst.msk [vmem:[#allocation3 + $0x13] sm:$0xf] %vm2826, %v3199
        %v3202 = vpack.c.bf16 %v2625, %v2624
        %v3204 = vrot.slane %v3202, 2
        %v3206 = vand.u32 %v3204, %v2636
        %3208 = vmatprep.subr.bf16.mxu0 0
        %3209 = vmatpush1.bf16.msra.mxu0 %v3206
        %3210 = vmatprep.subr.bf16.mxu0 0
        %3211 = vmatpush1.bf16.msra.mxu0 0
        %3212 = vmatprep.subr.bf16.mxu0 0
        %3213 = vmatpush1.bf16.msra.mxu0 0
        %3214 = vmatprep.subr.bf16.mxu0 0
        %3215 = vmatpush1.bf16.msra.mxu0 0
        %3216 = vmatprep.subr.bf16.mxu0 0
        %3217 = vmatpush1.bf16.msra.mxu0 0
        %3218 = vmatprep.subr.bf16.mxu0 0
        %3219 = vmatpush1.bf16.msra.mxu0 0
        %3220 = vmatprep.subr.bf16.mxu0 0
        %3221 = vmatpush1.bf16.msra.mxu0 0
        %3222 = vmatprep.subr.bf16.mxu0 0
        %3223 = vmatpush1.bf16.msra.mxu0 0
        %3224 = vmatprep.subr.bf16.mxu0 0
        %3225 = vmatpush1.bf16.msra.mxu0 0
        %3226 = vmatprep.subr.bf16.mxu0 0
        %3227 = vmatpush1.bf16.msra.mxu0 0
        %3228 = vmatprep.subr.bf16.mxu0 0
        %3229 = vmatpush1.bf16.msra.mxu0 0
        %3230 = vmatprep.subr.bf16.mxu0 0
        %3231 = vmatpush1.bf16.msra.mxu0 0
        %3232 = vmatprep.subr.bf16.mxu0 0
        %3233 = vmatpush1.bf16.msra.mxu0 0
        %3234 = vmatprep.subr.bf16.mxu0 0
        %3235 = vmatpush1.bf16.msra.mxu0 0
        %3236 = vmatprep.subr.bf16.mxu0 0
        %3237 = vmatpush1.bf16.msra.mxu0 0
        %3238 = vmatprep.subr.bf16.mxu0 0
        %3239 = vmatpush1.bf16.msra.mxu0 0
        %3240 = vmatprep.mubr.bf16.mxu0 0
        %3241 = vmatmul.mubr.bf16.gmra.mrb[0].mxu0 %v2631
        %v3242 = vpop.f32.mrb[0].mxu0
        %v3243 = vadd.f32 0.0, %v3242
        %v3244 = vpop.f32.mrb[0].mxu0
        %v3245 = vpop.f32.mrb[0].mxu0
        %v3246 = vpop.f32.mrb[0].mxu0
        %3247 = vdwg.mxu0
        %3248 = vst.msk [vmem:[#allocation3 + $0x19] sm:$0x1f] %vm2680, %v3243
        %3249 = vmatprep.subr.bf16.mxu0 0
        %3250 = vmatpush1.bf16.msra.mxu0 %v3206
        %3251 = vmatprep.subr.bf16.mxu0 0
        %3252 = vmatpush1.bf16.msra.mxu0 0
        %3253 = vmatprep.subr.bf16.mxu0 0
        %3254 = vmatpush1.bf16.msra.mxu0 0
        %3255 = vmatprep.subr.bf16.mxu0 0
        %3256 = vmatpush1.bf16.msra.mxu0 0
        %3257 = vmatprep.subr.bf16.mxu0 0
        %3258 = vmatpush1.bf16.msra.mxu0 0
        %3259 = vmatprep.subr.bf16.mxu0 0
        %3260 = vmatpush1.bf16.msra.mxu0 0
        %3261 = vmatprep.subr.bf16.mxu0 0
        %3262 = vmatpush1.bf16.msra.mxu0 0
        %3263 = vmatprep.subr.bf16.mxu0 0
        %3264 = vmatpush1.bf16.msra.mxu0 0
        %3265 = vmatprep.subr.bf16.mxu0 0
        %3266 = vmatpush1.bf16.msra.mxu0 0
        %3267 = vmatprep.subr.bf16.mxu0 0
        %3268 = vmatpush1.bf16.msra.mxu0 0
        %3269 = vmatprep.subr.bf16.mxu0 0
        %3270 = vmatpush1.bf16.msra.mxu0 0
        %3271 = vmatprep.subr.bf16.mxu0 0
        %3272 = vmatpush1.bf16.msra.mxu0 0
        %3273 = vmatprep.subr.bf16.mxu0 0
        %3274 = vmatpush1.bf16.msra.mxu0 0
        %3275 = vmatprep.subr.bf16.mxu0 0
        %3276 = vmatpush1.bf16.msra.mxu0 0
        %3277 = vmatprep.subr.bf16.mxu0 0
        %3278 = vmatpush1.bf16.msra.mxu0 0
        %3279 = vmatprep.subr.bf16.mxu0 0
        %3280 = vmatpush1.bf16.msra.mxu0 0
        %3281 = vmatprep.mubr.bf16.mxu0 0
        %3282 = vmatmul.mubr.bf16.gmra.mrb[0].mxu0 %v2682
        %v3283 = vpop.f32.mrb[0].mxu0
        %v3284 = vadd.f32 0.0, %v3283
        %v3285 = vpop.f32.mrb[0].mxu0
        %v3286 = vpop.f32.mrb[0].mxu0
        %v3287 = vpop.f32.mrb[0].mxu0
        %3288 = vdwg.mxu0
        %3290 = vrot.lane.b32.xlu0 %v3284, 16
        %v3291 = vpop.permute.xlu0 %3290
        %3293 = vst.msk [vmem:[#allocation3 + $0x19] sm:$0xf] %vm2728, %v3291
        %v3294 = vpack.c.bf16 %v2626, %v2625
        %v3296 = vrot.slane %v3294, 3
        %v3298 = vand.u32 %v3296, %v2636
        %3300 = vmatprep.subr.bf16.mxu0 0
        %3301 = vmatpush1.bf16.msra.mxu0 %v3298
        %3302 = vmatprep.subr.bf16.mxu0 0
        %3303 = vmatpush1.bf16.msra.mxu0 0
        %3304 = vmatprep.subr.bf16.mxu0 0
        %3305 = vmatpush1.bf16.msra.mxu0 0
        %3306 = vmatprep.subr.bf16.mxu0 0
        %3307 = vmatpush1.bf16.msra.mxu0 0
        %3308 = vmatprep.subr.bf16.mxu0 0
        %3309 = vmatpush1.bf16.msra.mxu0 0
        %3310 = vmatprep.subr.bf16.mxu0 0
        %3311 = vmatpush1.bf16.msra.mxu0 0
        %3312 = vmatprep.subr.bf16.mxu0 0
        %3313 = vmatpush1.bf16.msra.mxu0 0
        %3314 = vmatprep.subr.bf16.mxu0 0
        %3315 = vmatpush1.bf16.msra.mxu0 0
        %3316 = vmatprep.subr.bf16.mxu0 0
        %3317 = vmatpush1.bf16.msra.mxu0 0
        %3318 = vmatprep.subr.bf16.mxu0 0
        %3319 = vmatpush1.bf16.msra.mxu0 0
        %3320 = vmatprep.subr.bf16.mxu0 0
        %3321 = vmatpush1.bf16.msra.mxu0 0
        %3322 = vmatprep.subr.bf16.mxu0 0
        %3323 = vmatpush1.bf16.msra.mxu0 0
        %3324 = vmatprep.subr.bf16.mxu0 0
        %3325 = vmatpush1.bf16.msra.mxu0 0
        %3326 = vmatprep.subr.bf16.mxu0 0
        %3327 = vmatpush1.bf16.msra.mxu0 0
        %3328 = vmatprep.subr.bf16.mxu0 0
        %3329 = vmatpush1.bf16.msra.mxu0 0
        %3330 = vmatprep.subr.bf16.mxu0 0
        %3331 = vmatpush1.bf16.msra.mxu0 0
        %3332 = vmatprep.mubr.bf16.mxu0 0
        %3333 = vmatmul.mubr.bf16.gmra.mrb[0].mxu0 %v2631
        %v3334 = vpop.f32.mrb[0].mxu0
        %v3335 = vadd.f32 0.0, %v3334
        %v3336 = vpop.f32.mrb[0].mxu0
        %v3337 = vpop.f32.mrb[0].mxu0
        %v3338 = vpop.f32.mrb[0].mxu0
        %3339 = vdwg.mxu0
        %3341 = vrot.lane.b32.xlu0 %v3335, 32
        %v3342 = vpop.permute.xlu0 %3341
        %3344 = vst.msk [vmem:[#allocation3 + $0x19] sm:$0x1f] %vm2780, %v3342
        %3345 = vmatprep.subr.bf16.mxu0 0
        %3346 = vmatpush1.bf16.msra.mxu0 %v3298
        %3347 = vmatprep.subr.bf16.mxu0 0
        %3348 = vmatpush1.bf16.msra.mxu0 0
        %3349 = vmatprep.subr.bf16.mxu0 0
        %3350 = vmatpush1.bf16.msra.mxu0 0
        %3351 = vmatprep.subr.bf16.mxu0 0
        %3352 = vmatpush1.bf16.msra.mxu0 0
        %3353 = vmatprep.subr.bf16.mxu0 0
        %3354 = vmatpush1.bf16.msra.mxu0 0
        %3355 = vmatprep.subr.bf16.mxu0 0
        %3356 = vmatpush1.bf16.msra.mxu0 0
        %3357 = vmatprep.subr.bf16.mxu0 0
        %3358 = vmatpush1.bf16.msra.mxu0 0
        %3359 = vmatprep.subr.bf16.mxu0 0
        %3360 = vmatpush1.bf16.msra.mxu0 0
        %3361 = vmatprep.subr.bf16.mxu0 0
        %3362 = vmatpush1.bf16.msra.mxu0 0
        %3363 = vmatprep.subr.bf16.mxu0 0
        %3364 = vmatpush1.bf16.msra.mxu0 0
        %3365 = vmatprep.subr.bf16.mxu0 0
        %3366 = vmatpush1.bf16.msra.mxu0 0
        %3367 = vmatprep.subr.bf16.mxu0 0
        %3368 = vmatpush1.bf16.msra.mxu0 0
        %3369 = vmatprep.subr.bf16.mxu0 0
        %3370 = vmatpush1.bf16.msra.mxu0 0
        %3371 = vmatprep.subr.bf16.mxu0 0
        %3372 = vmatpush1.bf16.msra.mxu0 0
        %3373 = vmatprep.subr.bf16.mxu0 0
        %3374 = vmatpush1.bf16.msra.mxu0 0
        %3375 = vmatprep.subr.bf16.mxu0 0
        %3376 = vmatpush1.bf16.msra.mxu0 0
        %3377 = vmatprep.mubr.bf16.mxu0 0
        %3378 = vmatmul.mubr.bf16.gmra.mrb[0].mxu0 %v2682
        %v3379 = vpop.f32.mrb[0].mxu0
        %v3380 = vadd.f32 0.0, %v3379
        %v3381 = vpop.f32.mrb[0].mxu0
        %v3382 = vpop.f32.mrb[0].mxu0
        %v3383 = vpop.f32.mrb[0].mxu0
        %3384 = vdwg.mxu0
        %3386 = vrot.lane.b32.xlu0 %v3380, 48
        %v3387 = vpop.permute.xlu0 %3386
        %3389 = vst.msk [vmem:[#allocation3 + $0x19] sm:$0xf] %vm2826, %v3387
        %v3390 = vpack.c.bf16 %v2628, %v2627
        %v3392 = vand.u32 %v3390, %v2636
        %3394 = vmatprep.subr.bf16.mxu0 0
        %3395 = vmatpush1.bf16.msra.mxu0 %v3392
        %3396 = vmatprep.subr.bf16.mxu0 0
        %3397 = vmatpush1.bf16.msra.mxu0 0
        %3398 = vmatprep.subr.bf16.mxu0 0
        %3399 = vmatpush1.bf16.msra.mxu0 0
        %3400 = vmatprep.subr.bf16.mxu0 0
        %3401 = vmatpush1.bf16.msra.mxu0 0
        %3402 = vmatprep.subr.bf16.mxu0 0
        %3403 = vmatpush1.bf16.msra.mxu0 0
        %3404 = vmatprep.subr.bf16.mxu0 0
        %3405 = vmatpush1.bf16.msra.mxu0 0
        %3406 = vmatprep.subr.bf16.mxu0 0
        %3407 = vmatpush1.bf16.msra.mxu0 0
        %3408 = vmatprep.subr.bf16.mxu0 0
        %3409 = vmatpush1.bf16.msra.mxu0 0
        %3410 = vmatprep.subr.bf16.mxu0 0
        %3411 = vmatpush1.bf16.msra.mxu0 0
        %3412 = vmatprep.subr.bf16.mxu0 0
        %3413 = vmatpush1.bf16.msra.mxu0 0
        %3414 = vmatprep.subr.bf16.mxu0 0
        %3415 = vmatpush1.bf16.msra.mxu0 0
        %3416 = vmatprep.subr.bf16.mxu0 0
        %3417 = vmatpush1.bf16.msra.mxu0 0
        %3418 = vmatprep.subr.bf16.mxu0 0
        %3419 = vmatpush1.bf16.msra.mxu0 0
        %3420 = vmatprep.subr.bf16.mxu0 0
        %3421 = vmatpush1.bf16.msra.mxu0 0
        %3422 = vmatprep.subr.bf16.mxu0 0
        %3423 = vmatpush1.bf16.msra.mxu0 0
        %3424 = vmatprep.subr.bf16.mxu0 0
        %3425 = vmatpush1.bf16.msra.mxu0 0
        %3426 = vmatprep.mubr.bf16.mxu0 0
        %3427 = vmatmul.mubr.bf16.gmra.mrb[0].mxu0 %v2631
        %v3428 = vpop.f32.mrb[0].mxu0
        %v3429 = vadd.f32 0.0, %v3428
        %v3430 = vpop.f32.mrb[0].mxu0
        %v3431 = vpop.f32.mrb[0].mxu0
        %v3432 = vpop.f32.mrb[0].mxu0
        %3433 = vdwg.mxu0
        %3434 = vst.msk [vmem:[#allocation3 + $0x1f] sm:$0x1f] %vm2680, %v3429
        %3435 = vmatprep.subr.bf16.mxu0 0
        %3436 = vmatpush1.bf16.msra.mxu0 %v3392
        %3437 = vmatprep.subr.bf16.mxu0 0
        %3438 = vmatpush1.bf16.msra.mxu0 0
        %3439 = vmatprep.subr.bf16.mxu0 0
        %3440 = vmatpush1.bf16.msra.mxu0 0
        %3441 = vmatprep.subr.bf16.mxu0 0
        %3442 = vmatpush1.bf16.msra.mxu0 0
        %3443 = vmatprep.subr.bf16.mxu0 0
        %3444 = vmatpush1.bf16.msra.mxu0 0
        %3445 = vmatprep.subr.bf16.mxu0 0
        %3446 = vmatpush1.bf16.msra.mxu0 0
        %3447 = vmatprep.subr.bf16.mxu0 0
        %3448 = vmatpush1.bf16.msra.mxu0 0
        %3449 = vmatprep.subr.bf16.mxu0 0
        %3450 = vmatpush1.bf16.msra.mxu0 0
        %3451 = vmatprep.subr.bf16.mxu0 0
        %3452 = vmatpush1.bf16.msra.mxu0 0
        %3453 = vmatprep.subr.bf16.mxu0 0
        %3454 = vmatpush1.bf16.msra.mxu0 0
        %3455 = vmatprep.subr.bf16.mxu0 0
        %3456 = vmatpush1.bf16.msra.mxu0 0
        %3457 = vmatprep.subr.bf16.mxu0 0
        %3458 = vmatpush1.bf16.msra.mxu0 0
        %3459 = vmatprep.subr.bf16.mxu0 0
        %3460 = vmatpush1.bf16.msra.mxu0 0
        %3461 = vmatprep.subr.bf16.mxu0 0
        %3462 = vmatpush1.bf16.msra.mxu0 0
        %3463 = vmatprep.subr.bf16.mxu0 0
        %3464 = vmatpush1.bf16.msra.mxu0 0
        %3465 = vmatprep.subr.bf16.mxu0 0
        %3466 = vmatpush1.bf16.msra.mxu0 0
        %3467 = vmatprep.mubr.bf16.mxu0 0
        %3468 = vmatmul.mubr.bf16.gmra.mrb[0].mxu0 %v2682
        %v3469 = vpop.f32.mrb[0].mxu0
        %v3470 = vadd.f32 0.0, %v3469
        %v3471 = vpop.f32.mrb[0].mxu0
        %v3472 = vpop.f32.mrb[0].mxu0
        %v3473 = vpop.f32.mrb[0].mxu0
        %3474 = vdwg.mxu0
        %3476 = vrot.lane.b32.xlu0 %v3470, 16
        %v3477 = vpop.permute.xlu0 %3476
        %3479 = vst.msk [vmem:[#allocation3 + $0x1f] sm:$0xf] %vm2728, %v3477
        %v3480 = vld [vmem:[#allocation3] sm:$0xff]
        %v3481 = vld [vmem:[#allocation3 + $0x8] sm:$0xff]
        %v3482 = vld [vmem:[#allocation3 + $0x10] sm:$0xff]
        %v3483 = vld [vmem:[#allocation3 + $0x18] sm:$0x1f]
        %v3484 = vpack.c.bf16 %v3481, %v3480
        %v3485 = vpack.c.bf16 %v3483, %v3482
        %v3486 = vld [vmem:[%s2] sm:$0xf]
        %v3487 = vld [vmem:[%s2 + $0x4] sm:$0xf]
        %v3488 = vld [vmem:[%s2 + $0x8] sm:$0xf]
        %v3489 = vld [vmem:[%s2 + $0xc] sm:$0xf]
        %v3490 = vld [vmem:[%s2 + $0x10] sm:$0xf]
        %v3491 = vld [vmem:[%s2 + $0x14] sm:$0xf]
        %v3492 = vld [vmem:[%s2 + $0x18] sm:$0xf]
        %v3493 = vld [vmem:[%s2 + $0x1c] sm:$0xf]
        %v3494 = vld [vmem:[#allocation3 + $0x1] sm:$0xff]
        %v3495 = vld [vmem:[#allocation3 + $0x9] sm:$0xff]
        %v3496 = vld [vmem:[#allocation3 + $0x11] sm:$0xff]
        %v3497 = vld [vmem:[#allocation3 + $0x19] sm:$0x1f]
        %v3498 = vpack.c.bf16 %v3495, %v3494
        %v3499 = vpack.c.bf16 %v3497, %v3496
        %s3500 = scalar_lea.vmem %s2, 32
        %v3501 = vld [vmem:[%s3500] sm:$0xf]
        %v3502 = vld [vmem:[%s3500 + $0x4] sm:$0xf]
        %v3503 = vld [vmem:[%s3500 + $0x8] sm:$0xf]
        %v3504 = vld [vmem:[%s3500 + $0xc] sm:$0xf]
        %v3505 = vld [vmem:[%s3500 + $0x10] sm:$0xf]
        %v3506 = vld [vmem:[%s3500 + $0x14] sm:$0xf]
        %v3507 = vld [vmem:[%s3500 + $0x18] sm:$0xf]
        %v3508 = vld [vmem:[%s3500 + $0x1c] sm:$0xf]
        %v3517 = vunpack.c.l.b16 %v3501
        %v3518 = vunpack.c.l.b16 %v3502
        %v3519 = vunpack.c.l.b16 %v3503
        %v3520 = vunpack.c.l.b16 %v3504
        %v3521 = vunpack.c.l.b16 %v3505
        %v3522 = vunpack.c.l.b16 %v3506
        %v3523 = vunpack.c.l.b16 %v3507
        %v3524 = vunpack.c.l.b16 %v3508
        %v3525 = vpack.c.b16 %v3518, %v3517
        %v3526 = vpack.c.b16 %v3520, %v3519
        %v3527 = vpack.c.b16 %v3522, %v3521
        %v3528 = vpack.c.b16 %v3524, %v3523
        %v3534 = vsel %vm418, %v3498, 0
        %v3537 = vsel %vm418, %v3499, 0
        %3539 = vmatprep.subr.bf16.mxu0 0
        %3540 = vmatpush1.bf16.msra.mxu0 %v3525
        %3541 = vmatprep.subr.bf16.mxu0 0
        %3542 = vmatpush1.bf16.msra.mxu0 %v3526
        %3543 = vmatprep.subr.bf16.mxu0 0
        %3544 = vmatpush1.bf16.msra.mxu0 %v3527
        %3545 = vmatprep.subr.bf16.mxu0 0
        %3546 = vmatpush1.bf16.msra.mxu0 %v3528
        %3547 = vmatprep.subr.bf16.mxu0 0
        %3548 = vmatpush1.bf16.msra.mxu0 0
        %3549 = vmatprep.subr.bf16.mxu0 0
        %3550 = vmatpush1.bf16.msra.mxu0 0
        %3551 = vmatprep.subr.bf16.mxu0 0
        %3552 = vmatpush1.bf16.msra.mxu0 0
        %3553 = vmatprep.subr.bf16.mxu0 0
        %3554 = vmatpush1.bf16.msra.mxu0 0
        %3555 = vmatprep.subr.bf16.mxu0 0
        %3556 = vmatpush1.bf16.msra.mxu0 0
        %3557 = vmatprep.subr.bf16.mxu0 0
        %3558 = vmatpush1.bf16.msra.mxu0 0
        %3559 = vmatprep.subr.bf16.mxu0 0
        %3560 = vmatpush1.bf16.msra.mxu0 0
        %3561 = vmatprep.subr.bf16.mxu0 0
        %3562 = vmatpush1.bf16.msra.mxu0 0
        %3563 = vmatprep.subr.bf16.mxu0 0
        %3564 = vmatpush1.bf16.msra.mxu0 0
        %3565 = vmatprep.subr.bf16.mxu0 0
        %3566 = vmatpush1.bf16.msra.mxu0 0
        %3567 = vmatprep.subr.bf16.mxu0 0
        %3568 = vmatpush1.bf16.msra.mxu0 0
        %3569 = vmatprep.subr.bf16.mxu0 0
        %3570 = vmatpush1.bf16.msra.mxu0 0
        %3571 = vmatprep.mubr.bf16.mxu0 0
        %3572 = vmatmul.mubr.bf16.gmra.mrb[0].mxu0 %v3534
        %v3573 = vpop.f32.mrb[0].mxu0
        %v3574 = vadd.f32 0.0, %v3573
        %v3575 = vpop.f32.mrb[0].mxu0
        %v3576 = vpop.f32.mrb[0].mxu0
        %v3577 = vadd.f32 0.0, %v3576
        %v3578 = vpop.f32.mrb[0].mxu0
        %3579 = vmatprep.mubr.bf16.mxu0 0
        %3580 = vmatmul.mubr.bf16.gmra.mrb[0].mxu0 %v3537
        %v3581 = vpop.f32.mrb[0].mxu0
        %v3582 = vadd.f32 0.0, %v3581
        %v3583 = vpop.f32.mrb[0].mxu0
        %v3584 = vpop.f32.mrb[0].mxu0
        %v3585 = vadd.f32 0.0, %v3584
        %v3586 = vpop.f32.mrb[0].mxu0
        %3587 = vdwg.mxu0
        %v3596 = vunpack.c.l.b16 %v3486
        %v3597 = vunpack.c.l.b16 %v3487
        %v3598 = vunpack.c.l.b16 %v3488
        %v3599 = vunpack.c.l.b16 %v3489
        %v3600 = vunpack.c.l.b16 %v3490
        %v3601 = vunpack.c.l.b16 %v3491
        %v3602 = vunpack.c.l.b16 %v3492
        %v3603 = vunpack.c.l.b16 %v3493
        %v3604 = vpack.c.b16 %v3597, %v3596
        %v3605 = vpack.c.b16 %v3599, %v3598
        %v3606 = vpack.c.b16 %v3601, %v3600
        %v3607 = vpack.c.b16 %v3603, %v3602
        %v3613 = vsel %vm418, %v3484, 0
        %v3616 = vsel %vm418, %v3485, 0
        %3618 = vmatprep.subr.bf16.mxu0 0
        %3619 = vmatpush1.bf16.msra.mxu0 %v3604
        %3620 = vmatprep.subr.bf16.mxu0 0
        %3621 = vmatpush1.bf16.msra.mxu0 %v3605
        %3622 = vmatprep.subr.bf16.mxu0 0
        %3623 = vmatpush1.bf16.msra.mxu0 %v3606
        %3624 = vmatprep.subr.bf16.mxu0 0
        %3625 = vmatpush1.bf16.msra.mxu0 %v3607
        %3626 = vmatprep.subr.bf16.mxu0 0
        %3627 = vmatpush1.bf16.msra.mxu0 0
        %3628 = vmatprep.subr.bf16.mxu0 0
        %3629 = vmatpush1.bf16.msra.mxu0 0
        %3630 = vmatprep.subr.bf16.mxu0 0
        %3631 = vmatpush1.bf16.msra.mxu0 0
        %3632 = vmatprep.subr.bf16.mxu0 0
        %3633 = vmatpush1.bf16.msra.mxu0 0
        %3634 = vmatprep.subr.bf16.mxu0 0
        %3635 = vmatpush1.bf16.msra.mxu0 0
        %3636 = vmatprep.subr.bf16.mxu0 0
        %3637 = vmatpush1.bf16.msra.mxu0 0
        %3638 = vmatprep.subr.bf16.mxu0 0
        %3639 = vmatpush1.bf16.msra.mxu0 0
        %3640 = vmatprep.subr.bf16.mxu0 0
        %3641 = vmatpush1.bf16.msra.mxu0 0
        %3642 = vmatprep.subr.bf16.mxu0 0
        %3643 = vmatpush1.bf16.msra.mxu0 0
        %3644 = vmatprep.subr.bf16.mxu0 0
        %3645 = vmatpush1.bf16.msra.mxu0 0
        %3646 = vmatprep.subr.bf16.mxu0 0
        %3647 = vmatpush1.bf16.msra.mxu0 0
        %3648 = vmatprep.subr.bf16.mxu0 0
        %3649 = vmatpush1.bf16.msra.mxu0 0
        %3650 = vmatprep.mubr.bf16.mxu0 0
        %3651 = vmatmul.mubr.bf16.gmra.mrb[0].mxu0 %v3613
        %v3652 = vpop.f32.mrb[0].mxu0
        %v3653 = vadd.f32 %v3574, %v3652
        %v3654 = vpop.f32.mrb[0].mxu0
        %v3655 = vpop.f32.mrb[0].mxu0
        %v3656 = vadd.f32 %v3577, %v3655
        %v3657 = vpop.f32.mrb[0].mxu0
        %3658 = vmatprep.mubr.bf16.mxu0 0
        %3659 = vmatmul.mubr.bf16.gmra.mrb[0].mxu0 %v3616
        %v3660 = vpop.f32.mrb[0].mxu0
        %v3661 = vadd.f32 %v3582, %v3660
        %v3662 = vpop.f32.mrb[0].mxu0
        %v3663 = vpop.f32.mrb[0].mxu0
        %v3664 = vadd.f32 %v3585, %v3663
        %v3665 = vpop.f32.mrb[0].mxu0
        %3666 = vdwg.mxu0
        %v3667 = vld [vmem:[#allocation3 + $0x6] sm:$0xff]
        %v3668 = vld [vmem:[#allocation3 + $0xe] sm:$0xff]
        %v3669 = vld [vmem:[#allocation3 + $0x16] sm:$0xff]
        %v3670 = vld [vmem:[#allocation3 + $0x1e] sm:$0x1f]
        %v3671 = vpack.c.bf16 %v3668, %v3667
        %v3672 = vpack.c.bf16 %v3670, %v3669
        %s3673 = scalar_lea.vmem %s2, 64
        %v3674 = vld [vmem:[%s3673] sm:$0xf]
        %v3675 = vld [vmem:[%s3673 + $0x4] sm:$0xf]
        %v3676 = vld [vmem:[%s3673 + $0x8] sm:$0xf]
        %v3677 = vld [vmem:[%s3673 + $0xc] sm:$0xf]
        %v3678 = vld [vmem:[%s3673 + $0x10] sm:$0xf]
        %v3679 = vld [vmem:[%s3673 + $0x14] sm:$0xf]
        %v3680 = vld [vmem:[%s3673 + $0x18] sm:$0xf]
        %v3681 = vld [vmem:[%s3673 + $0x1c] sm:$0xf]
        %v3690 = vunpack.c.l.b16 %v3674
        %v3691 = vunpack.c.l.b16 %v3675
        %v3692 = vunpack.c.l.b16 %v3676
        %v3693 = vunpack.c.l.b16 %v3677
        %v3694 = vunpack.c.l.b16 %v3678
        %v3695 = vunpack.c.l.b16 %v3679
        %v3696 = vunpack.c.l.b16 %v3680
        %v3697 = vunpack.c.l.b16 %v3681
        %v3698 = vpack.c.b16 %v3691, %v3690
        %v3699 = vpack.c.b16 %v3693, %v3692
        %v3700 = vpack.c.b16 %v3695, %v3694
        %v3701 = vpack.c.b16 %v3697, %v3696
        %v3707 = vsel %vm418, %v3671, 0
        %v3710 = vsel %vm418, %v3672, 0
        %3712 = vmatprep.subr.bf16.mxu0 0
        %3713 = vmatpush1.bf16.msra.mxu0 %v3698
        %3714 = vmatprep.subr.bf16.mxu0 0
        %3715 = vmatpush1.bf16.msra.mxu0 %v3699
        %3716 = vmatprep.subr.bf16.mxu0 0
        %3717 = vmatpush1.bf16.msra.mxu0 %v3700
        %3718 = vmatprep.subr.bf16.mxu0 0
        %3719 = vmatpush1.bf16.msra.mxu0 %v3701
        %3720 = vmatprep.subr.bf16.mxu0 0
        %3721 = vmatpush1.bf16.msra.mxu0 0
        %3722 = vmatprep.subr.bf16.mxu0 0
        %3723 = vmatpush1.bf16.msra.mxu0 0
        %3724 = vmatprep.subr.bf16.mxu0 0
        %3725 = vmatpush1.bf16.msra.mxu0 0
        %3726 = vmatprep.subr.bf16.mxu0 0
        %3727 = vmatpush1.bf16.msra.mxu0 0
        %3728 = vmatprep.subr.bf16.mxu0 0
        %3729 = vmatpush1.bf16.msra.mxu0 0
        %3730 = vmatprep.subr.bf16.mxu0 0
        %3731 = vmatpush1.bf16.msra.mxu0 0
        %3732 = vmatprep.subr.bf16.mxu0 0
        %3733 = vmatpush1.bf16.msra.mxu0 0
        %3734 = vmatprep.subr.bf16.mxu0 0
        %3735 = vmatpush1.bf16.msra.mxu0 0
        %3736 = vmatprep.subr.bf16.mxu0 0
        %3737 = vmatpush1.bf16.msra.mxu0 0
        %3738 = vmatprep.subr.bf16.mxu0 0
        %3739 = vmatpush1.bf16.msra.mxu0 0
        %3740 = vmatprep.subr.bf16.mxu0 0
        %3741 = vmatpush1.bf16.msra.mxu0 0
        %3742 = vmatprep.subr.bf16.mxu0 0
        %3743 = vmatpush1.bf16.msra.mxu0 0
        %3744 = vmatprep.mubr.bf16.mxu0 0
        %3745 = vmatmul.mubr.bf16.gmra.mrb[0].mxu0 %v3707
        %v3746 = vpop.f32.mrb[0].mxu0
        %v3747 = vadd.f32 0.0, %v3746
        %v3748 = vpop.f32.mrb[0].mxu0
        %v3749 = vpop.f32.mrb[0].mxu0
        %v3750 = vadd.f32 0.0, %v3749
        %v3751 = vpop.f32.mrb[0].mxu0
        %3752 = vmatprep.mubr.bf16.mxu0 0
        %3753 = vmatmul.mubr.bf16.gmra.mrb[0].mxu0 %v3710
        %v3754 = vpop.f32.mrb[0].mxu0
        %v3755 = vadd.f32 0.0, %v3754
        %v3756 = vpop.f32.mrb[0].mxu0
        %v3757 = vpop.f32.mrb[0].mxu0
        %v3758 = vadd.f32 0.0, %v3757
        %v3759 = vpop.f32.mrb[0].mxu0
        %3760 = vdwg.mxu0
        %v3761 = vadd.f32 %v3653, %v3747
        %v3762 = vadd.f32 %v3656, %v3750
        %v3763 = vadd.f32 %v3661, %v3755
        %v3764 = vadd.f32 %v3664, %v3758
        %v3765 = vld [vmem:[#allocation3 + $0x7] sm:$0xff]
        %v3766 = vld [vmem:[#allocation3 + $0xf] sm:$0xff]
        %v3767 = vld [vmem:[#allocation3 + $0x17] sm:$0xff]
        %v3768 = vld [vmem:[#allocation3 + $0x1f] sm:$0x1f]
        %v3769 = vpack.c.bf16 %v3766, %v3765
        %v3770 = vpack.c.bf16 %v3768, %v3767
        %s3771 = scalar_lea.vmem %s2, 96
        %v3772 = vld [vmem:[%s3771] sm:$0xf]
        %v3773 = vld [vmem:[%s3771 + $0x4] sm:$0xf]
        %v3774 = vld [vmem:[%s3771 + $0x8] sm:$0xf]
        %v3775 = vld [vmem:[%s3771 + $0xc] sm:$0xf]
        %v3776 = vld [vmem:[%s3771 + $0x10] sm:$0xf]
        %v3777 = vld [vmem:[%s3771 + $0x14] sm:$0xf]
        %v3778 = vld [vmem:[%s3771 + $0x18] sm:$0xf]
        %v3779 = vld [vmem:[%s3771 + $0x1c] sm:$0xf]
        %v3788 = vunpack.c.l.b16 %v3772
        %v3789 = vunpack.c.l.b16 %v3773
        %v3790 = vunpack.c.l.b16 %v3774
        %v3791 = vunpack.c.l.b16 %v3775
        %v3792 = vunpack.c.l.b16 %v3776
        %v3793 = vunpack.c.l.b16 %v3777
        %v3794 = vunpack.c.l.b16 %v3778
        %v3795 = vunpack.c.l.b16 %v3779
        %v3796 = vpack.c.b16 %v3789, %v3788
        %v3797 = vpack.c.b16 %v3791, %v3790
        %v3798 = vpack.c.b16 %v3793, %v3792
        %v3799 = vpack.c.b16 %v3795, %v3794
        %v3805 = vsel %vm418, %v3769, 0
        %v3808 = vsel %vm418, %v3770, 0
        %3810 = vmatprep.subr.bf16.mxu0 0
        %3811 = vmatpush1.bf16.msra.mxu0 %v3796
        %3812 = vmatprep.subr.bf16.mxu0 0
        %3813 = vmatpush1.bf16.msra.mxu0 %v3797
        %3814 = vmatprep.subr.bf16.mxu0 0
        %3815 = vmatpush1.bf16.msra.mxu0 %v3798
        %3816 = vmatprep.subr.bf16.mxu0 0
        %3817 = vmatpush1.bf16.msra.mxu0 %v3799
        %3818 = vmatprep.subr.bf16.mxu0 0
        %3819 = vmatpush1.bf16.msra.mxu0 0
        %3820 = vmatprep.subr.bf16.mxu0 0
        %3821 = vmatpush1.bf16.msra.mxu0 0
        %3822 = vmatprep.subr.bf16.mxu0 0
        %3823 = vmatpush1.bf16.msra.mxu0 0
        %3824 = vmatprep.subr.bf16.mxu0 0
        %3825 = vmatpush1.bf16.msra.mxu0 0
        %3826 = vmatprep.subr.bf16.mxu0 0
        %3827 = vmatpush1.bf16.msra.mxu0 0
        %3828 = vmatprep.subr.bf16.mxu0 0
        %3829 = vmatpush1.bf16.msra.mxu0 0
        %3830 = vmatprep.subr.bf16.mxu0 0
        %3831 = vmatpush1.bf16.msra.mxu0 0
        %3832 = vmatprep.subr.bf16.mxu0 0
        %3833 = vmatpush1.bf16.msra.mxu0 0
        %3834 = vmatprep.subr.bf16.mxu0 0
        %3835 = vmatpush1.bf16.msra.mxu0 0
        %3836 = vmatprep.subr.bf16.mxu0 0
        %3837 = vmatpush1.bf16.msra.mxu0 0
        %3838 = vmatprep.subr.bf16.mxu0 0
        %3839 = vmatpush1.bf16.msra.mxu0 0
        %3840 = vmatprep.subr.bf16.mxu0 0
        %3841 = vmatpush1.bf16.msra.mxu0 0
        %3842 = vmatprep.mubr.bf16.mxu0 0
        %3843 = vmatmul.mubr.bf16.gmra.mrb[0].mxu0 %v3805
        %v3844 = vpop.f32.mrb[0].mxu0
        %v3845 = vadd.f32 0.0, %v3844
        %v3846 = vpop.f32.mrb[0].mxu0
        %v3847 = vpop.f32.mrb[0].mxu0
        %v3848 = vadd.f32 0.0, %v3847
        %v3849 = vpop.f32.mrb[0].mxu0
        %3850 = vmatprep.mubr.bf16.mxu0 0
        %3851 = vmatmul.mubr.bf16.gmra.mrb[0].mxu0 %v3808
        %v3852 = vpop.f32.mrb[0].mxu0
        %v3853 = vadd.f32 0.0, %v3852
        %v3854 = vpop.f32.mrb[0].mxu0
        %v3855 = vpop.f32.mrb[0].mxu0
        %v3856 = vadd.f32 0.0, %v3855
        %v3857 = vpop.f32.mrb[0].mxu0
        %3858 = vdwg.mxu0
        %v3859 = vadd.f32 %v3761, %v3845
        %v3860 = vadd.f32 %v3762, %v3848
        %v3861 = vadd.f32 %v3763, %v3853
        %v3862 = vadd.f32 %v3764, %v3856
        %v3863 = vld [vmem:[%s7] sm:$0x1]
        %v3865 = vlaneseq
        %v3866 = vshrl.u32 %v3865, 7
        %v3867 = vsub.s32 0, %v3866
        %v3868 = vrot.slane %v3863, %v3867
        %v3870 = vadd.f32 %v3859, %v3868
        %v3871 = vadd.f32 %v3860, %v3868
        %v3872 = vadd.f32 %v3861, %v3868
        %v3873 = vadd.f32 %v3862, %v3868
        %vm3874 = vcmp.ge.f32.partialorder %v3870, 0.0
        %vm3875 = vcmp.ge.f32.partialorder %v3871, 0.0
        %vm3876 = vcmp.ge.f32.partialorder %v3872, 0.0
        %vm3877 = vcmp.ge.f32.partialorder %v3873, 0.0
        %v3878 = vmul.f32 %v3870, 0.2
        %v3879 = vmul.f32 %v3871, 0.2
        %v3880 = vmul.f32 %v3872, 0.2
        %v3881 = vmul.f32 %v3873, 0.2
        %v3882 = vsel %vm3874, %v3870, %v3878
        %v3883 = vsel %vm3875, %v3871, %v3879
        %v3884 = vsel %vm3876, %v3872, %v3880
        %v3885 = vsel %vm3877, %v3873, %v3881
        %v3886 = vpack.c.bf16 %v3882, %v3882
        %vm3887 = vcmask 39936
        %v3888 = vsel %vm3887, %v511, 0
        %vm3890 = vcmask 1041408
        %vm3891 = vcmask 1042432
        %v3892 = vsel %vm3890, 4294967295, 65535
        %v3893 = vsel %vm3891, %v3892, 0
        %v3895 = vand.u32 %v3886, %v3893
        %3897 = vmatprep.subr.bf16.mxu0 0
        %3898 = vmatpush1.bf16.msra.mxu0 %v3895
        %3899 = vmatprep.subr.bf16.mxu0 0
        %3900 = vmatpush1.bf16.msra.mxu0 0
        %3901 = vmatprep.subr.bf16.mxu0 0
        %3902 = vmatpush1.bf16.msra.mxu0 0
        %3903 = vmatprep.subr.bf16.mxu0 0
        %3904 = vmatpush1.bf16.msra.mxu0 0
        %3905 = vmatprep.subr.bf16.mxu0 0
        %3906 = vmatpush1.bf16.msra.mxu0 0
        %3907 = vmatprep.subr.bf16.mxu0 0
        %3908 = vmatpush1.bf16.msra.mxu0 0
        %3909 = vmatprep.subr.bf16.mxu0 0
        %3910 = vmatpush1.bf16.msra.mxu0 0
        %3911 = vmatprep.subr.bf16.mxu0 0
        %3912 = vmatpush1.bf16.msra.mxu0 0
        %3913 = vmatprep.subr.bf16.mxu0 0
        %3914 = vmatpush1.bf16.msra.mxu0 0
        %3915 = vmatprep.subr.bf16.mxu0 0
        %3916 = vmatpush1.bf16.msra.mxu0 0
        %3917 = vmatprep.subr.bf16.mxu0 0
        %3918 = vmatpush1.bf16.msra.mxu0 0
        %3919 = vmatprep.subr.bf16.mxu0 0
        %3920 = vmatpush1.bf16.msra.mxu0 0
        %3921 = vmatprep.subr.bf16.mxu0 0
        %3922 = vmatpush1.bf16.msra.mxu0 0
        %3923 = vmatprep.subr.bf16.mxu0 0
        %3924 = vmatpush1.bf16.msra.mxu0 0
        %3925 = vmatprep.subr.bf16.mxu0 0
        %3926 = vmatpush1.bf16.msra.mxu0 0
        %3927 = vmatprep.subr.bf16.mxu0 0
        %3928 = vmatpush1.bf16.msra.mxu0 0
        %3929 = vmatprep.mubr.bf16.mxu0 0
        %3930 = vmatmul.mubr.bf16.gmra.mrb[0].mxu0 %v3888
        %v3931 = vpop.f32.mrb[0].mxu0
        %v3932 = vadd.f32 0.0, %v3931
        %v3933 = vpop.f32.mrb[0].mxu0
        %v3934 = vpop.f32.mrb[0].mxu0
        %v3935 = vpop.f32.mrb[0].mxu0
        %3936 = vdwg.mxu0
        %vm3937 = vcmask 256000
        %3938 = vst.msk [vmem:[#allocation4 + $0x5] sm:$0x7] %vm3937, %v3932
        %v3939 = vsel %vm3887, %v516, 0
        %3941 = vmatprep.subr.bf16.mxu0 0
        %3942 = vmatpush1.bf16.msra.mxu0 %v3895
        %3943 = vmatprep.subr.bf16.mxu0 0
        %3944 = vmatpush1.bf16.msra.mxu0 0
        %3945 = vmatprep.subr.bf16.mxu0 0
        %3946 = vmatpush1.bf16.msra.mxu0 0
        %3947 = vmatprep.subr.bf16.mxu0 0
        %3948 = vmatpush1.bf16.msra.mxu0 0
        %3949 = vmatprep.subr.bf16.mxu0 0
        %3950 = vmatpush1.bf16.msra.mxu0 0
        %3951 = vmatprep.subr.bf16.mxu0 0
        %3952 = vmatpush1.bf16.msra.mxu0 0
        %3953 = vmatprep.subr.bf16.mxu0 0
        %3954 = vmatpush1.bf16.msra.mxu0 0
        %3955 = vmatprep.subr.bf16.mxu0 0
        %3956 = vmatpush1.bf16.msra.mxu0 0
        %3957 = vmatprep.subr.bf16.mxu0 0
        %3958 = vmatpush1.bf16.msra.mxu0 0
        %3959 = vmatprep.subr.bf16.mxu0 0
        %3960 = vmatpush1.bf16.msra.mxu0 0
        %3961 = vmatprep.subr.bf16.mxu0 0
        %3962 = vmatpush1.bf16.msra.mxu0 0
        %3963 = vmatprep.subr.bf16.mxu0 0
        %3964 = vmatpush1.bf16.msra.mxu0 0
        %3965 = vmatprep.subr.bf16.mxu0 0
        %3966 = vmatpush1.bf16.msra.mxu0 0
        %3967 = vmatprep.subr.bf16.mxu0 0
        %3968 = vmatpush1.bf16.msra.mxu0 0
        %3969 = vmatprep.subr.bf16.mxu0 0
        %3970 = vmatpush1.bf16.msra.mxu0 0
        %3971 = vmatprep.subr.bf16.mxu0 0
        %3972 = vmatpush1.bf16.msra.mxu0 0
        %3973 = vmatprep.mubr.bf16.mxu0 0
        %3974 = vmatmul.mubr.bf16.gmra.mrb[0].mxu0 %v3939
        %v3975 = vpop.f32.mrb[0].mxu0
        %v3976 = vadd.f32 0.0, %v3975
        %v3977 = vpop.f32.mrb[0].mxu0
        %v3978 = vpop.f32.mrb[0].mxu0
        %v3979 = vpop.f32.mrb[0].mxu0
        %3980 = vdwg.mxu0
        %3982 = vrot.lane.b32.xlu0 %v3976, 32
        %v3983 = vpop.permute.xlu0 %3982
        %vm3985 = vcmask 517376
        %3986 = vst.msk [vmem:[#allocation4 + $0x5] sm:$0x3] %vm3985, %v3983
        %v3987 = vpack.c.bf16 %v3883, %v3882
        %v3989 = vrot.slane %v3987, 3
        %v3991 = vand.u32 %v3989, %v3893
        %3993 = vmatprep.subr.bf16.mxu0 0
        %3994 = vmatpush1.bf16.msra.mxu0 %v3991
        %3995 = vmatprep.subr.bf16.mxu0 0
        %3996 = vmatpush1.bf16.msra.mxu0 0
        %3997 = vmatprep.subr.bf16.mxu0 0
        %3998 = vmatpush1.bf16.msra.mxu0 0
        %3999 = vmatprep.subr.bf16.mxu0 0
        %4000 = vmatpush1.bf16.msra.mxu0 0
        %4001 = vmatprep.subr.bf16.mxu0 0
        %4002 = vmatpush1.bf16.msra.mxu0 0
        %4003 = vmatprep.subr.bf16.mxu0 0
        %4004 = vmatpush1.bf16.msra.mxu0 0
        %4005 = vmatprep.subr.bf16.mxu0 0
        %4006 = vmatpush1.bf16.msra.mxu0 0
        %4007 = vmatprep.subr.bf16.mxu0 0
        %4008 = vmatpush1.bf16.msra.mxu0 0
        %4009 = vmatprep.subr.bf16.mxu0 0
        %4010 = vmatpush1.bf16.msra.mxu0 0
        %4011 = vmatprep.subr.bf16.mxu0 0
        %4012 = vmatpush1.bf16.msra.mxu0 0
        %4013 = vmatprep.subr.bf16.mxu0 0
        %4014 = vmatpush1.bf16.msra.mxu0 0
        %4015 = vmatprep.subr.bf16.mxu0 0
        %4016 = vmatpush1.bf16.msra.mxu0 0
        %4017 = vmatprep.subr.bf16.mxu0 0
        %4018 = vmatpush1.bf16.msra.mxu0 0
        %4019 = vmatprep.subr.bf16.mxu0 0
        %4020 = vmatpush1.bf16.msra.mxu0 0
        %4021 = vmatprep.subr.bf16.mxu0 0
        %4022 = vmatpush1.bf16.msra.mxu0 0
        %4023 = vmatprep.subr.bf16.mxu0 0
        %4024 = vmatpush1.bf16.msra.mxu0 0
        %4025 = vmatprep.mubr.bf16.mxu0 0
        %4026 = vmatmul.mubr.bf16.gmra.mrb[0].mxu0 %v3888
        %v4027 = vpop.f32.mrb[0].mxu0
        %v4028 = vadd.f32 0.0, %v4027
        %v4029 = vpop.f32.mrb[0].mxu0
        %v4030 = vpop.f32.mrb[0].mxu0
        %v4031 = vpop.f32.mrb[0].mxu0
        %4032 = vdwg.mxu0
        %4034 = vrot.lane.b32.xlu0 %v4028, 64
        %v4035 = vpop.permute.xlu0 %4034
        %vm4037 = vcmask 780800
        %4038 = vst.msk [vmem:[#allocation4 + $0x5] sm:$0x7] %vm4037, %v4035
        %4039 = vmatprep.subr.bf16.mxu0 0
        %4040 = vmatpush1.bf16.msra.mxu0 %v3991
        %4041 = vmatprep.subr.bf16.mxu0 0
        %4042 = vmatpush1.bf16.msra.mxu0 0
        %4043 = vmatprep.subr.bf16.mxu0 0
        %4044 = vmatpush1.bf16.msra.mxu0 0
        %4045 = vmatprep.subr.bf16.mxu0 0
        %4046 = vmatpush1.bf16.msra.mxu0 0
        %4047 = vmatprep.subr.bf16.mxu0 0
        %4048 = vmatpush1.bf16.msra.mxu0 0
        %4049 = vmatprep.subr.bf16.mxu0 0
        %4050 = vmatpush1.bf16.msra.mxu0 0
        %4051 = vmatprep.subr.bf16.mxu0 0
        %4052 = vmatpush1.bf16.msra.mxu0 0
        %4053 = vmatprep.subr.bf16.mxu0 0
        %4054 = vmatpush1.bf16.msra.mxu0 0
        %4055 = vmatprep.subr.bf16.mxu0 0
        %4056 = vmatpush1.bf16.msra.mxu0 0
        %4057 = vmatprep.subr.bf16.mxu0 0
        %4058 = vmatpush1.bf16.msra.mxu0 0
        %4059 = vmatprep.subr.bf16.mxu0 0
        %4060 = vmatpush1.bf16.msra.mxu0 0
        %4061 = vmatprep.subr.bf16.mxu0 0
        %4062 = vmatpush1.bf16.msra.mxu0 0
        %4063 = vmatprep.subr.bf16.mxu0 0
        %4064 = vmatpush1.bf16.msra.mxu0 0
        %4065 = vmatprep.subr.bf16.mxu0 0
        %4066 = vmatpush1.bf16.msra.mxu0 0
        %4067 = vmatprep.subr.bf16.mxu0 0
        %4068 = vmatpush1.bf16.msra.mxu0 0
        %4069 = vmatprep.subr.bf16.mxu0 0
        %4070 = vmatpush1.bf16.msra.mxu0 0
        %4071 = vmatprep.mubr.bf16.mxu0 0
        %4072 = vmatmul.mubr.bf16.gmra.mrb[0].mxu0 %v3939
        %v4073 = vpop.f32.mrb[0].mxu0
        %v4074 = vadd.f32 0.0, %v4073
        %v4075 = vpop.f32.mrb[0].mxu0
        %v4076 = vpop.f32.mrb[0].mxu0
        %v4077 = vpop.f32.mrb[0].mxu0
        %4078 = vdwg.mxu0
        %4080 = vrot.lane.b32.xlu0 %v4074, 96
        %v4081 = vpop.permute.xlu0 %4080
        %vm4083 = vcmask 1042176
        %4084 = vst.msk [vmem:[#allocation4 + $0x5] sm:$0x3] %vm4083, %v4081
        %v4085 = vpack.c.bf16 %v3884, %v3883
        %v4087 = vrot.slane %v4085, 2
        %v4089 = vand.u32 %v4087, %v3893
        %4091 = vmatprep.subr.bf16.mxu0 0
        %4092 = vmatpush1.bf16.msra.mxu0 %v4089
        %4093 = vmatprep.subr.bf16.mxu0 0
        %4094 = vmatpush1.bf16.msra.mxu0 0
        %4095 = vmatprep.subr.bf16.mxu0 0
        %4096 = vmatpush1.bf16.msra.mxu0 0
        %4097 = vmatprep.subr.bf16.mxu0 0
        %4098 = vmatpush1.bf16.msra.mxu0 0
        %4099 = vmatprep.subr.bf16.mxu0 0
        %4100 = vmatpush1.bf16.msra.mxu0 0
        %4101 = vmatprep.subr.bf16.mxu0 0
        %4102 = vmatpush1.bf16.msra.mxu0 0
        %4103 = vmatprep.subr.bf16.mxu0 0
        %4104 = vmatpush1.bf16.msra.mxu0 0
        %4105 = vmatprep.subr.bf16.mxu0 0
        %4106 = vmatpush1.bf16.msra.mxu0 0
        %4107 = vmatprep.subr.bf16.mxu0 0
        %4108 = vmatpush1.bf16.msra.mxu0 0
        %4109 = vmatprep.subr.bf16.mxu0 0
        %4110 = vmatpush1.bf16.msra.mxu0 0
        %4111 = vmatprep.subr.bf16.mxu0 0
        %4112 = vmatpush1.bf16.msra.mxu0 0
        %4113 = vmatprep.subr.bf16.mxu0 0
        %4114 = vmatpush1.bf16.msra.mxu0 0
        %4115 = vmatprep.subr.bf16.mxu0 0
        %4116 = vmatpush1.bf16.msra.mxu0 0
        %4117 = vmatprep.subr.bf16.mxu0 0
        %4118 = vmatpush1.bf16.msra.mxu0 0
        %4119 = vmatprep.subr.bf16.mxu0 0
        %4120 = vmatpush1.bf16.msra.mxu0 0
        %4121 = vmatprep.subr.bf16.mxu0 0
        %4122 = vmatpush1.bf16.msra.mxu0 0
        %4123 = vmatprep.mubr.bf16.mxu0 0
        %4124 = vmatmul.mubr.bf16.gmra.mrb[0].mxu0 %v3888
        %v4125 = vpop.f32.mrb[0].mxu0
        %v4126 = vadd.f32 0.0, %v4125
        %v4127 = vpop.f32.mrb[0].mxu0
        %v4128 = vpop.f32.mrb[0].mxu0
        %v4129 = vpop.f32.mrb[0].mxu0
        %4130 = vdwg.mxu0
        %4131 = vst.msk [vmem:[#allocation4 + $0x9] sm:$0x7] %vm3937, %v4126
        %4132 = vmatprep.subr.bf16.mxu0 0
        %4133 = vmatpush1.bf16.msra.mxu0 %v4089
        %4134 = vmatprep.subr.bf16.mxu0 0
        %4135 = vmatpush1.bf16.msra.mxu0 0
        %4136 = vmatprep.subr.bf16.mxu0 0
        %4137 = vmatpush1.bf16.msra.mxu0 0
        %4138 = vmatprep.subr.bf16.mxu0 0
        %4139 = vmatpush1.bf16.msra.mxu0 0
        %4140 = vmatprep.subr.bf16.mxu0 0
        %4141 = vmatpush1.bf16.msra.mxu0 0
        %4142 = vmatprep.subr.bf16.mxu0 0
        %4143 = vmatpush1.bf16.msra.mxu0 0
        %4144 = vmatprep.subr.bf16.mxu0 0
        %4145 = vmatpush1.bf16.msra.mxu0 0
        %4146 = vmatprep.subr.bf16.mxu0 0
        %4147 = vmatpush1.bf16.msra.mxu0 0
        %4148 = vmatprep.subr.bf16.mxu0 0
        %4149 = vmatpush1.bf16.msra.mxu0 0
        %4150 = vmatprep.subr.bf16.mxu0 0
        %4151 = vmatpush1.bf16.msra.mxu0 0
        %4152 = vmatprep.subr.bf16.mxu0 0
        %4153 = vmatpush1.bf16.msra.mxu0 0
        %4154 = vmatprep.subr.bf16.mxu0 0
        %4155 = vmatpush1.bf16.msra.mxu0 0
        %4156 = vmatprep.subr.bf16.mxu0 0
        %4157 = vmatpush1.bf16.msra.mxu0 0
        %4158 = vmatprep.subr.bf16.mxu0 0
        %4159 = vmatpush1.bf16.msra.mxu0 0
        %4160 = vmatprep.subr.bf16.mxu0 0
        %4161 = vmatpush1.bf16.msra.mxu0 0
        %4162 = vmatprep.subr.bf16.mxu0 0
        %4163 = vmatpush1.bf16.msra.mxu0 0
        %4164 = vmatprep.mubr.bf16.mxu0 0
        %4165 = vmatmul.mubr.bf16.gmra.mrb[0].mxu0 %v3939
        %v4166 = vpop.f32.mrb[0].mxu0
        %v4167 = vadd.f32 0.0, %v4166
        %v4168 = vpop.f32.mrb[0].mxu0
        %v4169 = vpop.f32.mrb[0].mxu0
        %v4170 = vpop.f32.mrb[0].mxu0
        %4171 = vdwg.mxu0
        %4173 = vrot.lane.b32.xlu0 %v4167, 32
        %v4174 = vpop.permute.xlu0 %4173
        %4176 = vst.msk [vmem:[#allocation4 + $0x9] sm:$0x3] %vm3985, %v4174
        %v4177 = vpack.c.bf16 %v3884, %v3884
        %v4179 = vrot.slane %v4177, 1
        %v4181 = vand.u32 %v4179, %v3893
        %4183 = vmatprep.subr.bf16.mxu0 0
        %4184 = vmatpush1.bf16.msra.mxu0 %v4181
        %4185 = vmatprep.subr.bf16.mxu0 0
        %4186 = vmatpush1.bf16.msra.mxu0 0
        %4187 = vmatprep.subr.bf16.mxu0 0
        %4188 = vmatpush1.bf16.msra.mxu0 0
        %4189 = vmatprep.subr.bf16.mxu0 0
        %4190 = vmatpush1.bf16.msra.mxu0 0
        %4191 = vmatprep.subr.bf16.mxu0 0
        %4192 = vmatpush1.bf16.msra.mxu0 0
        %4193 = vmatprep.subr.bf16.mxu0 0
        %4194 = vmatpush1.bf16.msra.mxu0 0
        %4195 = vmatprep.subr.bf16.mxu0 0
        %4196 = vmatpush1.bf16.msra.mxu0 0
        %4197 = vmatprep.subr.bf16.mxu0 0
        %4198 = vmatpush1.bf16.msra.mxu0 0
        %4199 = vmatprep.subr.bf16.mxu0 0
        %4200 = vmatpush1.bf16.msra.mxu0 0
        %4201 = vmatprep.subr.bf16.mxu0 0
        %4202 = vmatpush1.bf16.msra.mxu0 0
        %4203 = vmatprep.subr.bf16.mxu0 0
        %4204 = vmatpush1.bf16.msra.mxu0 0
        %4205 = vmatprep.subr.bf16.mxu0 0
        %4206 = vmatpush1.bf16.msra.mxu0 0
        %4207 = vmatprep.subr.bf16.mxu0 0
        %4208 = vmatpush1.bf16.msra.mxu0 0
        %4209 = vmatprep.subr.bf16.mxu0 0
        %4210 = vmatpush1.bf16.msra.mxu0 0
        %4211 = vmatprep.subr.bf16.mxu0 0
        %4212 = vmatpush1.bf16.msra.mxu0 0
        %4213 = vmatprep.subr.bf16.mxu0 0
        %4214 = vmatpush1.bf16.msra.mxu0 0
        %4215 = vmatprep.mubr.bf16.mxu0 0
        %4216 = vmatmul.mubr.bf16.gmra.mrb[0].mxu0 %v3888
        %v4217 = vpop.f32.mrb[0].mxu0
        %v4218 = vadd.f32 0.0, %v4217
        %v4219 = vpop.f32.mrb[0].mxu0
        %v4220 = vpop.f32.mrb[0].mxu0
        %v4221 = vpop.f32.mrb[0].mxu0
        %4222 = vdwg.mxu0
        %4224 = vrot.lane.b32.xlu0 %v4218, 64
        %v4225 = vpop.permute.xlu0 %4224
        %4227 = vst.msk [vmem:[#allocation4 + $0x9] sm:$0x7] %vm4037, %v4225
        %4228 = vmatprep.subr.bf16.mxu0 0
        %4229 = vmatpush1.bf16.msra.mxu0 %v4181
        %4230 = vmatprep.subr.bf16.mxu0 0
        %4231 = vmatpush1.bf16.msra.mxu0 0
        %4232 = vmatprep.subr.bf16.mxu0 0
        %4233 = vmatpush1.bf16.msra.mxu0 0
        %4234 = vmatprep.subr.bf16.mxu0 0
        %4235 = vmatpush1.bf16.msra.mxu0 0
        %4236 = vmatprep.subr.bf16.mxu0 0
        %4237 = vmatpush1.bf16.msra.mxu0 0
        %4238 = vmatprep.subr.bf16.mxu0 0
        %4239 = vmatpush1.bf16.msra.mxu0 0
        %4240 = vmatprep.subr.bf16.mxu0 0
        %4241 = vmatpush1.bf16.msra.mxu0 0
        %4242 = vmatprep.subr.bf16.mxu0 0
        %4243 = vmatpush1.bf16.msra.mxu0 0
        %4244 = vmatprep.subr.bf16.mxu0 0
        %4245 = vmatpush1.bf16.msra.mxu0 0
        %4246 = vmatprep.subr.bf16.mxu0 0
        %4247 = vmatpush1.bf16.msra.mxu0 0
        %4248 = vmatprep.subr.bf16.mxu0 0
        %4249 = vmatpush1.bf16.msra.mxu0 0
        %4250 = vmatprep.subr.bf16.mxu0 0
        %4251 = vmatpush1.bf16.msra.mxu0 0
        %4252 = vmatprep.subr.bf16.mxu0 0
        %4253 = vmatpush1.bf16.msra.mxu0 0
        %4254 = vmatprep.subr.bf16.mxu0 0
        %4255 = vmatpush1.bf16.msra.mxu0 0
        %4256 = vmatprep.subr.bf16.mxu0 0
        %4257 = vmatpush1.bf16.msra.mxu0 0
        %4258 = vmatprep.subr.bf16.mxu0 0
        %4259 = vmatpush1.bf16.msra.mxu0 0
        %4260 = vmatprep.mubr.bf16.mxu0 0
        %4261 = vmatmul.mubr.bf16.gmra.mrb[0].mxu0 %v3939
        %v4262 = vpop.f32.mrb[0].mxu0
        %v4263 = vadd.f32 0.0, %v4262
        %v4264 = vpop.f32.mrb[0].mxu0
        %v4265 = vpop.f32.mrb[0].mxu0
        %v4266 = vpop.f32.mrb[0].mxu0
        %4267 = vdwg.mxu0
        %4269 = vrot.lane.b32.xlu0 %v4263, 96
        %v4270 = vpop.permute.xlu0 %4269
        %4272 = vst.msk [vmem:[#allocation4 + $0x9] sm:$0x3] %vm4083, %v4270
        %v4273 = vpack.c.bf16 %v3885, %v3885
        %v4275 = vand.u32 %v4273, %v3893
        %4277 = vmatprep.subr.bf16.mxu0 0
        %4278 = vmatpush1.bf16.msra.mxu0 %v4275
        %4279 = vmatprep.subr.bf16.mxu0 0
        %4280 = vmatpush1.bf16.msra.mxu0 0
        %4281 = vmatprep.subr.bf16.mxu0 0
        %4282 = vmatpush1.bf16.msra.mxu0 0
        %4283 = vmatprep.subr.bf16.mxu0 0
        %4284 = vmatpush1.bf16.msra.mxu0 0
        %4285 = vmatprep.subr.bf16.mxu0 0
        %4286 = vmatpush1.bf16.msra.mxu0 0
        %4287 = vmatprep.subr.bf16.mxu0 0
        %4288 = vmatpush1.bf16.msra.mxu0 0
        %4289 = vmatprep.subr.bf16.mxu0 0
        %4290 = vmatpush1.bf16.msra.mxu0 0
        %4291 = vmatprep.subr.bf16.mxu0 0
        %4292 = vmatpush1.bf16.msra.mxu0 0
        %4293 = vmatprep.subr.bf16.mxu0 0
        %4294 = vmatpush1.bf16.msra.mxu0 0
        %4295 = vmatprep.subr.bf16.mxu0 0
        %4296 = vmatpush1.bf16.msra.mxu0 0
        %4297 = vmatprep.subr.bf16.mxu0 0
        %4298 = vmatpush1.bf16.msra.mxu0 0
        %4299 = vmatprep.subr.bf16.mxu0 0
        %4300 = vmatpush1.bf16.msra.mxu0 0
        %4301 = vmatprep.subr.bf16.mxu0 0
        %4302 = vmatpush1.bf16.msra.mxu0 0
        %4303 = vmatprep.subr.bf16.mxu0 0
        %4304 = vmatpush1.bf16.msra.mxu0 0
        %4305 = vmatprep.subr.bf16.mxu0 0
        %4306 = vmatpush1.bf16.msra.mxu0 0
        %4307 = vmatprep.subr.bf16.mxu0 0
        %4308 = vmatpush1.bf16.msra.mxu0 0
        %4309 = vmatprep.mubr.bf16.mxu0 0
        %4310 = vmatmul.mubr.bf16.gmra.mrb[0].mxu0 %v3888
        %v4311 = vpop.f32.mrb[0].mxu0
        %v4312 = vadd.f32 0.0, %v4311
        %v4313 = vpop.f32.mrb[0].mxu0
        %v4314 = vpop.f32.mrb[0].mxu0
        %v4315 = vpop.f32.mrb[0].mxu0
        %4316 = vdwg.mxu0
        %4317 = vst.msk [vmem:[#allocation4 + $0xd] sm:$0x7] %vm3937, %v4312
        %4318 = vmatprep.subr.bf16.mxu0 0
        %4319 = vmatpush1.bf16.msra.mxu0 %v4275
        %4320 = vmatprep.subr.bf16.mxu0 0
        %4321 = vmatpush1.bf16.msra.mxu0 0
        %4322 = vmatprep.subr.bf16.mxu0 0
        %4323 = vmatpush1.bf16.msra.mxu0 0
        %4324 = vmatprep.subr.bf16.mxu0 0
        %4325 = vmatpush1.bf16.msra.mxu0 0
        %4326 = vmatprep.subr.bf16.mxu0 0
        %4327 = vmatpush1.bf16.msra.mxu0 0
        %4328 = vmatprep.subr.bf16.mxu0 0
        %4329 = vmatpush1.bf16.msra.mxu0 0
        %4330 = vmatprep.subr.bf16.mxu0 0
        %4331 = vmatpush1.bf16.msra.mxu0 0
        %4332 = vmatprep.subr.bf16.mxu0 0
        %4333 = vmatpush1.bf16.msra.mxu0 0
        %4334 = vmatprep.subr.bf16.mxu0 0
        %4335 = vmatpush1.bf16.msra.mxu0 0
        %4336 = vmatprep.subr.bf16.mxu0 0
        %4337 = vmatpush1.bf16.msra.mxu0 0
        %4338 = vmatprep.subr.bf16.mxu0 0
        %4339 = vmatpush1.bf16.msra.mxu0 0
        %4340 = vmatprep.subr.bf16.mxu0 0
        %4341 = vmatpush1.bf16.msra.mxu0 0
        %4342 = vmatprep.subr.bf16.mxu0 0
        %4343 = vmatpush1.bf16.msra.mxu0 0
        %4344 = vmatprep.subr.bf16.mxu0 0
        %4345 = vmatpush1.bf16.msra.mxu0 0
        %4346 = vmatprep.subr.bf16.mxu0 0
        %4347 = vmatpush1.bf16.msra.mxu0 0
        %4348 = vmatprep.subr.bf16.mxu0 0
        %4349 = vmatpush1.bf16.msra.mxu0 0
        %4350 = vmatprep.mubr.bf16.mxu0 0
        %4351 = vmatmul.mubr.bf16.gmra.mrb[0].mxu0 %v3939
        %v4352 = vpop.f32.mrb[0].mxu0
        %v4353 = vadd.f32 0.0, %v4352
        %v4354 = vpop.f32.mrb[0].mxu0
        %v4355 = vpop.f32.mrb[0].mxu0
        %v4356 = vpop.f32.mrb[0].mxu0
        %4357 = vdwg.mxu0
        %4359 = vrot.lane.b32.xlu0 %v4353, 32
        %v4360 = vpop.permute.xlu0 %4359
        %4362 = vst.msk [vmem:[#allocation4 + $0xd] sm:$0x3] %vm3985, %v4360
        %v4363 = vld [vmem:[#allocation4] sm:$0xff]
        %v4364 = vld [vmem:[#allocation4 + $0x8] sm:$0x7]
        %v4365 = vpack.c.bf16 %v4364, %v4363
        %v4366 = vld [vmem:[#allocation9] sm:$0xf]
        %v4367 = vld [vmem:[#allocation9 + $0x4] sm:$0xf]
        %v4368 = vld [vmem:[#allocation9 + $0x8] sm:$0xf]
        %v4369 = vld [vmem:[#allocation9 + $0xc] sm:$0xf]
        %v4370 = vld [vmem:[#allocation9 + $0x10] sm:$0xf]
        %v4371 = vld [vmem:[#allocation9 + $0x14] sm:$0xf]
        %v4372 = vld [vmem:[#allocation9 + $0x18] sm:$0xf]
        %v4373 = vld [vmem:[#allocation9 + $0x1c] sm:$0xf]
        %v4374 = vld [vmem:[#allocation9 + $0x20] sm:$0xf]
        %v4375 = vld [vmem:[#allocation9 + $0x24] sm:$0xf]
        %v4376 = vld [vmem:[#allocation9 + $0x28] sm:$0xf]
        %v4377 = vld [vmem:[#allocation9 + $0x2c] sm:$0xf]
        %v4378 = vld [vmem:[#allocation9 + $0x30] sm:$0xf]
        %v4379 = vld [vmem:[#allocation9 + $0x34] sm:$0xf]
        %v4380 = vld [vmem:[#allocation9 + $0x38] sm:$0xf]
        %v4381 = vld [vmem:[#allocation9 + $0x3c] sm:$0xf]
        %v4382 = vld [vmem:[#allocation4 + $0x1] sm:$0xff]
        %v4383 = vld [vmem:[#allocation4 + $0x9] sm:$0x7]
        %v4384 = vpack.c.bf16 %v4383, %v4382
        %s4385 = scalar_lea.vmem [#allocation9], 64
        %v4386 = vld [vmem:[%s4385] sm:$0xf]
        %v4387 = vld [vmem:[%s4385 + $0x4] sm:$0xf]
        %v4388 = vld [vmem:[%s4385 + $0x8] sm:$0xf]
        %v4389 = vld [vmem:[%s4385 + $0xc] sm:$0xf]
        %v4390 = vld [vmem:[%s4385 + $0x10] sm:$0xf]
        %v4391 = vld [vmem:[%s4385 + $0x14] sm:$0xf]
        %v4392 = vld [vmem:[%s4385 + $0x18] sm:$0xf]
        %v4393 = vld [vmem:[%s4385 + $0x1c] sm:$0xf]
        %v4394 = vld [vmem:[%s4385 + $0x20] sm:$0xf]
        %v4395 = vld [vmem:[%s4385 + $0x24] sm:$0xf]
        %v4396 = vld [vmem:[%s4385 + $0x28] sm:$0xf]
        %v4397 = vld [vmem:[%s4385 + $0x2c] sm:$0xf]
        %v4398 = vld [vmem:[%s4385 + $0x30] sm:$0xf]
        %v4399 = vld [vmem:[%s4385 + $0x34] sm:$0xf]
        %v4400 = vld [vmem:[%s4385 + $0x38] sm:$0xf]
        %v4401 = vld [vmem:[%s4385 + $0x3c] sm:$0xf]
        %v4418 = vunpack.c.l.b16 %v4386
        %v4419 = vunpack.c.l.b16 %v4387
        %v4420 = vunpack.c.l.b16 %v4388
        %v4421 = vunpack.c.l.b16 %v4389
        %v4422 = vunpack.c.l.b16 %v4390
        %v4423 = vunpack.c.l.b16 %v4391
        %v4424 = vunpack.c.l.b16 %v4392
        %v4425 = vunpack.c.l.b16 %v4393
        %v4426 = vunpack.c.l.b16 %v4394
        %v4427 = vunpack.c.l.b16 %v4395
        %v4428 = vunpack.c.l.b16 %v4396
        %v4429 = vunpack.c.l.b16 %v4397
        %v4430 = vunpack.c.l.b16 %v4398
        %v4431 = vunpack.c.l.b16 %v4399
        %v4432 = vunpack.c.l.b16 %v4400
        %v4433 = vunpack.c.l.b16 %v4401
        %v4434 = vpack.c.b16 %v4419, %v4418
        %v4435 = vpack.c.b16 %v4421, %v4420
        %v4436 = vpack.c.b16 %v4423, %v4422
        %v4437 = vpack.c.b16 %v4425, %v4424
        %v4438 = vpack.c.b16 %v4427, %v4426
        %v4439 = vpack.c.b16 %v4429, %v4428
        %v4440 = vpack.c.b16 %v4431, %v4430
        %v4441 = vpack.c.b16 %v4433, %v4432
        %4450 = vmatprep.subr.bf16.mxu0 0
        %4451 = vmatpush1.bf16.msra.mxu0 %v4434
        %4452 = vmatprep.subr.bf16.mxu0 0
        %4453 = vmatpush1.bf16.msra.mxu0 %v4435
        %4454 = vmatprep.subr.bf16.mxu0 0
        %4455 = vmatpush1.bf16.msra.mxu0 %v4436
        %4456 = vmatprep.subr.bf16.mxu0 0
        %4457 = vmatpush1.bf16.msra.mxu0 %v4437
        %4458 = vmatprep.subr.bf16.mxu0 0
        %4459 = vmatpush1.bf16.msra.mxu0 %v4438
        %4460 = vmatprep.subr.bf16.mxu0 0
        %4461 = vmatpush1.bf16.msra.mxu0 %v4439
        %4462 = vmatprep.subr.bf16.mxu0 0
        %4463 = vmatpush1.bf16.msra.mxu0 %v4440
        %4464 = vmatprep.subr.bf16.mxu0 0
        %4465 = vmatpush1.bf16.msra.mxu0 %v4441
        %4466 = vmatprep.subr.bf16.mxu0 0
        %4467 = vmatpush1.bf16.msra.mxu0 0
        %4468 = vmatprep.subr.bf16.mxu0 0
        %4469 = vmatpush1.bf16.msra.mxu0 0
        %4470 = vmatprep.subr.bf16.mxu0 0
        %4471 = vmatpush1.bf16.msra.mxu0 0
        %4472 = vmatprep.subr.bf16.mxu0 0
        %4473 = vmatpush1.bf16.msra.mxu0 0
        %4474 = vmatprep.subr.bf16.mxu0 0
        %4475 = vmatpush1.bf16.msra.mxu0 0
        %4476 = vmatprep.subr.bf16.mxu0 0
        %4477 = vmatpush1.bf16.msra.mxu0 0
        %4478 = vmatprep.subr.bf16.mxu0 0
        %4479 = vmatpush1.bf16.msra.mxu0 0
        %4480 = vmatprep.subr.bf16.mxu0 0
        %4481 = vmatpush1.bf16.msra.mxu0 0
        %4482 = vmatprep.mubr.bf16.mxu0 0
        %4483 = vmatmul.mubr.bf16.gmra.mrb[0].mxu0 %v4384
        %v4484 = vpop.f32.mrb[0].mxu0
        %v4485 = vadd.f32 0.0, %v4484
        %v4486 = vpop.f32.mrb[0].mxu0
        %v4487 = vpop.f32.mrb[0].mxu0
        %v4488 = vadd.f32 0.0, %v4487
        %v4489 = vpop.f32.mrb[0].mxu0
        %4490 = vdwg.mxu0
        %v4507 = vunpack.c.l.b16 %v4366
        %v4508 = vunpack.c.l.b16 %v4367
        %v4509 = vunpack.c.l.b16 %v4368
        %v4510 = vunpack.c.l.b16 %v4369
        %v4511 = vunpack.c.l.b16 %v4370
        %v4512 = vunpack.c.l.b16 %v4371
        %v4513 = vunpack.c.l.b16 %v4372
        %v4514 = vunpack.c.l.b16 %v4373
        %v4515 = vunpack.c.l.b16 %v4374
        %v4516 = vunpack.c.l.b16 %v4375
        %v4517 = vunpack.c.l.b16 %v4376
        %v4518 = vunpack.c.l.b16 %v4377
        %v4519 = vunpack.c.l.b16 %v4378
        %v4520 = vunpack.c.l.b16 %v4379
        %v4521 = vunpack.c.l.b16 %v4380
        %v4522 = vunpack.c.l.b16 %v4381
        %v4523 = vpack.c.b16 %v4508, %v4507
        %v4524 = vpack.c.b16 %v4510, %v4509
        %v4525 = vpack.c.b16 %v4512, %v4511
        %v4526 = vpack.c.b16 %v4514, %v4513
        %v4527 = vpack.c.b16 %v4516, %v4515
        %v4528 = vpack.c.b16 %v4518, %v4517
        %v4529 = vpack.c.b16 %v4520, %v4519
        %v4530 = vpack.c.b16 %v4522, %v4521
        %4539 = vmatprep.subr.bf16.mxu0 0
        %4540 = vmatpush1.bf16.msra.mxu0 %v4523
        %4541 = vmatprep.subr.bf16.mxu0 0
        %4542 = vmatpush1.bf16.msra.mxu0 %v4524
        %4543 = vmatprep.subr.bf16.mxu0 0
        %4544 = vmatpush1.bf16.msra.mxu0 %v4525
        %4545 = vmatprep.subr.bf16.mxu0 0
        %4546 = vmatpush1.bf16.msra.mxu0 %v4526
        %4547 = vmatprep.subr.bf16.mxu0 0
        %4548 = vmatpush1.bf16.msra.mxu0 %v4527
        %4549 = vmatprep.subr.bf16.mxu0 0
        %4550 = vmatpush1.bf16.msra.mxu0 %v4528
        %4551 = vmatprep.subr.bf16.mxu0 0
        %4552 = vmatpush1.bf16.msra.mxu0 %v4529
        %4553 = vmatprep.subr.bf16.mxu0 0
        %4554 = vmatpush1.bf16.msra.mxu0 %v4530
        %4555 = vmatprep.subr.bf16.mxu0 0
        %4556 = vmatpush1.bf16.msra.mxu0 0
        %4557 = vmatprep.subr.bf16.mxu0 0
        %4558 = vmatpush1.bf16.msra.mxu0 0
        %4559 = vmatprep.subr.bf16.mxu0 0
        %4560 = vmatpush1.bf16.msra.mxu0 0
        %4561 = vmatprep.subr.bf16.mxu0 0
        %4562 = vmatpush1.bf16.msra.mxu0 0
        %4563 = vmatprep.subr.bf16.mxu0 0
        %4564 = vmatpush1.bf16.msra.mxu0 0
        %4565 = vmatprep.subr.bf16.mxu0 0
        %4566 = vmatpush1.bf16.msra.mxu0 0
        %4567 = vmatprep.subr.bf16.mxu0 0
        %4568 = vmatpush1.bf16.msra.mxu0 0
        %4569 = vmatprep.subr.bf16.mxu0 0
        %4570 = vmatpush1.bf16.msra.mxu0 0
        %4571 = vmatprep.mubr.bf16.mxu0 0
        %4572 = vmatmul.mubr.bf16.gmra.mrb[0].mxu0 %v4365
        %v4573 = vpop.f32.mrb[0].mxu0
        %v4574 = vadd.f32 %v4485, %v4573
        %v4575 = vpop.f32.mrb[0].mxu0
        %v4576 = vpop.f32.mrb[0].mxu0
        %v4577 = vadd.f32 %v4488, %v4576
        %v4578 = vpop.f32.mrb[0].mxu0
        %4579 = vdwg.mxu0
        %v4580 = vld [vmem:[#allocation4 + $0x4] sm:$0xff]
        %v4581 = vld [vmem:[#allocation4 + $0xc] sm:$0x7]
        %v4582 = vpack.c.bf16 %v4581, %v4580
        %s4583 = scalar_lea.vmem [#allocation9], 128
        %v4584 = vld [vmem:[%s4583] sm:$0xf]
        %v4585 = vld [vmem:[%s4583 + $0x4] sm:$0xf]
        %v4586 = vld [vmem:[%s4583 + $0x8] sm:$0xf]
        %v4587 = vld [vmem:[%s4583 + $0xc] sm:$0xf]
        %v4588 = vld [vmem:[%s4583 + $0x10] sm:$0xf]
        %v4589 = vld [vmem:[%s4583 + $0x14] sm:$0xf]
        %v4590 = vld [vmem:[%s4583 + $0x18] sm:$0xf]
        %v4591 = vld [vmem:[%s4583 + $0x1c] sm:$0xf]
        %v4592 = vld [vmem:[%s4583 + $0x20] sm:$0xf]
        %v4593 = vld [vmem:[%s4583 + $0x24] sm:$0xf]
        %v4594 = vld [vmem:[%s4583 + $0x28] sm:$0xf]
        %v4595 = vld [vmem:[%s4583 + $0x2c] sm:$0xf]
        %v4596 = vld [vmem:[%s4583 + $0x30] sm:$0xf]
        %v4597 = vld [vmem:[%s4583 + $0x34] sm:$0xf]
        %v4598 = vld [vmem:[%s4583 + $0x38] sm:$0xf]
        %v4599 = vld [vmem:[%s4583 + $0x3c] sm:$0xf]
        %v4616 = vunpack.c.l.b16 %v4584
        %v4617 = vunpack.c.l.b16 %v4585
        %v4618 = vunpack.c.l.b16 %v4586
        %v4619 = vunpack.c.l.b16 %v4587
        %v4620 = vunpack.c.l.b16 %v4588
        %v4621 = vunpack.c.l.b16 %v4589
        %v4622 = vunpack.c.l.b16 %v4590
        %v4623 = vunpack.c.l.b16 %v4591
        %v4624 = vunpack.c.l.b16 %v4592
        %v4625 = vunpack.c.l.b16 %v4593
        %v4626 = vunpack.c.l.b16 %v4594
        %v4627 = vunpack.c.l.b16 %v4595
        %v4628 = vunpack.c.l.b16 %v4596
        %v4629 = vunpack.c.l.b16 %v4597
        %v4630 = vunpack.c.l.b16 %v4598
        %v4631 = vunpack.c.l.b16 %v4599
        %v4632 = vpack.c.b16 %v4617, %v4616
        %v4633 = vpack.c.b16 %v4619, %v4618
        %v4634 = vpack.c.b16 %v4621, %v4620
        %v4635 = vpack.c.b16 %v4623, %v4622
        %v4636 = vpack.c.b16 %v4625, %v4624
        %v4637 = vpack.c.b16 %v4627, %v4626
        %v4638 = vpack.c.b16 %v4629, %v4628
        %v4639 = vpack.c.b16 %v4631, %v4630
        %4648 = vmatprep.subr.bf16.mxu0 0
        %4649 = vmatpush1.bf16.msra.mxu0 %v4632
        %4650 = vmatprep.subr.bf16.mxu0 0
        %4651 = vmatpush1.bf16.msra.mxu0 %v4633
        %4652 = vmatprep.subr.bf16.mxu0 0
        %4653 = vmatpush1.bf16.msra.mxu0 %v4634
        %4654 = vmatprep.subr.bf16.mxu0 0
        %4655 = vmatpush1.bf16.msra.mxu0 %v4635
        %4656 = vmatprep.subr.bf16.mxu0 0
        %4657 = vmatpush1.bf16.msra.mxu0 %v4636
        %4658 = vmatprep.subr.bf16.mxu0 0
        %4659 = vmatpush1.bf16.msra.mxu0 %v4637
        %4660 = vmatprep.subr.bf16.mxu0 0
        %4661 = vmatpush1.bf16.msra.mxu0 %v4638
        %4662 = vmatprep.subr.bf16.mxu0 0
        %4663 = vmatpush1.bf16.msra.mxu0 %v4639
        %4664 = vmatprep.subr.bf16.mxu0 0
        %4665 = vmatpush1.bf16.msra.mxu0 0
        %4666 = vmatprep.subr.bf16.mxu0 0
        %4667 = vmatpush1.bf16.msra.mxu0 0
        %4668 = vmatprep.subr.bf16.mxu0 0
        %4669 = vmatpush1.bf16.msra.mxu0 0
        %4670 = vmatprep.subr.bf16.mxu0 0
        %4671 = vmatpush1.bf16.msra.mxu0 0
        %4672 = vmatprep.subr.bf16.mxu0 0
        %4673 = vmatpush1.bf16.msra.mxu0 0
        %4674 = vmatprep.subr.bf16.mxu0 0
        %4675 = vmatpush1.bf16.msra.mxu0 0
        %4676 = vmatprep.subr.bf16.mxu0 0
        %4677 = vmatpush1.bf16.msra.mxu0 0
        %4678 = vmatprep.subr.bf16.mxu0 0
        %4679 = vmatpush1.bf16.msra.mxu0 0
        %4680 = vmatprep.mubr.bf16.mxu0 0
        %4681 = vmatmul.mubr.bf16.gmra.mrb[0].mxu0 %v4582
        %v4682 = vpop.f32.mrb[0].mxu0
        %v4683 = vadd.f32 0.0, %v4682
        %v4684 = vpop.f32.mrb[0].mxu0
        %v4685 = vpop.f32.mrb[0].mxu0
        %v4686 = vadd.f32 0.0, %v4685
        %v4687 = vpop.f32.mrb[0].mxu0
        %4688 = vdwg.mxu0
        %v4689 = vadd.f32 %v4574, %v4683
        %v4690 = vadd.f32 %v4577, %v4686
        %v4691 = vld [vmem:[#allocation4 + $0x5] sm:$0xff]
        %v4692 = vld [vmem:[#allocation4 + $0xd] sm:$0x7]
        %v4693 = vpack.c.bf16 %v4692, %v4691
        %s4694 = scalar_lea.vmem [#allocation9], 192
        %v4695 = vld [vmem:[%s4694] sm:$0xf]
        %v4696 = vld [vmem:[%s4694 + $0x4] sm:$0xf]
        %v4697 = vld [vmem:[%s4694 + $0x8] sm:$0xf]
        %v4698 = vld [vmem:[%s4694 + $0xc] sm:$0xf]
        %v4699 = vld [vmem:[%s4694 + $0x10] sm:$0xf]
        %v4700 = vld [vmem:[%s4694 + $0x14] sm:$0xf]
        %v4701 = vld [vmem:[%s4694 + $0x18] sm:$0xf]
        %v4702 = vld [vmem:[%s4694 + $0x1c] sm:$0xf]
        %v4703 = vld [vmem:[%s4694 + $0x20] sm:$0xf]
        %v4704 = vld [vmem:[%s4694 + $0x24] sm:$0xf]
        %v4705 = vld [vmem:[%s4694 + $0x28] sm:$0xf]
        %v4706 = vld [vmem:[%s4694 + $0x2c] sm:$0xf]
        %v4707 = vld [vmem:[%s4694 + $0x30] sm:$0xf]
        %v4708 = vld [vmem:[%s4694 + $0x34] sm:$0xf]
        %v4709 = vld [vmem:[%s4694 + $0x38] sm:$0xf]
        %v4710 = vld [vmem:[%s4694 + $0x3c] sm:$0xf]
        %v4727 = vunpack.c.l.b16 %v4695
        %v4728 = vunpack.c.l.b16 %v4696
        %v4729 = vunpack.c.l.b16 %v4697
        %v4730 = vunpack.c.l.b16 %v4698
        %v4731 = vunpack.c.l.b16 %v4699
        %v4732 = vunpack.c.l.b16 %v4700
        %v4733 = vunpack.c.l.b16 %v4701
        %v4734 = vunpack.c.l.b16 %v4702
        %v4735 = vunpack.c.l.b16 %v4703
        %v4736 = vunpack.c.l.b16 %v4704
        %v4737 = vunpack.c.l.b16 %v4705
        %v4738 = vunpack.c.l.b16 %v4706
        %v4739 = vunpack.c.l.b16 %v4707
        %v4740 = vunpack.c.l.b16 %v4708
        %v4741 = vunpack.c.l.b16 %v4709
        %v4742 = vunpack.c.l.b16 %v4710
        %v4743 = vpack.c.b16 %v4728, %v4727
        %v4744 = vpack.c.b16 %v4730, %v4729
        %v4745 = vpack.c.b16 %v4732, %v4731
        %v4746 = vpack.c.b16 %v4734, %v4733
        %v4747 = vpack.c.b16 %v4736, %v4735
        %v4748 = vpack.c.b16 %v4738, %v4737
        %v4749 = vpack.c.b16 %v4740, %v4739
        %v4750 = vpack.c.b16 %v4742, %v4741
        %4759 = vmatprep.subr.bf16.mxu0 0
        %4760 = vmatpush1.bf16.msra.mxu0 %v4743
        %4761 = vmatprep.subr.bf16.mxu0 0
        %4762 = vmatpush1.bf16.msra.mxu0 %v4744
        %4763 = vmatprep.subr.bf16.mxu0 0
        %4764 = vmatpush1.bf16.msra.mxu0 %v4745
        %4765 = vmatprep.subr.bf16.mxu0 0
        %4766 = vmatpush1.bf16.msra.mxu0 %v4746
        %4767 = vmatprep.subr.bf16.mxu0 0
        %4768 = vmatpush1.bf16.msra.mxu0 %v4747
        %4769 = vmatprep.subr.bf16.mxu0 0
        %4770 = vmatpush1.bf16.msra.mxu0 %v4748
        %4771 = vmatprep.subr.bf16.mxu0 0
        %4772 = vmatpush1.bf16.msra.mxu0 %v4749
        %4773 = vmatprep.subr.bf16.mxu0 0
        %4774 = vmatpush1.bf16.msra.mxu0 %v4750
        %4775 = vmatprep.subr.bf16.mxu0 0
        %4776 = vmatpush1.bf16.msra.mxu0 0
        %4777 = vmatprep.subr.bf16.mxu0 0
        %4778 = vmatpush1.bf16.msra.mxu0 0
        %4779 = vmatprep.subr.bf16.mxu0 0
        %4780 = vmatpush1.bf16.msra.mxu0 0
        %4781 = vmatprep.subr.bf16.mxu0 0
        %4782 = vmatpush1.bf16.msra.mxu0 0
        %4783 = vmatprep.subr.bf16.mxu0 0
        %4784 = vmatpush1.bf16.msra.mxu0 0
        %4785 = vmatprep.subr.bf16.mxu0 0
        %4786 = vmatpush1.bf16.msra.mxu0 0
        %4787 = vmatprep.subr.bf16.mxu0 0
        %4788 = vmatpush1.bf16.msra.mxu0 0
        %4789 = vmatprep.subr.bf16.mxu0 0
        %4790 = vmatpush1.bf16.msra.mxu0 0
        %4791 = vmatprep.mubr.bf16.mxu0 0
        %4792 = vmatmul.mubr.bf16.gmra.mrb[0].mxu0 %v4693
        %v4793 = vpop.f32.mrb[0].mxu0
        %v4794 = vadd.f32 0.0, %v4793
        %v4795 = vpop.f32.mrb[0].mxu0
        %v4796 = vpop.f32.mrb[0].mxu0
        %v4797 = vadd.f32 0.0, %v4796
        %v4798 = vpop.f32.mrb[0].mxu0
        %4799 = vdwg.mxu0
        %v4800 = vadd.f32 %v4689, %v4794
        %v4801 = vadd.f32 %v4690, %v4797
        %v4802 = vld [vmem:[%s8] sm:$0x1]
        %v4804 = vlaneseq
        %v4805 = vshrl.u32 %v4804, 7
        %v4806 = vsub.s32 0, %v4805
        %v4807 = vrot.slane %v4802, %v4806
        %v4809 = vadd.f32 %v4800, %v4807
        %v4810 = vadd.f32 %v4801, %v4807
        %vm4811 = vcmp.ge.f32.partialorder %v4809, 0.0
        %vm4812 = vcmp.ge.f32.partialorder %v4810, 0.0
        %v4813 = vmul.f32 %v4809, 0.2
        %v4814 = vmul.f32 %v4810, 0.2
        %v4815 = vsel %vm4811, %v4809, %v4813
        %v4816 = vsel %vm4812, %v4810, %v4814
        %vm4817 = vcmask 518144
        %4818 = vst.msk [vmem:[#allocation5 + $0x10] sm:$0x7] %vm4817, %v4815
        %vm4819 = vcmask 522244
        %4820 = vst.msk [vmem:[#allocation5 + $0x13] sm:$0x70] %vm4819, %v4815
        %4821 = vst.msk [vmem:[#allocation5 + $0x1e] sm:$0x7] %vm4817, %v4816
        %v4822 = vld [vmem:[#allocation5] sm:$0xff]
        %v4823 = vld [vmem:[#allocation5 + $0x8] sm:$0xff]
        %v4824 = vld [vmem:[#allocation5 + $0x10] sm:$0xff]
        %v4825 = vld [vmem:[#allocation5 + $0x18] sm:$0x1]
        %v4826 = vpack.c.bf16 %v4823, %v4822
        %v4827 = vpack.c.bf16 %v4825, %v4824
        %v4828 = vld [vmem:[%s4] sm:$0xf]
        %v4829 = vld [vmem:[%s4 + $0x4] sm:$0xf]
        %v4830 = vld [vmem:[%s4 + $0x8] sm:$0xf]
        %v4831 = vld [vmem:[%s4 + $0xc] sm:$0xf]
        %v4832 = vld [vmem:[%s4 + $0x10] sm:$0xf]
        %v4833 = vld [vmem:[%s4 + $0x14] sm:$0xf]
        %v4834 = vld [vmem:[%s4 + $0x18] sm:$0xf]
        %v4835 = vld [vmem:[%s4 + $0x1c] sm:$0xf]
        %v4836 = vld [vmem:[#allocation5 + $0x1] sm:$0xff]
        %v4837 = vld [vmem:[#allocation5 + $0x9] sm:$0xff]
        %v4838 = vld [vmem:[#allocation5 + $0x11] sm:$0xff]
        %v4839 = vld [vmem:[#allocation5 + $0x19] sm:$0x1]
        %v4840 = vpack.c.bf16 %v4837, %v4836
        %v4841 = vpack.c.bf16 %v4839, %v4838
        %s4842 = scalar_lea.vmem %s4, 32
        %v4843 = vld [vmem:[%s4842] sm:$0xf]
        %v4844 = vld [vmem:[%s4842 + $0x4] sm:$0xf]
        %v4845 = vld [vmem:[%s4842 + $0x8] sm:$0xf]
        %v4846 = vld [vmem:[%s4842 + $0xc] sm:$0xf]
        %v4847 = vld [vmem:[%s4842 + $0x10] sm:$0xf]
        %v4848 = vld [vmem:[%s4842 + $0x14] sm:$0xf]
        %v4849 = vld [vmem:[%s4842 + $0x18] sm:$0xf]
        %v4850 = vld [vmem:[%s4842 + $0x1c] sm:$0xf]
        %v4859 = vunpack.c.l.b16 %v4843
        %v4860 = vunpack.c.l.b16 %v4844
        %v4861 = vunpack.c.l.b16 %v4845
        %v4862 = vunpack.c.l.b16 %v4846
        %v4863 = vunpack.c.l.b16 %v4847
        %v4864 = vunpack.c.l.b16 %v4848
        %v4865 = vunpack.c.l.b16 %v4849
        %v4866 = vunpack.c.l.b16 %v4850
        %v4867 = vpack.c.b16 %v4860, %v4859
        %v4868 = vpack.c.b16 %v4862, %v4861
        %v4869 = vpack.c.b16 %v4864, %v4863
        %v4870 = vpack.c.b16 %v4866, %v4865
        %v4876 = vsel %vm418, %v4840, 0
        %v4879 = vsel %vm418, %v4841, 0
        %4881 = vmatprep.subr.bf16.mxu0 0
        %4882 = vmatpush1.bf16.msra.mxu0 %v4867
        %4883 = vmatprep.subr.bf16.mxu0 0
        %4884 = vmatpush1.bf16.msra.mxu0 %v4868
        %4885 = vmatprep.subr.bf16.mxu0 0
        %4886 = vmatpush1.bf16.msra.mxu0 %v4869
        %4887 = vmatprep.subr.bf16.mxu0 0
        %4888 = vmatpush1.bf16.msra.mxu0 %v4870
        %4889 = vmatprep.subr.bf16.mxu0 0
        %4890 = vmatpush1.bf16.msra.mxu0 0
        %4891 = vmatprep.subr.bf16.mxu0 0
        %4892 = vmatpush1.bf16.msra.mxu0 0
        %4893 = vmatprep.subr.bf16.mxu0 0
        %4894 = vmatpush1.bf16.msra.mxu0 0
        %4895 = vmatprep.subr.bf16.mxu0 0
        %4896 = vmatpush1.bf16.msra.mxu0 0
        %4897 = vmatprep.subr.bf16.mxu0 0
        %4898 = vmatpush1.bf16.msra.mxu0 0
        %4899 = vmatprep.subr.bf16.mxu0 0
        %4900 = vmatpush1.bf16.msra.mxu0 0
        %4901 = vmatprep.subr.bf16.mxu0 0
        %4902 = vmatpush1.bf16.msra.mxu0 0
        %4903 = vmatprep.subr.bf16.mxu0 0
        %4904 = vmatpush1.bf16.msra.mxu0 0
        %4905 = vmatprep.subr.bf16.mxu0 0
        %4906 = vmatpush1.bf16.msra.mxu0 0
        %4907 = vmatprep.subr.bf16.mxu0 0
        %4908 = vmatpush1.bf16.msra.mxu0 0
        %4909 = vmatprep.subr.bf16.mxu0 0
        %4910 = vmatpush1.bf16.msra.mxu0 0
        %4911 = vmatprep.subr.bf16.mxu0 0
        %4912 = vmatpush1.bf16.msra.mxu0 0
        %4913 = vmatprep.mubr.bf16.mxu0 0
        %4914 = vmatmul.mubr.bf16.gmra.mrb[0].mxu0 %v4876
        %v4915 = vpop.f32.mrb[0].mxu0
        %v4916 = vadd.f32 0.0, %v4915
        %v4917 = vpop.f32.mrb[0].mxu0
        %v4918 = vpop.f32.mrb[0].mxu0
        %v4919 = vadd.f32 0.0, %v4918
        %v4920 = vpop.f32.mrb[0].mxu0
        %4921 = vmatprep.mubr.bf16.mxu0 0
        %4922 = vmatmul.mubr.bf16.gmra.mrb[0].mxu0 %v4879
        %v4923 = vpop.f32.mrb[0].mxu0
        %v4924 = vadd.f32 0.0, %v4923
        %v4925 = vpop.f32.mrb[0].mxu0
        %v4926 = vpop.f32.mrb[0].mxu0
        %v4927 = vadd.f32 0.0, %v4926
        %v4928 = vpop.f32.mrb[0].mxu0
        %4929 = vdwg.mxu0
        %v4938 = vunpack.c.l.b16 %v4828
        %v4939 = vunpack.c.l.b16 %v4829
        %v4940 = vunpack.c.l.b16 %v4830
        %v4941 = vunpack.c.l.b16 %v4831
        %v4942 = vunpack.c.l.b16 %v4832
        %v4943 = vunpack.c.l.b16 %v4833
        %v4944 = vunpack.c.l.b16 %v4834
        %v4945 = vunpack.c.l.b16 %v4835
        %v4946 = vpack.c.b16 %v4939, %v4938
        %v4947 = vpack.c.b16 %v4941, %v4940
        %v4948 = vpack.c.b16 %v4943, %v4942
        %v4949 = vpack.c.b16 %v4945, %v4944
        %v4955 = vsel %vm418, %v4826, 0
        %v4958 = vsel %vm418, %v4827, 0
        %4960 = vmatprep.subr.bf16.mxu0 0
        %4961 = vmatpush1.bf16.msra.mxu0 %v4946
        %4962 = vmatprep.subr.bf16.mxu0 0
        %4963 = vmatpush1.bf16.msra.mxu0 %v4947
        %4964 = vmatprep.subr.bf16.mxu0 0
        %4965 = vmatpush1.bf16.msra.mxu0 %v4948
        %4966 = vmatprep.subr.bf16.mxu0 0
        %4967 = vmatpush1.bf16.msra.mxu0 %v4949
        %4968 = vmatprep.subr.bf16.mxu0 0
        %4969 = vmatpush1.bf16.msra.mxu0 0
        %4970 = vmatprep.subr.bf16.mxu0 0
        %4971 = vmatpush1.bf16.msra.mxu0 0
        %4972 = vmatprep.subr.bf16.mxu0 0
        %4973 = vmatpush1.bf16.msra.mxu0 0
        %4974 = vmatprep.subr.bf16.mxu0 0
        %4975 = vmatpush1.bf16.msra.mxu0 0
        %4976 = vmatprep.subr.bf16.mxu0 0
        %4977 = vmatpush1.bf16.msra.mxu0 0
        %4978 = vmatprep.subr.bf16.mxu0 0
        %4979 = vmatpush1.bf16.msra.mxu0 0
        %4980 = vmatprep.subr.bf16.mxu0 0
        %4981 = vmatpush1.bf16.msra.mxu0 0
        %4982 = vmatprep.subr.bf16.mxu0 0
        %4983 = vmatpush1.bf16.msra.mxu0 0
        %4984 = vmatprep.subr.bf16.mxu0 0
        %4985 = vmatpush1.bf16.msra.mxu0 0
        %4986 = vmatprep.subr.bf16.mxu0 0
        %4987 = vmatpush1.bf16.msra.mxu0 0
        %4988 = vmatprep.subr.bf16.mxu0 0
        %4989 = vmatpush1.bf16.msra.mxu0 0
        %4990 = vmatprep.subr.bf16.mxu0 0
        %4991 = vmatpush1.bf16.msra.mxu0 0
        %4992 = vmatprep.mubr.bf16.mxu0 0
        %4993 = vmatmul.mubr.bf16.gmra.mrb[0].mxu0 %v4955
        %v4994 = vpop.f32.mrb[0].mxu0
        %v4995 = vadd.f32 %v4916, %v4994
        %v4996 = vpop.f32.mrb[0].mxu0
        %v4997 = vpop.f32.mrb[0].mxu0
        %v4998 = vadd.f32 %v4919, %v4997
        %v4999 = vpop.f32.mrb[0].mxu0
        %5000 = vmatprep.mubr.bf16.mxu0 0
        %5001 = vmatmul.mubr.bf16.gmra.mrb[0].mxu0 %v4958
        %v5002 = vpop.f32.mrb[0].mxu0
        %v5003 = vadd.f32 %v4924, %v5002
        %v5004 = vpop.f32.mrb[0].mxu0
        %v5005 = vpop.f32.mrb[0].mxu0
        %v5006 = vadd.f32 %v4927, %v5005
        %v5007 = vpop.f32.mrb[0].mxu0
        %5008 = vdwg.mxu0
        %v5009 = vld [vmem:[#allocation5 + $0x2] sm:$0xff]
        %v5010 = vld [vmem:[#allocation5 + $0xa] sm:$0xff]
        %v5011 = vld [vmem:[#allocation5 + $0x12] sm:$0xff]
        %v5012 = vld [vmem:[#allocation5 + $0x1a] sm:$0x1]
        %v5013 = vpack.c.bf16 %v5010, %v5009
        %v5014 = vpack.c.bf16 %v5012, %v5011
        %s5015 = scalar_lea.vmem %s4, 64
        %v5016 = vld [vmem:[%s5015] sm:$0xf]
        %v5017 = vld [vmem:[%s5015 + $0x4] sm:$0xf]
        %v5018 = vld [vmem:[%s5015 + $0x8] sm:$0xf]
        %v5019 = vld [vmem:[%s5015 + $0xc] sm:$0xf]
        %v5020 = vld [vmem:[%s5015 + $0x10] sm:$0xf]
        %v5021 = vld [vmem:[%s5015 + $0x14] sm:$0xf]
        %v5022 = vld [vmem:[%s5015 + $0x18] sm:$0xf]
        %v5023 = vld [vmem:[%s5015 + $0x1c] sm:$0xf]
        %v5032 = vunpack.c.l.b16 %v5016
        %v5033 = vunpack.c.l.b16 %v5017
        %v5034 = vunpack.c.l.b16 %v5018
        %v5035 = vunpack.c.l.b16 %v5019
        %v5036 = vunpack.c.l.b16 %v5020
        %v5037 = vunpack.c.l.b16 %v5021
        %v5038 = vunpack.c.l.b16 %v5022
        %v5039 = vunpack.c.l.b16 %v5023
        %v5040 = vpack.c.b16 %v5033, %v5032
        %v5041 = vpack.c.b16 %v5035, %v5034
        %v5042 = vpack.c.b16 %v5037, %v5036
        %v5043 = vpack.c.b16 %v5039, %v5038
        %v5049 = vsel %vm418, %v5013, 0
        %v5052 = vsel %vm418, %v5014, 0
        %5054 = vmatprep.subr.bf16.mxu0 0
        %5055 = vmatpush1.bf16.msra.mxu0 %v5040
        %5056 = vmatprep.subr.bf16.mxu0 0
        %5057 = vmatpush1.bf16.msra.mxu0 %v5041
        %5058 = vmatprep.subr.bf16.mxu0 0
        %5059 = vmatpush1.bf16.msra.mxu0 %v5042
        %5060 = vmatprep.subr.bf16.mxu0 0
        %5061 = vmatpush1.bf16.msra.mxu0 %v5043
        %5062 = vmatprep.subr.bf16.mxu0 0
        %5063 = vmatpush1.bf16.msra.mxu0 0
        %5064 = vmatprep.subr.bf16.mxu0 0
        %5065 = vmatpush1.bf16.msra.mxu0 0
        %5066 = vmatprep.subr.bf16.mxu0 0
        %5067 = vmatpush1.bf16.msra.mxu0 0
        %5068 = vmatprep.subr.bf16.mxu0 0
        %5069 = vmatpush1.bf16.msra.mxu0 0
        %5070 = vmatprep.subr.bf16.mxu0 0
        %5071 = vmatpush1.bf16.msra.mxu0 0
        %5072 = vmatprep.subr.bf16.mxu0 0
        %5073 = vmatpush1.bf16.msra.mxu0 0
        %5074 = vmatprep.subr.bf16.mxu0 0
        %5075 = vmatpush1.bf16.msra.mxu0 0
        %5076 = vmatprep.subr.bf16.mxu0 0
        %5077 = vmatpush1.bf16.msra.mxu0 0
        %5078 = vmatprep.subr.bf16.mxu0 0
        %5079 = vmatpush1.bf16.msra.mxu0 0
        %5080 = vmatprep.subr.bf16.mxu0 0
        %5081 = vmatpush1.bf16.msra.mxu0 0
        %5082 = vmatprep.subr.bf16.mxu0 0
        %5083 = vmatpush1.bf16.msra.mxu0 0
        %5084 = vmatprep.subr.bf16.mxu0 0
        %5085 = vmatpush1.bf16.msra.mxu0 0
        %5086 = vmatprep.mubr.bf16.mxu0 0
        %5087 = vmatmul.mubr.bf16.gmra.mrb[0].mxu0 %v5049
        %v5088 = vpop.f32.mrb[0].mxu0
        %v5089 = vadd.f32 0.0, %v5088
        %v5090 = vpop.f32.mrb[0].mxu0
        %v5091 = vpop.f32.mrb[0].mxu0
        %v5092 = vadd.f32 0.0, %v5091
        %v5093 = vpop.f32.mrb[0].mxu0
        %5094 = vmatprep.mubr.bf16.mxu0 0
        %5095 = vmatmul.mubr.bf16.gmra.mrb[0].mxu0 %v5052
        %v5096 = vpop.f32.mrb[0].mxu0
        %v5097 = vadd.f32 0.0, %v5096
        %v5098 = vpop.f32.mrb[0].mxu0
        %v5099 = vpop.f32.mrb[0].mxu0
        %v5100 = vadd.f32 0.0, %v5099
        %v5101 = vpop.f32.mrb[0].mxu0
        %5102 = vdwg.mxu0
        %v5103 = vadd.f32 %v4995, %v5089
        %v5104 = vadd.f32 %v4998, %v5092
        %v5105 = vadd.f32 %v5003, %v5097
        %v5106 = vadd.f32 %v5006, %v5100
        %v5107 = vld [vmem:[#allocation5 + $0x3] sm:$0xff]
        %v5108 = vld [vmem:[#allocation5 + $0xb] sm:$0xff]
        %v5109 = vld [vmem:[#allocation5 + $0x13] sm:$0xff]
        %v5110 = vld [vmem:[#allocation5 + $0x1b] sm:$0x1]
        %v5111 = vpack.c.bf16 %v5108, %v5107
        %v5112 = vpack.c.bf16 %v5110, %v5109
        %s5113 = scalar_lea.vmem %s4, 96
        %v5114 = vld [vmem:[%s5113] sm:$0xf]
        %v5115 = vld [vmem:[%s5113 + $0x4] sm:$0xf]
        %v5116 = vld [vmem:[%s5113 + $0x8] sm:$0xf]
        %v5117 = vld [vmem:[%s5113 + $0xc] sm:$0xf]
        %v5118 = vld [vmem:[%s5113 + $0x10] sm:$0xf]
        %v5119 = vld [vmem:[%s5113 + $0x14] sm:$0xf]
        %v5120 = vld [vmem:[%s5113 + $0x18] sm:$0xf]
        %v5121 = vld [vmem:[%s5113 + $0x1c] sm:$0xf]
        %v5130 = vunpack.c.l.b16 %v5114
        %v5131 = vunpack.c.l.b16 %v5115
        %v5132 = vunpack.c.l.b16 %v5116
        %v5133 = vunpack.c.l.b16 %v5117
        %v5134 = vunpack.c.l.b16 %v5118
        %v5135 = vunpack.c.l.b16 %v5119
        %v5136 = vunpack.c.l.b16 %v5120
        %v5137 = vunpack.c.l.b16 %v5121
        %v5138 = vpack.c.b16 %v5131, %v5130
        %v5139 = vpack.c.b16 %v5133, %v5132
        %v5140 = vpack.c.b16 %v5135, %v5134
        %v5141 = vpack.c.b16 %v5137, %v5136
        %v5147 = vsel %vm418, %v5111, 0
        %v5150 = vsel %vm418, %v5112, 0
        %5152 = vmatprep.subr.bf16.mxu0 0
        %5153 = vmatpush1.bf16.msra.mxu0 %v5138
        %5154 = vmatprep.subr.bf16.mxu0 0
        %5155 = vmatpush1.bf16.msra.mxu0 %v5139
        %5156 = vmatprep.subr.bf16.mxu0 0
        %5157 = vmatpush1.bf16.msra.mxu0 %v5140
        %5158 = vmatprep.subr.bf16.mxu0 0
        %5159 = vmatpush1.bf16.msra.mxu0 %v5141
        %5160 = vmatprep.subr.bf16.mxu0 0
        %5161 = vmatpush1.bf16.msra.mxu0 0
        %5162 = vmatprep.subr.bf16.mxu0 0
        %5163 = vmatpush1.bf16.msra.mxu0 0
        %5164 = vmatprep.subr.bf16.mxu0 0
        %5165 = vmatpush1.bf16.msra.mxu0 0
        %5166 = vmatprep.subr.bf16.mxu0 0
        %5167 = vmatpush1.bf16.msra.mxu0 0
        %5168 = vmatprep.subr.bf16.mxu0 0
        %5169 = vmatpush1.bf16.msra.mxu0 0
        %5170 = vmatprep.subr.bf16.mxu0 0
        %5171 = vmatpush1.bf16.msra.mxu0 0
        %5172 = vmatprep.subr.bf16.mxu0 0
        %5173 = vmatpush1.bf16.msra.mxu0 0
        %5174 = vmatprep.subr.bf16.mxu0 0
        %5175 = vmatpush1.bf16.msra.mxu0 0
        %5176 = vmatprep.subr.bf16.mxu0 0
        %5177 = vmatpush1.bf16.msra.mxu0 0
        %5178 = vmatprep.subr.bf16.mxu0 0
        %5179 = vmatpush1.bf16.msra.mxu0 0
        %5180 = vmatprep.subr.bf16.mxu0 0
        %5181 = vmatpush1.bf16.msra.mxu0 0
        %5182 = vmatprep.subr.bf16.mxu0 0
        %5183 = vmatpush1.bf16.msra.mxu0 0
        %5184 = vmatprep.mubr.bf16.mxu0 0
        %5185 = vmatmul.mubr.bf16.gmra.mrb[0].mxu0 %v5147
        %v5186 = vpop.f32.mrb[0].mxu0
        %v5187 = vadd.f32 0.0, %v5186
        %v5188 = vpop.f32.mrb[0].mxu0
        %v5189 = vpop.f32.mrb[0].mxu0
        %v5190 = vadd.f32 0.0, %v5189
        %v5191 = vpop.f32.mrb[0].mxu0
        %5192 = vmatprep.mubr.bf16.mxu0 0
        %5193 = vmatmul.mubr.bf16.gmra.mrb[0].mxu0 %v5150
        %v5194 = vpop.f32.mrb[0].mxu0
        %v5195 = vadd.f32 0.0, %v5194
        %v5196 = vpop.f32.mrb[0].mxu0
        %v5197 = vpop.f32.mrb[0].mxu0
        %v5198 = vadd.f32 0.0, %v5197
        %v5199 = vpop.f32.mrb[0].mxu0
        %5200 = vdwg.mxu0
        %v5201 = vadd.f32 %v5103, %v5187
        %v5202 = vadd.f32 %v5104, %v5190
        %v5203 = vadd.f32 %v5105, %v5195
        %v5204 = vadd.f32 %v5106, %v5198
        %v5205 = vld [vmem:[#allocation5 + $0x7] sm:$0xff]
        %v5206 = vld [vmem:[#allocation5 + $0xf] sm:$0xff]
        %v5207 = vld [vmem:[#allocation5 + $0x17] sm:$0xff]
        %v5208 = vld [vmem:[#allocation5 + $0x1f] sm:$0x1]
        %v5209 = vpack.c.bf16 %v5206, %v5205
        %v5210 = vpack.c.bf16 %v5208, %v5207
        %s5211 = scalar_lea.vmem %s4, 128
        %v5212 = vld [vmem:[%s5211] sm:$0xf]
        %v5213 = vld [vmem:[%s5211 + $0x4] sm:$0xf]
        %v5214 = vld [vmem:[%s5211 + $0x8] sm:$0xf]
        %v5215 = vld [vmem:[%s5211 + $0xc] sm:$0xf]
        %v5216 = vld [vmem:[%s5211 + $0x10] sm:$0xf]
        %v5217 = vld [vmem:[%s5211 + $0x14] sm:$0xf]
        %v5218 = vld [vmem:[%s5211 + $0x18] sm:$0xf]
        %v5219 = vld [vmem:[%s5211 + $0x1c] sm:$0xf]
        %v5228 = vunpack.c.l.b16 %v5212
        %v5229 = vunpack.c.l.b16 %v5213
        %v5230 = vunpack.c.l.b16 %v5214
        %v5231 = vunpack.c.l.b16 %v5215
        %v5232 = vunpack.c.l.b16 %v5216
        %v5233 = vunpack.c.l.b16 %v5217
        %v5234 = vunpack.c.l.b16 %v5218
        %v5235 = vunpack.c.l.b16 %v5219
        %v5236 = vpack.c.b16 %v5229, %v5228
        %v5237 = vpack.c.b16 %v5231, %v5230
        %v5238 = vpack.c.b16 %v5233, %v5232
        %v5239 = vpack.c.b16 %v5235, %v5234
        %v5245 = vsel %vm418, %v5209, 0
        %v5248 = vsel %vm418, %v5210, 0
        %5250 = vmatprep.subr.bf16.mxu0 0
        %5251 = vmatpush1.bf16.msra.mxu0 %v5236
        %5252 = vmatprep.subr.bf16.mxu0 0
        %5253 = vmatpush1.bf16.msra.mxu0 %v5237
        %5254 = vmatprep.subr.bf16.mxu0 0
        %5255 = vmatpush1.bf16.msra.mxu0 %v5238
        %5256 = vmatprep.subr.bf16.mxu0 0
        %5257 = vmatpush1.bf16.msra.mxu0 %v5239
        %5258 = vmatprep.subr.bf16.mxu0 0
        %5259 = vmatpush1.bf16.msra.mxu0 0
        %5260 = vmatprep.subr.bf16.mxu0 0
        %5261 = vmatpush1.bf16.msra.mxu0 0
        %5262 = vmatprep.subr.bf16.mxu0 0
        %5263 = vmatpush1.bf16.msra.mxu0 0
        %5264 = vmatprep.subr.bf16.mxu0 0
        %5265 = vmatpush1.bf16.msra.mxu0 0
        %5266 = vmatprep.subr.bf16.mxu0 0
        %5267 = vmatpush1.bf16.msra.mxu0 0
        %5268 = vmatprep.subr.bf16.mxu0 0
        %5269 = vmatpush1.bf16.msra.mxu0 0
        %5270 = vmatprep.subr.bf16.mxu0 0
        %5271 = vmatpush1.bf16.msra.mxu0 0
        %5272 = vmatprep.subr.bf16.mxu0 0
        %5273 = vmatpush1.bf16.msra.mxu0 0
        %5274 = vmatprep.subr.bf16.mxu0 0
        %5275 = vmatpush1.bf16.msra.mxu0 0
        %5276 = vmatprep.subr.bf16.mxu0 0
        %5277 = vmatpush1.bf16.msra.mxu0 0
        %5278 = vmatprep.subr.bf16.mxu0 0
        %5279 = vmatpush1.bf16.msra.mxu0 0
        %5280 = vmatprep.subr.bf16.mxu0 0
        %5281 = vmatpush1.bf16.msra.mxu0 0
        %5282 = vmatprep.mubr.bf16.mxu0 0
        %5283 = vmatmul.mubr.bf16.gmra.mrb[0].mxu0 %v5245
        %v5284 = vpop.f32.mrb[0].mxu0
        %v5285 = vadd.f32 0.0, %v5284
        %v5286 = vpop.f32.mrb[0].mxu0
        %v5287 = vpop.f32.mrb[0].mxu0
        %v5288 = vadd.f32 0.0, %v5287
        %v5289 = vpop.f32.mrb[0].mxu0
        %5290 = vmatprep.mubr.bf16.mxu0 0
        %5291 = vmatmul.mubr.bf16.gmra.mrb[0].mxu0 %v5248
        %v5292 = vpop.f32.mrb[0].mxu0
        %v5293 = vadd.f32 0.0, %v5292
        %v5294 = vpop.f32.mrb[0].mxu0
        %v5295 = vpop.f32.mrb[0].mxu0
        %v5296 = vadd.f32 0.0, %v5295
        %v5297 = vpop.f32.mrb[0].mxu0
        %5298 = vdwg.mxu0
        %v5299 = vadd.f32 %v5201, %v5285
        %v5300 = vadd.f32 %v5202, %v5288
        %v5301 = vadd.f32 %v5203, %v5293
        %v5302 = vadd.f32 %v5204, %v5296
        %v5303 = vld [vmem:[#allocation5 + $0x8] sm:$0xff]
        %v5304 = vld [vmem:[#allocation5 + $0x10] sm:$0xff]
        %v5305 = vld [vmem:[#allocation5 + $0x18] sm:$0xff]
        %v5306 = vld [vmem:[#allocation5 + $0x20] sm:$0x1]
        %v5307 = vpack.c.bf16 %v5304, %v5303
        %v5308 = vpack.c.bf16 %v5306, %v5305
        %s5309 = scalar_lea.vmem %s4, 160
        %v5310 = vld [vmem:[%s5309] sm:$0xf]
        %v5311 = vld [vmem:[%s5309 + $0x4] sm:$0xf]
        %v5312 = vld [vmem:[%s5309 + $0x8] sm:$0xf]
        %v5313 = vld [vmem:[%s5309 + $0xc] sm:$0xf]
        %v5314 = vld [vmem:[%s5309 + $0x10] sm:$0xf]
        %v5315 = vld [vmem:[%s5309 + $0x14] sm:$0xf]
        %v5316 = vld [vmem:[%s5309 + $0x18] sm:$0xf]
        %v5317 = vld [vmem:[%s5309 + $0x1c] sm:$0xf]
        %v5326 = vunpack.c.l.b16 %v5310
        %v5327 = vunpack.c.l.b16 %v5311
        %v5328 = vunpack.c.l.b16 %v5312
        %v5329 = vunpack.c.l.b16 %v5313
        %v5330 = vunpack.c.l.b16 %v5314
        %v5331 = vunpack.c.l.b16 %v5315
        %v5332 = vunpack.c.l.b16 %v5316
        %v5333 = vunpack.c.l.b16 %v5317
        %v5334 = vpack.c.b16 %v5327, %v5326
        %v5335 = vpack.c.b16 %v5329, %v5328
        %v5336 = vpack.c.b16 %v5331, %v5330
        %v5337 = vpack.c.b16 %v5333, %v5332
        %v5343 = vsel %vm418, %v5307, 0
        %v5346 = vsel %vm418, %v5308, 0
        %5348 = vmatprep.subr.bf16.mxu0 0
        %5349 = vmatpush1.bf16.msra.mxu0 %v5334
        %5350 = vmatprep.subr.bf16.mxu0 0
        %5351 = vmatpush1.bf16.msra.mxu0 %v5335
        %5352 = vmatprep.subr.bf16.mxu0 0
        %5353 = vmatpush1.bf16.msra.mxu0 %v5336
        %5354 = vmatprep.subr.bf16.mxu0 0
        %5355 = vmatpush1.bf16.msra.mxu0 %v5337
        %5356 = vmatprep.subr.bf16.mxu0 0
        %5357 = vmatpush1.bf16.msra.mxu0 0
        %5358 = vmatprep.subr.bf16.mxu0 0
        %5359 = vmatpush1.bf16.msra.mxu0 0
        %5360 = vmatprep.subr.bf16.mxu0 0
        %5361 = vmatpush1.bf16.msra.mxu0 0
        %5362 = vmatprep.subr.bf16.mxu0 0
        %5363 = vmatpush1.bf16.msra.mxu0 0
        %5364 = vmatprep.subr.bf16.mxu0 0
        %5365 = vmatpush1.bf16.msra.mxu0 0
        %5366 = vmatprep.subr.bf16.mxu0 0
        %5367 = vmatpush1.bf16.msra.mxu0 0
        %5368 = vmatprep.subr.bf16.mxu0 0
        %5369 = vmatpush1.bf16.msra.mxu0 0
        %5370 = vmatprep.subr.bf16.mxu0 0
        %5371 = vmatpush1.bf16.msra.mxu0 0
        %5372 = vmatprep.subr.bf16.mxu0 0
        %5373 = vmatpush1.bf16.msra.mxu0 0
        %5374 = vmatprep.subr.bf16.mxu0 0
        %5375 = vmatpush1.bf16.msra.mxu0 0
        %5376 = vmatprep.subr.bf16.mxu0 0
        %5377 = vmatpush1.bf16.msra.mxu0 0
        %5378 = vmatprep.subr.bf16.mxu0 0
        %5379 = vmatpush1.bf16.msra.mxu0 0
        %5380 = vmatprep.mubr.bf16.mxu0 0
        %5381 = vmatmul.mubr.bf16.gmra.mrb[0].mxu0 %v5343
        %v5382 = vpop.f32.mrb[0].mxu0
        %v5383 = vadd.f32 0.0, %v5382
        %v5384 = vpop.f32.mrb[0].mxu0
        %v5385 = vpop.f32.mrb[0].mxu0
        %v5386 = vadd.f32 0.0, %v5385
        %v5387 = vpop.f32.mrb[0].mxu0
        %5388 = vmatprep.mubr.bf16.mxu0 0
        %5389 = vmatmul.mubr.bf16.gmra.mrb[0].mxu0 %v5346
        %v5390 = vpop.f32.mrb[0].mxu0
        %v5391 = vadd.f32 0.0, %v5390
        %v5392 = vpop.f32.mrb[0].mxu0
        %v5393 = vpop.f32.mrb[0].mxu0
        %v5394 = vadd.f32 0.0, %v5393
        %v5395 = vpop.f32.mrb[0].mxu0
        %5396 = vdwg.mxu0
        %v5397 = vadd.f32 %v5299, %v5383
        %v5398 = vadd.f32 %v5300, %v5386
        %v5399 = vadd.f32 %v5301, %v5391
        %v5400 = vadd.f32 %v5302, %v5394
        %v5401 = vld [vmem:[#allocation5 + $0x9] sm:$0xff]
        %v5402 = vld [vmem:[#allocation5 + $0x11] sm:$0xff]
        %v5403 = vld [vmem:[#allocation5 + $0x19] sm:$0xff]
        %v5404 = vld [vmem:[#allocation5 + $0x21] sm:$0x1]
        %v5405 = vpack.c.bf16 %v5402, %v5401
        %v5406 = vpack.c.bf16 %v5404, %v5403
        %s5407 = scalar_lea.vmem %s4, 192
        %v5408 = vld [vmem:[%s5407] sm:$0xf]
        %v5409 = vld [vmem:[%s5407 + $0x4] sm:$0xf]
        %v5410 = vld [vmem:[%s5407 + $0x8] sm:$0xf]
        %v5411 = vld [vmem:[%s5407 + $0xc] sm:$0xf]
        %v5412 = vld [vmem:[%s5407 + $0x10] sm:$0xf]
        %v5413 = vld [vmem:[%s5407 + $0x14] sm:$0xf]
        %v5414 = vld [vmem:[%s5407 + $0x18] sm:$0xf]
        %v5415 = vld [vmem:[%s5407 + $0x1c] sm:$0xf]
        %v5424 = vunpack.c.l.b16 %v5408
        %v5425 = vunpack.c.l.b16 %v5409
        %v5426 = vunpack.c.l.b16 %v5410
        %v5427 = vunpack.c.l.b16 %v5411
        %v5428 = vunpack.c.l.b16 %v5412
        %v5429 = vunpack.c.l.b16 %v5413
        %v5430 = vunpack.c.l.b16 %v5414
        %v5431 = vunpack.c.l.b16 %v5415
        %v5432 = vpack.c.b16 %v5425, %v5424
        %v5433 = vpack.c.b16 %v5427, %v5426
        %v5434 = vpack.c.b16 %v5429, %v5428
        %v5435 = vpack.c.b16 %v5431, %v5430
        %v5441 = vsel %vm418, %v5405, 0
        %v5444 = vsel %vm418, %v5406, 0
        %5446 = vmatprep.subr.bf16.mxu0 0
        %5447 = vmatpush1.bf16.msra.mxu0 %v5432
        %5448 = vmatprep.subr.bf16.mxu0 0
        %5449 = vmatpush1.bf16.msra.mxu0 %v5433
        %5450 = vmatprep.subr.bf16.mxu0 0
        %5451 = vmatpush1.bf16.msra.mxu0 %v5434
        %5452 = vmatprep.subr.bf16.mxu0 0
        %5453 = vmatpush1.bf16.msra.mxu0 %v5435
        %5454 = vmatprep.subr.bf16.mxu0 0
        %5455 = vmatpush1.bf16.msra.mxu0 0
        %5456 = vmatprep.subr.bf16.mxu0 0
        %5457 = vmatpush1.bf16.msra.mxu0 0
        %5458 = vmatprep.subr.bf16.mxu0 0
        %5459 = vmatpush1.bf16.msra.mxu0 0
        %5460 = vmatprep.subr.bf16.mxu0 0
        %5461 = vmatpush1.bf16.msra.mxu0 0
        %5462 = vmatprep.subr.bf16.mxu0 0
        %5463 = vmatpush1.bf16.msra.mxu0 0
        %5464 = vmatprep.subr.bf16.mxu0 0
        %5465 = vmatpush1.bf16.msra.mxu0 0
        %5466 = vmatprep.subr.bf16.mxu0 0
        %5467 = vmatpush1.bf16.msra.mxu0 0
        %5468 = vmatprep.subr.bf16.mxu0 0
        %5469 = vmatpush1.bf16.msra.mxu0 0
        %5470 = vmatprep.subr.bf16.mxu0 0
        %5471 = vmatpush1.bf16.msra.mxu0 0
        %5472 = vmatprep.subr.bf16.mxu0 0
        %5473 = vmatpush1.bf16.msra.mxu0 0
        %5474 = vmatprep.subr.bf16.mxu0 0
        %5475 = vmatpush1.bf16.msra.mxu0 0
        %5476 = vmatprep.subr.bf16.mxu0 0
        %5477 = vmatpush1.bf16.msra.mxu0 0
        %5478 = vmatprep.mubr.bf16.mxu0 0
        %5479 = vmatmul.mubr.bf16.gmra.mrb[0].mxu0 %v5441
        %v5480 = vpop.f32.mrb[0].mxu0
        %v5481 = vadd.f32 0.0, %v5480
        %v5482 = vpop.f32.mrb[0].mxu0
        %v5483 = vpop.f32.mrb[0].mxu0
        %v5484 = vadd.f32 0.0, %v5483
        %v5485 = vpop.f32.mrb[0].mxu0
        %5486 = vmatprep.mubr.bf16.mxu0 0
        %5487 = vmatmul.mubr.bf16.gmra.mrb[0].mxu0 %v5444
        %v5488 = vpop.f32.mrb[0].mxu0
        %v5489 = vadd.f32 0.0, %v5488
        %v5490 = vpop.f32.mrb[0].mxu0
        %v5491 = vpop.f32.mrb[0].mxu0
        %v5492 = vadd.f32 0.0, %v5491
        %v5493 = vpop.f32.mrb[0].mxu0
        %5494 = vdwg.mxu0
        %v5495 = vadd.f32 %v5397, %v5481
        %v5496 = vadd.f32 %v5398, %v5484
        %v5497 = vadd.f32 %v5399, %v5489
        %v5498 = vadd.f32 %v5400, %v5492
        %v5499 = vld [vmem:[#allocation5 + $0xa] sm:$0xff]
        %v5500 = vld [vmem:[#allocation5 + $0x12] sm:$0xff]
        %v5501 = vld [vmem:[#allocation5 + $0x1a] sm:$0xff]
        %v5502 = vld [vmem:[#allocation5 + $0x22] sm:$0x1]
        %v5503 = vpack.c.bf16 %v5500, %v5499
        %v5504 = vpack.c.bf16 %v5502, %v5501
        %s5505 = scalar_lea.vmem %s4, 224
        %v5506 = vld [vmem:[%s5505] sm:$0xf]
        %v5507 = vld [vmem:[%s5505 + $0x4] sm:$0xf]
        %v5508 = vld [vmem:[%s5505 + $0x8] sm:$0xf]
        %v5509 = vld [vmem:[%s5505 + $0xc] sm:$0xf]
        %v5510 = vld [vmem:[%s5505 + $0x10] sm:$0xf]
        %v5511 = vld [vmem:[%s5505 + $0x14] sm:$0xf]
        %v5512 = vld [vmem:[%s5505 + $0x18] sm:$0xf]
        %v5513 = vld [vmem:[%s5505 + $0x1c] sm:$0xf]
        %v5522 = vunpack.c.l.b16 %v5506
        %v5523 = vunpack.c.l.b16 %v5507
        %v5524 = vunpack.c.l.b16 %v5508
        %v5525 = vunpack.c.l.b16 %v5509
        %v5526 = vunpack.c.l.b16 %v5510
        %v5527 = vunpack.c.l.b16 %v5511
        %v5528 = vunpack.c.l.b16 %v5512
        %v5529 = vunpack.c.l.b16 %v5513
        %v5530 = vpack.c.b16 %v5523, %v5522
        %v5531 = vpack.c.b16 %v5525, %v5524
        %v5532 = vpack.c.b16 %v5527, %v5526
        %v5533 = vpack.c.b16 %v5529, %v5528
        %v5539 = vsel %vm418, %v5503, 0
        %v5542 = vsel %vm418, %v5504, 0
        %5544 = vmatprep.subr.bf16.mxu0 0
        %5545 = vmatpush1.bf16.msra.mxu0 %v5530
        %5546 = vmatprep.subr.bf16.mxu0 0
        %5547 = vmatpush1.bf16.msra.mxu0 %v5531
        %5548 = vmatprep.subr.bf16.mxu0 0
        %5549 = vmatpush1.bf16.msra.mxu0 %v5532
        %5550 = vmatprep.subr.bf16.mxu0 0
        %5551 = vmatpush1.bf16.msra.mxu0 %v5533
        %5552 = vmatprep.subr.bf16.mxu0 0
        %5553 = vmatpush1.bf16.msra.mxu0 0
        %5554 = vmatprep.subr.bf16.mxu0 0
        %5555 = vmatpush1.bf16.msra.mxu0 0
        %5556 = vmatprep.subr.bf16.mxu0 0
        %5557 = vmatpush1.bf16.msra.mxu0 0
        %5558 = vmatprep.subr.bf16.mxu0 0
        %5559 = vmatpush1.bf16.msra.mxu0 0
        %5560 = vmatprep.subr.bf16.mxu0 0
        %5561 = vmatpush1.bf16.msra.mxu0 0
        %5562 = vmatprep.subr.bf16.mxu0 0
        %5563 = vmatpush1.bf16.msra.mxu0 0
        %5564 = vmatprep.subr.bf16.mxu0 0
        %5565 = vmatpush1.bf16.msra.mxu0 0
        %5566 = vmatprep.subr.bf16.mxu0 0
        %5567 = vmatpush1.bf16.msra.mxu0 0
        %5568 = vmatprep.subr.bf16.mxu0 0
        %5569 = vmatpush1.bf16.msra.mxu0 0
        %5570 = vmatprep.subr.bf16.mxu0 0
        %5571 = vmatpush1.bf16.msra.mxu0 0
        %5572 = vmatprep.subr.bf16.mxu0 0
        %5573 = vmatpush1.bf16.msra.mxu0 0
        %5574 = vmatprep.subr.bf16.mxu0 0
        %5575 = vmatpush1.bf16.msra.mxu0 0
        %5576 = vmatprep.mubr.bf16.mxu0 0
        %5577 = vmatmul.mubr.bf16.gmra.mrb[0].mxu0 %v5539
        %v5578 = vpop.f32.mrb[0].mxu0
        %v5579 = vadd.f32 0.0, %v5578
        %v5580 = vpop.f32.mrb[0].mxu0
        %v5581 = vpop.f32.mrb[0].mxu0
        %v5582 = vadd.f32 0.0, %v5581
        %v5583 = vpop.f32.mrb[0].mxu0
        %5584 = vmatprep.mubr.bf16.mxu0 0
        %5585 = vmatmul.mubr.bf16.gmra.mrb[0].mxu0 %v5542
        %v5586 = vpop.f32.mrb[0].mxu0
        %v5587 = vadd.f32 0.0, %v5586
        %v5588 = vpop.f32.mrb[0].mxu0
        %v5589 = vpop.f32.mrb[0].mxu0
        %v5590 = vadd.f32 0.0, %v5589
        %v5591 = vpop.f32.mrb[0].mxu0
        %5592 = vdwg.mxu0
        %v5593 = vadd.f32 %v5495, %v5579
        %v5594 = vadd.f32 %v5496, %v5582
        %v5595 = vadd.f32 %v5497, %v5587
        %v5596 = vadd.f32 %v5498, %v5590
        %v5597 = vld [vmem:[#allocation5 + $0xe] sm:$0xff]
        %v5598 = vld [vmem:[#allocation5 + $0x16] sm:$0xff]
        %v5599 = vld [vmem:[#allocation5 + $0x1e] sm:$0xff]
        %v5600 = vld [vmem:[#allocation5 + $0x26] sm:$0x1]
        %v5601 = vpack.c.bf16 %v5598, %v5597
        %v5602 = vpack.c.bf16 %v5600, %v5599
        %s5603 = scalar_lea.vmem %s4, 256
        %v5604 = vld [vmem:[%s5603] sm:$0xf]
        %v5605 = vld [vmem:[%s5603 + $0x4] sm:$0xf]
        %v5606 = vld [vmem:[%s5603 + $0x8] sm:$0xf]
        %v5607 = vld [vmem:[%s5603 + $0xc] sm:$0xf]
        %v5608 = vld [vmem:[%s5603 + $0x10] sm:$0xf]
        %v5609 = vld [vmem:[%s5603 + $0x14] sm:$0xf]
        %v5610 = vld [vmem:[%s5603 + $0x18] sm:$0xf]
        %v5611 = vld [vmem:[%s5603 + $0x1c] sm:$0xf]
        %v5620 = vunpack.c.l.b16 %v5604
        %v5621 = vunpack.c.l.b16 %v5605
        %v5622 = vunpack.c.l.b16 %v5606
        %v5623 = vunpack.c.l.b16 %v5607
        %v5624 = vunpack.c.l.b16 %v5608
        %v5625 = vunpack.c.l.b16 %v5609
        %v5626 = vunpack.c.l.b16 %v5610
        %v5627 = vunpack.c.l.b16 %v5611
        %v5628 = vpack.c.b16 %v5621, %v5620
        %v5629 = vpack.c.b16 %v5623, %v5622
        %v5630 = vpack.c.b16 %v5625, %v5624
        %v5631 = vpack.c.b16 %v5627, %v5626
        %v5637 = vsel %vm418, %v5601, 0
        %v5640 = vsel %vm418, %v5602, 0
        %5642 = vmatprep.subr.bf16.mxu0 0
        %5643 = vmatpush1.bf16.msra.mxu0 %v5628
        %5644 = vmatprep.subr.bf16.mxu0 0
        %5645 = vmatpush1.bf16.msra.mxu0 %v5629
        %5646 = vmatprep.subr.bf16.mxu0 0
        %5647 = vmatpush1.bf16.msra.mxu0 %v5630
        %5648 = vmatprep.subr.bf16.mxu0 0
        %5649 = vmatpush1.bf16.msra.mxu0 %v5631
        %5650 = vmatprep.subr.bf16.mxu0 0
        %5651 = vmatpush1.bf16.msra.mxu0 0
        %5652 = vmatprep.subr.bf16.mxu0 0
        %5653 = vmatpush1.bf16.msra.mxu0 0
        %5654 = vmatprep.subr.bf16.mxu0 0
        %5655 = vmatpush1.bf16.msra.mxu0 0
        %5656 = vmatprep.subr.bf16.mxu0 0
        %5657 = vmatpush1.bf16.msra.mxu0 0
        %5658 = vmatprep.subr.bf16.mxu0 0
        %5659 = vmatpush1.bf16.msra.mxu0 0
        %5660 = vmatprep.subr.bf16.mxu0 0
        %5661 = vmatpush1.bf16.msra.mxu0 0
        %5662 = vmatprep.subr.bf16.mxu0 0
        %5663 = vmatpush1.bf16.msra.mxu0 0
        %5664 = vmatprep.subr.bf16.mxu0 0
        %5665 = vmatpush1.bf16.msra.mxu0 0
        %5666 = vmatprep.subr.bf16.mxu0 0
        %5667 = vmatpush1.bf16.msra.mxu0 0
        %5668 = vmatprep.subr.bf16.mxu0 0
        %5669 = vmatpush1.bf16.msra.mxu0 0
        %5670 = vmatprep.subr.bf16.mxu0 0
        %5671 = vmatpush1.bf16.msra.mxu0 0
        %5672 = vmatprep.subr.bf16.mxu0 0
        %5673 = vmatpush1.bf16.msra.mxu0 0
        %5674 = vmatprep.mubr.bf16.mxu0 0
        %5675 = vmatmul.mubr.bf16.gmra.mrb[0].mxu0 %v5637
        %v5676 = vpop.f32.mrb[0].mxu0
        %v5677 = vadd.f32 0.0, %v5676
        %v5678 = vpop.f32.mrb[0].mxu0
        %v5679 = vpop.f32.mrb[0].mxu0
        %v5680 = vadd.f32 0.0, %v5679
        %v5681 = vpop.f32.mrb[0].mxu0
        %5682 = vmatprep.mubr.bf16.mxu0 0
        %5683 = vmatmul.mubr.bf16.gmra.mrb[0].mxu0 %v5640
        %v5684 = vpop.f32.mrb[0].mxu0
        %v5685 = vadd.f32 0.0, %v5684
        %v5686 = vpop.f32.mrb[0].mxu0
        %v5687 = vpop.f32.mrb[0].mxu0
        %v5688 = vadd.f32 0.0, %v5687
        %v5689 = vpop.f32.mrb[0].mxu0
        %5690 = vdwg.mxu0
        %v5691 = vadd.f32 %v5593, %v5677
        %v5692 = vadd.f32 %v5594, %v5680
        %v5693 = vadd.f32 %v5595, %v5685
        %v5694 = vadd.f32 %v5596, %v5688
        %v5695 = vld [vmem:[#allocation5 + $0xf] sm:$0xff]
        %v5696 = vld [vmem:[#allocation5 + $0x17] sm:$0xff]
        %v5697 = vld [vmem:[#allocation5 + $0x1f] sm:$0xff]
        %v5698 = vld [vmem:[#allocation5 + $0x27] sm:$0x1]
        %v5699 = vpack.c.bf16 %v5696, %v5695
        %v5700 = vpack.c.bf16 %v5698, %v5697
        %s5701 = scalar_lea.vmem %s4, 288
        %v5702 = vld [vmem:[%s5701] sm:$0xf]
        %v5703 = vld [vmem:[%s5701 + $0x4] sm:$0xf]
        %v5704 = vld [vmem:[%s5701 + $0x8] sm:$0xf]
        %v5705 = vld [vmem:[%s5701 + $0xc] sm:$0xf]
        %v5706 = vld [vmem:[%s5701 + $0x10] sm:$0xf]
        %v5707 = vld [vmem:[%s5701 + $0x14] sm:$0xf]
        %v5708 = vld [vmem:[%s5701 + $0x18] sm:$0xf]
        %v5709 = vld [vmem:[%s5701 + $0x1c] sm:$0xf]
        %v5718 = vunpack.c.l.b16 %v5702
        %v5719 = vunpack.c.l.b16 %v5703
        %v5720 = vunpack.c.l.b16 %v5704
        %v5721 = vunpack.c.l.b16 %v5705
        %v5722 = vunpack.c.l.b16 %v5706
        %v5723 = vunpack.c.l.b16 %v5707
        %v5724 = vunpack.c.l.b16 %v5708
        %v5725 = vunpack.c.l.b16 %v5709
        %v5726 = vpack.c.b16 %v5719, %v5718
        %v5727 = vpack.c.b16 %v5721, %v5720
        %v5728 = vpack.c.b16 %v5723, %v5722
        %v5729 = vpack.c.b16 %v5725, %v5724
        %v5735 = vsel %vm418, %v5699, 0
        %v5738 = vsel %vm418, %v5700, 0
        %5740 = vmatprep.subr.bf16.mxu0 0
        %5741 = vmatpush1.bf16.msra.mxu0 %v5726
        %5742 = vmatprep.subr.bf16.mxu0 0
        %5743 = vmatpush1.bf16.msra.mxu0 %v5727
        %5744 = vmatprep.subr.bf16.mxu0 0
        %5745 = vmatpush1.bf16.msra.mxu0 %v5728
        %5746 = vmatprep.subr.bf16.mxu0 0
        %5747 = vmatpush1.bf16.msra.mxu0 %v5729
        %5748 = vmatprep.subr.bf16.mxu0 0
        %5749 = vmatpush1.bf16.msra.mxu0 0
        %5750 = vmatprep.subr.bf16.mxu0 0
        %5751 = vmatpush1.bf16.msra.mxu0 0
        %5752 = vmatprep.subr.bf16.mxu0 0
        %5753 = vmatpush1.bf16.msra.mxu0 0
        %5754 = vmatprep.subr.bf16.mxu0 0
        %5755 = vmatpush1.bf16.msra.mxu0 0
        %5756 = vmatprep.subr.bf16.mxu0 0
        %5757 = vmatpush1.bf16.msra.mxu0 0
        %5758 = vmatprep.subr.bf16.mxu0 0
        %5759 = vmatpush1.bf16.msra.mxu0 0
        %5760 = vmatprep.subr.bf16.mxu0 0
        %5761 = vmatpush1.bf16.msra.mxu0 0
        %5762 = vmatprep.subr.bf16.mxu0 0
        %5763 = vmatpush1.bf16.msra.mxu0 0
        %5764 = vmatprep.subr.bf16.mxu0 0
        %5765 = vmatpush1.bf16.msra.mxu0 0
        %5766 = vmatprep.subr.bf16.mxu0 0
        %5767 = vmatpush1.bf16.msra.mxu0 0
        %5768 = vmatprep.subr.bf16.mxu0 0
        %5769 = vmatpush1.bf16.msra.mxu0 0
        %5770 = vmatprep.subr.bf16.mxu0 0
        %5771 = vmatpush1.bf16.msra.mxu0 0
        %5772 = vmatprep.mubr.bf16.mxu0 0
        %5773 = vmatmul.mubr.bf16.gmra.mrb[0].mxu0 %v5735
        %v5774 = vpop.f32.mrb[0].mxu0
        %v5775 = vadd.f32 0.0, %v5774
        %v5776 = vpop.f32.mrb[0].mxu0
        %v5777 = vpop.f32.mrb[0].mxu0
        %v5778 = vadd.f32 0.0, %v5777
        %v5779 = vpop.f32.mrb[0].mxu0
        %5780 = vmatprep.mubr.bf16.mxu0 0
        %5781 = vmatmul.mubr.bf16.gmra.mrb[0].mxu0 %v5738
        %v5782 = vpop.f32.mrb[0].mxu0
        %v5783 = vadd.f32 0.0, %v5782
        %v5784 = vpop.f32.mrb[0].mxu0
        %v5785 = vpop.f32.mrb[0].mxu0
        %v5786 = vadd.f32 0.0, %v5785
        %v5787 = vpop.f32.mrb[0].mxu0
        %5788 = vdwg.mxu0
        %v5789 = vadd.f32 %v5691, %v5775
        %v5790 = vadd.f32 %v5692, %v5778
        %v5791 = vadd.f32 %v5693, %v5783
        %v5792 = vadd.f32 %v5694, %v5786
        %v5793 = vld [vmem:[#allocation5 + $0x10] sm:$0xff]
        %v5794 = vld [vmem:[#allocation5 + $0x18] sm:$0xff]
        %v5795 = vld [vmem:[#allocation5 + $0x20] sm:$0xff]
        %v5796 = vld [vmem:[#allocation5 + $0x28] sm:$0x1]
        %v5797 = vpack.c.bf16 %v5794, %v5793
        %v5798 = vpack.c.bf16 %v5796, %v5795
        %s5799 = scalar_lea.vmem %s4, 320
        %v5800 = vld [vmem:[%s5799] sm:$0xf]
        %v5801 = vld [vmem:[%s5799 + $0x4] sm:$0xf]
        %v5802 = vld [vmem:[%s5799 + $0x8] sm:$0xf]
        %v5803 = vld [vmem:[%s5799 + $0xc] sm:$0xf]
        %v5804 = vld [vmem:[%s5799 + $0x10] sm:$0xf]
        %v5805 = vld [vmem:[%s5799 + $0x14] sm:$0xf]
        %v5806 = vld [vmem:[%s5799 + $0x18] sm:$0xf]
        %v5807 = vld [vmem:[%s5799 + $0x1c] sm:$0xf]
        %v5816 = vunpack.c.l.b16 %v5800
        %v5817 = vunpack.c.l.b16 %v5801
        %v5818 = vunpack.c.l.b16 %v5802
        %v5819 = vunpack.c.l.b16 %v5803
        %v5820 = vunpack.c.l.b16 %v5804
        %v5821 = vunpack.c.l.b16 %v5805
        %v5822 = vunpack.c.l.b16 %v5806
        %v5823 = vunpack.c.l.b16 %v5807
        %v5824 = vpack.c.b16 %v5817, %v5816
        %v5825 = vpack.c.b16 %v5819, %v5818
        %v5826 = vpack.c.b16 %v5821, %v5820
        %v5827 = vpack.c.b16 %v5823, %v5822
        %v5833 = vsel %vm418, %v5797, 0
        %v5836 = vsel %vm418, %v5798, 0
        %5838 = vmatprep.subr.bf16.mxu0 0
        %5839 = vmatpush1.bf16.msra.mxu0 %v5824
        %5840 = vmatprep.subr.bf16.mxu0 0
        %5841 = vmatpush1.bf16.msra.mxu0 %v5825
        %5842 = vmatprep.subr.bf16.mxu0 0
        %5843 = vmatpush1.bf16.msra.mxu0 %v5826
        %5844 = vmatprep.subr.bf16.mxu0 0
        %5845 = vmatpush1.bf16.msra.mxu0 %v5827
        %5846 = vmatprep.subr.bf16.mxu0 0
        %5847 = vmatpush1.bf16.msra.mxu0 0
        %5848 = vmatprep.subr.bf16.mxu0 0
        %5849 = vmatpush1.bf16.msra.mxu0 0
        %5850 = vmatprep.subr.bf16.mxu0 0
        %5851 = vmatpush1.bf16.msra.mxu0 0
        %5852 = vmatprep.subr.bf16.mxu0 0
        %5853 = vmatpush1.bf16.msra.mxu0 0
        %5854 = vmatprep.subr.bf16.mxu0 0
        %5855 = vmatpush1.bf16.msra.mxu0 0
        %5856 = vmatprep.subr.bf16.mxu0 0
        %5857 = vmatpush1.bf16.msra.mxu0 0
        %5858 = vmatprep.subr.bf16.mxu0 0
        %5859 = vmatpush1.bf16.msra.mxu0 0
        %5860 = vmatprep.subr.bf16.mxu0 0
        %5861 = vmatpush1.bf16.msra.mxu0 0
        %5862 = vmatprep.subr.bf16.mxu0 0
        %5863 = vmatpush1.bf16.msra.mxu0 0
        %5864 = vmatprep.subr.bf16.mxu0 0
        %5865 = vmatpush1.bf16.msra.mxu0 0
        %5866 = vmatprep.subr.bf16.mxu0 0
        %5867 = vmatpush1.bf16.msra.mxu0 0
        %5868 = vmatprep.subr.bf16.mxu0 0
        %5869 = vmatpush1.bf16.msra.mxu0 0
        %5870 = vmatprep.mubr.bf16.mxu0 0
        %5871 = vmatmul.mubr.bf16.gmra.mrb[0].mxu0 %v5833
        %v5872 = vpop.f32.mrb[0].mxu0
        %v5873 = vadd.f32 0.0, %v5872
        %v5874 = vpop.f32.mrb[0].mxu0
        %v5875 = vpop.f32.mrb[0].mxu0
        %v5876 = vadd.f32 0.0, %v5875
        %v5877 = vpop.f32.mrb[0].mxu0
        %5878 = vmatprep.mubr.bf16.mxu0 0
        %5879 = vmatmul.mubr.bf16.gmra.mrb[0].mxu0 %v5836
        %v5880 = vpop.f32.mrb[0].mxu0
        %v5881 = vadd.f32 0.0, %v5880
        %v5882 = vpop.f32.mrb[0].mxu0
        %v5883 = vpop.f32.mrb[0].mxu0
        %v5884 = vadd.f32 0.0, %v5883
        %v5885 = vpop.f32.mrb[0].mxu0
        %5886 = vdwg.mxu0
        %v5887 = vadd.f32 %v5789, %v5873
        %v5888 = vadd.f32 %v5790, %v5876
        %v5889 = vadd.f32 %v5791, %v5881
        %v5890 = vadd.f32 %v5792, %v5884
        %v5891 = vld [vmem:[#allocation5 + $0x11] sm:$0xff]
        %v5892 = vld [vmem:[#allocation5 + $0x19] sm:$0xff]
        %v5893 = vld [vmem:[#allocation5 + $0x21] sm:$0xff]
        %v5894 = vld [vmem:[#allocation5 + $0x29] sm:$0x1]
        %v5895 = vpack.c.bf16 %v5892, %v5891
        %v5896 = vpack.c.bf16 %v5894, %v5893
        %s5897 = scalar_lea.vmem %s4, 352
        %v5898 = vld [vmem:[%s5897] sm:$0xf]
        %v5899 = vld [vmem:[%s5897 + $0x4] sm:$0xf]
        %v5900 = vld [vmem:[%s5897 + $0x8] sm:$0xf]
        %v5901 = vld [vmem:[%s5897 + $0xc] sm:$0xf]
        %v5902 = vld [vmem:[%s5897 + $0x10] sm:$0xf]
        %v5903 = vld [vmem:[%s5897 + $0x14] sm:$0xf]
        %v5904 = vld [vmem:[%s5897 + $0x18] sm:$0xf]
        %v5905 = vld [vmem:[%s5897 + $0x1c] sm:$0xf]
        %v5914 = vunpack.c.l.b16 %v5898
        %v5915 = vunpack.c.l.b16 %v5899
        %v5916 = vunpack.c.l.b16 %v5900
        %v5917 = vunpack.c.l.b16 %v5901
        %v5918 = vunpack.c.l.b16 %v5902
        %v5919 = vunpack.c.l.b16 %v5903
        %v5920 = vunpack.c.l.b16 %v5904
        %v5921 = vunpack.c.l.b16 %v5905
        %v5922 = vpack.c.b16 %v5915, %v5914
        %v5923 = vpack.c.b16 %v5917, %v5916
        %v5924 = vpack.c.b16 %v5919, %v5918
        %v5925 = vpack.c.b16 %v5921, %v5920
        %v5931 = vsel %vm418, %v5895, 0
        %v5934 = vsel %vm418, %v5896, 0
        %5936 = vmatprep.subr.bf16.mxu0 0
        %5937 = vmatpush1.bf16.msra.mxu0 %v5922
        %5938 = vmatprep.subr.bf16.mxu0 0
        %5939 = vmatpush1.bf16.msra.mxu0 %v5923
        %5940 = vmatprep.subr.bf16.mxu0 0
        %5941 = vmatpush1.bf16.msra.mxu0 %v5924
        %5942 = vmatprep.subr.bf16.mxu0 0
        %5943 = vmatpush1.bf16.msra.mxu0 %v5925
        %5944 = vmatprep.subr.bf16.mxu0 0
        %5945 = vmatpush1.bf16.msra.mxu0 0
        %5946 = vmatprep.subr.bf16.mxu0 0
        %5947 = vmatpush1.bf16.msra.mxu0 0
        %5948 = vmatprep.subr.bf16.mxu0 0
        %5949 = vmatpush1.bf16.msra.mxu0 0
        %5950 = vmatprep.subr.bf16.mxu0 0
        %5951 = vmatpush1.bf16.msra.mxu0 0
        %5952 = vmatprep.subr.bf16.mxu0 0
        %5953 = vmatpush1.bf16.msra.mxu0 0
        %5954 = vmatprep.subr.bf16.mxu0 0
        %5955 = vmatpush1.bf16.msra.mxu0 0
        %5956 = vmatprep.subr.bf16.mxu0 0
        %5957 = vmatpush1.bf16.msra.mxu0 0
        %5958 = vmatprep.subr.bf16.mxu0 0
        %5959 = vmatpush1.bf16.msra.mxu0 0
        %5960 = vmatprep.subr.bf16.mxu0 0
        %5961 = vmatpush1.bf16.msra.mxu0 0
        %5962 = vmatprep.subr.bf16.mxu0 0
        %5963 = vmatpush1.bf16.msra.mxu0 0
        %5964 = vmatprep.subr.bf16.mxu0 0
        %5965 = vmatpush1.bf16.msra.mxu0 0
        %5966 = vmatprep.subr.bf16.mxu0 0
        %5967 = vmatpush1.bf16.msra.mxu0 0
        %5968 = vmatprep.mubr.bf16.mxu0 0
        %5969 = vmatmul.mubr.bf16.gmra.mrb[0].mxu0 %v5931
        %v5970 = vpop.f32.mrb[0].mxu0
        %v5971 = vadd.f32 0.0, %v5970
        %v5972 = vpop.f32.mrb[0].mxu0
        %v5973 = vpop.f32.mrb[0].mxu0
        %v5974 = vadd.f32 0.0, %v5973
        %v5975 = vpop.f32.mrb[0].mxu0
        %5976 = vmatprep.mubr.bf16.mxu0 0
        %5977 = vmatmul.mubr.bf16.gmra.mrb[0].mxu0 %v5934
        %v5978 = vpop.f32.mrb[0].mxu0
        %v5979 = vadd.f32 0.0, %v5978
        %v5980 = vpop.f32.mrb[0].mxu0
        %v5981 = vpop.f32.mrb[0].mxu0
        %v5982 = vadd.f32 0.0, %v5981
        %v5983 = vpop.f32.mrb[0].mxu0
        %5984 = vdwg.mxu0
        %v5985 = vadd.f32 %v5887, %v5971
        %v5986 = vadd.f32 %v5888, %v5974
        %v5987 = vadd.f32 %v5889, %v5979
        %v5988 = vadd.f32 %v5890, %v5982
        %v5989 = vld [vmem:[#allocation5 + $0x15] sm:$0xff]
        %v5990 = vld [vmem:[#allocation5 + $0x1d] sm:$0xff]
        %v5991 = vld [vmem:[#allocation5 + $0x25] sm:$0xff]
        %v5992 = vld [vmem:[#allocation5 + $0x2d] sm:$0x1]
        %v5993 = vpack.c.bf16 %v5990, %v5989
        %v5994 = vpack.c.bf16 %v5992, %v5991
        %s5995 = scalar_lea.vmem %s4, 384
        %v5996 = vld [vmem:[%s5995] sm:$0xf]
        %v5997 = vld [vmem:[%s5995 + $0x4] sm:$0xf]
        %v5998 = vld [vmem:[%s5995 + $0x8] sm:$0xf]
        %v5999 = vld [vmem:[%s5995 + $0xc] sm:$0xf]
        %v6000 = vld [vmem:[%s5995 + $0x10] sm:$0xf]
        %v6001 = vld [vmem:[%s5995 + $0x14] sm:$0xf]
        %v6002 = vld [vmem:[%s5995 + $0x18] sm:$0xf]
        %v6003 = vld [vmem:[%s5995 + $0x1c] sm:$0xf]
        %v6012 = vunpack.c.l.b16 %v5996
        %v6013 = vunpack.c.l.b16 %v5997
        %v6014 = vunpack.c.l.b16 %v5998
        %v6015 = vunpack.c.l.b16 %v5999
        %v6016 = vunpack.c.l.b16 %v6000
        %v6017 = vunpack.c.l.b16 %v6001
        %v6018 = vunpack.c.l.b16 %v6002
        %v6019 = vunpack.c.l.b16 %v6003
        %v6020 = vpack.c.b16 %v6013, %v6012
        %v6021 = vpack.c.b16 %v6015, %v6014
        %v6022 = vpack.c.b16 %v6017, %v6016
        %v6023 = vpack.c.b16 %v6019, %v6018
        %v6029 = vsel %vm418, %v5993, 0
        %v6032 = vsel %vm418, %v5994, 0
        %6034 = vmatprep.subr.bf16.mxu0 0
        %6035 = vmatpush1.bf16.msra.mxu0 %v6020
        %6036 = vmatprep.subr.bf16.mxu0 0
        %6037 = vmatpush1.bf16.msra.mxu0 %v6021
        %6038 = vmatprep.subr.bf16.mxu0 0
        %6039 = vmatpush1.bf16.msra.mxu0 %v6022
        %6040 = vmatprep.subr.bf16.mxu0 0
        %6041 = vmatpush1.bf16.msra.mxu0 %v6023
        %6042 = vmatprep.subr.bf16.mxu0 0
        %6043 = vmatpush1.bf16.msra.mxu0 0
        %6044 = vmatprep.subr.bf16.mxu0 0
        %6045 = vmatpush1.bf16.msra.mxu0 0
        %6046 = vmatprep.subr.bf16.mxu0 0
        %6047 = vmatpush1.bf16.msra.mxu0 0
        %6048 = vmatprep.subr.bf16.mxu0 0
        %6049 = vmatpush1.bf16.msra.mxu0 0
        %6050 = vmatprep.subr.bf16.mxu0 0
        %6051 = vmatpush1.bf16.msra.mxu0 0
        %6052 = vmatprep.subr.bf16.mxu0 0
        %6053 = vmatpush1.bf16.msra.mxu0 0
        %6054 = vmatprep.subr.bf16.mxu0 0
        %6055 = vmatpush1.bf16.msra.mxu0 0
        %6056 = vmatprep.subr.bf16.mxu0 0
        %6057 = vmatpush1.bf16.msra.mxu0 0
        %6058 = vmatprep.subr.bf16.mxu0 0
        %6059 = vmatpush1.bf16.msra.mxu0 0
        %6060 = vmatprep.subr.bf16.mxu0 0
        %6061 = vmatpush1.bf16.msra.mxu0 0
        %6062 = vmatprep.subr.bf16.mxu0 0
        %6063 = vmatpush1.bf16.msra.mxu0 0
        %6064 = vmatprep.subr.bf16.mxu0 0
        %6065 = vmatpush1.bf16.msra.mxu0 0
        %6066 = vmatprep.mubr.bf16.mxu0 0
        %6067 = vmatmul.mubr.bf16.gmra.mrb[0].mxu0 %v6029
        %v6068 = vpop.f32.mrb[0].mxu0
        %v6069 = vadd.f32 0.0, %v6068
        %v6070 = vpop.f32.mrb[0].mxu0
        %v6071 = vpop.f32.mrb[0].mxu0
        %v6072 = vadd.f32 0.0, %v6071
        %v6073 = vpop.f32.mrb[0].mxu0
        %6074 = vmatprep.mubr.bf16.mxu0 0
        %6075 = vmatmul.mubr.bf16.gmra.mrb[0].mxu0 %v6032
        %v6076 = vpop.f32.mrb[0].mxu0
        %v6077 = vadd.f32 0.0, %v6076
        %v6078 = vpop.f32.mrb[0].mxu0
        %v6079 = vpop.f32.mrb[0].mxu0
        %v6080 = vadd.f32 0.0, %v6079
        %v6081 = vpop.f32.mrb[0].mxu0
        %6082 = vdwg.mxu0
        %v6083 = vadd.f32 %v5985, %v6069
        %v6084 = vadd.f32 %v5986, %v6072
        %v6085 = vadd.f32 %v5987, %v6077
        %v6086 = vadd.f32 %v5988, %v6080
        %v6087 = vld [vmem:[#allocation5 + $0x16] sm:$0xff]
        %v6088 = vld [vmem:[#allocation5 + $0x1e] sm:$0xff]
        %v6089 = vld [vmem:[#allocation5 + $0x26] sm:$0xff]
        %v6090 = vld [vmem:[#allocation5 + $0x2e] sm:$0x1]
        %v6091 = vpack.c.bf16 %v6088, %v6087
        %v6092 = vpack.c.bf16 %v6090, %v6089
        %s6093 = scalar_lea.vmem %s4, 416
        %v6094 = vld [vmem:[%s6093] sm:$0xf]
        %v6095 = vld [vmem:[%s6093 + $0x4] sm:$0xf]
        %v6096 = vld [vmem:[%s6093 + $0x8] sm:$0xf]
        %v6097 = vld [vmem:[%s6093 + $0xc] sm:$0xf]
        %v6098 = vld [vmem:[%s6093 + $0x10] sm:$0xf]
        %v6099 = vld [vmem:[%s6093 + $0x14] sm:$0xf]
        %v6100 = vld [vmem:[%s6093 + $0x18] sm:$0xf]
        %v6101 = vld [vmem:[%s6093 + $0x1c] sm:$0xf]
        %v6110 = vunpack.c.l.b16 %v6094
        %v6111 = vunpack.c.l.b16 %v6095
        %v6112 = vunpack.c.l.b16 %v6096
        %v6113 = vunpack.c.l.b16 %v6097
        %v6114 = vunpack.c.l.b16 %v6098
        %v6115 = vunpack.c.l.b16 %v6099
        %v6116 = vunpack.c.l.b16 %v6100
        %v6117 = vunpack.c.l.b16 %v6101
        %v6118 = vpack.c.b16 %v6111, %v6110
        %v6119 = vpack.c.b16 %v6113, %v6112
        %v6120 = vpack.c.b16 %v6115, %v6114
        %v6121 = vpack.c.b16 %v6117, %v6116
        %v6127 = vsel %vm418, %v6091, 0
        %v6130 = vsel %vm418, %v6092, 0
        %6132 = vmatprep.subr.bf16.mxu0 0
        %6133 = vmatpush1.bf16.msra.mxu0 %v6118
        %6134 = vmatprep.subr.bf16.mxu0 0
        %6135 = vmatpush1.bf16.msra.mxu0 %v6119
        %6136 = vmatprep.subr.bf16.mxu0 0
        %6137 = vmatpush1.bf16.msra.mxu0 %v6120
        %6138 = vmatprep.subr.bf16.mxu0 0
        %6139 = vmatpush1.bf16.msra.mxu0 %v6121
        %6140 = vmatprep.subr.bf16.mxu0 0
        %6141 = vmatpush1.bf16.msra.mxu0 0
        %6142 = vmatprep.subr.bf16.mxu0 0
        %6143 = vmatpush1.bf16.msra.mxu0 0
        %6144 = vmatprep.subr.bf16.mxu0 0
        %6145 = vmatpush1.bf16.msra.mxu0 0
        %6146 = vmatprep.subr.bf16.mxu0 0
        %6147 = vmatpush1.bf16.msra.mxu0 0
        %6148 = vmatprep.subr.bf16.mxu0 0
        %6149 = vmatpush1.bf16.msra.mxu0 0
        %6150 = vmatprep.subr.bf16.mxu0 0
        %6151 = vmatpush1.bf16.msra.mxu0 0
        %6152 = vmatprep.subr.bf16.mxu0 0
        %6153 = vmatpush1.bf16.msra.mxu0 0
        %6154 = vmatprep.subr.bf16.mxu0 0
        %6155 = vmatpush1.bf16.msra.mxu0 0
        %6156 = vmatprep.subr.bf16.mxu0 0
        %6157 = vmatpush1.bf16.msra.mxu0 0
        %6158 = vmatprep.subr.bf16.mxu0 0
        %6159 = vmatpush1.bf16.msra.mxu0 0
        %6160 = vmatprep.subr.bf16.mxu0 0
        %6161 = vmatpush1.bf16.msra.mxu0 0
        %6162 = vmatprep.subr.bf16.mxu0 0
        %6163 = vmatpush1.bf16.msra.mxu0 0
        %6164 = vmatprep.mubr.bf16.mxu0 0
        %6165 = vmatmul.mubr.bf16.gmra.mrb[0].mxu0 %v6127
        %v6166 = vpop.f32.mrb[0].mxu0
        %v6167 = vadd.f32 0.0, %v6166
        %v6168 = vpop.f32.mrb[0].mxu0
        %v6169 = vpop.f32.mrb[0].mxu0
        %v6170 = vadd.f32 0.0, %v6169
        %v6171 = vpop.f32.mrb[0].mxu0
        %6172 = vmatprep.mubr.bf16.mxu0 0
        %6173 = vmatmul.mubr.bf16.gmra.mrb[0].mxu0 %v6130
        %v6174 = vpop.f32.mrb[0].mxu0
        %v6175 = vadd.f32 0.0, %v6174
        %v6176 = vpop.f32.mrb[0].mxu0
        %v6177 = vpop.f32.mrb[0].mxu0
        %v6178 = vadd.f32 0.0, %v6177
        %v6179 = vpop.f32.mrb[0].mxu0
        %6180 = vdwg.mxu0
        %v6181 = vadd.f32 %v6083, %v6167
        %v6182 = vadd.f32 %v6084, %v6170
        %v6183 = vadd.f32 %v6085, %v6175
        %v6184 = vadd.f32 %v6086, %v6178
        %v6185 = vld [vmem:[#allocation5 + $0x17] sm:$0xff]
        %v6186 = vld [vmem:[#allocation5 + $0x1f] sm:$0xff]
        %v6187 = vld [vmem:[#allocation5 + $0x27] sm:$0xff]
        %v6188 = vld [vmem:[#allocation5 + $0x2f] sm:$0x1]
        %v6189 = vpack.c.bf16 %v6186, %v6185
        %v6190 = vpack.c.bf16 %v6188, %v6187
        %s6191 = scalar_lea.vmem %s4, 448
        %v6192 = vld [vmem:[%s6191] sm:$0xf]
        %v6193 = vld [vmem:[%s6191 + $0x4] sm:$0xf]
        %v6194 = vld [vmem:[%s6191 + $0x8] sm:$0xf]
        %v6195 = vld [vmem:[%s6191 + $0xc] sm:$0xf]
        %v6196 = vld [vmem:[%s6191 + $0x10] sm:$0xf]
        %v6197 = vld [vmem:[%s6191 + $0x14] sm:$0xf]
        %v6198 = vld [vmem:[%s6191 + $0x18] sm:$0xf]
        %v6199 = vld [vmem:[%s6191 + $0x1c] sm:$0xf]
        %v6208 = vunpack.c.l.b16 %v6192
        %v6209 = vunpack.c.l.b16 %v6193
        %v6210 = vunpack.c.l.b16 %v6194
        %v6211 = vunpack.c.l.b16 %v6195
        %v6212 = vunpack.c.l.b16 %v6196
        %v6213 = vunpack.c.l.b16 %v6197
        %v6214 = vunpack.c.l.b16 %v6198
        %v6215 = vunpack.c.l.b16 %v6199
        %v6216 = vpack.c.b16 %v6209, %v6208
        %v6217 = vpack.c.b16 %v6211, %v6210
        %v6218 = vpack.c.b16 %v6213, %v6212
        %v6219 = vpack.c.b16 %v6215, %v6214
        %v6225 = vsel %vm418, %v6189, 0
        %v6228 = vsel %vm418, %v6190, 0
        %6230 = vmatprep.subr.bf16.mxu0 0
        %6231 = vmatpush1.bf16.msra.mxu0 %v6216
        %6232 = vmatprep.subr.bf16.mxu0 0
        %6233 = vmatpush1.bf16.msra.mxu0 %v6217
        %6234 = vmatprep.subr.bf16.mxu0 0
        %6235 = vmatpush1.bf16.msra.mxu0 %v6218
        %6236 = vmatprep.subr.bf16.mxu0 0
        %6237 = vmatpush1.bf16.msra.mxu0 %v6219
        %6238 = vmatprep.subr.bf16.mxu0 0
        %6239 = vmatpush1.bf16.msra.mxu0 0
        %6240 = vmatprep.subr.bf16.mxu0 0
        %6241 = vmatpush1.bf16.msra.mxu0 0
        %6242 = vmatprep.subr.bf16.mxu0 0
        %6243 = vmatpush1.bf16.msra.mxu0 0
        %6244 = vmatprep.subr.bf16.mxu0 0
        %6245 = vmatpush1.bf16.msra.mxu0 0
        %6246 = vmatprep.subr.bf16.mxu0 0
        %6247 = vmatpush1.bf16.msra.mxu0 0
        %6248 = vmatprep.subr.bf16.mxu0 0
        %6249 = vmatpush1.bf16.msra.mxu0 0
        %6250 = vmatprep.subr.bf16.mxu0 0
        %6251 = vmatpush1.bf16.msra.mxu0 0
        %6252 = vmatprep.subr.bf16.mxu0 0
        %6253 = vmatpush1.bf16.msra.mxu0 0
        %6254 = vmatprep.subr.bf16.mxu0 0
        %6255 = vmatpush1.bf16.msra.mxu0 0
        %6256 = vmatprep.subr.bf16.mxu0 0
        %6257 = vmatpush1.bf16.msra.mxu0 0
        %6258 = vmatprep.subr.bf16.mxu0 0
        %6259 = vmatpush1.bf16.msra.mxu0 0
        %6260 = vmatprep.subr.bf16.mxu0 0
        %6261 = vmatpush1.bf16.msra.mxu0 0
        %6262 = vmatprep.mubr.bf16.mxu0 0
        %6263 = vmatmul.mubr.bf16.gmra.mrb[0].mxu0 %v6225
        %v6264 = vpop.f32.mrb[0].mxu0
        %v6265 = vadd.f32 0.0, %v6264
        %v6266 = vpop.f32.mrb[0].mxu0
        %v6267 = vpop.f32.mrb[0].mxu0
        %v6268 = vadd.f32 0.0, %v6267
        %v6269 = vpop.f32.mrb[0].mxu0
        %6270 = vmatprep.mubr.bf16.mxu0 0
        %6271 = vmatmul.mubr.bf16.gmra.mrb[0].mxu0 %v6228
        %v6272 = vpop.f32.mrb[0].mxu0
        %v6273 = vadd.f32 0.0, %v6272
        %v6274 = vpop.f32.mrb[0].mxu0
        %v6275 = vpop.f32.mrb[0].mxu0
        %v6276 = vadd.f32 0.0, %v6275
        %v6277 = vpop.f32.mrb[0].mxu0
        %6278 = vdwg.mxu0
        %v6279 = vadd.f32 %v6181, %v6265
        %v6280 = vadd.f32 %v6182, %v6268
        %v6281 = vadd.f32 %v6183, %v6273
        %v6282 = vadd.f32 %v6184, %v6276
        %v6283 = vld [vmem:[#allocation5 + $0x18] sm:$0xff]
        %v6284 = vld [vmem:[#allocation5 + $0x20] sm:$0xff]
        %v6285 = vld [vmem:[#allocation5 + $0x28] sm:$0xff]
        %v6286 = vld [vmem:[#allocation5 + $0x30] sm:$0x1]
        %v6287 = vpack.c.bf16 %v6284, %v6283
        %v6288 = vpack.c.bf16 %v6286, %v6285
        %s6289 = scalar_lea.vmem %s4, 480
        %v6290 = vld [vmem:[%s6289] sm:$0xf]
        %v6291 = vld [vmem:[%s6289 + $0x4] sm:$0xf]
        %v6292 = vld [vmem:[%s6289 + $0x8] sm:$0xf]
        %v6293 = vld [vmem:[%s6289 + $0xc] sm:$0xf]
        %v6294 = vld [vmem:[%s6289 + $0x10] sm:$0xf]
        %v6295 = vld [vmem:[%s6289 + $0x14] sm:$0xf]
        %v6296 = vld [vmem:[%s6289 + $0x18] sm:$0xf]
        %v6297 = vld [vmem:[%s6289 + $0x1c] sm:$0xf]
        %v6306 = vunpack.c.l.b16 %v6290
        %v6307 = vunpack.c.l.b16 %v6291
        %v6308 = vunpack.c.l.b16 %v6292
        %v6309 = vunpack.c.l.b16 %v6293
        %v6310 = vunpack.c.l.b16 %v6294
        %v6311 = vunpack.c.l.b16 %v6295
        %v6312 = vunpack.c.l.b16 %v6296
        %v6313 = vunpack.c.l.b16 %v6297
        %v6314 = vpack.c.b16 %v6307, %v6306
        %v6315 = vpack.c.b16 %v6309, %v6308
        %v6316 = vpack.c.b16 %v6311, %v6310
        %v6317 = vpack.c.b16 %v6313, %v6312
        %v6323 = vsel %vm418, %v6287, 0
        %v6326 = vsel %vm418, %v6288, 0
        %6328 = vmatprep.subr.bf16.mxu0 0
        %6329 = vmatpush1.bf16.msra.mxu0 %v6314
        %6330 = vmatprep.subr.bf16.mxu0 0
        %6331 = vmatpush1.bf16.msra.mxu0 %v6315
        %6332 = vmatprep.subr.bf16.mxu0 0
        %6333 = vmatpush1.bf16.msra.mxu0 %v6316
        %6334 = vmatprep.subr.bf16.mxu0 0
        %6335 = vmatpush1.bf16.msra.mxu0 %v6317
        %6336 = vmatprep.subr.bf16.mxu0 0
        %6337 = vmatpush1.bf16.msra.mxu0 0
        %6338 = vmatprep.subr.bf16.mxu0 0
        %6339 = vmatpush1.bf16.msra.mxu0 0
        %6340 = vmatprep.subr.bf16.mxu0 0
        %6341 = vmatpush1.bf16.msra.mxu0 0
        %6342 = vmatprep.subr.bf16.mxu0 0
        %6343 = vmatpush1.bf16.msra.mxu0 0
        %6344 = vmatprep.subr.bf16.mxu0 0
        %6345 = vmatpush1.bf16.msra.mxu0 0
        %6346 = vmatprep.subr.bf16.mxu0 0
        %6347 = vmatpush1.bf16.msra.mxu0 0
        %6348 = vmatprep.subr.bf16.mxu0 0
        %6349 = vmatpush1.bf16.msra.mxu0 0
        %6350 = vmatprep.subr.bf16.mxu0 0
        %6351 = vmatpush1.bf16.msra.mxu0 0
        %6352 = vmatprep.subr.bf16.mxu0 0
        %6353 = vmatpush1.bf16.msra.mxu0 0
        %6354 = vmatprep.subr.bf16.mxu0 0
        %6355 = vmatpush1.bf16.msra.mxu0 0
        %6356 = vmatprep.subr.bf16.mxu0 0
        %6357 = vmatpush1.bf16.msra.mxu0 0
        %6358 = vmatprep.subr.bf16.mxu0 0
        %6359 = vmatpush1.bf16.msra.mxu0 0
        %6360 = vmatprep.mubr.bf16.mxu0 0
        %6361 = vmatmul.mubr.bf16.gmra.mrb[0].mxu0 %v6323
        %v6362 = vpop.f32.mrb[0].mxu0
        %v6363 = vadd.f32 0.0, %v6362
        %v6364 = vpop.f32.mrb[0].mxu0
        %v6365 = vpop.f32.mrb[0].mxu0
        %v6366 = vadd.f32 0.0, %v6365
        %v6367 = vpop.f32.mrb[0].mxu0
        %6368 = vmatprep.mubr.bf16.mxu0 0
        %6369 = vmatmul.mubr.bf16.gmra.mrb[0].mxu0 %v6326
        %v6370 = vpop.f32.mrb[0].mxu0
        %v6371 = vadd.f32 0.0, %v6370
        %v6372 = vpop.f32.mrb[0].mxu0
        %v6373 = vpop.f32.mrb[0].mxu0
        %v6374 = vadd.f32 0.0, %v6373
        %v6375 = vpop.f32.mrb[0].mxu0
        %6376 = vdwg.mxu0
        %v6377 = vadd.f32 %v6279, %v6363
        %v6378 = vadd.f32 %v6280, %v6366
        %v6379 = vadd.f32 %v6281, %v6371
        %v6380 = vadd.f32 %v6282, %v6374
        %v6381 = vld [vmem:[%s9] sm:$0x1]
        %v6383 = vlaneseq
        %v6384 = vshrl.u32 %v6383, 7
        %v6385 = vsub.s32 0, %v6384
        %v6386 = vrot.slane %v6381, %v6385
        %v6388 = vadd.f32 %v6377, %v6386
        %v6389 = vadd.f32 %v6378, %v6386
        %v6390 = vadd.f32 %v6379, %v6386
        %v6391 = vadd.f32 %v6380, %v6386
        %vm6392 = vcmp.ge.f32.partialorder %v6388, 0.0
        %vm6393 = vcmp.ge.f32.partialorder %v6389, 0.0
        %vm6394 = vcmp.ge.f32.partialorder %v6390, 0.0
        %vm6395 = vcmp.ge.f32.partialorder %v6391, 0.0
        %v6396 = vmul.f32 %v6388, 0.2
        %v6397 = vmul.f32 %v6389, 0.2
        %v6398 = vmul.f32 %v6390, 0.2
        %v6399 = vmul.f32 %v6391, 0.2
        %v6400 = vsel %vm6392, %v6388, %v6396
        %v6401 = vsel %vm6393, %v6389, %v6397
        %v6402 = vsel %vm6394, %v6390, %v6398
        %v6403 = vsel %vm6395, %v6391, %v6399
        %6404 = vst [vmem:[#allocation6 + $0x12] sm:$0xf] %v6400
        %6405 = vst [vmem:[#allocation6 + $0x13] sm:$0x80] %v6400
        %6406 = vst [vmem:[#allocation6 + $0x1b] sm:$0x7] %v6401
        %6407 = vst [vmem:[#allocation6 + $0x1c] sm:$0xc0] %v6401
        %6408 = vst [vmem:[#allocation6 + $0x24] sm:$0x3] %v6402
        %6409 = vst [vmem:[#allocation6 + $0x25] sm:$0xe0] %v6402
        %6410 = vst [vmem:[#allocation6 + $0x2d] sm:$0x1] %v6403
        %v6411 = vld [vmem:[#allocation6] sm:$0xff]
        %v6412 = vld [vmem:[#allocation6 + $0x8] sm:$0xff]
        %v6413 = vld [vmem:[#allocation6 + $0x10] sm:$0xff]
        %v6414 = vld [vmem:[#allocation6 + $0x18] sm:$0xff]
        %v6415 = vld [vmem:[#allocation6 + $0x20] sm:$0x1f]
        %v6416 = vpack.c.bf16 %v6412, %v6411
        %v6417 = vpack.c.bf16 %v6414, %v6413
        %v6418 = vpack.c.bf16 %v6415, %v6415
        %v6419 = vld [vmem:[%s5] sm:$0xf]
        %v6420 = vld [vmem:[%s5 + $0x4] sm:$0xf]
        %v6421 = vld [vmem:[%s5 + $0x8] sm:$0xf]
        %v6422 = vld [vmem:[%s5 + $0xc] sm:$0xf]
        %v6423 = vld [vmem:[%s5 + $0x10] sm:$0xf]
        %v6424 = vld [vmem:[%s5 + $0x14] sm:$0xf]
        %v6425 = vld [vmem:[%s5 + $0x18] sm:$0xf]
        %v6426 = vld [vmem:[%s5 + $0x1c] sm:$0xf]
        %v6427 = vld [vmem:[%s5 + $0x20] sm:$0xf]
        %v6428 = vld [vmem:[%s5 + $0x24] sm:$0xf]
        %v6429 = vld [vmem:[%s5 + $0x28] sm:$0xf]
        %v6430 = vld [vmem:[%s5 + $0x2c] sm:$0xf]
        %v6431 = vld [vmem:[%s5 + $0x30] sm:$0xf]
        %v6432 = vld [vmem:[%s5 + $0x34] sm:$0xf]
        %v6433 = vld [vmem:[%s5 + $0x38] sm:$0xf]
        %v6434 = vld [vmem:[%s5 + $0x3c] sm:$0xf]
        %v6435 = vld [vmem:[#allocation6 + $0x1] sm:$0xff]
        %v6436 = vld [vmem:[#allocation6 + $0x9] sm:$0xff]
        %v6437 = vld [vmem:[#allocation6 + $0x11] sm:$0xff]
        %v6438 = vld [vmem:[#allocation6 + $0x19] sm:$0xff]
        %v6439 = vld [vmem:[#allocation6 + $0x21] sm:$0x1f]
        %v6440 = vpack.c.bf16 %v6436, %v6435
        %v6441 = vpack.c.bf16 %v6438, %v6437
        %v6442 = vpack.c.bf16 %v6439, %v6439
        %s6443 = scalar_lea.vmem %s5, 64
        %v6444 = vld [vmem:[%s6443] sm:$0xf]
        %v6445 = vld [vmem:[%s6443 + $0x4] sm:$0xf]
        %v6446 = vld [vmem:[%s6443 + $0x8] sm:$0xf]
        %v6447 = vld [vmem:[%s6443 + $0xc] sm:$0xf]
        %v6448 = vld [vmem:[%s6443 + $0x10] sm:$0xf]
        %v6449 = vld [vmem:[%s6443 + $0x14] sm:$0xf]
        %v6450 = vld [vmem:[%s6443 + $0x18] sm:$0xf]
        %v6451 = vld [vmem:[%s6443 + $0x1c] sm:$0xf]
        %v6452 = vld [vmem:[%s6443 + $0x20] sm:$0xf]
        %v6453 = vld [vmem:[%s6443 + $0x24] sm:$0xf]
        %v6454 = vld [vmem:[%s6443 + $0x28] sm:$0xf]
        %v6455 = vld [vmem:[%s6443 + $0x2c] sm:$0xf]
        %v6456 = vld [vmem:[%s6443 + $0x30] sm:$0xf]
        %v6457 = vld [vmem:[%s6443 + $0x34] sm:$0xf]
        %v6458 = vld [vmem:[%s6443 + $0x38] sm:$0xf]
        %v6459 = vld [vmem:[%s6443 + $0x3c] sm:$0xf]
        %v6476 = vunpack.c.l.b16 %v6444
        %v6477 = vunpack.c.l.b16 %v6445
        %v6478 = vunpack.c.l.b16 %v6446
        %v6479 = vunpack.c.l.b16 %v6447
        %v6480 = vunpack.c.l.b16 %v6448
        %v6481 = vunpack.c.l.b16 %v6449
        %v6482 = vunpack.c.l.b16 %v6450
        %v6483 = vunpack.c.l.b16 %v6451
        %v6484 = vunpack.c.l.b16 %v6452
        %v6485 = vunpack.c.l.b16 %v6453
        %v6486 = vunpack.c.l.b16 %v6454
        %v6487 = vunpack.c.l.b16 %v6455
        %v6488 = vunpack.c.l.b16 %v6456
        %v6489 = vunpack.c.l.b16 %v6457
        %v6490 = vunpack.c.l.b16 %v6458
        %v6491 = vunpack.c.l.b16 %v6459
        %v6492 = vpack.c.b16 %v6477, %v6476
        %v6493 = vpack.c.b16 %v6479, %v6478
        %v6494 = vpack.c.b16 %v6481, %v6480
        %v6495 = vpack.c.b16 %v6483, %v6482
        %v6496 = vpack.c.b16 %v6485, %v6484
        %v6497 = vpack.c.b16 %v6487, %v6486
        %v6498 = vpack.c.b16 %v6489, %v6488
        %v6499 = vpack.c.b16 %v6491, %v6490
        %6508 = vmatprep.subr.bf16.mxu0 0
        %6509 = vmatpush1.bf16.msra.mxu0 %v6492
        %6510 = vmatprep.subr.bf16.mxu0 0
        %6511 = vmatpush1.bf16.msra.mxu0 %v6493
        %6512 = vmatprep.subr.bf16.mxu0 0
        %6513 = vmatpush1.bf16.msra.mxu0 %v6494
        %6514 = vmatprep.subr.bf16.mxu0 0
        %6515 = vmatpush1.bf16.msra.mxu0 %v6495
        %6516 = vmatprep.subr.bf16.mxu0 0
        %6517 = vmatpush1.bf16.msra.mxu0 %v6496
        %6518 = vmatprep.subr.bf16.mxu0 0
        %6519 = vmatpush1.bf16.msra.mxu0 %v6497
        %6520 = vmatprep.subr.bf16.mxu0 0
        %6521 = vmatpush1.bf16.msra.mxu0 %v6498
        %6522 = vmatprep.subr.bf16.mxu0 0
        %6523 = vmatpush1.bf16.msra.mxu0 %v6499
        %6524 = vmatprep.subr.bf16.mxu0 0
        %6525 = vmatpush1.bf16.msra.mxu0 0
        %6526 = vmatprep.subr.bf16.mxu0 0
        %6527 = vmatpush1.bf16.msra.mxu0 0
        %6528 = vmatprep.subr.bf16.mxu0 0
        %6529 = vmatpush1.bf16.msra.mxu0 0
        %6530 = vmatprep.subr.bf16.mxu0 0
        %6531 = vmatpush1.bf16.msra.mxu0 0
        %6532 = vmatprep.subr.bf16.mxu0 0
        %6533 = vmatpush1.bf16.msra.mxu0 0
        %6534 = vmatprep.subr.bf16.mxu0 0
        %6535 = vmatpush1.bf16.msra.mxu0 0
        %6536 = vmatprep.subr.bf16.mxu0 0
        %6537 = vmatpush1.bf16.msra.mxu0 0
        %6538 = vmatprep.subr.bf16.mxu0 0
        %6539 = vmatpush1.bf16.msra.mxu0 0
        %6540 = vmatprep.mubr.bf16.mxu0 0
        %6541 = vmatmul.mubr.bf16.gmra.mrb[0].mxu0 %v6440
        %v6542 = vpop.f32.mrb[0].mxu0
        %v6543 = vadd.f32 0.0, %v6542
        %v6544 = vpop.f32.mrb[0].mxu0
        %v6545 = vpop.f32.mrb[0].mxu0
        %v6546 = vadd.f32 0.0, %v6545
        %v6547 = vpop.f32.mrb[0].mxu0
        %6548 = vmatprep.mubr.bf16.mxu0 0
        %6549 = vmatmul.mubr.bf16.gmra.mrb[0].mxu0 %v6441
        %v6550 = vpop.f32.mrb[0].mxu0
        %v6551 = vadd.f32 0.0, %v6550
        %v6552 = vpop.f32.mrb[0].mxu0
        %v6553 = vpop.f32.mrb[0].mxu0
        %v6554 = vadd.f32 0.0, %v6553
        %v6555 = vpop.f32.mrb[0].mxu0
        %6556 = vmatprep.mubr.bf16.mxu0 0
        %6557 = vmatmul.mubr.bf16.gmra.mrb[0].mxu0 %v6442
        %v6558 = vpop.f32.mrb[0].mxu0
        %v6559 = vadd.f32 0.0, %v6558
        %v6560 = vpop.f32.mrb[0].mxu0
        %v6561 = vpop.f32.mrb[0].mxu0
        %v6562 = vpop.f32.mrb[0].mxu0
        %6563 = vdwg.mxu0
        %v6580 = vunpack.c.l.b16 %v6419
        %v6581 = vunpack.c.l.b16 %v6420
        %v6582 = vunpack.c.l.b16 %v6421
        %v6583 = vunpack.c.l.b16 %v6422
        %v6584 = vunpack.c.l.b16 %v6423
        %v6585 = vunpack.c.l.b16 %v6424
        %v6586 = vunpack.c.l.b16 %v6425
        %v6587 = vunpack.c.l.b16 %v6426
        %v6588 = vunpack.c.l.b16 %v6427
        %v6589 = vunpack.c.l.b16 %v6428
        %v6590 = vunpack.c.l.b16 %v6429
        %v6591 = vunpack.c.l.b16 %v6430
        %v6592 = vunpack.c.l.b16 %v6431
        %v6593 = vunpack.c.l.b16 %v6432
        %v6594 = vunpack.c.l.b16 %v6433
        %v6595 = vunpack.c.l.b16 %v6434
        %v6596 = vpack.c.b16 %v6581, %v6580
        %v6597 = vpack.c.b16 %v6583, %v6582
        %v6598 = vpack.c.b16 %v6585, %v6584
        %v6599 = vpack.c.b16 %v6587, %v6586
        %v6600 = vpack.c.b16 %v6589, %v6588
        %v6601 = vpack.c.b16 %v6591, %v6590
        %v6602 = vpack.c.b16 %v6593, %v6592
        %v6603 = vpack.c.b16 %v6595, %v6594
        %6612 = vmatprep.subr.bf16.mxu0 0
        %6613 = vmatpush1.bf16.msra.mxu0 %v6596
        %6614 = vmatprep.subr.bf16.mxu0 0
        %6615 = vmatpush1.bf16.msra.mxu0 %v6597
        %6616 = vmatprep.subr.bf16.mxu0 0
        %6617 = vmatpush1.bf16.msra.mxu0 %v6598
        %6618 = vmatprep.subr.bf16.mxu0 0
        %6619 = vmatpush1.bf16.msra.mxu0 %v6599
        %6620 = vmatprep.subr.bf16.mxu0 0
        %6621 = vmatpush1.bf16.msra.mxu0 %v6600
        %6622 = vmatprep.subr.bf16.mxu0 0
        %6623 = vmatpush1.bf16.msra.mxu0 %v6601
        %6624 = vmatprep.subr.bf16.mxu0 0
        %6625 = vmatpush1.bf16.msra.mxu0 %v6602
        %6626 = vmatprep.subr.bf16.mxu0 0
        %6627 = vmatpush1.bf16.msra.mxu0 %v6603
        %6628 = vmatprep.subr.bf16.mxu0 0
        %6629 = vmatpush1.bf16.msra.mxu0 0
        %6630 = vmatprep.subr.bf16.mxu0 0
        %6631 = vmatpush1.bf16.msra.mxu0 0
        %6632 = vmatprep.subr.bf16.mxu0 0
        %6633 = vmatpush1.bf16.msra.mxu0 0
        %6634 = vmatprep.subr.bf16.mxu0 0
        %6635 = vmatpush1.bf16.msra.mxu0 0
        %6636 = vmatprep.subr.bf16.mxu0 0
        %6637 = vmatpush1.bf16.msra.mxu0 0
        %6638 = vmatprep.subr.bf16.mxu0 0
        %6639 = vmatpush1.bf16.msra.mxu0 0
        %6640 = vmatprep.subr.bf16.mxu0 0
        %6641 = vmatpush1.bf16.msra.mxu0 0
        %6642 = vmatprep.subr.bf16.mxu0 0
        %6643 = vmatpush1.bf16.msra.mxu0 0
        %6644 = vmatprep.mubr.bf16.mxu0 0
        %6645 = vmatmul.mubr.bf16.gmra.mrb[0].mxu0 %v6416
        %v6646 = vpop.f32.mrb[0].mxu0
        %v6647 = vadd.f32 %v6543, %v6646
        %v6648 = vpop.f32.mrb[0].mxu0
        %v6649 = vpop.f32.mrb[0].mxu0
        %v6650 = vadd.f32 %v6546, %v6649
        %v6651 = vpop.f32.mrb[0].mxu0
        %6652 = vmatprep.mubr.bf16.mxu0 0
        %6653 = vmatmul.mubr.bf16.gmra.mrb[0].mxu0 %v6417
        %v6654 = vpop.f32.mrb[0].mxu0
        %v6655 = vadd.f32 %v6551, %v6654
        %v6656 = vpop.f32.mrb[0].mxu0
        %v6657 = vpop.f32.mrb[0].mxu0
        %v6658 = vadd.f32 %v6554, %v6657
        %v6659 = vpop.f32.mrb[0].mxu0
        %6660 = vmatprep.mubr.bf16.mxu0 0
        %6661 = vmatmul.mubr.bf16.gmra.mrb[0].mxu0 %v6418
        %v6662 = vpop.f32.mrb[0].mxu0
        %v6663 = vadd.f32 %v6559, %v6662
        %v6664 = vpop.f32.mrb[0].mxu0
        %v6665 = vpop.f32.mrb[0].mxu0
        %v6666 = vpop.f32.mrb[0].mxu0
        %6667 = vdwg.mxu0
        %v6668 = vld [vmem:[#allocation6 + $0x2] sm:$0xff]
        %v6669 = vld [vmem:[#allocation6 + $0xa] sm:$0xff]
        %v6670 = vld [vmem:[#allocation6 + $0x12] sm:$0xff]
        %v6671 = vld [vmem:[#allocation6 + $0x1a] sm:$0xff]
        %v6672 = vld [vmem:[#allocation6 + $0x22] sm:$0x1f]
        %v6673 = vpack.c.bf16 %v6669, %v6668
        %v6674 = vpack.c.bf16 %v6671, %v6670
        %v6675 = vpack.c.bf16 %v6672, %v6672
        %s6676 = scalar_lea.vmem %s5, 128
        %v6677 = vld [vmem:[%s6676] sm:$0xf]
        %v6678 = vld [vmem:[%s6676 + $0x4] sm:$0xf]
        %v6679 = vld [vmem:[%s6676 + $0x8] sm:$0xf]
        %v6680 = vld [vmem:[%s6676 + $0xc] sm:$0xf]
        %v6681 = vld [vmem:[%s6676 + $0x10] sm:$0xf]
        %v6682 = vld [vmem:[%s6676 + $0x14] sm:$0xf]
        %v6683 = vld [vmem:[%s6676 + $0x18] sm:$0xf]
        %v6684 = vld [vmem:[%s6676 + $0x1c] sm:$0xf]
        %v6685 = vld [vmem:[%s6676 + $0x20] sm:$0xf]
        %v6686 = vld [vmem:[%s6676 + $0x24] sm:$0xf]
        %v6687 = vld [vmem:[%s6676 + $0x28] sm:$0xf]
        %v6688 = vld [vmem:[%s6676 + $0x2c] sm:$0xf]
        %v6689 = vld [vmem:[%s6676 + $0x30] sm:$0xf]
        %v6690 = vld [vmem:[%s6676 + $0x34] sm:$0xf]
        %v6691 = vld [vmem:[%s6676 + $0x38] sm:$0xf]
        %v6692 = vld [vmem:[%s6676 + $0x3c] sm:$0xf]
        %v6709 = vunpack.c.l.b16 %v6677
        %v6710 = vunpack.c.l.b16 %v6678
        %v6711 = vunpack.c.l.b16 %v6679
        %v6712 = vunpack.c.l.b16 %v6680
        %v6713 = vunpack.c.l.b16 %v6681
        %v6714 = vunpack.c.l.b16 %v6682
        %v6715 = vunpack.c.l.b16 %v6683
        %v6716 = vunpack.c.l.b16 %v6684
        %v6717 = vunpack.c.l.b16 %v6685
        %v6718 = vunpack.c.l.b16 %v6686
        %v6719 = vunpack.c.l.b16 %v6687
        %v6720 = vunpack.c.l.b16 %v6688
        %v6721 = vunpack.c.l.b16 %v6689
        %v6722 = vunpack.c.l.b16 %v6690
        %v6723 = vunpack.c.l.b16 %v6691
        %v6724 = vunpack.c.l.b16 %v6692
        %v6725 = vpack.c.b16 %v6710, %v6709
        %v6726 = vpack.c.b16 %v6712, %v6711
        %v6727 = vpack.c.b16 %v6714, %v6713
        %v6728 = vpack.c.b16 %v6716, %v6715
        %v6729 = vpack.c.b16 %v6718, %v6717
        %v6730 = vpack.c.b16 %v6720, %v6719
        %v6731 = vpack.c.b16 %v6722, %v6721
        %v6732 = vpack.c.b16 %v6724, %v6723
        %6741 = vmatprep.subr.bf16.mxu0 0
        %6742 = vmatpush1.bf16.msra.mxu0 %v6725
        %6743 = vmatprep.subr.bf16.mxu0 0
        %6744 = vmatpush1.bf16.msra.mxu0 %v6726
        %6745 = vmatprep.subr.bf16.mxu0 0
        %6746 = vmatpush1.bf16.msra.mxu0 %v6727
        %6747 = vmatprep.subr.bf16.mxu0 0
        %6748 = vmatpush1.bf16.msra.mxu0 %v6728
        %6749 = vmatprep.subr.bf16.mxu0 0
        %6750 = vmatpush1.bf16.msra.mxu0 %v6729
        %6751 = vmatprep.subr.bf16.mxu0 0
        %6752 = vmatpush1.bf16.msra.mxu0 %v6730
        %6753 = vmatprep.subr.bf16.mxu0 0
        %6754 = vmatpush1.bf16.msra.mxu0 %v6731
        %6755 = vmatprep.subr.bf16.mxu0 0
        %6756 = vmatpush1.bf16.msra.mxu0 %v6732
        %6757 = vmatprep.subr.bf16.mxu0 0
        %6758 = vmatpush1.bf16.msra.mxu0 0
        %6759 = vmatprep.subr.bf16.mxu0 0
        %6760 = vmatpush1.bf16.msra.mxu0 0
        %6761 = vmatprep.subr.bf16.mxu0 0
        %6762 = vmatpush1.bf16.msra.mxu0 0
        %6763 = vmatprep.subr.bf16.mxu0 0
        %6764 = vmatpush1.bf16.msra.mxu0 0
        %6765 = vmatprep.subr.bf16.mxu0 0
        %6766 = vmatpush1.bf16.msra.mxu0 0
        %6767 = vmatprep.subr.bf16.mxu0 0
        %6768 = vmatpush1.bf16.msra.mxu0 0
        %6769 = vmatprep.subr.bf16.mxu0 0
        %6770 = vmatpush1.bf16.msra.mxu0 0
        %6771 = vmatprep.subr.bf16.mxu0 0
        %6772 = vmatpush1.bf16.msra.mxu0 0
        %6773 = vmatprep.mubr.bf16.mxu0 0
        %6774 = vmatmul.mubr.bf16.gmra.mrb[0].mxu0 %v6673
        %v6775 = vpop.f32.mrb[0].mxu0
        %v6776 = vadd.f32 0.0, %v6775
        %v6777 = vpop.f32.mrb[0].mxu0
        %v6778 = vpop.f32.mrb[0].mxu0
        %v6779 = vadd.f32 0.0, %v6778
        %v6780 = vpop.f32.mrb[0].mxu0
        %6781 = vmatprep.mubr.bf16.mxu0 0
        %6782 = vmatmul.mubr.bf16.gmra.mrb[0].mxu0 %v6674
        %v6783 = vpop.f32.mrb[0].mxu0
        %v6784 = vadd.f32 0.0, %v6783
        %v6785 = vpop.f32.mrb[0].mxu0
        %v6786 = vpop.f32.mrb[0].mxu0
        %v6787 = vadd.f32 0.0, %v6786
        %v6788 = vpop.f32.mrb[0].mxu0
        %6789 = vmatprep.mubr.bf16.mxu0 0
        %6790 = vmatmul.mubr.bf16.gmra.mrb[0].mxu0 %v6675
        %v6791 = vpop.f32.mrb[0].mxu0
        %v6792 = vadd.f32 0.0, %v6791
        %v6793 = vpop.f32.mrb[0].mxu0
        %v6794 = vpop.f32.mrb[0].mxu0
        %v6795 = vpop.f32.mrb[0].mxu0
        %6796 = vdwg.mxu0
        %v6797 = vadd.f32 %v6647, %v6776
        %v6798 = vadd.f32 %v6650, %v6779
        %v6799 = vadd.f32 %v6655, %v6784
        %v6800 = vadd.f32 %v6658, %v6787
        %v6801 = vadd.f32 %v6663, %v6792
        %v6802 = vld [vmem:[#allocation6 + $0x3] sm:$0xff]
        %v6803 = vld [vmem:[#allocation6 + $0xb] sm:$0xff]
        %v6804 = vld [vmem:[#allocation6 + $0x13] sm:$0xff]
        %v6805 = vld [vmem:[#allocation6 + $0x1b] sm:$0xff]
        %v6806 = vld [vmem:[#allocation6 + $0x23] sm:$0x1f]
        %v6807 = vpack.c.bf16 %v6803, %v6802
        %v6808 = vpack.c.bf16 %v6805, %v6804
        %v6809 = vpack.c.bf16 %v6806, %v6806
        %s6810 = scalar_lea.vmem %s5, 192
        %v6811 = vld [vmem:[%s6810] sm:$0xf]
        %v6812 = vld [vmem:[%s6810 + $0x4] sm:$0xf]
        %v6813 = vld [vmem:[%s6810 + $0x8] sm:$0xf]
        %v6814 = vld [vmem:[%s6810 + $0xc] sm:$0xf]
        %v6815 = vld [vmem:[%s6810 + $0x10] sm:$0xf]
        %v6816 = vld [vmem:[%s6810 + $0x14] sm:$0xf]
        %v6817 = vld [vmem:[%s6810 + $0x18] sm:$0xf]
        %v6818 = vld [vmem:[%s6810 + $0x1c] sm:$0xf]
        %v6819 = vld [vmem:[%s6810 + $0x20] sm:$0xf]
        %v6820 = vld [vmem:[%s6810 + $0x24] sm:$0xf]
        %v6821 = vld [vmem:[%s6810 + $0x28] sm:$0xf]
        %v6822 = vld [vmem:[%s6810 + $0x2c] sm:$0xf]
        %v6823 = vld [vmem:[%s6810 + $0x30] sm:$0xf]
        %v6824 = vld [vmem:[%s6810 + $0x34] sm:$0xf]
        %v6825 = vld [vmem:[%s6810 + $0x38] sm:$0xf]
        %v6826 = vld [vmem:[%s6810 + $0x3c] sm:$0xf]
        %v6843 = vunpack.c.l.b16 %v6811
        %v6844 = vunpack.c.l.b16 %v6812
        %v6845 = vunpack.c.l.b16 %v6813
        %v6846 = vunpack.c.l.b16 %v6814
        %v6847 = vunpack.c.l.b16 %v6815
        %v6848 = vunpack.c.l.b16 %v6816
        %v6849 = vunpack.c.l.b16 %v6817
        %v6850 = vunpack.c.l.b16 %v6818
        %v6851 = vunpack.c.l.b16 %v6819
        %v6852 = vunpack.c.l.b16 %v6820
        %v6853 = vunpack.c.l.b16 %v6821
        %v6854 = vunpack.c.l.b16 %v6822
        %v6855 = vunpack.c.l.b16 %v6823
        %v6856 = vunpack.c.l.b16 %v6824
        %v6857 = vunpack.c.l.b16 %v6825
        %v6858 = vunpack.c.l.b16 %v6826
        %v6859 = vpack.c.b16 %v6844, %v6843
        %v6860 = vpack.c.b16 %v6846, %v6845
        %v6861 = vpack.c.b16 %v6848, %v6847
        %v6862 = vpack.c.b16 %v6850, %v6849
        %v6863 = vpack.c.b16 %v6852, %v6851
        %v6864 = vpack.c.b16 %v6854, %v6853
        %v6865 = vpack.c.b16 %v6856, %v6855
        %v6866 = vpack.c.b16 %v6858, %v6857
        %6875 = vmatprep.subr.bf16.mxu0 0
        %6876 = vmatpush1.bf16.msra.mxu0 %v6859
        %6877 = vmatprep.subr.bf16.mxu0 0
        %6878 = vmatpush1.bf16.msra.mxu0 %v6860
        %6879 = vmatprep.subr.bf16.mxu0 0
        %6880 = vmatpush1.bf16.msra.mxu0 %v6861
        %6881 = vmatprep.subr.bf16.mxu0 0
        %6882 = vmatpush1.bf16.msra.mxu0 %v6862
        %6883 = vmatprep.subr.bf16.mxu0 0
        %6884 = vmatpush1.bf16.msra.mxu0 %v6863
        %6885 = vmatprep.subr.bf16.mxu0 0
        %6886 = vmatpush1.bf16.msra.mxu0 %v6864
        %6887 = vmatprep.subr.bf16.mxu0 0
        %6888 = vmatpush1.bf16.msra.mxu0 %v6865
        %6889 = vmatprep.subr.bf16.mxu0 0
        %6890 = vmatpush1.bf16.msra.mxu0 %v6866
        %6891 = vmatprep.subr.bf16.mxu0 0
        %6892 = vmatpush1.bf16.msra.mxu0 0
        %6893 = vmatprep.subr.bf16.mxu0 0
        %6894 = vmatpush1.bf16.msra.mxu0 0
        %6895 = vmatprep.subr.bf16.mxu0 0
        %6896 = vmatpush1.bf16.msra.mxu0 0
        %6897 = vmatprep.subr.bf16.mxu0 0
        %6898 = vmatpush1.bf16.msra.mxu0 0
        %6899 = vmatprep.subr.bf16.mxu0 0
        %6900 = vmatpush1.bf16.msra.mxu0 0
        %6901 = vmatprep.subr.bf16.mxu0 0
        %6902 = vmatpush1.bf16.msra.mxu0 0
        %6903 = vmatprep.subr.bf16.mxu0 0
        %6904 = vmatpush1.bf16.msra.mxu0 0
        %6905 = vmatprep.subr.bf16.mxu0 0
        %6906 = vmatpush1.bf16.msra.mxu0 0
        %6907 = vmatprep.mubr.bf16.mxu0 0
        %6908 = vmatmul.mubr.bf16.gmra.mrb[0].mxu0 %v6807
        %v6909 = vpop.f32.mrb[0].mxu0
        %v6910 = vadd.f32 0.0, %v6909
        %v6911 = vpop.f32.mrb[0].mxu0
        %v6912 = vpop.f32.mrb[0].mxu0
        %v6913 = vadd.f32 0.0, %v6912
        %v6914 = vpop.f32.mrb[0].mxu0
        %6915 = vmatprep.mubr.bf16.mxu0 0
        %6916 = vmatmul.mubr.bf16.gmra.mrb[0].mxu0 %v6808
        %v6917 = vpop.f32.mrb[0].mxu0
        %v6918 = vadd.f32 0.0, %v6917
        %v6919 = vpop.f32.mrb[0].mxu0
        %v6920 = vpop.f32.mrb[0].mxu0
        %v6921 = vadd.f32 0.0, %v6920
        %v6922 = vpop.f32.mrb[0].mxu0
        %6923 = vmatprep.mubr.bf16.mxu0 0
        %6924 = vmatmul.mubr.bf16.gmra.mrb[0].mxu0 %v6809
        %v6925 = vpop.f32.mrb[0].mxu0
        %v6926 = vadd.f32 0.0, %v6925
        %v6927 = vpop.f32.mrb[0].mxu0
        %v6928 = vpop.f32.mrb[0].mxu0
        %v6929 = vpop.f32.mrb[0].mxu0
        %6930 = vdwg.mxu0
        %v6931 = vadd.f32 %v6797, %v6910
        %v6932 = vadd.f32 %v6798, %v6913
        %v6933 = vadd.f32 %v6799, %v6918
        %v6934 = vadd.f32 %v6800, %v6921
        %v6935 = vadd.f32 %v6801, %v6926
        %v6936 = vld [vmem:[#allocation6 + $0x8] sm:$0xff]
        %v6937 = vld [vmem:[#allocation6 + $0x10] sm:$0xff]
        %v6938 = vld [vmem:[#allocation6 + $0x18] sm:$0xff]
        %v6939 = vld [vmem:[#allocation6 + $0x20] sm:$0xff]
        %v6940 = vld [vmem:[#allocation6 + $0x28] sm:$0x1f]
        %v6941 = vpack.c.bf16 %v6937, %v6936
        %v6942 = vpack.c.bf16 %v6939, %v6938
        %v6943 = vpack.c.bf16 %v6940, %v6940
        %s6944 = scalar_lea.vmem %s5, 256
        %v6945 = vld [vmem:[%s6944] sm:$0xf]
        %v6946 = vld [vmem:[%s6944 + $0x4] sm:$0xf]
        %v6947 = vld [vmem:[%s6944 + $0x8] sm:$0xf]
        %v6948 = vld [vmem:[%s6944 + $0xc] sm:$0xf]
        %v6949 = vld [vmem:[%s6944 + $0x10] sm:$0xf]
        %v6950 = vld [vmem:[%s6944 + $0x14] sm:$0xf]
        %v6951 = vld [vmem:[%s6944 + $0x18] sm:$0xf]
        %v6952 = vld [vmem:[%s6944 + $0x1c] sm:$0xf]
        %v6953 = vld [vmem:[%s6944 + $0x20] sm:$0xf]
        %v6954 = vld [vmem:[%s6944 + $0x24] sm:$0xf]
        %v6955 = vld [vmem:[%s6944 + $0x28] sm:$0xf]
        %v6956 = vld [vmem:[%s6944 + $0x2c] sm:$0xf]
        %v6957 = vld [vmem:[%s6944 + $0x30] sm:$0xf]
        %v6958 = vld [vmem:[%s6944 + $0x34] sm:$0xf]
        %v6959 = vld [vmem:[%s6944 + $0x38] sm:$0xf]
        %v6960 = vld [vmem:[%s6944 + $0x3c] sm:$0xf]
        %v6977 = vunpack.c.l.b16 %v6945
        %v6978 = vunpack.c.l.b16 %v6946
        %v6979 = vunpack.c.l.b16 %v6947
        %v6980 = vunpack.c.l.b16 %v6948
        %v6981 = vunpack.c.l.b16 %v6949
        %v6982 = vunpack.c.l.b16 %v6950
        %v6983 = vunpack.c.l.b16 %v6951
        %v6984 = vunpack.c.l.b16 %v6952
        %v6985 = vunpack.c.l.b16 %v6953
        %v6986 = vunpack.c.l.b16 %v6954
        %v6987 = vunpack.c.l.b16 %v6955
        %v6988 = vunpack.c.l.b16 %v6956
        %v6989 = vunpack.c.l.b16 %v6957
        %v6990 = vunpack.c.l.b16 %v6958
        %v6991 = vunpack.c.l.b16 %v6959
        %v6992 = vunpack.c.l.b16 %v6960
        %v6993 = vpack.c.b16 %v6978, %v6977
        %v6994 = vpack.c.b16 %v6980, %v6979
        %v6995 = vpack.c.b16 %v6982, %v6981
        %v6996 = vpack.c.b16 %v6984, %v6983
        %v6997 = vpack.c.b16 %v6986, %v6985
        %v6998 = vpack.c.b16 %v6988, %v6987
        %v6999 = vpack.c.b16 %v6990, %v6989
        %v7000 = vpack.c.b16 %v6992, %v6991
        %7009 = vmatprep.subr.bf16.mxu0 0
        %7010 = vmatpush1.bf16.msra.mxu0 %v6993
        %7011 = vmatprep.subr.bf16.mxu0 0
        %7012 = vmatpush1.bf16.msra.mxu0 %v6994
        %7013 = vmatprep.subr.bf16.mxu0 0
        %7014 = vmatpush1.bf16.msra.mxu0 %v6995
        %7015 = vmatprep.subr.bf16.mxu0 0
        %7016 = vmatpush1.bf16.msra.mxu0 %v6996
        %7017 = vmatprep.subr.bf16.mxu0 0
        %7018 = vmatpush1.bf16.msra.mxu0 %v6997
        %7019 = vmatprep.subr.bf16.mxu0 0
        %7020 = vmatpush1.bf16.msra.mxu0 %v6998
        %7021 = vmatprep.subr.bf16.mxu0 0
        %7022 = vmatpush1.bf16.msra.mxu0 %v6999
        %7023 = vmatprep.subr.bf16.mxu0 0
        %7024 = vmatpush1.bf16.msra.mxu0 %v7000
        %7025 = vmatprep.subr.bf16.mxu0 0
        %7026 = vmatpush1.bf16.msra.mxu0 0
        %7027 = vmatprep.subr.bf16.mxu0 0
        %7028 = vmatpush1.bf16.msra.mxu0 0
        %7029 = vmatprep.subr.bf16.mxu0 0
        %7030 = vmatpush1.bf16.msra.mxu0 0
        %7031 = vmatprep.subr.bf16.mxu0 0
        %7032 = vmatpush1.bf16.msra.mxu0 0
        %7033 = vmatprep.subr.bf16.mxu0 0
        %7034 = vmatpush1.bf16.msra.mxu0 0
        %7035 = vmatprep.subr.bf16.mxu0 0
        %7036 = vmatpush1.bf16.msra.mxu0 0
        %7037 = vmatprep.subr.bf16.mxu0 0
        %7038 = vmatpush1.bf16.msra.mxu0 0
        %7039 = vmatprep.subr.bf16.mxu0 0
        %7040 = vmatpush1.bf16.msra.mxu0 0
        %7041 = vmatprep.mubr.bf16.mxu0 0
        %7042 = vmatmul.mubr.bf16.gmra.mrb[0].mxu0 %v6941
        %v7043 = vpop.f32.mrb[0].mxu0
        %v7044 = vadd.f32 0.0, %v7043
        %v7045 = vpop.f32.mrb[0].mxu0
        %v7046 = vpop.f32.mrb[0].mxu0
        %v7047 = vadd.f32 0.0, %v7046
        %v7048 = vpop.f32.mrb[0].mxu0
        %7049 = vmatprep.mubr.bf16.mxu0 0
        %7050 = vmatmul.mubr.bf16.gmra.mrb[0].mxu0 %v6942
        %v7051 = vpop.f32.mrb[0].mxu0
        %v7052 = vadd.f32 0.0, %v7051
        %v7053 = vpop.f32.mrb[0].mxu0
        %v7054 = vpop.f32.mrb[0].mxu0
        %v7055 = vadd.f32 0.0, %v7054
        %v7056 = vpop.f32.mrb[0].mxu0
        %7057 = vmatprep.mubr.bf16.mxu0 0
        %7058 = vmatmul.mubr.bf16.gmra.mrb[0].mxu0 %v6943
        %v7059 = vpop.f32.mrb[0].mxu0
        %v7060 = vadd.f32 0.0, %v7059
        %v7061 = vpop.f32.mrb[0].mxu0
        %v7062 = vpop.f32.mrb[0].mxu0
        %v7063 = vpop.f32.mrb[0].mxu0
        %7064 = vdwg.mxu0
        %v7065 = vadd.f32 %v6931, %v7044
        %v7066 = vadd.f32 %v6932, %v7047
        %v7067 = vadd.f32 %v6933, %v7052
        %v7068 = vadd.f32 %v6934, %v7055
        %v7069 = vadd.f32 %v6935, %v7060
        %v7070 = vld [vmem:[#allocation6 + $0x9] sm:$0xff]
        %v7071 = vld [vmem:[#allocation6 + $0x11] sm:$0xff]
        %v7072 = vld [vmem:[#allocation6 + $0x19] sm:$0xff]
        %v7073 = vld [vmem:[#allocation6 + $0x21] sm:$0xff]
        %v7074 = vld [vmem:[#allocation6 + $0x29] sm:$0x1f]
        %v7075 = vpack.c.bf16 %v7071, %v7070
        %v7076 = vpack.c.bf16 %v7073, %v7072
        %v7077 = vpack.c.bf16 %v7074, %v7074
        %s7078 = scalar_lea.vmem %s5, 320
        %v7079 = vld [vmem:[%s7078] sm:$0xf]
        %v7080 = vld [vmem:[%s7078 + $0x4] sm:$0xf]
        %v7081 = vld [vmem:[%s7078 + $0x8] sm:$0xf]
        %v7082 = vld [vmem:[%s7078 + $0xc] sm:$0xf]
        %v7083 = vld [vmem:[%s7078 + $0x10] sm:$0xf]
        %v7084 = vld [vmem:[%s7078 + $0x14] sm:$0xf]
        %v7085 = vld [vmem:[%s7078 + $0x18] sm:$0xf]
        %v7086 = vld [vmem:[%s7078 + $0x1c] sm:$0xf]
        %v7087 = vld [vmem:[%s7078 + $0x20] sm:$0xf]
        %v7088 = vld [vmem:[%s7078 + $0x24] sm:$0xf]
        %v7089 = vld [vmem:[%s7078 + $0x28] sm:$0xf]
        %v7090 = vld [vmem:[%s7078 + $0x2c] sm:$0xf]
        %v7091 = vld [vmem:[%s7078 + $0x30] sm:$0xf]
        %v7092 = vld [vmem:[%s7078 + $0x34] sm:$0xf]
        %v7093 = vld [vmem:[%s7078 + $0x38] sm:$0xf]
        %v7094 = vld [vmem:[%s7078 + $0x3c] sm:$0xf]
        %v7111 = vunpack.c.l.b16 %v7079
        %v7112 = vunpack.c.l.b16 %v7080
        %v7113 = vunpack.c.l.b16 %v7081
        %v7114 = vunpack.c.l.b16 %v7082
        %v7115 = vunpack.c.l.b16 %v7083
        %v7116 = vunpack.c.l.b16 %v7084
        %v7117 = vunpack.c.l.b16 %v7085
        %v7118 = vunpack.c.l.b16 %v7086
        %v7119 = vunpack.c.l.b16 %v7087
        %v7120 = vunpack.c.l.b16 %v7088
        %v7121 = vunpack.c.l.b16 %v7089
        %v7122 = vunpack.c.l.b16 %v7090
        %v7123 = vunpack.c.l.b16 %v7091
        %v7124 = vunpack.c.l.b16 %v7092
        %v7125 = vunpack.c.l.b16 %v7093
        %v7126 = vunpack.c.l.b16 %v7094
        %v7127 = vpack.c.b16 %v7112, %v7111
        %v7128 = vpack.c.b16 %v7114, %v7113
        %v7129 = vpack.c.b16 %v7116, %v7115
        %v7130 = vpack.c.b16 %v7118, %v7117
        %v7131 = vpack.c.b16 %v7120, %v7119
        %v7132 = vpack.c.b16 %v7122, %v7121
        %v7133 = vpack.c.b16 %v7124, %v7123
        %v7134 = vpack.c.b16 %v7126, %v7125
        %7143 = vmatprep.subr.bf16.mxu0 0
        %7144 = vmatpush1.bf16.msra.mxu0 %v7127
        %7145 = vmatprep.subr.bf16.mxu0 0
        %7146 = vmatpush1.bf16.msra.mxu0 %v7128
        %7147 = vmatprep.subr.bf16.mxu0 0
        %7148 = vmatpush1.bf16.msra.mxu0 %v7129
        %7149 = vmatprep.subr.bf16.mxu0 0
        %7150 = vmatpush1.bf16.msra.mxu0 %v7130
        %7151 = vmatprep.subr.bf16.mxu0 0
        %7152 = vmatpush1.bf16.msra.mxu0 %v7131
        %7153 = vmatprep.subr.bf16.mxu0 0
        %7154 = vmatpush1.bf16.msra.mxu0 %v7132
        %7155 = vmatprep.subr.bf16.mxu0 0
        %7156 = vmatpush1.bf16.msra.mxu0 %v7133
        %7157 = vmatprep.subr.bf16.mxu0 0
        %7158 = vmatpush1.bf16.msra.mxu0 %v7134
        %7159 = vmatprep.subr.bf16.mxu0 0
        %7160 = vmatpush1.bf16.msra.mxu0 0
        %7161 = vmatprep.subr.bf16.mxu0 0
        %7162 = vmatpush1.bf16.msra.mxu0 0
        %7163 = vmatprep.subr.bf16.mxu0 0
        %7164 = vmatpush1.bf16.msra.mxu0 0
        %7165 = vmatprep.subr.bf16.mxu0 0
        %7166 = vmatpush1.bf16.msra.mxu0 0
        %7167 = vmatprep.subr.bf16.mxu0 0
        %7168 = vmatpush1.bf16.msra.mxu0 0
        %7169 = vmatprep.subr.bf16.mxu0 0
        %7170 = vmatpush1.bf16.msra.mxu0 0
        %7171 = vmatprep.subr.bf16.mxu0 0
        %7172 = vmatpush1.bf16.msra.mxu0 0
        %7173 = vmatprep.subr.bf16.mxu0 0
        %7174 = vmatpush1.bf16.msra.mxu0 0
        %7175 = vmatprep.mubr.bf16.mxu0 0
        %7176 = vmatmul.mubr.bf16.gmra.mrb[0].mxu0 %v7075
        %v7177 = vpop.f32.mrb[0].mxu0
        %v7178 = vadd.f32 0.0, %v7177
        %v7179 = vpop.f32.mrb[0].mxu0
        %v7180 = vpop.f32.mrb[0].mxu0
        %v7181 = vadd.f32 0.0, %v7180
        %v7182 = vpop.f32.mrb[0].mxu0
        %7183 = vmatprep.mubr.bf16.mxu0 0
        %7184 = vmatmul.mubr.bf16.gmra.mrb[0].mxu0 %v7076
        %v7185 = vpop.f32.mrb[0].mxu0
        %v7186 = vadd.f32 0.0, %v7185
        %v7187 = vpop.f32.mrb[0].mxu0
        %v7188 = vpop.f32.mrb[0].mxu0
        %v7189 = vadd.f32 0.0, %v7188
        %v7190 = vpop.f32.mrb[0].mxu0
        %7191 = vmatprep.mubr.bf16.mxu0 0
        %7192 = vmatmul.mubr.bf16.gmra.mrb[0].mxu0 %v7077
        %v7193 = vpop.f32.mrb[0].mxu0
        %v7194 = vadd.f32 0.0, %v7193
        %v7195 = vpop.f32.mrb[0].mxu0
        %v7196 = vpop.f32.mrb[0].mxu0
        %v7197 = vpop.f32.mrb[0].mxu0
        %7198 = vdwg.mxu0
        %v7199 = vadd.f32 %v7065, %v7178
        %v7200 = vadd.f32 %v7066, %v7181
        %v7201 = vadd.f32 %v7067, %v7186
        %v7202 = vadd.f32 %v7068, %v7189
        %v7203 = vadd.f32 %v7069, %v7194
        %v7204 = vld [vmem:[#allocation6 + $0xa] sm:$0xff]
        %v7205 = vld [vmem:[#allocation6 + $0x12] sm:$0xff]
        %v7206 = vld [vmem:[#allocation6 + $0x1a] sm:$0xff]
        %v7207 = vld [vmem:[#allocation6 + $0x22] sm:$0xff]
        %v7208 = vld [vmem:[#allocation6 + $0x2a] sm:$0x1f]
        %v7209 = vpack.c.bf16 %v7205, %v7204
        %v7210 = vpack.c.bf16 %v7207, %v7206
        %v7211 = vpack.c.bf16 %v7208, %v7208
        %s7212 = scalar_lea.vmem %s5, 384
        %v7213 = vld [vmem:[%s7212] sm:$0xf]
        %v7214 = vld [vmem:[%s7212 + $0x4] sm:$0xf]
        %v7215 = vld [vmem:[%s7212 + $0x8] sm:$0xf]
        %v7216 = vld [vmem:[%s7212 + $0xc] sm:$0xf]
        %v7217 = vld [vmem:[%s7212 + $0x10] sm:$0xf]
        %v7218 = vld [vmem:[%s7212 + $0x14] sm:$0xf]
        %v7219 = vld [vmem:[%s7212 + $0x18] sm:$0xf]
        %v7220 = vld [vmem:[%s7212 + $0x1c] sm:$0xf]
        %v7221 = vld [vmem:[%s7212 + $0x20] sm:$0xf]
        %v7222 = vld [vmem:[%s7212 + $0x24] sm:$0xf]
        %v7223 = vld [vmem:[%s7212 + $0x28] sm:$0xf]
        %v7224 = vld [vmem:[%s7212 + $0x2c] sm:$0xf]
        %v7225 = vld [vmem:[%s7212 + $0x30] sm:$0xf]
        %v7226 = vld [vmem:[%s7212 + $0x34] sm:$0xf]
        %v7227 = vld [vmem:[%s7212 + $0x38] sm:$0xf]
        %v7228 = vld [vmem:[%s7212 + $0x3c] sm:$0xf]
        %v7245 = vunpack.c.l.b16 %v7213
        %v7246 = vunpack.c.l.b16 %v7214
        %v7247 = vunpack.c.l.b16 %v7215
        %v7248 = vunpack.c.l.b16 %v7216
        %v7249 = vunpack.c.l.b16 %v7217
        %v7250 = vunpack.c.l.b16 %v7218
        %v7251 = vunpack.c.l.b16 %v7219
        %v7252 = vunpack.c.l.b16 %v7220
        %v7253 = vunpack.c.l.b16 %v7221
        %v7254 = vunpack.c.l.b16 %v7222
        %v7255 = vunpack.c.l.b16 %v7223
        %v7256 = vunpack.c.l.b16 %v7224
        %v7257 = vunpack.c.l.b16 %v7225
        %v7258 = vunpack.c.l.b16 %v7226
        %v7259 = vunpack.c.l.b16 %v7227
        %v7260 = vunpack.c.l.b16 %v7228
        %v7261 = vpack.c.b16 %v7246, %v7245
        %v7262 = vpack.c.b16 %v7248, %v7247
        %v7263 = vpack.c.b16 %v7250, %v7249
        %v7264 = vpack.c.b16 %v7252, %v7251
        %v7265 = vpack.c.b16 %v7254, %v7253
        %v7266 = vpack.c.b16 %v7256, %v7255
        %v7267 = vpack.c.b16 %v7258, %v7257
        %v7268 = vpack.c.b16 %v7260, %v7259
        %7277 = vmatprep.subr.bf16.mxu0 0
        %7278 = vmatpush1.bf16.msra.mxu0 %v7261
        %7279 = vmatprep.subr.bf16.mxu0 0
        %7280 = vmatpush1.bf16.msra.mxu0 %v7262
        %7281 = vmatprep.subr.bf16.mxu0 0
        %7282 = vmatpush1.bf16.msra.mxu0 %v7263
        %7283 = vmatprep.subr.bf16.mxu0 0
        %7284 = vmatpush1.bf16.msra.mxu0 %v7264
        %7285 = vmatprep.subr.bf16.mxu0 0
        %7286 = vmatpush1.bf16.msra.mxu0 %v7265
        %7287 = vmatprep.subr.bf16.mxu0 0
        %7288 = vmatpush1.bf16.msra.mxu0 %v7266
        %7289 = vmatprep.subr.bf16.mxu0 0
        %7290 = vmatpush1.bf16.msra.mxu0 %v7267
        %7291 = vmatprep.subr.bf16.mxu0 0
        %7292 = vmatpush1.bf16.msra.mxu0 %v7268
        %7293 = vmatprep.subr.bf16.mxu0 0
        %7294 = vmatpush1.bf16.msra.mxu0 0
        %7295 = vmatprep.subr.bf16.mxu0 0
        %7296 = vmatpush1.bf16.msra.mxu0 0
        %7297 = vmatprep.subr.bf16.mxu0 0
        %7298 = vmatpush1.bf16.msra.mxu0 0
        %7299 = vmatprep.subr.bf16.mxu0 0
        %7300 = vmatpush1.bf16.msra.mxu0 0
        %7301 = vmatprep.subr.bf16.mxu0 0
        %7302 = vmatpush1.bf16.msra.mxu0 0
        %7303 = vmatprep.subr.bf16.mxu0 0
        %7304 = vmatpush1.bf16.msra.mxu0 0
        %7305 = vmatprep.subr.bf16.mxu0 0
        %7306 = vmatpush1.bf16.msra.mxu0 0
        %7307 = vmatprep.subr.bf16.mxu0 0
        %7308 = vmatpush1.bf16.msra.mxu0 0
        %7309 = vmatprep.mubr.bf16.mxu0 0
        %7310 = vmatmul.mubr.bf16.gmra.mrb[0].mxu0 %v7209
        %v7311 = vpop.f32.mrb[0].mxu0
        %v7312 = vadd.f32 0.0, %v7311
        %v7313 = vpop.f32.mrb[0].mxu0
        %v7314 = vpop.f32.mrb[0].mxu0
        %v7315 = vadd.f32 0.0, %v7314
        %v7316 = vpop.f32.mrb[0].mxu0
        %7317 = vmatprep.mubr.bf16.mxu0 0
        %7318 = vmatmul.mubr.bf16.gmra.mrb[0].mxu0 %v7210
        %v7319 = vpop.f32.mrb[0].mxu0
        %v7320 = vadd.f32 0.0, %v7319
        %v7321 = vpop.f32.mrb[0].mxu0
        %v7322 = vpop.f32.mrb[0].mxu0
        %v7323 = vadd.f32 0.0, %v7322
        %v7324 = vpop.f32.mrb[0].mxu0
        %7325 = vmatprep.mubr.bf16.mxu0 0
        %7326 = vmatmul.mubr.bf16.gmra.mrb[0].mxu0 %v7211
        %v7327 = vpop.f32.mrb[0].mxu0
        %v7328 = vadd.f32 0.0, %v7327
        %v7329 = vpop.f32.mrb[0].mxu0
        %v7330 = vpop.f32.mrb[0].mxu0
        %v7331 = vpop.f32.mrb[0].mxu0
        %7332 = vdwg.mxu0
        %v7333 = vadd.f32 %v7199, %v7312
        %v7334 = vadd.f32 %v7200, %v7315
        %v7335 = vadd.f32 %v7201, %v7320
        %v7336 = vadd.f32 %v7202, %v7323
        %v7337 = vadd.f32 %v7203, %v7328
        %v7338 = vld [vmem:[#allocation6 + $0xb] sm:$0xff]
        %v7339 = vld [vmem:[#allocation6 + $0x13] sm:$0xff]
        %v7340 = vld [vmem:[#allocation6 + $0x1b] sm:$0xff]
        %v7341 = vld [vmem:[#allocation6 + $0x23] sm:$0xff]
        %v7342 = vld [vmem:[#allocation6 + $0x2b] sm:$0x1f]
        %v7343 = vpack.c.bf16 %v7339, %v7338
        %v7344 = vpack.c.bf16 %v7341, %v7340
        %v7345 = vpack.c.bf16 %v7342, %v7342
        %s7346 = scalar_lea.vmem %s5, 448
        %v7347 = vld [vmem:[%s7346] sm:$0xf]
        %v7348 = vld [vmem:[%s7346 + $0x4] sm:$0xf]
        %v7349 = vld [vmem:[%s7346 + $0x8] sm:$0xf]
        %v7350 = vld [vmem:[%s7346 + $0xc] sm:$0xf]
        %v7351 = vld [vmem:[%s7346 + $0x10] sm:$0xf]
        %v7352 = vld [vmem:[%s7346 + $0x14] sm:$0xf]
        %v7353 = vld [vmem:[%s7346 + $0x18] sm:$0xf]
        %v7354 = vld [vmem:[%s7346 + $0x1c] sm:$0xf]
        %v7355 = vld [vmem:[%s7346 + $0x20] sm:$0xf]
        %v7356 = vld [vmem:[%s7346 + $0x24] sm:$0xf]
        %v7357 = vld [vmem:[%s7346 + $0x28] sm:$0xf]
        %v7358 = vld [vmem:[%s7346 + $0x2c] sm:$0xf]
        %v7359 = vld [vmem:[%s7346 + $0x30] sm:$0xf]
        %v7360 = vld [vmem:[%s7346 + $0x34] sm:$0xf]
        %v7361 = vld [vmem:[%s7346 + $0x38] sm:$0xf]
        %v7362 = vld [vmem:[%s7346 + $0x3c] sm:$0xf]
        %v7379 = vunpack.c.l.b16 %v7347
        %v7380 = vunpack.c.l.b16 %v7348
        %v7381 = vunpack.c.l.b16 %v7349
        %v7382 = vunpack.c.l.b16 %v7350
        %v7383 = vunpack.c.l.b16 %v7351
        %v7384 = vunpack.c.l.b16 %v7352
        %v7385 = vunpack.c.l.b16 %v7353
        %v7386 = vunpack.c.l.b16 %v7354
        %v7387 = vunpack.c.l.b16 %v7355
        %v7388 = vunpack.c.l.b16 %v7356
        %v7389 = vunpack.c.l.b16 %v7357
        %v7390 = vunpack.c.l.b16 %v7358
        %v7391 = vunpack.c.l.b16 %v7359
        %v7392 = vunpack.c.l.b16 %v7360
        %v7393 = vunpack.c.l.b16 %v7361
        %v7394 = vunpack.c.l.b16 %v7362
        %v7395 = vpack.c.b16 %v7380, %v7379
        %v7396 = vpack.c.b16 %v7382, %v7381
        %v7397 = vpack.c.b16 %v7384, %v7383
        %v7398 = vpack.c.b16 %v7386, %v7385
        %v7399 = vpack.c.b16 %v7388, %v7387
        %v7400 = vpack.c.b16 %v7390, %v7389
        %v7401 = vpack.c.b16 %v7392, %v7391
        %v7402 = vpack.c.b16 %v7394, %v7393
        %7411 = vmatprep.subr.bf16.mxu0 0
        %7412 = vmatpush1.bf16.msra.mxu0 %v7395
        %7413 = vmatprep.subr.bf16.mxu0 0
        %7414 = vmatpush1.bf16.msra.mxu0 %v7396
        %7415 = vmatprep.subr.bf16.mxu0 0
        %7416 = vmatpush1.bf16.msra.mxu0 %v7397
        %7417 = vmatprep.subr.bf16.mxu0 0
        %7418 = vmatpush1.bf16.msra.mxu0 %v7398
        %7419 = vmatprep.subr.bf16.mxu0 0
        %7420 = vmatpush1.bf16.msra.mxu0 %v7399
        %7421 = vmatprep.subr.bf16.mxu0 0
        %7422 = vmatpush1.bf16.msra.mxu0 %v7400
        %7423 = vmatprep.subr.bf16.mxu0 0
        %7424 = vmatpush1.bf16.msra.mxu0 %v7401
        %7425 = vmatprep.subr.bf16.mxu0 0
        %7426 = vmatpush1.bf16.msra.mxu0 %v7402
        %7427 = vmatprep.subr.bf16.mxu0 0
        %7428 = vmatpush1.bf16.msra.mxu0 0
        %7429 = vmatprep.subr.bf16.mxu0 0
        %7430 = vmatpush1.bf16.msra.mxu0 0
        %7431 = vmatprep.subr.bf16.mxu0 0
        %7432 = vmatpush1.bf16.msra.mxu0 0
        %7433 = vmatprep.subr.bf16.mxu0 0
        %7434 = vmatpush1.bf16.msra.mxu0 0
        %7435 = vmatprep.subr.bf16.mxu0 0
        %7436 = vmatpush1.bf16.msra.mxu0 0
        %7437 = vmatprep.subr.bf16.mxu0 0
        %7438 = vmatpush1.bf16.msra.mxu0 0
        %7439 = vmatprep.subr.bf16.mxu0 0
        %7440 = vmatpush1.bf16.msra.mxu0 0
        %7441 = vmatprep.subr.bf16.mxu0 0
        %7442 = vmatpush1.bf16.msra.mxu0 0
        %7443 = vmatprep.mubr.bf16.mxu0 0
        %7444 = vmatmul.mubr.bf16.gmra.mrb[0].mxu0 %v7343
        %v7445 = vpop.f32.mrb[0].mxu0
        %v7446 = vadd.f32 0.0, %v7445
        %v7447 = vpop.f32.mrb[0].mxu0
        %v7448 = vpop.f32.mrb[0].mxu0
        %v7449 = vadd.f32 0.0, %v7448
        %v7450 = vpop.f32.mrb[0].mxu0
        %7451 = vmatprep.mubr.bf16.mxu0 0
        %7452 = vmatmul.mubr.bf16.gmra.mrb[0].mxu0 %v7344
        %v7453 = vpop.f32.mrb[0].mxu0
        %v7454 = vadd.f32 0.0, %v7453
        %v7455 = vpop.f32.mrb[0].mxu0
        %v7456 = vpop.f32.mrb[0].mxu0
        %v7457 = vadd.f32 0.0, %v7456
        %v7458 = vpop.f32.mrb[0].mxu0
        %7459 = vmatprep.mubr.bf16.mxu0 0
        %7460 = vmatmul.mubr.bf16.gmra.mrb[0].mxu0 %v7345
        %v7461 = vpop.f32.mrb[0].mxu0
        %v7462 = vadd.f32 0.0, %v7461
        %v7463 = vpop.f32.mrb[0].mxu0
        %v7464 = vpop.f32.mrb[0].mxu0
        %v7465 = vpop.f32.mrb[0].mxu0
        %7466 = vdwg.mxu0
        %v7467 = vadd.f32 %v7333, %v7446
        %v7468 = vadd.f32 %v7334, %v7449
        %v7469 = vadd.f32 %v7335, %v7454
        %v7470 = vadd.f32 %v7336, %v7457
        %v7471 = vadd.f32 %v7337, %v7462
        %v7472 = vld [vmem:[#allocation6 + $0x10] sm:$0xff]
        %v7473 = vld [vmem:[#allocation6 + $0x18] sm:$0xff]
        %v7474 = vld [vmem:[#allocation6 + $0x20] sm:$0xff]
        %v7475 = vld [vmem:[#allocation6 + $0x28] sm:$0xff]
        %v7476 = vld [vmem:[#allocation6 + $0x30] sm:$0x1f]
        %v7477 = vpack.c.bf16 %v7473, %v7472
        %v7478 = vpack.c.bf16 %v7475, %v7474
        %v7479 = vpack.c.bf16 %v7476, %v7476
        %s7480 = scalar_lea.vmem %s5, 512
        %v7481 = vld [vmem:[%s7480] sm:$0xf]
        %v7482 = vld [vmem:[%s7480 + $0x4] sm:$0xf]
        %v7483 = vld [vmem:[%s7480 + $0x8] sm:$0xf]
        %v7484 = vld [vmem:[%s7480 + $0xc] sm:$0xf]
        %v7485 = vld [vmem:[%s7480 + $0x10] sm:$0xf]
        %v7486 = vld [vmem:[%s7480 + $0x14] sm:$0xf]
        %v7487 = vld [vmem:[%s7480 + $0x18] sm:$0xf]
        %v7488 = vld [vmem:[%s7480 + $0x1c] sm:$0xf]
        %v7489 = vld [vmem:[%s7480 + $0x20] sm:$0xf]
        %v7490 = vld [vmem:[%s7480 + $0x24] sm:$0xf]
        %v7491 = vld [vmem:[%s7480 + $0x28] sm:$0xf]
        %v7492 = vld [vmem:[%s7480 + $0x2c] sm:$0xf]
        %v7493 = vld [vmem:[%s7480 + $0x30] sm:$0xf]
        %v7494 = vld [vmem:[%s7480 + $0x34] sm:$0xf]
        %v7495 = vld [vmem:[%s7480 + $0x38] sm:$0xf]
        %v7496 = vld [vmem:[%s7480 + $0x3c] sm:$0xf]
        %v7513 = vunpack.c.l.b16 %v7481
        %v7514 = vunpack.c.l.b16 %v7482
        %v7515 = vunpack.c.l.b16 %v7483
        %v7516 = vunpack.c.l.b16 %v7484
        %v7517 = vunpack.c.l.b16 %v7485
        %v7518 = vunpack.c.l.b16 %v7486
        %v7519 = vunpack.c.l.b16 %v7487
        %v7520 = vunpack.c.l.b16 %v7488
        %v7521 = vunpack.c.l.b16 %v7489
        %v7522 = vunpack.c.l.b16 %v7490
        %v7523 = vunpack.c.l.b16 %v7491
        %v7524 = vunpack.c.l.b16 %v7492
        %v7525 = vunpack.c.l.b16 %v7493
        %v7526 = vunpack.c.l.b16 %v7494
        %v7527 = vunpack.c.l.b16 %v7495
        %v7528 = vunpack.c.l.b16 %v7496
        %v7529 = vpack.c.b16 %v7514, %v7513
        %v7530 = vpack.c.b16 %v7516, %v7515
        %v7531 = vpack.c.b16 %v7518, %v7517
        %v7532 = vpack.c.b16 %v7520, %v7519
        %v7533 = vpack.c.b16 %v7522, %v7521
        %v7534 = vpack.c.b16 %v7524, %v7523
        %v7535 = vpack.c.b16 %v7526, %v7525
        %v7536 = vpack.c.b16 %v7528, %v7527
        %7545 = vmatprep.subr.bf16.mxu0 0
        %7546 = vmatpush1.bf16.msra.mxu0 %v7529
        %7547 = vmatprep.subr.bf16.mxu0 0
        %7548 = vmatpush1.bf16.msra.mxu0 %v7530
        %7549 = vmatprep.subr.bf16.mxu0 0
        %7550 = vmatpush1.bf16.msra.mxu0 %v7531
        %7551 = vmatprep.subr.bf16.mxu0 0
        %7552 = vmatpush1.bf16.msra.mxu0 %v7532
        %7553 = vmatprep.subr.bf16.mxu0 0
        %7554 = vmatpush1.bf16.msra.mxu0 %v7533
        %7555 = vmatprep.subr.bf16.mxu0 0
        %7556 = vmatpush1.bf16.msra.mxu0 %v7534
        %7557 = vmatprep.subr.bf16.mxu0 0
        %7558 = vmatpush1.bf16.msra.mxu0 %v7535
        %7559 = vmatprep.subr.bf16.mxu0 0
        %7560 = vmatpush1.bf16.msra.mxu0 %v7536
        %7561 = vmatprep.subr.bf16.mxu0 0
        %7562 = vmatpush1.bf16.msra.mxu0 0
        %7563 = vmatprep.subr.bf16.mxu0 0
        %7564 = vmatpush1.bf16.msra.mxu0 0
        %7565 = vmatprep.subr.bf16.mxu0 0
        %7566 = vmatpush1.bf16.msra.mxu0 0
        %7567 = vmatprep.subr.bf16.mxu0 0
        %7568 = vmatpush1.bf16.msra.mxu0 0
        %7569 = vmatprep.subr.bf16.mxu0 0
        %7570 = vmatpush1.bf16.msra.mxu0 0
        %7571 = vmatprep.subr.bf16.mxu0 0
        %7572 = vmatpush1.bf16.msra.mxu0 0
        %7573 = vmatprep.subr.bf16.mxu0 0
        %7574 = vmatpush1.bf16.msra.mxu0 0
        %7575 = vmatprep.subr.bf16.mxu0 0
        %7576 = vmatpush1.bf16.msra.mxu0 0
        %7577 = vmatprep.mubr.bf16.mxu0 0
        %7578 = vmatmul.mubr.bf16.gmra.mrb[0].mxu0 %v7477
        %v7579 = vpop.f32.mrb[0].mxu0
        %v7580 = vadd.f32 0.0, %v7579
        %v7581 = vpop.f32.mrb[0].mxu0
        %v7582 = vpop.f32.mrb[0].mxu0
        %v7583 = vadd.f32 0.0, %v7582
        %v7584 = vpop.f32.mrb[0].mxu0
        %7585 = vmatprep.mubr.bf16.mxu0 0
        %7586 = vmatmul.mubr.bf16.gmra.mrb[0].mxu0 %v7478
        %v7587 = vpop.f32.mrb[0].mxu0
        %v7588 = vadd.f32 0.0, %v7587
        %v7589 = vpop.f32.mrb[0].mxu0
        %v7590 = vpop.f32.mrb[0].mxu0
        %v7591 = vadd.f32 0.0, %v7590
        %v7592 = vpop.f32.mrb[0].mxu0
        %7593 = vmatprep.mubr.bf16.mxu0 0
        %7594 = vmatmul.mubr.bf16.gmra.mrb[0].mxu0 %v7479
        %v7595 = vpop.f32.mrb[0].mxu0
        %v7596 = vadd.f32 0.0, %v7595
        %v7597 = vpop.f32.mrb[0].mxu0
        %v7598 = vpop.f32.mrb[0].mxu0
        %v7599 = vpop.f32.mrb[0].mxu0
        %7600 = vdwg.mxu0
        %v7601 = vadd.f32 %v7467, %v7580
        %v7602 = vadd.f32 %v7468, %v7583
        %v7603 = vadd.f32 %v7469, %v7588
        %v7604 = vadd.f32 %v7470, %v7591
        %v7605 = vadd.f32 %v7471, %v7596
        %v7606 = vld [vmem:[#allocation6 + $0x11] sm:$0xff]
        %v7607 = vld [vmem:[#allocation6 + $0x19] sm:$0xff]
        %v7608 = vld [vmem:[#allocation6 + $0x21] sm:$0xff]
        %v7609 = vld [vmem:[#allocation6 + $0x29] sm:$0xff]
        %v7610 = vld [vmem:[#allocation6 + $0x31] sm:$0x1f]
        %v7611 = vpack.c.bf16 %v7607, %v7606
        %v7612 = vpack.c.bf16 %v7609, %v7608
        %v7613 = vpack.c.bf16 %v7610, %v7610
        %s7614 = scalar_lea.vmem %s5, 576
        %v7615 = vld [vmem:[%s7614] sm:$0xf]
        %v7616 = vld [vmem:[%s7614 + $0x4] sm:$0xf]
        %v7617 = vld [vmem:[%s7614 + $0x8] sm:$0xf]
        %v7618 = vld [vmem:[%s7614 + $0xc] sm:$0xf]
        %v7619 = vld [vmem:[%s7614 + $0x10] sm:$0xf]
        %v7620 = vld [vmem:[%s7614 + $0x14] sm:$0xf]
        %v7621 = vld [vmem:[%s7614 + $0x18] sm:$0xf]
        %v7622 = vld [vmem:[%s7614 + $0x1c] sm:$0xf]
        %v7623 = vld [vmem:[%s7614 + $0x20] sm:$0xf]
        %v7624 = vld [vmem:[%s7614 + $0x24] sm:$0xf]
        %v7625 = vld [vmem:[%s7614 + $0x28] sm:$0xf]
        %v7626 = vld [vmem:[%s7614 + $0x2c] sm:$0xf]
        %v7627 = vld [vmem:[%s7614 + $0x30] sm:$0xf]
        %v7628 = vld [vmem:[%s7614 + $0x34] sm:$0xf]
        %v7629 = vld [vmem:[%s7614 + $0x38] sm:$0xf]
        %v7630 = vld [vmem:[%s7614 + $0x3c] sm:$0xf]
        %v7647 = vunpack.c.l.b16 %v7615
        %v7648 = vunpack.c.l.b16 %v7616
        %v7649 = vunpack.c.l.b16 %v7617
        %v7650 = vunpack.c.l.b16 %v7618
        %v7651 = vunpack.c.l.b16 %v7619
        %v7652 = vunpack.c.l.b16 %v7620
        %v7653 = vunpack.c.l.b16 %v7621
        %v7654 = vunpack.c.l.b16 %v7622
        %v7655 = vunpack.c.l.b16 %v7623
        %v7656 = vunpack.c.l.b16 %v7624
        %v7657 = vunpack.c.l.b16 %v7625
        %v7658 = vunpack.c.l.b16 %v7626
        %v7659 = vunpack.c.l.b16 %v7627
        %v7660 = vunpack.c.l.b16 %v7628
        %v7661 = vunpack.c.l.b16 %v7629
        %v7662 = vunpack.c.l.b16 %v7630
        %v7663 = vpack.c.b16 %v7648, %v7647
        %v7664 = vpack.c.b16 %v7650, %v7649
        %v7665 = vpack.c.b16 %v7652, %v7651
        %v7666 = vpack.c.b16 %v7654, %v7653
        %v7667 = vpack.c.b16 %v7656, %v7655
        %v7668 = vpack.c.b16 %v7658, %v7657
        %v7669 = vpack.c.b16 %v7660, %v7659
        %v7670 = vpack.c.b16 %v7662, %v7661
        %7679 = vmatprep.subr.bf16.mxu0 0
        %7680 = vmatpush1.bf16.msra.mxu0 %v7663
        %7681 = vmatprep.subr.bf16.mxu0 0
        %7682 = vmatpush1.bf16.msra.mxu0 %v7664
        %7683 = vmatprep.subr.bf16.mxu0 0
        %7684 = vmatpush1.bf16.msra.mxu0 %v7665
        %7685 = vmatprep.subr.bf16.mxu0 0
        %7686 = vmatpush1.bf16.msra.mxu0 %v7666
        %7687 = vmatprep.subr.bf16.mxu0 0
        %7688 = vmatpush1.bf16.msra.mxu0 %v7667
        %7689 = vmatprep.subr.bf16.mxu0 0
        %7690 = vmatpush1.bf16.msra.mxu0 %v7668
        %7691 = vmatprep.subr.bf16.mxu0 0
        %7692 = vmatpush1.bf16.msra.mxu0 %v7669
        %7693 = vmatprep.subr.bf16.mxu0 0
        %7694 = vmatpush1.bf16.msra.mxu0 %v7670
        %7695 = vmatprep.subr.bf16.mxu0 0
        %7696 = vmatpush1.bf16.msra.mxu0 0
        %7697 = vmatprep.subr.bf16.mxu0 0
        %7698 = vmatpush1.bf16.msra.mxu0 0
        %7699 = vmatprep.subr.bf16.mxu0 0
        %7700 = vmatpush1.bf16.msra.mxu0 0
        %7701 = vmatprep.subr.bf16.mxu0 0
        %7702 = vmatpush1.bf16.msra.mxu0 0
        %7703 = vmatprep.subr.bf16.mxu0 0
        %7704 = vmatpush1.bf16.msra.mxu0 0
        %7705 = vmatprep.subr.bf16.mxu0 0
        %7706 = vmatpush1.bf16.msra.mxu0 0
        %7707 = vmatprep.subr.bf16.mxu0 0
        %7708 = vmatpush1.bf16.msra.mxu0 0
        %7709 = vmatprep.subr.bf16.mxu0 0
        %7710 = vmatpush1.bf16.msra.mxu0 0
        %7711 = vmatprep.mubr.bf16.mxu0 0
        %7712 = vmatmul.mubr.bf16.gmra.mrb[0].mxu0 %v7611
        %v7713 = vpop.f32.mrb[0].mxu0
        %v7714 = vadd.f32 0.0, %v7713
        %v7715 = vpop.f32.mrb[0].mxu0
        %v7716 = vpop.f32.mrb[0].mxu0
        %v7717 = vadd.f32 0.0, %v7716
        %v7718 = vpop.f32.mrb[0].mxu0
        %7719 = vmatprep.mubr.bf16.mxu0 0
        %7720 = vmatmul.mubr.bf16.gmra.mrb[0].mxu0 %v7612
        %v7721 = vpop.f32.mrb[0].mxu0
        %v7722 = vadd.f32 0.0, %v7721
        %v7723 = vpop.f32.mrb[0].mxu0
        %v7724 = vpop.f32.mrb[0].mxu0
        %v7725 = vadd.f32 0.0, %v7724
        %v7726 = vpop.f32.mrb[0].mxu0
        %7727 = vmatprep.mubr.bf16.mxu0 0
        %7728 = vmatmul.mubr.bf16.gmra.mrb[0].mxu0 %v7613
        %v7729 = vpop.f32.mrb[0].mxu0
        %v7730 = vadd.f32 0.0, %v7729
        %v7731 = vpop.f32.mrb[0].mxu0
        %v7732 = vpop.f32.mrb[0].mxu0
        %v7733 = vpop.f32.mrb[0].mxu0
        %7734 = vdwg.mxu0
        %v7735 = vadd.f32 %v7601, %v7714
        %v7736 = vadd.f32 %v7602, %v7717
        %v7737 = vadd.f32 %v7603, %v7722
        %v7738 = vadd.f32 %v7604, %v7725
        %v7739 = vadd.f32 %v7605, %v7730
        %v7740 = vld [vmem:[#allocation6 + $0x12] sm:$0xff]
        %v7741 = vld [vmem:[#allocation6 + $0x1a] sm:$0xff]
        %v7742 = vld [vmem:[#allocation6 + $0x22] sm:$0xff]
        %v7743 = vld [vmem:[#allocation6 + $0x2a] sm:$0xff]
        %v7744 = vld [vmem:[#allocation6 + $0x32] sm:$0x1f]
        %v7745 = vpack.c.bf16 %v7741, %v7740
        %v7746 = vpack.c.bf16 %v7743, %v7742
        %v7747 = vpack.c.bf16 %v7744, %v7744
        %s7748 = scalar_lea.vmem %s5, 640
        %v7749 = vld [vmem:[%s7748] sm:$0xf]
        %v7750 = vld [vmem:[%s7748 + $0x4] sm:$0xf]
        %v7751 = vld [vmem:[%s7748 + $0x8] sm:$0xf]
        %v7752 = vld [vmem:[%s7748 + $0xc] sm:$0xf]
        %v7753 = vld [vmem:[%s7748 + $0x10] sm:$0xf]
        %v7754 = vld [vmem:[%s7748 + $0x14] sm:$0xf]
        %v7755 = vld [vmem:[%s7748 + $0x18] sm:$0xf]
        %v7756 = vld [vmem:[%s7748 + $0x1c] sm:$0xf]
        %v7757 = vld [vmem:[%s7748 + $0x20] sm:$0xf]
        %v7758 = vld [vmem:[%s7748 + $0x24] sm:$0xf]
        %v7759 = vld [vmem:[%s7748 + $0x28] sm:$0xf]
        %v7760 = vld [vmem:[%s7748 + $0x2c] sm:$0xf]
        %v7761 = vld [vmem:[%s7748 + $0x30] sm:$0xf]
        %v7762 = vld [vmem:[%s7748 + $0x34] sm:$0xf]
        %v7763 = vld [vmem:[%s7748 + $0x38] sm:$0xf]
        %v7764 = vld [vmem:[%s7748 + $0x3c] sm:$0xf]
        %v7781 = vunpack.c.l.b16 %v7749
        %v7782 = vunpack.c.l.b16 %v7750
        %v7783 = vunpack.c.l.b16 %v7751
        %v7784 = vunpack.c.l.b16 %v7752
        %v7785 = vunpack.c.l.b16 %v7753
        %v7786 = vunpack.c.l.b16 %v7754
        %v7787 = vunpack.c.l.b16 %v7755
        %v7788 = vunpack.c.l.b16 %v7756
        %v7789 = vunpack.c.l.b16 %v7757
        %v7790 = vunpack.c.l.b16 %v7758
        %v7791 = vunpack.c.l.b16 %v7759
        %v7792 = vunpack.c.l.b16 %v7760
        %v7793 = vunpack.c.l.b16 %v7761
        %v7794 = vunpack.c.l.b16 %v7762
        %v7795 = vunpack.c.l.b16 %v7763
        %v7796 = vunpack.c.l.b16 %v7764
        %v7797 = vpack.c.b16 %v7782, %v7781
        %v7798 = vpack.c.b16 %v7784, %v7783
        %v7799 = vpack.c.b16 %v7786, %v7785
        %v7800 = vpack.c.b16 %v7788, %v7787
        %v7801 = vpack.c.b16 %v7790, %v7789
        %v7802 = vpack.c.b16 %v7792, %v7791
        %v7803 = vpack.c.b16 %v7794, %v7793
        %v7804 = vpack.c.b16 %v7796, %v7795
        %7813 = vmatprep.subr.bf16.mxu0 0
        %7814 = vmatpush1.bf16.msra.mxu0 %v7797
        %7815 = vmatprep.subr.bf16.mxu0 0
        %7816 = vmatpush1.bf16.msra.mxu0 %v7798
        %7817 = vmatprep.subr.bf16.mxu0 0
        %7818 = vmatpush1.bf16.msra.mxu0 %v7799
        %7819 = vmatprep.subr.bf16.mxu0 0
        %7820 = vmatpush1.bf16.msra.mxu0 %v7800
        %7821 = vmatprep.subr.bf16.mxu0 0
        %7822 = vmatpush1.bf16.msra.mxu0 %v7801
        %7823 = vmatprep.subr.bf16.mxu0 0
        %7824 = vmatpush1.bf16.msra.mxu0 %v7802
        %7825 = vmatprep.subr.bf16.mxu0 0
        %7826 = vmatpush1.bf16.msra.mxu0 %v7803
        %7827 = vmatprep.subr.bf16.mxu0 0
        %7828 = vmatpush1.bf16.msra.mxu0 %v7804
        %7829 = vmatprep.subr.bf16.mxu0 0
        %7830 = vmatpush1.bf16.msra.mxu0 0
        %7831 = vmatprep.subr.bf16.mxu0 0
        %7832 = vmatpush1.bf16.msra.mxu0 0
        %7833 = vmatprep.subr.bf16.mxu0 0
        %7834 = vmatpush1.bf16.msra.mxu0 0
        %7835 = vmatprep.subr.bf16.mxu0 0
        %7836 = vmatpush1.bf16.msra.mxu0 0
        %7837 = vmatprep.subr.bf16.mxu0 0
        %7838 = vmatpush1.bf16.msra.mxu0 0
        %7839 = vmatprep.subr.bf16.mxu0 0
        %7840 = vmatpush1.bf16.msra.mxu0 0
        %7841 = vmatprep.subr.bf16.mxu0 0
        %7842 = vmatpush1.bf16.msra.mxu0 0
        %7843 = vmatprep.subr.bf16.mxu0 0
        %7844 = vmatpush1.bf16.msra.mxu0 0
        %7845 = vmatprep.mubr.bf16.mxu0 0
        %7846 = vmatmul.mubr.bf16.gmra.mrb[0].mxu0 %v7745
        %v7847 = vpop.f32.mrb[0].mxu0
        %v7848 = vadd.f32 0.0, %v7847
        %v7849 = vpop.f32.mrb[0].mxu0
        %v7850 = vpop.f32.mrb[0].mxu0
        %v7851 = vadd.f32 0.0, %v7850
        %v7852 = vpop.f32.mrb[0].mxu0
        %7853 = vmatprep.mubr.bf16.mxu0 0
        %7854 = vmatmul.mubr.bf16.gmra.mrb[0].mxu0 %v7746
        %v7855 = vpop.f32.mrb[0].mxu0
        %v7856 = vadd.f32 0.0, %v7855
        %v7857 = vpop.f32.mrb[0].mxu0
        %v7858 = vpop.f32.mrb[0].mxu0
        %v7859 = vadd.f32 0.0, %v7858
        %v7860 = vpop.f32.mrb[0].mxu0
        %7861 = vmatprep.mubr.bf16.mxu0 0
        %7862 = vmatmul.mubr.bf16.gmra.mrb[0].mxu0 %v7747
        %v7863 = vpop.f32.mrb[0].mxu0
        %v7864 = vadd.f32 0.0, %v7863
        %v7865 = vpop.f32.mrb[0].mxu0
        %v7866 = vpop.f32.mrb[0].mxu0
        %v7867 = vpop.f32.mrb[0].mxu0
        %7868 = vdwg.mxu0
        %v7869 = vadd.f32 %v7735, %v7848
        %v7870 = vadd.f32 %v7736, %v7851
        %v7871 = vadd.f32 %v7737, %v7856
        %v7872 = vadd.f32 %v7738, %v7859
        %v7873 = vadd.f32 %v7739, %v7864
        %v7874 = vld [vmem:[#allocation6 + $0x13] sm:$0xff]
        %v7875 = vld [vmem:[#allocation6 + $0x1b] sm:$0xff]
        %v7876 = vld [vmem:[#allocation6 + $0x23] sm:$0xff]
        %v7877 = vld [vmem:[#allocation6 + $0x2b] sm:$0xff]
        %v7878 = vld [vmem:[#allocation6 + $0x33] sm:$0x1f]
        %v7879 = vpack.c.bf16 %v7875, %v7874
        %v7880 = vpack.c.bf16 %v7877, %v7876
        %v7881 = vpack.c.bf16 %v7878, %v7878
        %s7882 = scalar_lea.vmem %s5, 704
        %v7883 = vld [vmem:[%s7882] sm:$0xf]
        %v7884 = vld [vmem:[%s7882 + $0x4] sm:$0xf]
        %v7885 = vld [vmem:[%s7882 + $0x8] sm:$0xf]
        %v7886 = vld [vmem:[%s7882 + $0xc] sm:$0xf]
        %v7887 = vld [vmem:[%s7882 + $0x10] sm:$0xf]
        %v7888 = vld [vmem:[%s7882 + $0x14] sm:$0xf]
        %v7889 = vld [vmem:[%s7882 + $0x18] sm:$0xf]
        %v7890 = vld [vmem:[%s7882 + $0x1c] sm:$0xf]
        %v7891 = vld [vmem:[%s7882 + $0x20] sm:$0xf]
        %v7892 = vld [vmem:[%s7882 + $0x24] sm:$0xf]
        %v7893 = vld [vmem:[%s7882 + $0x28] sm:$0xf]
        %v7894 = vld [vmem:[%s7882 + $0x2c] sm:$0xf]
        %v7895 = vld [vmem:[%s7882 + $0x30] sm:$0xf]
        %v7896 = vld [vmem:[%s7882 + $0x34] sm:$0xf]
        %v7897 = vld [vmem:[%s7882 + $0x38] sm:$0xf]
        %v7898 = vld [vmem:[%s7882 + $0x3c] sm:$0xf]
        %v7915 = vunpack.c.l.b16 %v7883
        %v7916 = vunpack.c.l.b16 %v7884
        %v7917 = vunpack.c.l.b16 %v7885
        %v7918 = vunpack.c.l.b16 %v7886
        %v7919 = vunpack.c.l.b16 %v7887
        %v7920 = vunpack.c.l.b16 %v7888
        %v7921 = vunpack.c.l.b16 %v7889
        %v7922 = vunpack.c.l.b16 %v7890
        %v7923 = vunpack.c.l.b16 %v7891
        %v7924 = vunpack.c.l.b16 %v7892
        %v7925 = vunpack.c.l.b16 %v7893
        %v7926 = vunpack.c.l.b16 %v7894
        %v7927 = vunpack.c.l.b16 %v7895
        %v7928 = vunpack.c.l.b16 %v7896
        %v7929 = vunpack.c.l.b16 %v7897
        %v7930 = vunpack.c.l.b16 %v7898
        %v7931 = vpack.c.b16 %v7916, %v7915
        %v7932 = vpack.c.b16 %v7918, %v7917
        %v7933 = vpack.c.b16 %v7920, %v7919
        %v7934 = vpack.c.b16 %v7922, %v7921
        %v7935 = vpack.c.b16 %v7924, %v7923
        %v7936 = vpack.c.b16 %v7926, %v7925
        %v7937 = vpack.c.b16 %v7928, %v7927
        %v7938 = vpack.c.b16 %v7930, %v7929
        %7947 = vmatprep.subr.bf16.mxu0 0
        %7948 = vmatpush1.bf16.msra.mxu0 %v7931
        %7949 = vmatprep.subr.bf16.mxu0 0
        %7950 = vmatpush1.bf16.msra.mxu0 %v7932
        %7951 = vmatprep.subr.bf16.mxu0 0
        %7952 = vmatpush1.bf16.msra.mxu0 %v7933
        %7953 = vmatprep.subr.bf16.mxu0 0
        %7954 = vmatpush1.bf16.msra.mxu0 %v7934
        %7955 = vmatprep.subr.bf16.mxu0 0
        %7956 = vmatpush1.bf16.msra.mxu0 %v7935
        %7957 = vmatprep.subr.bf16.mxu0 0
        %7958 = vmatpush1.bf16.msra.mxu0 %v7936
        %7959 = vmatprep.subr.bf16.mxu0 0
        %7960 = vmatpush1.bf16.msra.mxu0 %v7937
        %7961 = vmatprep.subr.bf16.mxu0 0
        %7962 = vmatpush1.bf16.msra.mxu0 %v7938
        %7963 = vmatprep.subr.bf16.mxu0 0
        %7964 = vmatpush1.bf16.msra.mxu0 0
        %7965 = vmatprep.subr.bf16.mxu0 0
        %7966 = vmatpush1.bf16.msra.mxu0 0
        %7967 = vmatprep.subr.bf16.mxu0 0
        %7968 = vmatpush1.bf16.msra.mxu0 0
        %7969 = vmatprep.subr.bf16.mxu0 0
        %7970 = vmatpush1.bf16.msra.mxu0 0
        %7971 = vmatprep.subr.bf16.mxu0 0
        %7972 = vmatpush1.bf16.msra.mxu0 0
        %7973 = vmatprep.subr.bf16.mxu0 0
        %7974 = vmatpush1.bf16.msra.mxu0 0
        %7975 = vmatprep.subr.bf16.mxu0 0
        %7976 = vmatpush1.bf16.msra.mxu0 0
        %7977 = vmatprep.subr.bf16.mxu0 0
        %7978 = vmatpush1.bf16.msra.mxu0 0
        %7979 = vmatprep.mubr.bf16.mxu0 0
        %7980 = vmatmul.mubr.bf16.gmra.mrb[0].mxu0 %v7879
        %v7981 = vpop.f32.mrb[0].mxu0
        %v7982 = vadd.f32 0.0, %v7981
        %v7983 = vpop.f32.mrb[0].mxu0
        %v7984 = vpop.f32.mrb[0].mxu0
        %v7985 = vadd.f32 0.0, %v7984
        %v7986 = vpop.f32.mrb[0].mxu0
        %7987 = vmatprep.mubr.bf16.mxu0 0
        %7988 = vmatmul.mubr.bf16.gmra.mrb[0].mxu0 %v7880
        %v7989 = vpop.f32.mrb[0].mxu0
        %v7990 = vadd.f32 0.0, %v7989
        %v7991 = vpop.f32.mrb[0].mxu0
        %v7992 = vpop.f32.mrb[0].mxu0
        %v7993 = vadd.f32 0.0, %v7992
        %v7994 = vpop.f32.mrb[0].mxu0
        %7995 = vmatprep.mubr.bf16.mxu0 0
        %7996 = vmatmul.mubr.bf16.gmra.mrb[0].mxu0 %v7881
        %v7997 = vpop.f32.mrb[0].mxu0
        %v7998 = vadd.f32 0.0, %v7997
        %v7999 = vpop.f32.mrb[0].mxu0
        %v8000 = vpop.f32.mrb[0].mxu0
        %v8001 = vpop.f32.mrb[0].mxu0
        %8002 = vdwg.mxu0
        %v8003 = vadd.f32 %v7869, %v7982
        %v8004 = vadd.f32 %v7870, %v7985
        %v8005 = vadd.f32 %v7871, %v7990
        %v8006 = vadd.f32 %v7872, %v7993
        %v8007 = vadd.f32 %v7873, %v7998
        %v8008 = vld [vmem:[#allocation6 + $0x18] sm:$0xff]
        %v8009 = vld [vmem:[#allocation6 + $0x20] sm:$0xff]
        %v8010 = vld [vmem:[#allocation6 + $0x28] sm:$0xff]
        %v8011 = vld [vmem:[#allocation6 + $0x30] sm:$0xff]
        %v8012 = vld [vmem:[#allocation6 + $0x38] sm:$0x1f]
        %v8013 = vpack.c.bf16 %v8009, %v8008
        %v8014 = vpack.c.bf16 %v8011, %v8010
        %v8015 = vpack.c.bf16 %v8012, %v8012
        %s8016 = scalar_lea.vmem %s5, 768
        %v8017 = vld [vmem:[%s8016] sm:$0xf]
        %v8018 = vld [vmem:[%s8016 + $0x4] sm:$0xf]
        %v8019 = vld [vmem:[%s8016 + $0x8] sm:$0xf]
        %v8020 = vld [vmem:[%s8016 + $0xc] sm:$0xf]
        %v8021 = vld [vmem:[%s8016 + $0x10] sm:$0xf]
        %v8022 = vld [vmem:[%s8016 + $0x14] sm:$0xf]
        %v8023 = vld [vmem:[%s8016 + $0x18] sm:$0xf]
        %v8024 = vld [vmem:[%s8016 + $0x1c] sm:$0xf]
        %v8025 = vld [vmem:[%s8016 + $0x20] sm:$0xf]
        %v8026 = vld [vmem:[%s8016 + $0x24] sm:$0xf]
        %v8027 = vld [vmem:[%s8016 + $0x28] sm:$0xf]
        %v8028 = vld [vmem:[%s8016 + $0x2c] sm:$0xf]
        %v8029 = vld [vmem:[%s8016 + $0x30] sm:$0xf]
        %v8030 = vld [vmem:[%s8016 + $0x34] sm:$0xf]
        %v8031 = vld [vmem:[%s8016 + $0x38] sm:$0xf]
        %v8032 = vld [vmem:[%s8016 + $0x3c] sm:$0xf]
        %v8049 = vunpack.c.l.b16 %v8017
        %v8050 = vunpack.c.l.b16 %v8018
        %v8051 = vunpack.c.l.b16 %v8019
        %v8052 = vunpack.c.l.b16 %v8020
        %v8053 = vunpack.c.l.b16 %v8021
        %v8054 = vunpack.c.l.b16 %v8022
        %v8055 = vunpack.c.l.b16 %v8023
        %v8056 = vunpack.c.l.b16 %v8024
        %v8057 = vunpack.c.l.b16 %v8025
        %v8058 = vunpack.c.l.b16 %v8026
        %v8059 = vunpack.c.l.b16 %v8027
        %v8060 = vunpack.c.l.b16 %v8028
        %v8061 = vunpack.c.l.b16 %v8029
        %v8062 = vunpack.c.l.b16 %v8030
        %v8063 = vunpack.c.l.b16 %v8031
        %v8064 = vunpack.c.l.b16 %v8032
        %v8065 = vpack.c.b16 %v8050, %v8049
        %v8066 = vpack.c.b16 %v8052, %v8051
        %v8067 = vpack.c.b16 %v8054, %v8053
        %v8068 = vpack.c.b16 %v8056, %v8055
        %v8069 = vpack.c.b16 %v8058, %v8057
        %v8070 = vpack.c.b16 %v8060, %v8059
        %v8071 = vpack.c.b16 %v8062, %v8061
        %v8072 = vpack.c.b16 %v8064, %v8063
        %8081 = vmatprep.subr.bf16.mxu0 0
        %8082 = vmatpush1.bf16.msra.mxu0 %v8065
        %8083 = vmatprep.subr.bf16.mxu0 0
        %8084 = vmatpush1.bf16.msra.mxu0 %v8066
        %8085 = vmatprep.subr.bf16.mxu0 0
        %8086 = vmatpush1.bf16.msra.mxu0 %v8067
        %8087 = vmatprep.subr.bf16.mxu0 0
        %8088 = vmatpush1.bf16.msra.mxu0 %v8068
        %8089 = vmatprep.subr.bf16.mxu0 0
        %8090 = vmatpush1.bf16.msra.mxu0 %v8069
        %8091 = vmatprep.subr.bf16.mxu0 0
        %8092 = vmatpush1.bf16.msra.mxu0 %v8070
        %8093 = vmatprep.subr.bf16.mxu0 0
        %8094 = vmatpush1.bf16.msra.mxu0 %v8071
        %8095 = vmatprep.subr.bf16.mxu0 0
        %8096 = vmatpush1.bf16.msra.mxu0 %v8072
        %8097 = vmatprep.subr.bf16.mxu0 0
        %8098 = vmatpush1.bf16.msra.mxu0 0
        %8099 = vmatprep.subr.bf16.mxu0 0
        %8100 = vmatpush1.bf16.msra.mxu0 0
        %8101 = vmatprep.subr.bf16.mxu0 0
        %8102 = vmatpush1.bf16.msra.mxu0 0
        %8103 = vmatprep.subr.bf16.mxu0 0
        %8104 = vmatpush1.bf16.msra.mxu0 0
        %8105 = vmatprep.subr.bf16.mxu0 0
        %8106 = vmatpush1.bf16.msra.mxu0 0
        %8107 = vmatprep.subr.bf16.mxu0 0
        %8108 = vmatpush1.bf16.msra.mxu0 0
        %8109 = vmatprep.subr.bf16.mxu0 0
        %8110 = vmatpush1.bf16.msra.mxu0 0
        %8111 = vmatprep.subr.bf16.mxu0 0
        %8112 = vmatpush1.bf16.msra.mxu0 0
        %8113 = vmatprep.mubr.bf16.mxu0 0
        %8114 = vmatmul.mubr.bf16.gmra.mrb[0].mxu0 %v8013
        %v8115 = vpop.f32.mrb[0].mxu0
        %v8116 = vadd.f32 0.0, %v8115
        %v8117 = vpop.f32.mrb[0].mxu0
        %v8118 = vpop.f32.mrb[0].mxu0
        %v8119 = vadd.f32 0.0, %v8118
        %v8120 = vpop.f32.mrb[0].mxu0
        %8121 = vmatprep.mubr.bf16.mxu0 0
        %8122 = vmatmul.mubr.bf16.gmra.mrb[0].mxu0 %v8014
        %v8123 = vpop.f32.mrb[0].mxu0
        %v8124 = vadd.f32 0.0, %v8123
        %v8125 = vpop.f32.mrb[0].mxu0
        %v8126 = vpop.f32.mrb[0].mxu0
        %v8127 = vadd.f32 0.0, %v8126
        %v8128 = vpop.f32.mrb[0].mxu0
        %8129 = vmatprep.mubr.bf16.mxu0 0
        %8130 = vmatmul.mubr.bf16.gmra.mrb[0].mxu0 %v8015
        %v8131 = vpop.f32.mrb[0].mxu0
        %v8132 = vadd.f32 0.0, %v8131
        %v8133 = vpop.f32.mrb[0].mxu0
        %v8134 = vpop.f32.mrb[0].mxu0
        %v8135 = vpop.f32.mrb[0].mxu0
        %8136 = vdwg.mxu0
        %v8137 = vadd.f32 %v8003, %v8116
        %v8138 = vadd.f32 %v8004, %v8119
        %v8139 = vadd.f32 %v8005, %v8124
        %v8140 = vadd.f32 %v8006, %v8127
        %v8141 = vadd.f32 %v8007, %v8132
        %v8142 = vld [vmem:[#allocation6 + $0x19] sm:$0xff]
        %v8143 = vld [vmem:[#allocation6 + $0x21] sm:$0xff]
        %v8144 = vld [vmem:[#allocation6 + $0x29] sm:$0xff]
        %v8145 = vld [vmem:[#allocation6 + $0x31] sm:$0xff]
        %v8146 = vld [vmem:[#allocation6 + $0x39] sm:$0x1f]
        %v8147 = vpack.c.bf16 %v8143, %v8142
        %v8148 = vpack.c.bf16 %v8145, %v8144
        %v8149 = vpack.c.bf16 %v8146, %v8146
        %s8150 = scalar_lea.vmem %s5, 832
        %v8151 = vld [vmem:[%s8150] sm:$0xf]
        %v8152 = vld [vmem:[%s8150 + $0x4] sm:$0xf]
        %v8153 = vld [vmem:[%s8150 + $0x8] sm:$0xf]
        %v8154 = vld [vmem:[%s8150 + $0xc] sm:$0xf]
        %v8155 = vld [vmem:[%s8150 + $0x10] sm:$0xf]
        %v8156 = vld [vmem:[%s8150 + $0x14] sm:$0xf]
        %v8157 = vld [vmem:[%s8150 + $0x18] sm:$0xf]
        %v8158 = vld [vmem:[%s8150 + $0x1c] sm:$0xf]
        %v8159 = vld [vmem:[%s8150 + $0x20] sm:$0xf]
        %v8160 = vld [vmem:[%s8150 + $0x24] sm:$0xf]
        %v8161 = vld [vmem:[%s8150 + $0x28] sm:$0xf]
        %v8162 = vld [vmem:[%s8150 + $0x2c] sm:$0xf]
        %v8163 = vld [vmem:[%s8150 + $0x30] sm:$0xf]
        %v8164 = vld [vmem:[%s8150 + $0x34] sm:$0xf]
        %v8165 = vld [vmem:[%s8150 + $0x38] sm:$0xf]
        %v8166 = vld [vmem:[%s8150 + $0x3c] sm:$0xf]
        %v8183 = vunpack.c.l.b16 %v8151
        %v8184 = vunpack.c.l.b16 %v8152
        %v8185 = vunpack.c.l.b16 %v8153
        %v8186 = vunpack.c.l.b16 %v8154
        %v8187 = vunpack.c.l.b16 %v8155
        %v8188 = vunpack.c.l.b16 %v8156
        %v8189 = vunpack.c.l.b16 %v8157
        %v8190 = vunpack.c.l.b16 %v8158
        %v8191 = vunpack.c.l.b16 %v8159
        %v8192 = vunpack.c.l.b16 %v8160
        %v8193 = vunpack.c.l.b16 %v8161
        %v8194 = vunpack.c.l.b16 %v8162
        %v8195 = vunpack.c.l.b16 %v8163
        %v8196 = vunpack.c.l.b16 %v8164
        %v8197 = vunpack.c.l.b16 %v8165
        %v8198 = vunpack.c.l.b16 %v8166
        %v8199 = vpack.c.b16 %v8184, %v8183
        %v8200 = vpack.c.b16 %v8186, %v8185
        %v8201 = vpack.c.b16 %v8188, %v8187
        %v8202 = vpack.c.b16 %v8190, %v8189
        %v8203 = vpack.c.b16 %v8192, %v8191
        %v8204 = vpack.c.b16 %v8194, %v8193
        %v8205 = vpack.c.b16 %v8196, %v8195
        %v8206 = vpack.c.b16 %v8198, %v8197
        %8215 = vmatprep.subr.bf16.mxu0 0
        %8216 = vmatpush1.bf16.msra.mxu0 %v8199
        %8217 = vmatprep.subr.bf16.mxu0 0
        %8218 = vmatpush1.bf16.msra.mxu0 %v8200
        %8219 = vmatprep.subr.bf16.mxu0 0
        %8220 = vmatpush1.bf16.msra.mxu0 %v8201
        %8221 = vmatprep.subr.bf16.mxu0 0
        %8222 = vmatpush1.bf16.msra.mxu0 %v8202
        %8223 = vmatprep.subr.bf16.mxu0 0
        %8224 = vmatpush1.bf16.msra.mxu0 %v8203
        %8225 = vmatprep.subr.bf16.mxu0 0
        %8226 = vmatpush1.bf16.msra.mxu0 %v8204
        %8227 = vmatprep.subr.bf16.mxu0 0
        %8228 = vmatpush1.bf16.msra.mxu0 %v8205
        %8229 = vmatprep.subr.bf16.mxu0 0
        %8230 = vmatpush1.bf16.msra.mxu0 %v8206
        %8231 = vmatprep.subr.bf16.mxu0 0
        %8232 = vmatpush1.bf16.msra.mxu0 0
        %8233 = vmatprep.subr.bf16.mxu0 0
        %8234 = vmatpush1.bf16.msra.mxu0 0
        %8235 = vmatprep.subr.bf16.mxu0 0
        %8236 = vmatpush1.bf16.msra.mxu0 0
        %8237 = vmatprep.subr.bf16.mxu0 0
        %8238 = vmatpush1.bf16.msra.mxu0 0
        %8239 = vmatprep.subr.bf16.mxu0 0
        %8240 = vmatpush1.bf16.msra.mxu0 0
        %8241 = vmatprep.subr.bf16.mxu0 0
        %8242 = vmatpush1.bf16.msra.mxu0 0
        %8243 = vmatprep.subr.bf16.mxu0 0
        %8244 = vmatpush1.bf16.msra.mxu0 0
        %8245 = vmatprep.subr.bf16.mxu0 0
        %8246 = vmatpush1.bf16.msra.mxu0 0
        %8247 = vmatprep.mubr.bf16.mxu0 0
        %8248 = vmatmul.mubr.bf16.gmra.mrb[0].mxu0 %v8147
        %v8249 = vpop.f32.mrb[0].mxu0
        %v8250 = vadd.f32 0.0, %v8249
        %v8251 = vpop.f32.mrb[0].mxu0
        %v8252 = vpop.f32.mrb[0].mxu0
        %v8253 = vadd.f32 0.0, %v8252
        %v8254 = vpop.f32.mrb[0].mxu0
        %8255 = vmatprep.mubr.bf16.mxu0 0
        %8256 = vmatmul.mubr.bf16.gmra.mrb[0].mxu0 %v8148
        %v8257 = vpop.f32.mrb[0].mxu0
        %v8258 = vadd.f32 0.0, %v8257
        %v8259 = vpop.f32.mrb[0].mxu0
        %v8260 = vpop.f32.mrb[0].mxu0
        %v8261 = vadd.f32 0.0, %v8260
        %v8262 = vpop.f32.mrb[0].mxu0
        %8263 = vmatprep.mubr.bf16.mxu0 0
        %8264 = vmatmul.mubr.bf16.gmra.mrb[0].mxu0 %v8149
        %v8265 = vpop.f32.mrb[0].mxu0
        %v8266 = vadd.f32 0.0, %v8265
        %v8267 = vpop.f32.mrb[0].mxu0
        %v8268 = vpop.f32.mrb[0].mxu0
        %v8269 = vpop.f32.mrb[0].mxu0
        %8270 = vdwg.mxu0
        %v8271 = vadd.f32 %v8137, %v8250
        %v8272 = vadd.f32 %v8138, %v8253
        %v8273 = vadd.f32 %v8139, %v8258
        %v8274 = vadd.f32 %v8140, %v8261
        %v8275 = vadd.f32 %v8141, %v8266
        %v8276 = vld [vmem:[#allocation6 + $0x1a] sm:$0xff]
        %v8277 = vld [vmem:[#allocation6 + $0x22] sm:$0xff]
        %v8278 = vld [vmem:[#allocation6 + $0x2a] sm:$0xff]
        %v8279 = vld [vmem:[#allocation6 + $0x32] sm:$0xff]
        %v8280 = vld [vmem:[#allocation6 + $0x3a] sm:$0x1f]
        %v8281 = vpack.c.bf16 %v8277, %v8276
        %v8282 = vpack.c.bf16 %v8279, %v8278
        %v8283 = vpack.c.bf16 %v8280, %v8280
        %s8284 = scalar_lea.vmem %s5, 896
        %v8285 = vld [vmem:[%s8284] sm:$0xf]
        %v8286 = vld [vmem:[%s8284 + $0x4] sm:$0xf]
        %v8287 = vld [vmem:[%s8284 + $0x8] sm:$0xf]
        %v8288 = vld [vmem:[%s8284 + $0xc] sm:$0xf]
        %v8289 = vld [vmem:[%s8284 + $0x10] sm:$0xf]
        %v8290 = vld [vmem:[%s8284 + $0x14] sm:$0xf]
        %v8291 = vld [vmem:[%s8284 + $0x18] sm:$0xf]
        %v8292 = vld [vmem:[%s8284 + $0x1c] sm:$0xf]
        %v8293 = vld [vmem:[%s8284 + $0x20] sm:$0xf]
        %v8294 = vld [vmem:[%s8284 + $0x24] sm:$0xf]
        %v8295 = vld [vmem:[%s8284 + $0x28] sm:$0xf]
        %v8296 = vld [vmem:[%s8284 + $0x2c] sm:$0xf]
        %v8297 = vld [vmem:[%s8284 + $0x30] sm:$0xf]
        %v8298 = vld [vmem:[%s8284 + $0x34] sm:$0xf]
        %v8299 = vld [vmem:[%s8284 + $0x38] sm:$0xf]
        %v8300 = vld [vmem:[%s8284 + $0x3c] sm:$0xf]
        %v8317 = vunpack.c.l.b16 %v8285
        %v8318 = vunpack.c.l.b16 %v8286
        %v8319 = vunpack.c.l.b16 %v8287
        %v8320 = vunpack.c.l.b16 %v8288
        %v8321 = vunpack.c.l.b16 %v8289
        %v8322 = vunpack.c.l.b16 %v8290
        %v8323 = vunpack.c.l.b16 %v8291
        %v8324 = vunpack.c.l.b16 %v8292
        %v8325 = vunpack.c.l.b16 %v8293
        %v8326 = vunpack.c.l.b16 %v8294
        %v8327 = vunpack.c.l.b16 %v8295
        %v8328 = vunpack.c.l.b16 %v8296
        %v8329 = vunpack.c.l.b16 %v8297
        %v8330 = vunpack.c.l.b16 %v8298
        %v8331 = vunpack.c.l.b16 %v8299
        %v8332 = vunpack.c.l.b16 %v8300
        %v8333 = vpack.c.b16 %v8318, %v8317
        %v8334 = vpack.c.b16 %v8320, %v8319
        %v8335 = vpack.c.b16 %v8322, %v8321
        %v8336 = vpack.c.b16 %v8324, %v8323
        %v8337 = vpack.c.b16 %v8326, %v8325
        %v8338 = vpack.c.b16 %v8328, %v8327
        %v8339 = vpack.c.b16 %v8330, %v8329
        %v8340 = vpack.c.b16 %v8332, %v8331
        %8349 = vmatprep.subr.bf16.mxu0 0
        %8350 = vmatpush1.bf16.msra.mxu0 %v8333
        %8351 = vmatprep.subr.bf16.mxu0 0
        %8352 = vmatpush1.bf16.msra.mxu0 %v8334
        %8353 = vmatprep.subr.bf16.mxu0 0
        %8354 = vmatpush1.bf16.msra.mxu0 %v8335
        %8355 = vmatprep.subr.bf16.mxu0 0
        %8356 = vmatpush1.bf16.msra.mxu0 %v8336
        %8357 = vmatprep.subr.bf16.mxu0 0
        %8358 = vmatpush1.bf16.msra.mxu0 %v8337
        %8359 = vmatprep.subr.bf16.mxu0 0
        %8360 = vmatpush1.bf16.msra.mxu0 %v8338
        %8361 = vmatprep.subr.bf16.mxu0 0
        %8362 = vmatpush1.bf16.msra.mxu0 %v8339
        %8363 = vmatprep.subr.bf16.mxu0 0
        %8364 = vmatpush1.bf16.msra.mxu0 %v8340
        %8365 = vmatprep.subr.bf16.mxu0 0
        %8366 = vmatpush1.bf16.msra.mxu0 0
        %8367 = vmatprep.subr.bf16.mxu0 0
        %8368 = vmatpush1.bf16.msra.mxu0 0
        %8369 = vmatprep.subr.bf16.mxu0 0
        %8370 = vmatpush1.bf16.msra.mxu0 0
        %8371 = vmatprep.subr.bf16.mxu0 0
        %8372 = vmatpush1.bf16.msra.mxu0 0
        %8373 = vmatprep.subr.bf16.mxu0 0
        %8374 = vmatpush1.bf16.msra.mxu0 0
        %8375 = vmatprep.subr.bf16.mxu0 0
        %8376 = vmatpush1.bf16.msra.mxu0 0
        %8377 = vmatprep.subr.bf16.mxu0 0
        %8378 = vmatpush1.bf16.msra.mxu0 0
        %8379 = vmatprep.subr.bf16.mxu0 0
        %8380 = vmatpush1.bf16.msra.mxu0 0
        %8381 = vmatprep.mubr.bf16.mxu0 0
        %8382 = vmatmul.mubr.bf16.gmra.mrb[0].mxu0 %v8281
        %v8383 = vpop.f32.mrb[0].mxu0
        %v8384 = vadd.f32 0.0, %v8383
        %v8385 = vpop.f32.mrb[0].mxu0
        %v8386 = vpop.f32.mrb[0].mxu0
        %v8387 = vadd.f32 0.0, %v8386
        %v8388 = vpop.f32.mrb[0].mxu0
        %8389 = vmatprep.mubr.bf16.mxu0 0
        %8390 = vmatmul.mubr.bf16.gmra.mrb[0].mxu0 %v8282
        %v8391 = vpop.f32.mrb[0].mxu0
        %v8392 = vadd.f32 0.0, %v8391
        %v8393 = vpop.f32.mrb[0].mxu0
        %v8394 = vpop.f32.mrb[0].mxu0
        %v8395 = vadd.f32 0.0, %v8394
        %v8396 = vpop.f32.mrb[0].mxu0
        %8397 = vmatprep.mubr.bf16.mxu0 0
        %8398 = vmatmul.mubr.bf16.gmra.mrb[0].mxu0 %v8283
        %v8399 = vpop.f32.mrb[0].mxu0
        %v8400 = vadd.f32 0.0, %v8399
        %v8401 = vpop.f32.mrb[0].mxu0
        %v8402 = vpop.f32.mrb[0].mxu0
        %v8403 = vpop.f32.mrb[0].mxu0
        %8404 = vdwg.mxu0
        %v8405 = vadd.f32 %v8271, %v8384
        %v8406 = vadd.f32 %v8272, %v8387
        %v8407 = vadd.f32 %v8273, %v8392
        %v8408 = vadd.f32 %v8274, %v8395
        %v8409 = vadd.f32 %v8275, %v8400
        %v8410 = vld [vmem:[#allocation6 + $0x1b] sm:$0xff]
        %v8411 = vld [vmem:[#allocation6 + $0x23] sm:$0xff]
        %v8412 = vld [vmem:[#allocation6 + $0x2b] sm:$0xff]
        %v8413 = vld [vmem:[#allocation6 + $0x33] sm:$0xff]
        %v8414 = vld [vmem:[#allocation6 + $0x3b] sm:$0x1f]
        %v8415 = vpack.c.bf16 %v8411, %v8410
        %v8416 = vpack.c.bf16 %v8413, %v8412
        %v8417 = vpack.c.bf16 %v8414, %v8414
        %s8418 = scalar_lea.vmem %s5, 960
        %v8419 = vld [vmem:[%s8418] sm:$0xf]
        %v8420 = vld [vmem:[%s8418 + $0x4] sm:$0xf]
        %v8421 = vld [vmem:[%s8418 + $0x8] sm:$0xf]
        %v8422 = vld [vmem:[%s8418 + $0xc] sm:$0xf]
        %v8423 = vld [vmem:[%s8418 + $0x10] sm:$0xf]
        %v8424 = vld [vmem:[%s8418 + $0x14] sm:$0xf]
        %v8425 = vld [vmem:[%s8418 + $0x18] sm:$0xf]
        %v8426 = vld [vmem:[%s8418 + $0x1c] sm:$0xf]
        %v8427 = vld [vmem:[%s8418 + $0x20] sm:$0xf]
        %v8428 = vld [vmem:[%s8418 + $0x24] sm:$0xf]
        %v8429 = vld [vmem:[%s8418 + $0x28] sm:$0xf]
        %v8430 = vld [vmem:[%s8418 + $0x2c] sm:$0xf]
        %v8431 = vld [vmem:[%s8418 + $0x30] sm:$0xf]
        %v8432 = vld [vmem:[%s8418 + $0x34] sm:$0xf]
        %v8433 = vld [vmem:[%s8418 + $0x38] sm:$0xf]
        %v8434 = vld [vmem:[%s8418 + $0x3c] sm:$0xf]
        %v8451 = vunpack.c.l.b16 %v8419
        %v8452 = vunpack.c.l.b16 %v8420
        %v8453 = vunpack.c.l.b16 %v8421
        %v8454 = vunpack.c.l.b16 %v8422
        %v8455 = vunpack.c.l.b16 %v8423
        %v8456 = vunpack.c.l.b16 %v8424
        %v8457 = vunpack.c.l.b16 %v8425
        %v8458 = vunpack.c.l.b16 %v8426
        %v8459 = vunpack.c.l.b16 %v8427
        %v8460 = vunpack.c.l.b16 %v8428
        %v8461 = vunpack.c.l.b16 %v8429
        %v8462 = vunpack.c.l.b16 %v8430
        %v8463 = vunpack.c.l.b16 %v8431
        %v8464 = vunpack.c.l.b16 %v8432
        %v8465 = vunpack.c.l.b16 %v8433
        %v8466 = vunpack.c.l.b16 %v8434
        %v8467 = vpack.c.b16 %v8452, %v8451
        %v8468 = vpack.c.b16 %v8454, %v8453
        %v8469 = vpack.c.b16 %v8456, %v8455
        %v8470 = vpack.c.b16 %v8458, %v8457
        %v8471 = vpack.c.b16 %v8460, %v8459
        %v8472 = vpack.c.b16 %v8462, %v8461
        %v8473 = vpack.c.b16 %v8464, %v8463
        %v8474 = vpack.c.b16 %v8466, %v8465
        %8483 = vmatprep.subr.bf16.mxu0 0
        %8484 = vmatpush1.bf16.msra.mxu0 %v8467
        %8485 = vmatprep.subr.bf16.mxu0 0
        %8486 = vmatpush1.bf16.msra.mxu0 %v8468
        %8487 = vmatprep.subr.bf16.mxu0 0
        %8488 = vmatpush1.bf16.msra.mxu0 %v8469
        %8489 = vmatprep.subr.bf16.mxu0 0
        %8490 = vmatpush1.bf16.msra.mxu0 %v8470
        %8491 = vmatprep.subr.bf16.mxu0 0
        %8492 = vmatpush1.bf16.msra.mxu0 %v8471
        %8493 = vmatprep.subr.bf16.mxu0 0
        %8494 = vmatpush1.bf16.msra.mxu0 %v8472
        %8495 = vmatprep.subr.bf16.mxu0 0
        %8496 = vmatpush1.bf16.msra.mxu0 %v8473
        %8497 = vmatprep.subr.bf16.mxu0 0
        %8498 = vmatpush1.bf16.msra.mxu0 %v8474
        %8499 = vmatprep.subr.bf16.mxu0 0
        %8500 = vmatpush1.bf16.msra.mxu0 0
        %8501 = vmatprep.subr.bf16.mxu0 0
        %8502 = vmatpush1.bf16.msra.mxu0 0
        %8503 = vmatprep.subr.bf16.mxu0 0
        %8504 = vmatpush1.bf16.msra.mxu0 0
        %8505 = vmatprep.subr.bf16.mxu0 0
        %8506 = vmatpush1.bf16.msra.mxu0 0
        %8507 = vmatprep.subr.bf16.mxu0 0
        %8508 = vmatpush1.bf16.msra.mxu0 0
        %8509 = vmatprep.subr.bf16.mxu0 0
        %8510 = vmatpush1.bf16.msra.mxu0 0
        %8511 = vmatprep.subr.bf16.mxu0 0
        %8512 = vmatpush1.bf16.msra.mxu0 0
        %8513 = vmatprep.subr.bf16.mxu0 0
        %8514 = vmatpush1.bf16.msra.mxu0 0
        %8515 = vmatprep.mubr.bf16.mxu0 0
        %8516 = vmatmul.mubr.bf16.gmra.mrb[0].mxu0 %v8415
        %v8517 = vpop.f32.mrb[0].mxu0
        %v8518 = vadd.f32 0.0, %v8517
        %v8519 = vpop.f32.mrb[0].mxu0
        %v8520 = vpop.f32.mrb[0].mxu0
        %v8521 = vadd.f32 0.0, %v8520
        %v8522 = vpop.f32.mrb[0].mxu0
        %8523 = vmatprep.mubr.bf16.mxu0 0
        %8524 = vmatmul.mubr.bf16.gmra.mrb[0].mxu0 %v8416
        %v8525 = vpop.f32.mrb[0].mxu0
        %v8526 = vadd.f32 0.0, %v8525
        %v8527 = vpop.f32.mrb[0].mxu0
        %v8528 = vpop.f32.mrb[0].mxu0
        %v8529 = vadd.f32 0.0, %v8528
        %v8530 = vpop.f32.mrb[0].mxu0
        %8531 = vmatprep.mubr.bf16.mxu0 0
        %8532 = vmatmul.mubr.bf16.gmra.mrb[0].mxu0 %v8417
        %v8533 = vpop.f32.mrb[0].mxu0
        %v8534 = vadd.f32 0.0, %v8533
        %v8535 = vpop.f32.mrb[0].mxu0
        %v8536 = vpop.f32.mrb[0].mxu0
        %v8537 = vpop.f32.mrb[0].mxu0
        %8538 = vdwg.mxu0
        %v8539 = vadd.f32 %v8405, %v8518
        %v8540 = vadd.f32 %v8406, %v8521
        %v8541 = vadd.f32 %v8407, %v8526
        %v8542 = vadd.f32 %v8408, %v8529
        %v8543 = vadd.f32 %v8409, %v8534
        %v8544 = vld [vmem:[%s10] sm:$0x1]
        %v8546 = vlaneseq
        %v8547 = vshrl.u32 %v8546, 7
        %v8548 = vsub.s32 0, %v8547
        %v8549 = vrot.slane %v8544, %v8548
        %v8551 = vadd.f32 %v8539, %v8549
        %v8552 = vadd.f32 %v8540, %v8549
        %v8553 = vadd.f32 %v8541, %v8549
        %v8554 = vadd.f32 %v8542, %v8549
        %v8555 = vadd.f32 %v8543, %v8549
        %vm8556 = vcmask 61440
        %8557 = vst.msk [vmem:[%s416] sm:$0x1f] %vm8556, %v8551
        %s8558 = scalar_lea.vmem %s416, 8
        %8559 = vst.msk [vmem:[%s8558] sm:$0x1f] %vm8556, %v8552
        %s8560 = scalar_lea.vmem %s416, 16
        %8561 = vst.msk [vmem:[%s8560] sm:$0x1f] %vm8556, %v8553
        %s8562 = scalar_lea.vmem %s416, 24
        %8563 = vst.msk [vmem:[%s8562] sm:$0x1f] %vm8556, %v8554
        %s8564 = scalar_lea.vmem %s416, 32
        %8565 = vst.msk [vmem:[%s8564] sm:$0x1f] %vm8556, %v8555
        %p8566 = scmp.lt.s32.totalorder %s24, 1
        %s8567 = scalar_select %p8566, %s24, 1
        %s8568 = smul.addr %s8567, 5
        %s8569 = smul.addr %s8568, 8
        %s8570 = scalar_lea.vmem %s11, %s8569
        // Predicated region
        $region73: #{patchgan_forward_pallas.1} parent=63 // pred_check
          %p8571 = pneg %p278
        $region74: #{patchgan_forward_pallas.1} parent=63 // pred_check_branch
          %8573 = sbr.rel (%p8571) target = $region76
        $region75: #{patchgan_forward_pallas.1} parent=63 // pred_region
          _
        $region76: #{patchgan_forward_pallas.1} parent=63 // pred_fallthru
          _
      $region64: #{patchgan_forward_pallas.1} parent=5 // pred_fallthru
        _
      %p8574 = scmp.le.s32.totalorder 2, %s19
      // Predicated region
      $region77: #{patchgan_forward_pallas.1} parent=5 // pred_check
        %p8575 = pneg %p8574
      $region78: #{patchgan_forward_pallas.1} parent=5 // pred_check_branch
        %8577 = sbr.rel (%p8575) target = $region80
      $region79: #{patchgan_forward_pallas.1} parent=5 // pred_region
        %s8578 = ssub.s32 %s19, 2
        // Predicated region
        $region81: #{patchgan_forward_pallas.1} parent=79 // pred_check
          %p8579 = pneg %p284
        $region82: #{patchgan_forward_pallas.1} parent=79 // pred_check_branch
          %8581 = sbr.rel (%p8579) target = $region84
        $region83: #{patchgan_forward_pallas.1} parent=79 // pred_region
          %p8582 = scmp.lt.s32.totalorder %s25, 1
          %s8583 = scalar_select %p8582, %s25, 1
          %s8584 = smul.addr %s8583, 5
          %s8585 = smul.addr %s8584, 8
          %s8586 = scalar_lea.vmem %s11, %s8585
        $region84: #{patchgan_forward_pallas.1} parent=79 // pred_fallthru
          _
      $region80: #{patchgan_forward_pallas.1} parent=5 // pred_fallthru
        _
    $region6: #{patchgan_forward_pallas.1} parent=1 // loop_footer
      %s23 = sadd.s32 1, %s19
    $region7: #{patchgan_forward_pallas.1} parent=1 // loop_footer_branch
      %18 = sbr.rel target = $region3
    $region8: #{patchgan_forward_pallas.1} parent=1 // loop_exit
      _
    %8587 = vsyncpa [#allocation8], 1
    %s8588 = scalar_lea.sflag [#allocation8], 1
    %8589 = vsyncpa %s8588, 1
    %8590 = vsyncpa [#allocation10], 1

</llo_original>
